<compile_context>
chip_gen: v7x
topology: tpu7x:2x2x1
jax: 0.10.0
libtpu: 0.0.40
codegen_flags: <defaults>
</compile_context>

<pallas_src>
import functools
import math

import jax
import jax.numpy as jnp
from jax.experimental import pallas as pl
from jax.experimental.pallas import tpu as pltpu


# ----------------------------------------------------------------------------
# In-kernel helpers (f32 non-matmul math, bf16 MXU operands)
# ----------------------------------------------------------------------------
def _ln(x, g, b, eps=1e-5):
    mean = jnp.mean(x, axis=-1, keepdims=True)
    xc = x - mean
    var = jnp.mean(xc * xc, axis=-1, keepdims=True)
    return xc * jax.lax.rsqrt(var + eps) * g + b


def _gelu(y):
    # tanh-approx GELU (nanoGPT-style)
    return 0.5 * y * (1.0 + jnp.tanh(0.7978845608028654 * (y + 0.044715 * y * y * y)))


def _mm(a_f32, w_bf16, bias_f32=None):
    """(M,K) f32 @ (K,N) bf16 -> (M,N) f32 (+ optional f32 bias)."""
    y = jnp.dot(a_f32.astype(jnp.bfloat16), w_bf16,
                preferred_element_type=jnp.float32)
    if bias_f32 is not None:
        y = y + bias_f32
    return y


def _mha_proj(q, k, v, wo, n_head, causal):
    """Multi-head attention with the head-concat folded into the output
    projection.  q: (Sq, E) f32, k/v: (Sk, E) f32, wo: (E, E) bf16.
    Returns (Sq, E) f32 (output-projection bias NOT included)."""
    Sq, E = q.shape
    Sk = k.shape[0]
    Dh = E // n_head
    scale = 1.0 / math.sqrt(Dh)

    add_mask = None
    if causal:
        # hoisted out of the (unrolled) per-head loop: built exactly once
        iq = jax.lax.broadcasted_iota(jnp.int32, (Sq, Sk), 0)
        ik = jax.lax.broadcasted_iota(jnp.int32, (Sq, Sk), 1)
        add_mask = jnp.where(ik <= iq, 0.0, -1e30)          # f32 additive mask

    acc = jnp.zeros((Sq, E), jnp.float32)
    for h in range(n_head):
        lo = h * Dh
        qh = (q[:, lo:lo + Dh] * scale).astype(jnp.bfloat16)  # scale folded into q
        kh = k[:, lo:lo + Dh].astype(jnp.bfloat16)
        vh = v[:, lo:lo + Dh].astype(jnp.bfloat16)
        s = jax.lax.dot_general(qh, kh, (((1,), (1,)), ((), ())),
                                preferred_element_type=jnp.float32)   # (Sq, Sk) f32
        if add_mask is not None:
            s = s + add_mask
        m = jnp.max(s, axis=-1, keepdims=True)
        p = jnp.exp(s - m)
        p = p * pl.reciprocal(jnp.sum(p, axis=-1, keepdims=True), approx=True)
        oh = jnp.dot(p.astype(jnp.bfloat16), vh,
                     preferred_element_type=jnp.float32)               # (Sq, Dh)
        # concat eliminated: accumulate through the matching rows of wo
        acc = acc + jnp.dot(oh.astype(jnp.bfloat16), wo[lo:lo + Dh, :],
                            preferred_element_type=jnp.float32)
    return acc


def _encoder_layer(x, wqkv, wo, wfc, wproj, vecs, n_head):
    """Pre-LN encoder block.  vecs: (8, 4E) f32 packed small vectors."""
    E = x.shape[-1]
    ln1g, ln1b = vecs[0, :E], vecs[1, :E]
    bqkv, bo = vecs[2, :3 * E], vecs[3, :E]
    ln2g, ln2b = vecs[4, :E], vecs[5, :E]
    bfc, bproj = vecs[6, :4 * E], vecs[7, :E]

    a = _ln(x, ln1g, ln1b)
    qkv = _mm(a, wqkv, bqkv)                                           # (S, 3E)
    attn = _mha_proj(qkv[:, :E], qkv[:, E:2 * E], qkv[:, 2 * E:],
                     wo, n_head, causal=False)
    x = x + attn + bo

    a = _ln(x, ln2g, ln2b)
    h = _gelu(_mm(a, wfc, bfc))
    x = x + _mm(h, wproj, bproj)
    return x


def _decoder_layer(x, enc, wqkv, wo1, wq, wkv, wo2, wfc, wproj, vecs, n_head):
    """Pre-LN decoder block (causal self-attn + cross-attn + MLP).
    vecs: (13, 4E) f32 packed small vectors."""
    E = x.shape[-1]
    ln1g, ln1b = vecs[0, :E], vecs[1, :E]
    bqkv, bo1 = vecs[2, :3 * E], vecs[3, :E]
    ln2g, ln2b = vecs[4, :E], vecs[5, :E]
    bq, bkv, bo2 = vecs[6, :E], vecs[7, :2 * E], vecs[8, :E]
    ln3g, ln3b = vecs[9, :E], vecs[10, :E]
    bfc, bproj = vecs[11, :4 * E], vecs[12, :E]

    # causal self-attention
    a = _ln(x, ln1g, ln1b)
    qkv = _mm(a, wqkv, bqkv)
    attn = _mha_proj(qkv[:, :E], qkv[:, E:2 * E], qkv[:, 2 * E:],
                     wo1, n_head, causal=True)
    x = x + attn + bo1

    # cross-attention (q from ln2(x), fused K/V from the VMEM-resident encoder output)
    a = _ln(x, ln2g, ln2b)
    q = _mm(a, wq, bq)
    kv = _mm(enc, wkv, bkv)                                            # (Se, 2E)
    attn = _mha_proj(q, kv[:, :E], kv[:, E:], wo2, n_head, causal=False)
    x = x + attn + bo2

    # MLP
    a = _ln(x, ln3g, ln3b)
    h = _gelu(_mm(a, wfc, bfc))
    x = x + _mm(h, wproj, bproj)
    return x


# ----------------------------------------------------------------------------
# Single fused kernel: embeddings + encoder stack + decoder stack + final LN
# ----------------------------------------------------------------------------
def _forward_kernel(graph_ref, src_ref, wte_enc_w, wte_dec_w, misc_vecs,
                    e_wqkv, e_wo, e_wfc, e_wproj, e_vecs,
                    d_wqkv, d_wo1, d_wq, d_wkv, d_wo2, d_wfc, d_wproj, d_vecs,
                    out_ref, *, n_head, n_enc, n_dec):
    misc = misc_vecs[...].astype(jnp.float32)          # (4, E): enc_b, dec_b, lnf_g, lnf_b

    # --- encoder: continuous embedding + n_enc pre-LN blocks ---
    enc = _mm(graph_ref[0].astype(jnp.float32), wte_enc_w[...], misc[0])
    for l in range(n_enc):                             # static unroll (small n_layer)
        enc = _encoder_layer(enc, e_wqkv[l], e_wo[l], e_wfc[l], e_wproj[l],
                             e_vecs[l].astype(jnp.float32), n_head)

    # --- decoder: continuous embedding + n_dec blocks ---
    dec = _mm(src_ref[0].astype(jnp.float32), wte_dec_w[...], misc[1])
    for l in range(n_dec):
        dec = _decoder_layer(dec, enc, d_wqkv[l], d_wo1[l], d_wq[l], d_wkv[l],
                             d_wo2[l], d_wfc[l], d_wproj[l],
                             d_vecs[l].astype(jnp.float32), n_head)

    # --- final LayerNorm ---
    out_ref[0] = _ln(dec, misc[2], misc[3]).astype(out_ref.dtype)


# ----------------------------------------------------------------------------
# pallas_call wrapper (grid over batch, parallel for megacore / 2-TC v7x)
# ----------------------------------------------------------------------------
def _const_spec(a):
    zeros = (0,) * a.ndim
    return pl.BlockSpec(a.shape, lambda b, _z=zeros: _z)


def _batch_spec(shape):
    trailing = (0,) * (len(shape) - 1)
    return pl.BlockSpec((1,) + tuple(shape[1:]), lambda b, _t=trailing: (b,) + _t)


def transformer_with_graph2vec_forward(packed, src, graph_embeddings, *, n_head):
    B, S_dec, _ = src.shape
    E = packed["misc_vecs"].shape[-1]
    n_enc = packed["enc_wqkv"].shape[0]
    n_dec = packed["dec_wqkv"].shape[0]

    weight_args = [
        packed["wte_enc_w"], packed["wte_dec_w"], packed["misc_vecs"],
        packed["enc_wqkv"], packed["enc_wo"], packed["enc_wfc"],
        packed["enc_wproj"], packed["enc_vecs"],
        packed["dec_wqkv"], packed["dec_wo1"], packed["dec_wq"],
        packed["dec_wkv"], packed["dec_wo2"], packed["dec_wfc"],
        packed["dec_wproj"], packed["dec_vecs"],
    ]

    kernel = functools.partial(_forward_kernel, n_head=n_head,
                               n_enc=n_enc, n_dec=n_dec)

    return pl.pallas_call(
        kernel,
        out_shape=jax.ShapeDtypeStruct((B, S_dec, E), jnp.float32),
        grid=(B,),
        in_specs=[_batch_spec(graph_embeddings.shape), _batch_spec(src.shape)]
                 + [_const_spec(a) for a in weight_args],
        out_specs=_batch_spec((B, S_dec, E)),
        compiler_params=pltpu.CompilerParams(dimension_semantics=("parallel",)),
    )(graph_embeddings, src, *weight_args)


# ----------------------------------------------------------------------------
# Parameter init (natural per-layer format) + one-time packing to kernel format
# ----------------------------------------------------------------------------
def _init_linear(key, in_dim, out_dim, dtype=jnp.float32):
    kw, kb = jax.random.split(key)
    w = jax.random.normal(kw, (in_dim, out_dim), dtype) / math.sqrt(in_dim)
    b = 0.02 * jax.random.normal(kb, (out_dim,), dtype)
    return w, b


def _init_ln(dim, dtype=jnp.float32):
    return {"g": jnp.ones((dim,), dtype), "b": jnp.zeros((dim,), dtype)}


def init_params(key, cfg):
    E = cfg["n_embd"]
    keys = iter(jax.random.split(key, 512))
    nk = lambda: next(keys)

    def attn_params():                          # fused QKV
        wqkv, bqkv = _init_linear(nk(), E, 3 * E)
        wo, bo = _init_linear(nk(), E, E)
        return {"wqkv": wqkv, "bqkv": bqkv, "wo": wo, "bo": bo}

    def cross_attn_params():                    # separate Q, fused KV
        wq, bq = _init_linear(nk(), E, E)
        wkv, bkv = _init_linear(nk(), E, 2 * E)
        wo, bo = _init_linear(nk(), E, E)
        return {"wq": wq, "bq": bq, "wkv": wkv, "bkv": bkv, "wo": wo, "bo": bo}

    def mlp_params():
        wfc, bfc = _init_linear(nk(), E, 4 * E)
        wproj, bproj = _init_linear(nk(), 4 * E, E)
        return {"wfc": wfc, "bfc": bfc, "wproj": wproj, "bproj": bproj}

    def lin_dict(in_dim):
        w, b = _init_linear(nk(), in_dim, E)
        return {"w": w, "b": b}

    return {
        "wte_enc": lin_dict(cfg["graph_input_embedding"]),
        "wte_dec": lin_dict(cfg["batch_size"]),
        "encoder": [
            {"ln1": _init_ln(E), "attn": attn_params(),
             "ln2": _init_ln(E), "mlp": mlp_params()}
            for _ in range(cfg["n_layer"])
        ],
        "decoder": [
            {"ln1": _init_ln(E), "self_attn": attn_params(),
             "ln2": _init_ln(E), "cross_attn": cross_attn_params(),
             "ln3": _init_ln(E), "mlp": mlp_params()}
            for _ in range(cfg["n_layer"])
        ],
        "ln_f": _init_ln(E),
    }


def pack_params(params):
    """One-time conversion to the fused-kernel format: per-layer weights stacked
    on a leading L axis (bf16 -> half the DMA bytes / VMEM), and all tiny
    LayerNorm / bias vectors packed into one (L, rows, 4E) f32 array per stack."""
    E = params["ln_f"]["g"].shape[0]
    W = 4 * E
    bf16 = jnp.bfloat16

    def row(v):
        v = v.astype(jnp.float32)
        return jnp.pad(v, (0, W - v.shape[0]))

    def stack_w(layers, outer, inner):
        return jnp.stack([lp[outer][inner] for lp in layers]).astype(bf16)

    enc, dec = params["encoder"], params["decoder"]

    enc_vecs = jnp.stack([jnp.stack([
        row(lp["ln1"]["g"]), row(lp["ln1"]["b"]),
        row(lp["attn"]["bqkv"]), row(lp["attn"]["bo"]),
        row(lp["ln2"]["g"]), row(lp["ln2"]["b"]),
        row(lp["mlp"]["bfc"]), row(lp["mlp"]["bproj"]),
    ]) for lp in enc])                                       # (L, 8, 4E)

    dec_vecs = jnp.stack([jnp.stack([
        row(lp["ln1"]["g"]), row(lp["ln1"]["b"]),
        row(lp["self_attn"]["bqkv"]), row(lp["self_attn"]["bo"]),
        row(lp["ln2"]["g"]), row(lp["ln2"]["b"]),
        row(lp["cross_attn"]["bq"]), row(lp["cross_attn"]["bkv"]),
        row(lp["cross_attn"]["bo"]),
        row(lp["ln3"]["g"]), row(lp["ln3"]["b"]),
        row(lp["mlp"]["bfc"]), row(lp["mlp"]["bproj"]),
    ]) for lp in dec])                                       # (L, 13, 4E)

    return {
        "wte_enc_w": params["wte_enc"]["w"].astype(bf16),
        "wte_dec_w": params["wte_dec"]["w"].astype(bf16),
        "misc_vecs": jnp.stack([params["wte_enc"]["b"], params["wte_dec"]["b"],
                                params["ln_f"]["g"], params["ln_f"]["b"]]
                               ).astype(jnp.float32),        # (4, E)
        "enc_wqkv": stack_w(enc, "attn", "wqkv"),
        "enc_wo": stack_w(enc, "attn", "wo"),
        "enc_wfc": stack_w(enc, "mlp", "wfc"),
        "enc_wproj": stack_w(enc, "mlp", "wproj"),
        "enc_vecs": enc_vecs,
        "dec_wqkv": stack_w(dec, "self_attn", "wqkv"),
        "dec_wo1": stack_w(dec, "self_attn", "wo"),
        "dec_wq": stack_w(dec, "cross_attn", "wq"),
        "dec_wkv": stack_w(dec, "cross_attn", "wkv"),
        "dec_wo2": stack_w(dec, "cross_attn", "wo"),
        "dec_wfc": stack_w(dec, "mlp", "wfc"),
        "dec_wproj": stack_w(dec, "mlp", "wproj"),
        "dec_vecs": dec_vecs,
    }


# ----------------------------------------------------------------------------
if __name__ == "__main__":
    cfg = dict(
        n_embd=32,
        n_head=4,
        n_layer=2,
        graph_input_embedding=16,
        batch_size=8,        # feature dim of `src` per nn.Linear(config.batch_size, n_embd)
        dropout=0.0,         # dropout is identity at inference
        bias=True,
    )
    B, S_enc, S_dec = 2, 8, 8

    root = jax.random.PRNGKey(0)
    k_param, k_src, k_graph = jax.random.split(root, 3)

    params = init_params(k_param, cfg)
    packed = pack_params(params)   # one-time conversion to the fused-kernel layout

    graph_embeddings = jax.random.normal(
        k_graph, (B, S_enc, cfg["graph_input_embedding"]), jnp.float32)
    src = jax.random.normal(k_src, (B, S_dec, cfg["batch_size"]), jnp.float32)

    fwd = jax.jit(functools.partial(
        transformer_with_graph2vec_forward, n_head=cfg["n_head"]))
    out = jax.block_until_ready(fwd(packed, src, graph_embeddings))

    assert out.shape == (B, S_dec, cfg["n_embd"])
    assert bool(jnp.all(jnp.isfinite(out)))
    # TODO(synk): Encoder/Decoder/LayerNorm class bodies were not provided in the
    # source; a standard pre-LN transformer encoder/decoder stack (causal decoder
    # self-attention, tanh-GELU MLP) is assumed.
    print("KERNEL_OK")
</pallas_src>

<mosaic_0001>
module attributes {stable_mosaic.version = 11 : i64} {
  func.func @_forward_kernel(%arg0: i32, %arg1: memref<1x8x16xf32, #tpu.memory_space<vmem>>, %arg2: memref<1x8x8xf32, #tpu.memory_space<vmem>>, %arg3: memref<16x32xbf16, #tpu.memory_space<vmem>>, %arg4: memref<8x32xbf16, #tpu.memory_space<vmem>>, %arg5: memref<4x32xf32, #tpu.memory_space<vmem>>, %arg6: memref<2x32x96xbf16, #tpu.memory_space<vmem>>, %arg7: memref<2x32x32xbf16, #tpu.memory_space<vmem>>, %arg8: memref<2x32x128xbf16, #tpu.memory_space<vmem>>, %arg9: memref<2x128x32xbf16, #tpu.memory_space<vmem>>, %arg10: memref<2x8x128xf32, #tpu.memory_space<vmem>>, %arg11: memref<2x32x96xbf16, #tpu.memory_space<vmem>>, %arg12: memref<2x32x32xbf16, #tpu.memory_space<vmem>>, %arg13: memref<2x32x32xbf16, #tpu.memory_space<vmem>>, %arg14: memref<2x32x64xbf16, #tpu.memory_space<vmem>>, %arg15: memref<2x32x32xbf16, #tpu.memory_space<vmem>>, %arg16: memref<2x32x128xbf16, #tpu.memory_space<vmem>>, %arg17: memref<2x128x32xbf16, #tpu.memory_space<vmem>>, %arg18: memref<2x13x128xf32, #tpu.memory_space<vmem>>, %arg19: memref<1x8x32xf32, #tpu.memory_space<vmem>>) attributes {dimension_semantics = [#tpu.dimension_semantics<parallel>], iteration_bounds = array<i64: 2>, scalar_prefetch = 0 : i64, scratch_operands = 0 : i64, tpu.core_type = #tpu.core_type<tc>, window_params = [{transform_indices = @transform_0, window_bounds = array<i64: 1, 8, 16>}, {transform_indices = @transform_1, window_bounds = array<i64: 1, 8, 8>}, {pipeline_mode = #tpu.pipeline_mode<synchronous>, transform_indices = @transform_2, window_bounds = array<i64: 16, 32>}, {pipeline_mode = #tpu.pipeline_mode<synchronous>, transform_indices = @transform_3, window_bounds = array<i64: 8, 32>}, {pipeline_mode = #tpu.pipeline_mode<synchronous>, transform_indices = @transform_4, window_bounds = array<i64: 4, 32>}, {pipeline_mode = #tpu.pipeline_mode<synchronous>, transform_indices = @transform_5, window_bounds = array<i64: 2, 32, 96>}, {pipeline_mode = #tpu.pipeline_mode<synchronous>, transform_indices = @transform_6, window_bounds = array<i64: 2, 32, 32>}, {pipeline_mode = #tpu.pipeline_mode<synchronous>, transform_indices = @transform_7, window_bounds = array<i64: 2, 32, 128>}, {pipeline_mode = #tpu.pipeline_mode<synchronous>, transform_indices = @transform_8, window_bounds = array<i64: 2, 128, 32>}, {pipeline_mode = #tpu.pipeline_mode<synchronous>, transform_indices = @transform_9, window_bounds = array<i64: 2, 8, 128>}, {pipeline_mode = #tpu.pipeline_mode<synchronous>, transform_indices = @transform_10, window_bounds = array<i64: 2, 32, 96>}, {pipeline_mode = #tpu.pipeline_mode<synchronous>, transform_indices = @transform_11, window_bounds = array<i64: 2, 32, 32>}, {pipeline_mode = #tpu.pipeline_mode<synchronous>, transform_indices = @transform_12, window_bounds = array<i64: 2, 32, 32>}, {pipeline_mode = #tpu.pipeline_mode<synchronous>, transform_indices = @transform_13, window_bounds = array<i64: 2, 32, 64>}, {pipeline_mode = #tpu.pipeline_mode<synchronous>, transform_indices = @transform_14, window_bounds = array<i64: 2, 32, 32>}, {pipeline_mode = #tpu.pipeline_mode<synchronous>, transform_indices = @transform_15, window_bounds = array<i64: 2, 32, 128>}, {pipeline_mode = #tpu.pipeline_mode<synchronous>, transform_indices = @transform_16, window_bounds = array<i64: 2, 128, 32>}, {pipeline_mode = #tpu.pipeline_mode<synchronous>, transform_indices = @transform_17, window_bounds = array<i64: 2, 13, 128>}, {transform_indices = @transform_18, window_bounds = array<i64: 1, 8, 32>}]} {
    %c0 = arith.constant 0 : index
    %c0_0 = arith.constant 0 : index
    %0 = vector.load %arg5[%c0, %c0_0] : memref<4x32xf32, #tpu.memory_space<vmem>>, vector<4x32xf32>
    %c0_1 = arith.constant 0 : index
    %c0_2 = arith.constant 0 : index
    %c0_3 = arith.constant 0 : index
    %1 = vector.load %arg1[%c0_1, %c0_2, %c0_3] : memref<1x8x16xf32, #tpu.memory_space<vmem>>, vector<1x8x16xf32>
    %2 = vector.shape_cast %1 : vector<1x8x16xf32> to vector<8x16xf32>
    %c0_4 = arith.constant 0 : index
    %c0_5 = arith.constant 0 : index
    %3 = vector.load %arg3[%c0_4, %c0_5] : memref<16x32xbf16, #tpu.memory_space<vmem>>, vector<16x32xbf16>
    %4 = vector.extract_strided_slice %0 {offsets = [0, 0], sizes = [1, 32], strides = [1, 1]} : vector<4x32xf32> to vector<1x32xf32>
    %5 = vector.shape_cast %4 : vector<1x32xf32> to vector<32xf32>
    %6 = arith.truncf %2 : vector<8x16xf32> to vector<8x16xbf16>
    %cst = arith.constant dense<0.000000e+00> : vector<8x32xf32>
    %7 = tpu.matmul %6, %3, %cst {dimension_numbers = #tpu.dot_dimension_numbers<[1], [0], [0], [1], [0, 0, 1, 1], [], []>} : vector<8x16xbf16>, vector<16x32xbf16>, vector<8x32xf32> -> vector<8x32xf32>
    %8 = vector.shape_cast %5 : vector<32xf32> to vector<1x32xf32>
    %9 = vector.broadcast %8 : vector<1x32xf32> to vector<8x32xf32>
    %10 = arith.addf %7, %9 : vector<8x32xf32>
    %c0_6 = arith.constant 0 : index
    %c0_7 = arith.constant 0 : index
    %c0_8 = arith.constant 0 : index
    %11 = vector.load %arg6[%c0_6, %c0_7, %c0_8] : memref<2x32x96xbf16, #tpu.memory_space<vmem>>, vector<1x32x96xbf16>
    %12 = vector.shape_cast %11 : vector<1x32x96xbf16> to vector<32x96xbf16>
    %c0_9 = arith.constant 0 : index
    %c0_10 = arith.constant 0 : index
    %c0_11 = arith.constant 0 : index
    %13 = vector.load %arg7[%c0_9, %c0_10, %c0_11] : memref<2x32x32xbf16, #tpu.memory_space<vmem>>, vector<1x32x32xbf16>
    %14 = vector.shape_cast %13 : vector<1x32x32xbf16> to vector<32x32xbf16>
    %c0_12 = arith.constant 0 : index
    %c0_13 = arith.constant 0 : index
    %c0_14 = arith.constant 0 : index
    %15 = vector.load %arg8[%c0_12, %c0_13, %c0_14] : memref<2x32x128xbf16, #tpu.memory_space<vmem>>, vector<1x32x128xbf16>
    %16 = vector.shape_cast %15 : vector<1x32x128xbf16> to vector<32x128xbf16>
    %c0_15 = arith.constant 0 : index
    %c0_16 = arith.constant 0 : index
    %c0_17 = arith.constant 0 : index
    %17 = vector.load %arg9[%c0_15, %c0_16, %c0_17] : memref<2x128x32xbf16, #tpu.memory_space<vmem>>, vector<1x128x32xbf16>
    %18 = vector.shape_cast %17 : vector<1x128x32xbf16> to vector<128x32xbf16>
    %c0_18 = arith.constant 0 : index
    %c0_19 = arith.constant 0 : index
    %c0_20 = arith.constant 0 : index
    %19 = vector.load %arg10[%c0_18, %c0_19, %c0_20] : memref<2x8x128xf32, #tpu.memory_space<vmem>>, vector<1x8x128xf32>
    %20 = vector.shape_cast %19 : vector<1x8x128xf32> to vector<8x128xf32>
    %21 = vector.extract_strided_slice %20 {offsets = [0, 0], sizes = [1, 32], strides = [1, 1]} : vector<8x128xf32> to vector<1x32xf32>
    %22 = vector.shape_cast %21 : vector<1x32xf32> to vector<32xf32>
    %23 = vector.extract_strided_slice %20 {offsets = [1, 0], sizes = [1, 32], strides = [1, 1]} : vector<8x128xf32> to vector<1x32xf32>
    %24 = vector.shape_cast %23 : vector<1x32xf32> to vector<32xf32>
    %25 = vector.extract_strided_slice %20 {offsets = [2, 0], sizes = [1, 96], strides = [1, 1]} : vector<8x128xf32> to vector<1x96xf32>
    %26 = vector.shape_cast %25 : vector<1x96xf32> to vector<96xf32>
    %27 = vector.extract_strided_slice %20 {offsets = [3, 0], sizes = [1, 32], strides = [1, 1]} : vector<8x128xf32> to vector<1x32xf32>
    %28 = vector.shape_cast %27 : vector<1x32xf32> to vector<32xf32>
    %29 = vector.extract_strided_slice %20 {offsets = [4, 0], sizes = [1, 32], strides = [1, 1]} : vector<8x128xf32> to vector<1x32xf32>
    %30 = vector.shape_cast %29 : vector<1x32xf32> to vector<32xf32>
    %31 = vector.extract_strided_slice %20 {offsets = [5, 0], sizes = [1, 32], strides = [1, 1]} : vector<8x128xf32> to vector<1x32xf32>
    %32 = vector.shape_cast %31 : vector<1x32xf32> to vector<32xf32>
    %33 = vector.extract_strided_slice %20 {offsets = [6, 0], sizes = [1, 128], strides = [1, 1]} : vector<8x128xf32> to vector<1x128xf32>
    %34 = vector.shape_cast %33 : vector<1x128xf32> to vector<128xf32>
    %35 = vector.extract_strided_slice %20 {offsets = [7, 0], sizes = [1, 32], strides = [1, 1]} : vector<8x128xf32> to vector<1x32xf32>
    %36 = vector.shape_cast %35 : vector<1x32xf32> to vector<32xf32>
    %cst_21 = arith.constant dense<0.000000e+00> : vector<8xf32>
    %37 = vector.multi_reduction <add>, %10, %cst_21 [1] : vector<8x32xf32> to vector<8xf32>
    %38 = vector.shape_cast %37 : vector<8xf32> to vector<8x1xf32>
    %cst_22 = arith.constant 3.200000e+01 : f32
    %39 = vector.broadcast %cst_22 : f32 to vector<8x1xf32>
    %40 = arith.divf %38, %39 : vector<8x1xf32>
    %41 = vector.broadcast %40 : vector<8x1xf32> to vector<8x32xf32>
    %42 = arith.subf %10, %41 : vector<8x32xf32>
    %43 = arith.mulf %42, %42 : vector<8x32xf32>
    %cst_23 = arith.constant dense<0.000000e+00> : vector<8xf32>
    %44 = vector.multi_reduction <add>, %43, %cst_23 [1] : vector<8x32xf32> to vector<8xf32>
    %45 = vector.shape_cast %44 : vector<8xf32> to vector<8x1xf32>
    %cst_24 = arith.constant 3.200000e+01 : f32
    %46 = vector.broadcast %cst_24 : f32 to vector<8x1xf32>
    %47 = arith.divf %45, %46 : vector<8x1xf32>
    %cst_25 = arith.constant 9.99999974E-6 : f32
    %48 = vector.broadcast %cst_25 : f32 to vector<8x1xf32>
    %49 = arith.addf %47, %48 : vector<8x1xf32>
    %50 = math.rsqrt %49 : vector<8x1xf32>
    %51 = vector.broadcast %50 : vector<8x1xf32> to vector<8x32xf32>
    %52 = arith.mulf %42, %51 : vector<8x32xf32>
    %53 = vector.shape_cast %22 : vector<32xf32> to vector<1x32xf32>
    %54 = vector.broadcast %53 : vector<1x32xf32> to vector<8x32xf32>
    %55 = arith.mulf %52, %54 : vector<8x32xf32>
    %56 = vector.shape_cast %24 : vector<32xf32> to vector<1x32xf32>
    %57 = vector.broadcast %56 : vector<1x32xf32> to vector<8x32xf32>
    %58 = arith.addf %55, %57 : vector<8x32xf32>
    %59 = arith.truncf %58 : vector<8x32xf32> to vector<8x32xbf16>
    %cst_26 = arith.constant dense<0.000000e+00> : vector<8x96xf32>
    %60 = tpu.matmul %59, %12, %cst_26 {dimension_numbers = #tpu.dot_dimension_numbers<[1], [0], [0], [1], [0, 0, 1, 1], [], []>} : vector<8x32xbf16>, vector<32x96xbf16>, vector<8x96xf32> -> vector<8x96xf32>
    %61 = vector.shape_cast %26 : vector<96xf32> to vector<1x96xf32>
    %62 = vector.broadcast %61 : vector<1x96xf32> to vector<8x96xf32>
    %63 = arith.addf %60, %62 : vector<8x96xf32>
    %64 = vector.extract_strided_slice %63 {offsets = [0, 0], sizes = [8, 32], strides = [1, 1]} : vector<8x96xf32> to vector<8x32xf32>
    %65 = vector.extract_strided_slice %63 {offsets = [0, 32], sizes = [8, 32], strides = [1, 1]} : vector<8x96xf32> to vector<8x32xf32>
    %66 = vector.extract_strided_slice %63 {offsets = [0, 64], sizes = [8, 32], strides = [1, 1]} : vector<8x96xf32> to vector<8x32xf32>
    %cst_27 = arith.constant 0.000000e+00 : f32
    %67 = vector.broadcast %cst_27 : f32 to vector<8x32xf32>
    %68 = vector.extract_strided_slice %64 {offsets = [0, 0], sizes = [8, 8], strides = [1, 1]} : vector<8x32xf32> to vector<8x8xf32>
    %cst_28 = arith.constant 0.353553385 : f32
    %69 = vector.broadcast %cst_28 : f32 to vector<8x8xf32>
    %70 = arith.mulf %68, %69 : vector<8x8xf32>
    %71 = arith.truncf %70 : vector<8x8xf32> to vector<8x8xbf16>
    %72 = vector.extract_strided_slice %65 {offsets = [0, 0], sizes = [8, 8], strides = [1, 1]} : vector<8x32xf32> to vector<8x8xf32>
    %73 = arith.truncf %72 : vector<8x8xf32> to vector<8x8xbf16>
    %74 = vector.extract_strided_slice %66 {offsets = [0, 0], sizes = [8, 8], strides = [1, 1]} : vector<8x32xf32> to vector<8x8xf32>
    %75 = arith.truncf %74 : vector<8x8xf32> to vector<8x8xbf16>
    %cst_29 = arith.constant dense<0.000000e+00> : vector<8x8xf32>
    %76 = tpu.matmul %71, %73, %cst_29 {dimension_numbers = #tpu.dot_dimension_numbers<[1], [1], [0], [0], [0, 0, 1, 0], [], []>} : vector<8x8xbf16>, vector<8x8xbf16>, vector<8x8xf32> -> vector<8x8xf32>
    %cst_30 = arith.constant dense<0xFF800000> : vector<8xf32>
    %77 = vector.multi_reduction <maximumf>, %76, %cst_30 [1] : vector<8x8xf32> to vector<8xf32>
    %78 = vector.shape_cast %77 : vector<8xf32> to vector<8x1xf32>
    %79 = vector.broadcast %78 : vector<8x1xf32> to vector<8x8xf32>
    %80 = arith.subf %76, %79 : vector<8x8xf32>
    %81 = math.exp %80 : vector<8x8xf32>
    %cst_31 = arith.constant dense<0.000000e+00> : vector<8xf32>
    %82 = vector.multi_reduction <add>, %81, %cst_31 [1] : vector<8x8xf32> to vector<8xf32>
    %83 = vector.shape_cast %82 : vector<8xf32> to vector<8x1xf32>
    %84 = tpu.reciprocal %83 {approx = true} : vector<8x1xf32> -> vector<8x1xf32>
    %85 = vector.broadcast %84 : vector<8x1xf32> to vector<8x8xf32>
    %86 = arith.mulf %81, %85 : vector<8x8xf32>
    %87 = arith.truncf %86 : vector<8x8xf32> to vector<8x8xbf16>
    %cst_32 = arith.constant dense<0.000000e+00> : vector<8x8xf32>
    %88 = tpu.matmul %87, %75, %cst_32 {dimension_numbers = #tpu.dot_dimension_numbers<[1], [0], [0], [1], [0, 0, 1, 1], [], []>} : vector<8x8xbf16>, vector<8x8xbf16>, vector<8x8xf32> -> vector<8x8xf32>
    %89 = arith.truncf %88 : vector<8x8xf32> to vector<8x8xbf16>
    %90 = vector.extract_strided_slice %14 {offsets = [0, 0], sizes = [8, 32], strides = [1, 1]} : vector<32x32xbf16> to vector<8x32xbf16>
    %cst_33 = arith.constant dense<0.000000e+00> : vector<8x32xf32>
    %91 = tpu.matmul %89, %90, %cst_33 {dimension_numbers = #tpu.dot_dimension_numbers<[1], [0], [0], [1], [0, 0, 1, 1], [], []>} : vector<8x8xbf16>, vector<8x32xbf16>, vector<8x32xf32> -> vector<8x32xf32>
    %92 = arith.addf %67, %91 : vector<8x32xf32>
    %93 = vector.extract_strided_slice %64 {offsets = [0, 8], sizes = [8, 8], strides = [1, 1]} : vector<8x32xf32> to vector<8x8xf32>
    %cst_34 = arith.constant 0.353553385 : f32
    %94 = vector.broadcast %cst_34 : f32 to vector<8x8xf32>
    %95 = arith.mulf %93, %94 : vector<8x8xf32>
    %96 = arith.truncf %95 : vector<8x8xf32> to vector<8x8xbf16>
    %97 = vector.extract_strided_slice %65 {offsets = [0, 8], sizes = [8, 8], strides = [1, 1]} : vector<8x32xf32> to vector<8x8xf32>
    %98 = arith.truncf %97 : vector<8x8xf32> to vector<8x8xbf16>
    %99 = vector.extract_strided_slice %66 {offsets = [0, 8], sizes = [8, 8], strides = [1, 1]} : vector<8x32xf32> to vector<8x8xf32>
    %100 = arith.truncf %99 : vector<8x8xf32> to vector<8x8xbf16>
    %cst_35 = arith.constant dense<0.000000e+00> : vector<8x8xf32>
    %101 = tpu.matmul %96, %98, %cst_35 {dimension_numbers = #tpu.dot_dimension_numbers<[1], [1], [0], [0], [0, 0, 1, 0], [], []>} : vector<8x8xbf16>, vector<8x8xbf16>, vector<8x8xf32> -> vector<8x8xf32>
    %cst_36 = arith.constant dense<0xFF800000> : vector<8xf32>
    %102 = vector.multi_reduction <maximumf>, %101, %cst_36 [1] : vector<8x8xf32> to vector<8xf32>
    %103 = vector.shape_cast %102 : vector<8xf32> to vector<8x1xf32>
    %104 = vector.broadcast %103 : vector<8x1xf32> to vector<8x8xf32>
    %105 = arith.subf %101, %104 : vector<8x8xf32>
    %106 = math.exp %105 : vector<8x8xf32>
    %cst_37 = arith.constant dense<0.000000e+00> : vector<8xf32>
    %107 = vector.multi_reduction <add>, %106, %cst_37 [1] : vector<8x8xf32> to vector<8xf32>
    %108 = vector.shape_cast %107 : vector<8xf32> to vector<8x1xf32>
    %109 = tpu.reciprocal %108 {approx = true} : vector<8x1xf32> -> vector<8x1xf32>
    %110 = vector.broadcast %109 : vector<8x1xf32> to vector<8x8xf32>
    %111 = arith.mulf %106, %110 : vector<8x8xf32>
    %112 = arith.truncf %111 : vector<8x8xf32> to vector<8x8xbf16>
    %cst_38 = arith.constant dense<0.000000e+00> : vector<8x8xf32>
    %113 = tpu.matmul %112, %100, %cst_38 {dimension_numbers = #tpu.dot_dimension_numbers<[1], [0], [0], [1], [0, 0, 1, 1], [], []>} : vector<8x8xbf16>, vector<8x8xbf16>, vector<8x8xf32> -> vector<8x8xf32>
    %114 = arith.truncf %113 : vector<8x8xf32> to vector<8x8xbf16>
    %115 = vector.extract_strided_slice %14 {offsets = [8, 0], sizes = [8, 32], strides = [1, 1]} : vector<32x32xbf16> to vector<8x32xbf16>
    %cst_39 = arith.constant dense<0.000000e+00> : vector<8x32xf32>
    %116 = tpu.matmul %114, %115, %cst_39 {dimension_numbers = #tpu.dot_dimension_numbers<[1], [0], [0], [1], [0, 0, 1, 1], [], []>} : vector<8x8xbf16>, vector<8x32xbf16>, vector<8x32xf32> -> vector<8x32xf32>
    %117 = arith.addf %92, %116 : vector<8x32xf32>
    %118 = vector.extract_strided_slice %64 {offsets = [0, 16], sizes = [8, 8], strides = [1, 1]} : vector<8x32xf32> to vector<8x8xf32>
    %cst_40 = arith.constant 0.353553385 : f32
    %119 = vector.broadcast %cst_40 : f32 to vector<8x8xf32>
    %120 = arith.mulf %118, %119 : vector<8x8xf32>
    %121 = arith.truncf %120 : vector<8x8xf32> to vector<8x8xbf16>
    %122 = vector.extract_strided_slice %65 {offsets = [0, 16], sizes = [8, 8], strides = [1, 1]} : vector<8x32xf32> to vector<8x8xf32>
    %123 = arith.truncf %122 : vector<8x8xf32> to vector<8x8xbf16>
    %124 = vector.extract_strided_slice %66 {offsets = [0, 16], sizes = [8, 8], strides = [1, 1]} : vector<8x32xf32> to vector<8x8xf32>
    %125 = arith.truncf %124 : vector<8x8xf32> to vector<8x8xbf16>
    %cst_41 = arith.constant dense<0.000000e+00> : vector<8x8xf32>
    %126 = tpu.matmul %121, %123, %cst_41 {dimension_numbers = #tpu.dot_dimension_numbers<[1], [1], [0], [0], [0, 0, 1, 0], [], []>} : vector<8x8xbf16>, vector<8x8xbf16>, vector<8x8xf32> -> vector<8x8xf32>
    %cst_42 = arith.constant dense<0xFF800000> : vector<8xf32>
    %127 = vector.multi_reduction <maximumf>, %126, %cst_42 [1] : vector<8x8xf32> to vector<8xf32>
    %128 = vector.shape_cast %127 : vector<8xf32> to vector<8x1xf32>
    %129 = vector.broadcast %128 : vector<8x1xf32> to vector<8x8xf32>
    %130 = arith.subf %126, %129 : vector<8x8xf32>
    %131 = math.exp %130 : vector<8x8xf32>
    %cst_43 = arith.constant dense<0.000000e+00> : vector<8xf32>
    %132 = vector.multi_reduction <add>, %131, %cst_43 [1] : vector<8x8xf32> to vector<8xf32>
    %133 = vector.shape_cast %132 : vector<8xf32> to vector<8x1xf32>
    %134 = tpu.reciprocal %133 {approx = true} : vector<8x1xf32> -> vector<8x1xf32>
    %135 = vector.broadcast %134 : vector<8x1xf32> to vector<8x8xf32>
    %136 = arith.mulf %131, %135 : vector<8x8xf32>
    %137 = arith.truncf %136 : vector<8x8xf32> to vector<8x8xbf16>
    %cst_44 = arith.constant dense<0.000000e+00> : vector<8x8xf32>
    %138 = tpu.matmul %137, %125, %cst_44 {dimension_numbers = #tpu.dot_dimension_numbers<[1], [0], [0], [1], [0, 0, 1, 1], [], []>} : vector<8x8xbf16>, vector<8x8xbf16>, vector<8x8xf32> -> vector<8x8xf32>
    %139 = arith.truncf %138 : vector<8x8xf32> to vector<8x8xbf16>
    %140 = vector.extract_strided_slice %14 {offsets = [16, 0], sizes = [8, 32], strides = [1, 1]} : vector<32x32xbf16> to vector<8x32xbf16>
    %cst_45 = arith.constant dense<0.000000e+00> : vector<8x32xf32>
    %141 = tpu.matmul %139, %140, %cst_45 {dimension_numbers = #tpu.dot_dimension_numbers<[1], [0], [0], [1], [0, 0, 1, 1], [], []>} : vector<8x8xbf16>, vector<8x32xbf16>, vector<8x32xf32> -> vector<8x32xf32>
    %142 = arith.addf %117, %141 : vector<8x32xf32>
    %143 = vector.extract_strided_slice %64 {offsets = [0, 24], sizes = [8, 8], strides = [1, 1]} : vector<8x32xf32> to vector<8x8xf32>
    %cst_46 = arith.constant 0.353553385 : f32
    %144 = vector.broadcast %cst_46 : f32 to vector<8x8xf32>
    %145 = arith.mulf %143, %144 : vector<8x8xf32>
    %146 = arith.truncf %145 : vector<8x8xf32> to vector<8x8xbf16>
    %147 = vector.extract_strided_slice %65 {offsets = [0, 24], sizes = [8, 8], strides = [1, 1]} : vector<8x32xf32> to vector<8x8xf32>
    %148 = arith.truncf %147 : vector<8x8xf32> to vector<8x8xbf16>
    %149 = vector.extract_strided_slice %66 {offsets = [0, 24], sizes = [8, 8], strides = [1, 1]} : vector<8x32xf32> to vector<8x8xf32>
    %150 = arith.truncf %149 : vector<8x8xf32> to vector<8x8xbf16>
    %cst_47 = arith.constant dense<0.000000e+00> : vector<8x8xf32>
    %151 = tpu.matmul %146, %148, %cst_47 {dimension_numbers = #tpu.dot_dimension_numbers<[1], [1], [0], [0], [0, 0, 1, 0], [], []>} : vector<8x8xbf16>, vector<8x8xbf16>, vector<8x8xf32> -> vector<8x8xf32>
    %cst_48 = arith.constant dense<0xFF800000> : vector<8xf32>
    %152 = vector.multi_reduction <maximumf>, %151, %cst_48 [1] : vector<8x8xf32> to vector<8xf32>
    %153 = vector.shape_cast %152 : vector<8xf32> to vector<8x1xf32>
    %154 = vector.broadcast %153 : vector<8x1xf32> to vector<8x8xf32>
    %155 = arith.subf %151, %154 : vector<8x8xf32>
    %156 = math.exp %155 : vector<8x8xf32>
    %cst_49 = arith.constant dense<0.000000e+00> : vector<8xf32>
    %157 = vector.multi_reduction <add>, %156, %cst_49 [1] : vector<8x8xf32> to vector<8xf32>
    %158 = vector.shape_cast %157 : vector<8xf32> to vector<8x1xf32>
    %159 = tpu.reciprocal %158 {approx = true} : vector<8x1xf32> -> vector<8x1xf32>
    %160 = vector.broadcast %159 : vector<8x1xf32> to vector<8x8xf32>
    %161 = arith.mulf %156, %160 : vector<8x8xf32>
    %162 = arith.truncf %161 : vector<8x8xf32> to vector<8x8xbf16>
    %cst_50 = arith.constant dense<0.000000e+00> : vector<8x8xf32>
    %163 = tpu.matmul %162, %150, %cst_50 {dimension_numbers = #tpu.dot_dimension_numbers<[1], [0], [0], [1], [0, 0, 1, 1], [], []>} : vector<8x8xbf16>, vector<8x8xbf16>, vector<8x8xf32> -> vector<8x8xf32>
    %164 = arith.truncf %163 : vector<8x8xf32> to vector<8x8xbf16>
    %165 = vector.extract_strided_slice %14 {offsets = [24, 0], sizes = [8, 32], strides = [1, 1]} : vector<32x32xbf16> to vector<8x32xbf16>
    %cst_51 = arith.constant dense<0.000000e+00> : vector<8x32xf32>
    %166 = tpu.matmul %164, %165, %cst_51 {dimension_numbers = #tpu.dot_dimension_numbers<[1], [0], [0], [1], [0, 0, 1, 1], [], []>} : vector<8x8xbf16>, vector<8x32xbf16>, vector<8x32xf32> -> vector<8x32xf32>
    %167 = arith.addf %142, %166 : vector<8x32xf32>
    %168 = arith.addf %10, %167 : vector<8x32xf32>
    %169 = vector.shape_cast %28 : vector<32xf32> to vector<1x32xf32>
    %170 = vector.broadcast %169 : vector<1x32xf32> to vector<8x32xf32>
    %171 = arith.addf %168, %170 : vector<8x32xf32>
    %cst_52 = arith.constant dense<0.000000e+00> : vector<8xf32>
    %172 = vector.multi_reduction <add>, %171, %cst_52 [1] : vector<8x32xf32> to vector<8xf32>
    %173 = vector.shape_cast %172 : vector<8xf32> to vector<8x1xf32>
    %cst_53 = arith.constant 3.200000e+01 : f32
    %174 = vector.broadcast %cst_53 : f32 to vector<8x1xf32>
    %175 = arith.divf %173, %174 : vector<8x1xf32>
    %176 = vector.broadcast %175 : vector<8x1xf32> to vector<8x32xf32>
    %177 = arith.subf %171, %176 : vector<8x32xf32>
    %178 = arith.mulf %177, %177 : vector<8x32xf32>
    %cst_54 = arith.constant dense<0.000000e+00> : vector<8xf32>
    %179 = vector.multi_reduction <add>, %178, %cst_54 [1] : vector<8x32xf32> to vector<8xf32>
    %180 = vector.shape_cast %179 : vector<8xf32> to vector<8x1xf32>
    %cst_55 = arith.constant 3.200000e+01 : f32
    %181 = vector.broadcast %cst_55 : f32 to vector<8x1xf32>
    %182 = arith.divf %180, %181 : vector<8x1xf32>
    %cst_56 = arith.constant 9.99999974E-6 : f32
    %183 = vector.broadcast %cst_56 : f32 to vector<8x1xf32>
    %184 = arith.addf %182, %183 : vector<8x1xf32>
    %185 = math.rsqrt %184 : vector<8x1xf32>
    %186 = vector.broadcast %185 : vector<8x1xf32> to vector<8x32xf32>
    %187 = arith.mulf %177, %186 : vector<8x32xf32>
    %188 = vector.shape_cast %30 : vector<32xf32> to vector<1x32xf32>
    %189 = vector.broadcast %188 : vector<1x32xf32> to vector<8x32xf32>
    %190 = arith.mulf %187, %189 : vector<8x32xf32>
    %191 = vector.shape_cast %32 : vector<32xf32> to vector<1x32xf32>
    %192 = vector.broadcast %191 : vector<1x32xf32> to vector<8x32xf32>
    %193 = arith.addf %190, %192 : vector<8x32xf32>
    %194 = arith.truncf %193 : vector<8x32xf32> to vector<8x32xbf16>
    %cst_57 = arith.constant dense<0.000000e+00> : vector<8x128xf32>
    %195 = tpu.matmul %194, %16, %cst_57 {dimension_numbers = #tpu.dot_dimension_numbers<[1], [0], [0], [1], [0, 0, 1, 1], [], []>} : vector<8x32xbf16>, vector<32x128xbf16>, vector<8x128xf32> -> vector<8x128xf32>
    %196 = vector.shape_cast %34 : vector<128xf32> to vector<1x128xf32>
    %197 = vector.broadcast %196 : vector<1x128xf32> to vector<8x128xf32>
    %198 = arith.addf %195, %197 : vector<8x128xf32>
    %cst_58 = arith.constant 5.000000e-01 : f32
    %199 = vector.broadcast %cst_58 : f32 to vector<8x128xf32>
    %200 = arith.mulf %199, %198 : vector<8x128xf32>
    %cst_59 = arith.constant 4.471500e-02 : f32
    %201 = vector.broadcast %cst_59 : f32 to vector<8x128xf32>
    %202 = arith.mulf %201, %198 : vector<8x128xf32>
    %203 = arith.mulf %202, %198 : vector<8x128xf32>
    %204 = arith.mulf %203, %198 : vector<8x128xf32>
    %205 = arith.addf %198, %204 : vector<8x128xf32>
    %cst_60 = arith.constant 0.797884583 : f32
    %206 = vector.broadcast %cst_60 : f32 to vector<8x128xf32>
    %207 = arith.mulf %206, %205 : vector<8x128xf32>
    %208 = math.tanh %207 : vector<8x128xf32>
    %cst_61 = arith.constant 1.000000e+00 : f32
    %209 = vector.broadcast %cst_61 : f32 to vector<8x128xf32>
    %210 = arith.addf %209, %208 : vector<8x128xf32>
    %211 = arith.mulf %200, %210 : vector<8x128xf32>
    %212 = arith.truncf %211 : vector<8x128xf32> to vector<8x128xbf16>
    %cst_62 = arith.constant dense<0.000000e+00> : vector<8x32xf32>
    %213 = tpu.matmul %212, %18, %cst_62 {dimension_numbers = #tpu.dot_dimension_numbers<[1], [0], [0], [1], [0, 0, 1, 1], [], []>} : vector<8x128xbf16>, vector<128x32xbf16>, vector<8x32xf32> -> vector<8x32xf32>
    %214 = vector.shape_cast %36 : vector<32xf32> to vector<1x32xf32>
    %215 = vector.broadcast %214 : vector<1x32xf32> to vector<8x32xf32>
    %216 = arith.addf %213, %215 : vector<8x32xf32>
    %217 = arith.addf %171, %216 : vector<8x32xf32>
    %c1 = arith.constant 1 : index
    %c0_63 = arith.constant 0 : index
    %c0_64 = arith.constant 0 : index
    %218 = vector.load %arg6[%c1, %c0_63, %c0_64] : memref<2x32x96xbf16, #tpu.memory_space<vmem>>, vector<1x32x96xbf16>
    %219 = vector.shape_cast %218 : vector<1x32x96xbf16> to vector<32x96xbf16>
    %c1_65 = arith.constant 1 : index
    %c0_66 = arith.constant 0 : index
    %c0_67 = arith.constant 0 : index
    %220 = vector.load %arg7[%c1_65, %c0_66, %c0_67] : memref<2x32x32xbf16, #tpu.memory_space<vmem>>, vector<1x32x32xbf16>
    %221 = vector.shape_cast %220 : vector<1x32x32xbf16> to vector<32x32xbf16>
    %c1_68 = arith.constant 1 : index
    %c0_69 = arith.constant 0 : index
    %c0_70 = arith.constant 0 : index
    %222 = vector.load %arg8[%c1_68, %c0_69, %c0_70] : memref<2x32x128xbf16, #tpu.memory_space<vmem>>, vector<1x32x128xbf16>
    %223 = vector.shape_cast %222 : vector<1x32x128xbf16> to vector<32x128xbf16>
    %c1_71 = arith.constant 1 : index
    %c0_72 = arith.constant 0 : index
    %c0_73 = arith.constant 0 : index
    %224 = vector.load %arg9[%c1_71, %c0_72, %c0_73] : memref<2x128x32xbf16, #tpu.memory_space<vmem>>, vector<1x128x32xbf16>
    %225 = vector.shape_cast %224 : vector<1x128x32xbf16> to vector<128x32xbf16>
    %c1_74 = arith.constant 1 : index
    %c0_75 = arith.constant 0 : index
    %c0_76 = arith.constant 0 : index
    %226 = vector.load %arg10[%c1_74, %c0_75, %c0_76] : memref<2x8x128xf32, #tpu.memory_space<vmem>>, vector<1x8x128xf32>
    %227 = vector.shape_cast %226 : vector<1x8x128xf32> to vector<8x128xf32>
    %228 = vector.extract_strided_slice %227 {offsets = [0, 0], sizes = [1, 32], strides = [1, 1]} : vector<8x128xf32> to vector<1x32xf32>
    %229 = vector.shape_cast %228 : vector<1x32xf32> to vector<32xf32>
    %230 = vector.extract_strided_slice %227 {offsets = [1, 0], sizes = [1, 32], strides = [1, 1]} : vector<8x128xf32> to vector<1x32xf32>
    %231 = vector.shape_cast %230 : vector<1x32xf32> to vector<32xf32>
    %232 = vector.extract_strided_slice %227 {offsets = [2, 0], sizes = [1, 96], strides = [1, 1]} : vector<8x128xf32> to vector<1x96xf32>
    %233 = vector.shape_cast %232 : vector<1x96xf32> to vector<96xf32>
    %234 = vector.extract_strided_slice %227 {offsets = [3, 0], sizes = [1, 32], strides = [1, 1]} : vector<8x128xf32> to vector<1x32xf32>
    %235 = vector.shape_cast %234 : vector<1x32xf32> to vector<32xf32>
    %236 = vector.extract_strided_slice %227 {offsets = [4, 0], sizes = [1, 32], strides = [1, 1]} : vector<8x128xf32> to vector<1x32xf32>
    %237 = vector.shape_cast %236 : vector<1x32xf32> to vector<32xf32>
    %238 = vector.extract_strided_slice %227 {offsets = [5, 0], sizes = [1, 32], strides = [1, 1]} : vector<8x128xf32> to vector<1x32xf32>
    %239 = vector.shape_cast %238 : vector<1x32xf32> to vector<32xf32>
    %240 = vector.extract_strided_slice %227 {offsets = [6, 0], sizes = [1, 128], strides = [1, 1]} : vector<8x128xf32> to vector<1x128xf32>
    %241 = vector.shape_cast %240 : vector<1x128xf32> to vector<128xf32>
    %242 = vector.extract_strided_slice %227 {offsets = [7, 0], sizes = [1, 32], strides = [1, 1]} : vector<8x128xf32> to vector<1x32xf32>
    %243 = vector.shape_cast %242 : vector<1x32xf32> to vector<32xf32>
    %cst_77 = arith.constant dense<0.000000e+00> : vector<8xf32>
    %244 = vector.multi_reduction <add>, %217, %cst_77 [1] : vector<8x32xf32> to vector<8xf32>
    %245 = vector.shape_cast %244 : vector<8xf32> to vector<8x1xf32>
    %cst_78 = arith.constant 3.200000e+01 : f32
    %246 = vector.broadcast %cst_78 : f32 to vector<8x1xf32>
    %247 = arith.divf %245, %246 : vector<8x1xf32>
    %248 = vector.broadcast %247 : vector<8x1xf32> to vector<8x32xf32>
    %249 = arith.subf %217, %248 : vector<8x32xf32>
    %250 = arith.mulf %249, %249 : vector<8x32xf32>
    %cst_79 = arith.constant dense<0.000000e+00> : vector<8xf32>
    %251 = vector.multi_reduction <add>, %250, %cst_79 [1] : vector<8x32xf32> to vector<8xf32>
    %252 = vector.shape_cast %251 : vector<8xf32> to vector<8x1xf32>
    %cst_80 = arith.constant 3.200000e+01 : f32
    %253 = vector.broadcast %cst_80 : f32 to vector<8x1xf32>
    %254 = arith.divf %252, %253 : vector<8x1xf32>
    %cst_81 = arith.constant 9.99999974E-6 : f32
    %255 = vector.broadcast %cst_81 : f32 to vector<8x1xf32>
    %256 = arith.addf %254, %255 : vector<8x1xf32>
    %257 = math.rsqrt %256 : vector<8x1xf32>
    %258 = vector.broadcast %257 : vector<8x1xf32> to vector<8x32xf32>
    %259 = arith.mulf %249, %258 : vector<8x32xf32>
    %260 = vector.shape_cast %229 : vector<32xf32> to vector<1x32xf32>
    %261 = vector.broadcast %260 : vector<1x32xf32> to vector<8x32xf32>
    %262 = arith.mulf %259, %261 : vector<8x32xf32>
    %263 = vector.shape_cast %231 : vector<32xf32> to vector<1x32xf32>
    %264 = vector.broadcast %263 : vector<1x32xf32> to vector<8x32xf32>
    %265 = arith.addf %262, %264 : vector<8x32xf32>
    %266 = arith.truncf %265 : vector<8x32xf32> to vector<8x32xbf16>
    %cst_82 = arith.constant dense<0.000000e+00> : vector<8x96xf32>
    %267 = tpu.matmul %266, %219, %cst_82 {dimension_numbers = #tpu.dot_dimension_numbers<[1], [0], [0], [1], [0, 0, 1, 1], [], []>} : vector<8x32xbf16>, vector<32x96xbf16>, vector<8x96xf32> -> vector<8x96xf32>
    %268 = vector.shape_cast %233 : vector<96xf32> to vector<1x96xf32>
    %269 = vector.broadcast %268 : vector<1x96xf32> to vector<8x96xf32>
    %270 = arith.addf %267, %269 : vector<8x96xf32>
    %271 = vector.extract_strided_slice %270 {offsets = [0, 0], sizes = [8, 32], strides = [1, 1]} : vector<8x96xf32> to vector<8x32xf32>
    %272 = vector.extract_strided_slice %270 {offsets = [0, 32], sizes = [8, 32], strides = [1, 1]} : vector<8x96xf32> to vector<8x32xf32>
    %273 = vector.extract_strided_slice %270 {offsets = [0, 64], sizes = [8, 32], strides = [1, 1]} : vector<8x96xf32> to vector<8x32xf32>
    %cst_83 = arith.constant 0.000000e+00 : f32
    %274 = vector.broadcast %cst_83 : f32 to vector<8x32xf32>
    %275 = vector.extract_strided_slice %271 {offsets = [0, 0], sizes = [8, 8], strides = [1, 1]} : vector<8x32xf32> to vector<8x8xf32>
    %cst_84 = arith.constant 0.353553385 : f32
    %276 = vector.broadcast %cst_84 : f32 to vector<8x8xf32>
    %277 = arith.mulf %275, %276 : vector<8x8xf32>
    %278 = arith.truncf %277 : vector<8x8xf32> to vector<8x8xbf16>
    %279 = vector.extract_strided_slice %272 {offsets = [0, 0], sizes = [8, 8], strides = [1, 1]} : vector<8x32xf32> to vector<8x8xf32>
    %280 = arith.truncf %279 : vector<8x8xf32> to vector<8x8xbf16>
    %281 = vector.extract_strided_slice %273 {offsets = [0, 0], sizes = [8, 8], strides = [1, 1]} : vector<8x32xf32> to vector<8x8xf32>
    %282 = arith.truncf %281 : vector<8x8xf32> to vector<8x8xbf16>
    %cst_85 = arith.constant dense<0.000000e+00> : vector<8x8xf32>
    %283 = tpu.matmul %278, %280, %cst_85 {dimension_numbers = #tpu.dot_dimension_numbers<[1], [1], [0], [0], [0, 0, 1, 0], [], []>} : vector<8x8xbf16>, vector<8x8xbf16>, vector<8x8xf32> -> vector<8x8xf32>
    %cst_86 = arith.constant dense<0xFF800000> : vector<8xf32>
    %284 = vector.multi_reduction <maximumf>, %283, %cst_86 [1] : vector<8x8xf32> to vector<8xf32>
    %285 = vector.shape_cast %284 : vector<8xf32> to vector<8x1xf32>
    %286 = vector.broadcast %285 : vector<8x1xf32> to vector<8x8xf32>
    %287 = arith.subf %283, %286 : vector<8x8xf32>
    %288 = math.exp %287 : vector<8x8xf32>
    %cst_87 = arith.constant dense<0.000000e+00> : vector<8xf32>
    %289 = vector.multi_reduction <add>, %288, %cst_87 [1] : vector<8x8xf32> to vector<8xf32>
    %290 = vector.shape_cast %289 : vector<8xf32> to vector<8x1xf32>
    %291 = tpu.reciprocal %290 {approx = true} : vector<8x1xf32> -> vector<8x1xf32>
    %292 = vector.broadcast %291 : vector<8x1xf32> to vector<8x8xf32>
    %293 = arith.mulf %288, %292 : vector<8x8xf32>
    %294 = arith.truncf %293 : vector<8x8xf32> to vector<8x8xbf16>
    %cst_88 = arith.constant dense<0.000000e+00> : vector<8x8xf32>
    %295 = tpu.matmul %294, %282, %cst_88 {dimension_numbers = #tpu.dot_dimension_numbers<[1], [0], [0], [1], [0, 0, 1, 1], [], []>} : vector<8x8xbf16>, vector<8x8xbf16>, vector<8x8xf32> -> vector<8x8xf32>
    %296 = arith.truncf %295 : vector<8x8xf32> to vector<8x8xbf16>
    %297 = vector.extract_strided_slice %221 {offsets = [0, 0], sizes = [8, 32], strides = [1, 1]} : vector<32x32xbf16> to vector<8x32xbf16>
    %cst_89 = arith.constant dense<0.000000e+00> : vector<8x32xf32>
    %298 = tpu.matmul %296, %297, %cst_89 {dimension_numbers = #tpu.dot_dimension_numbers<[1], [0], [0], [1], [0, 0, 1, 1], [], []>} : vector<8x8xbf16>, vector<8x32xbf16>, vector<8x32xf32> -> vector<8x32xf32>
    %299 = arith.addf %274, %298 : vector<8x32xf32>
    %300 = vector.extract_strided_slice %271 {offsets = [0, 8], sizes = [8, 8], strides = [1, 1]} : vector<8x32xf32> to vector<8x8xf32>
    %cst_90 = arith.constant 0.353553385 : f32
    %301 = vector.broadcast %cst_90 : f32 to vector<8x8xf32>
    %302 = arith.mulf %300, %301 : vector<8x8xf32>
    %303 = arith.truncf %302 : vector<8x8xf32> to vector<8x8xbf16>
    %304 = vector.extract_strided_slice %272 {offsets = [0, 8], sizes = [8, 8], strides = [1, 1]} : vector<8x32xf32> to vector<8x8xf32>
    %305 = arith.truncf %304 : vector<8x8xf32> to vector<8x8xbf16>
    %306 = vector.extract_strided_slice %273 {offsets = [0, 8], sizes = [8, 8], strides = [1, 1]} : vector<8x32xf32> to vector<8x8xf32>
    %307 = arith.truncf %306 : vector<8x8xf32> to vector<8x8xbf16>
    %cst_91 = arith.constant dense<0.000000e+00> : vector<8x8xf32>
    %308 = tpu.matmul %303, %305, %cst_91 {dimension_numbers = #tpu.dot_dimension_numbers<[1], [1], [0], [0], [0, 0, 1, 0], [], []>} : vector<8x8xbf16>, vector<8x8xbf16>, vector<8x8xf32> -> vector<8x8xf32>
    %cst_92 = arith.constant dense<0xFF800000> : vector<8xf32>
    %309 = vector.multi_reduction <maximumf>, %308, %cst_92 [1] : vector<8x8xf32> to vector<8xf32>
    %310 = vector.shape_cast %309 : vector<8xf32> to vector<8x1xf32>
    %311 = vector.broadcast %310 : vector<8x1xf32> to vector<8x8xf32>
    %312 = arith.subf %308, %311 : vector<8x8xf32>
    %313 = math.exp %312 : vector<8x8xf32>
    %cst_93 = arith.constant dense<0.000000e+00> : vector<8xf32>
    %314 = vector.multi_reduction <add>, %313, %cst_93 [1] : vector<8x8xf32> to vector<8xf32>
    %315 = vector.shape_cast %314 : vector<8xf32> to vector<8x1xf32>
    %316 = tpu.reciprocal %315 {approx = true} : vector<8x1xf32> -> vector<8x1xf32>
    %317 = vector.broadcast %316 : vector<8x1xf32> to vector<8x8xf32>
    %318 = arith.mulf %313, %317 : vector<8x8xf32>
    %319 = arith.truncf %318 : vector<8x8xf32> to vector<8x8xbf16>
    %cst_94 = arith.constant dense<0.000000e+00> : vector<8x8xf32>
    %320 = tpu.matmul %319, %307, %cst_94 {dimension_numbers = #tpu.dot_dimension_numbers<[1], [0], [0], [1], [0, 0, 1, 1], [], []>} : vector<8x8xbf16>, vector<8x8xbf16>, vector<8x8xf32> -> vector<8x8xf32>
    %321 = arith.truncf %320 : vector<8x8xf32> to vector<8x8xbf16>
    %322 = vector.extract_strided_slice %221 {offsets = [8, 0], sizes = [8, 32], strides = [1, 1]} : vector<32x32xbf16> to vector<8x32xbf16>
    %cst_95 = arith.constant dense<0.000000e+00> : vector<8x32xf32>
    %323 = tpu.matmul %321, %322, %cst_95 {dimension_numbers = #tpu.dot_dimension_numbers<[1], [0], [0], [1], [0, 0, 1, 1], [], []>} : vector<8x8xbf16>, vector<8x32xbf16>, vector<8x32xf32> -> vector<8x32xf32>
    %324 = arith.addf %299, %323 : vector<8x32xf32>
    %325 = vector.extract_strided_slice %271 {offsets = [0, 16], sizes = [8, 8], strides = [1, 1]} : vector<8x32xf32> to vector<8x8xf32>
    %cst_96 = arith.constant 0.353553385 : f32
    %326 = vector.broadcast %cst_96 : f32 to vector<8x8xf32>
    %327 = arith.mulf %325, %326 : vector<8x8xf32>
    %328 = arith.truncf %327 : vector<8x8xf32> to vector<8x8xbf16>
    %329 = vector.extract_strided_slice %272 {offsets = [0, 16], sizes = [8, 8], strides = [1, 1]} : vector<8x32xf32> to vector<8x8xf32>
    %330 = arith.truncf %329 : vector<8x8xf32> to vector<8x8xbf16>
    %331 = vector.extract_strided_slice %273 {offsets = [0, 16], sizes = [8, 8], strides = [1, 1]} : vector<8x32xf32> to vector<8x8xf32>
    %332 = arith.truncf %331 : vector<8x8xf32> to vector<8x8xbf16>
    %cst_97 = arith.constant dense<0.000000e+00> : vector<8x8xf32>
    %333 = tpu.matmul %328, %330, %cst_97 {dimension_numbers = #tpu.dot_dimension_numbers<[1], [1], [0], [0], [0, 0, 1, 0], [], []>} : vector<8x8xbf16>, vector<8x8xbf16>, vector<8x8xf32> -> vector<8x8xf32>
    %cst_98 = arith.constant dense<0xFF800000> : vector<8xf32>
    %334 = vector.multi_reduction <maximumf>, %333, %cst_98 [1] : vector<8x8xf32> to vector<8xf32>
    %335 = vector.shape_cast %334 : vector<8xf32> to vector<8x1xf32>
    %336 = vector.broadcast %335 : vector<8x1xf32> to vector<8x8xf32>
    %337 = arith.subf %333, %336 : vector<8x8xf32>
    %338 = math.exp %337 : vector<8x8xf32>
    %cst_99 = arith.constant dense<0.000000e+00> : vector<8xf32>
    %339 = vector.multi_reduction <add>, %338, %cst_99 [1] : vector<8x8xf32> to vector<8xf32>
    %340 = vector.shape_cast %339 : vector<8xf32> to vector<8x1xf32>
    %341 = tpu.reciprocal %340 {approx = true} : vector<8x1xf32> -> vector<8x1xf32>
    %342 = vector.broadcast %341 : vector<8x1xf32> to vector<8x8xf32>
    %343 = arith.mulf %338, %342 : vector<8x8xf32>
    %344 = arith.truncf %343 : vector<8x8xf32> to vector<8x8xbf16>
    %cst_100 = arith.constant dense<0.000000e+00> : vector<8x8xf32>
    %345 = tpu.matmul %344, %332, %cst_100 {dimension_numbers = #tpu.dot_dimension_numbers<[1], [0], [0], [1], [0, 0, 1, 1], [], []>} : vector<8x8xbf16>, vector<8x8xbf16>, vector<8x8xf32> -> vector<8x8xf32>
    %346 = arith.truncf %345 : vector<8x8xf32> to vector<8x8xbf16>
    %347 = vector.extract_strided_slice %221 {offsets = [16, 0], sizes = [8, 32], strides = [1, 1]} : vector<32x32xbf16> to vector<8x32xbf16>
    %cst_101 = arith.constant dense<0.000000e+00> : vector<8x32xf32>
    %348 = tpu.matmul %346, %347, %cst_101 {dimension_numbers = #tpu.dot_dimension_numbers<[1], [0], [0], [1], [0, 0, 1, 1], [], []>} : vector<8x8xbf16>, vector<8x32xbf16>, vector<8x32xf32> -> vector<8x32xf32>
    %349 = arith.addf %324, %348 : vector<8x32xf32>
    %350 = vector.extract_strided_slice %271 {offsets = [0, 24], sizes = [8, 8], strides = [1, 1]} : vector<8x32xf32> to vector<8x8xf32>
    %cst_102 = arith.constant 0.353553385 : f32
    %351 = vector.broadcast %cst_102 : f32 to vector<8x8xf32>
    %352 = arith.mulf %350, %351 : vector<8x8xf32>
    %353 = arith.truncf %352 : vector<8x8xf32> to vector<8x8xbf16>
    %354 = vector.extract_strided_slice %272 {offsets = [0, 24], sizes = [8, 8], strides = [1, 1]} : vector<8x32xf32> to vector<8x8xf32>
    %355 = arith.truncf %354 : vector<8x8xf32> to vector<8x8xbf16>
    %356 = vector.extract_strided_slice %273 {offsets = [0, 24], sizes = [8, 8], strides = [1, 1]} : vector<8x32xf32> to vector<8x8xf32>
    %357 = arith.truncf %356 : vector<8x8xf32> to vector<8x8xbf16>
    %cst_103 = arith.constant dense<0.000000e+00> : vector<8x8xf32>
    %358 = tpu.matmul %353, %355, %cst_103 {dimension_numbers = #tpu.dot_dimension_numbers<[1], [1], [0], [0], [0, 0, 1, 0], [], []>} : vector<8x8xbf16>, vector<8x8xbf16>, vector<8x8xf32> -> vector<8x8xf32>
    %cst_104 = arith.constant dense<0xFF800000> : vector<8xf32>
    %359 = vector.multi_reduction <maximumf>, %358, %cst_104 [1] : vector<8x8xf32> to vector<8xf32>
    %360 = vector.shape_cast %359 : vector<8xf32> to vector<8x1xf32>
    %361 = vector.broadcast %360 : vector<8x1xf32> to vector<8x8xf32>
    %362 = arith.subf %358, %361 : vector<8x8xf32>
    %363 = math.exp %362 : vector<8x8xf32>
    %cst_105 = arith.constant dense<0.000000e+00> : vector<8xf32>
    %364 = vector.multi_reduction <add>, %363, %cst_105 [1] : vector<8x8xf32> to vector<8xf32>
    %365 = vector.shape_cast %364 : vector<8xf32> to vector<8x1xf32>
    %366 = tpu.reciprocal %365 {approx = true} : vector<8x1xf32> -> vector<8x1xf32>
    %367 = vector.broadcast %366 : vector<8x1xf32> to vector<8x8xf32>
    %368 = arith.mulf %363, %367 : vector<8x8xf32>
    %369 = arith.truncf %368 : vector<8x8xf32> to vector<8x8xbf16>
    %cst_106 = arith.constant dense<0.000000e+00> : vector<8x8xf32>
    %370 = tpu.matmul %369, %357, %cst_106 {dimension_numbers = #tpu.dot_dimension_numbers<[1], [0], [0], [1], [0, 0, 1, 1], [], []>} : vector<8x8xbf16>, vector<8x8xbf16>, vector<8x8xf32> -> vector<8x8xf32>
    %371 = arith.truncf %370 : vector<8x8xf32> to vector<8x8xbf16>
    %372 = vector.extract_strided_slice %221 {offsets = [24, 0], sizes = [8, 32], strides = [1, 1]} : vector<32x32xbf16> to vector<8x32xbf16>
    %cst_107 = arith.constant dense<0.000000e+00> : vector<8x32xf32>
    %373 = tpu.matmul %371, %372, %cst_107 {dimension_numbers = #tpu.dot_dimension_numbers<[1], [0], [0], [1], [0, 0, 1, 1], [], []>} : vector<8x8xbf16>, vector<8x32xbf16>, vector<8x32xf32> -> vector<8x32xf32>
    %374 = arith.addf %349, %373 : vector<8x32xf32>
    %375 = arith.addf %217, %374 : vector<8x32xf32>
    %376 = vector.shape_cast %235 : vector<32xf32> to vector<1x32xf32>
    %377 = vector.broadcast %376 : vector<1x32xf32> to vector<8x32xf32>
    %378 = arith.addf %375, %377 : vector<8x32xf32>
    %cst_108 = arith.constant dense<0.000000e+00> : vector<8xf32>
    %379 = vector.multi_reduction <add>, %378, %cst_108 [1] : vector<8x32xf32> to vector<8xf32>
    %380 = vector.shape_cast %379 : vector<8xf32> to vector<8x1xf32>
    %cst_109 = arith.constant 3.200000e+01 : f32
    %381 = vector.broadcast %cst_109 : f32 to vector<8x1xf32>
    %382 = arith.divf %380, %381 : vector<8x1xf32>
    %383 = vector.broadcast %382 : vector<8x1xf32> to vector<8x32xf32>
    %384 = arith.subf %378, %383 : vector<8x32xf32>
    %385 = arith.mulf %384, %384 : vector<8x32xf32>
    %cst_110 = arith.constant dense<0.000000e+00> : vector<8xf32>
    %386 = vector.multi_reduction <add>, %385, %cst_110 [1] : vector<8x32xf32> to vector<8xf32>
    %387 = vector.shape_cast %386 : vector<8xf32> to vector<8x1xf32>
    %cst_111 = arith.constant 3.200000e+01 : f32
    %388 = vector.broadcast %cst_111 : f32 to vector<8x1xf32>
    %389 = arith.divf %387, %388 : vector<8x1xf32>
    %cst_112 = arith.constant 9.99999974E-6 : f32
    %390 = vector.broadcast %cst_112 : f32 to vector<8x1xf32>
    %391 = arith.addf %389, %390 : vector<8x1xf32>
    %392 = math.rsqrt %391 : vector<8x1xf32>
    %393 = vector.broadcast %392 : vector<8x1xf32> to vector<8x32xf32>
    %394 = arith.mulf %384, %393 : vector<8x32xf32>
    %395 = vector.shape_cast %237 : vector<32xf32> to vector<1x32xf32>
    %396 = vector.broadcast %395 : vector<1x32xf32> to vector<8x32xf32>
    %397 = arith.mulf %394, %396 : vector<8x32xf32>
    %398 = vector.shape_cast %239 : vector<32xf32> to vector<1x32xf32>
    %399 = vector.broadcast %398 : vector<1x32xf32> to vector<8x32xf32>
    %400 = arith.addf %397, %399 : vector<8x32xf32>
    %401 = arith.truncf %400 : vector<8x32xf32> to vector<8x32xbf16>
    %cst_113 = arith.constant dense<0.000000e+00> : vector<8x128xf32>
    %402 = tpu.matmul %401, %223, %cst_113 {dimension_numbers = #tpu.dot_dimension_numbers<[1], [0], [0], [1], [0, 0, 1, 1], [], []>} : vector<8x32xbf16>, vector<32x128xbf16>, vector<8x128xf32> -> vector<8x128xf32>
    %403 = vector.shape_cast %241 : vector<128xf32> to vector<1x128xf32>
    %404 = vector.broadcast %403 : vector<1x128xf32> to vector<8x128xf32>
    %405 = arith.addf %402, %404 : vector<8x128xf32>
    %cst_114 = arith.constant 5.000000e-01 : f32
    %406 = vector.broadcast %cst_114 : f32 to vector<8x128xf32>
    %407 = arith.mulf %406, %405 : vector<8x128xf32>
    %cst_115 = arith.constant 4.471500e-02 : f32
    %408 = vector.broadcast %cst_115 : f32 to vector<8x128xf32>
    %409 = arith.mulf %408, %405 : vector<8x128xf32>
    %410 = arith.mulf %409, %405 : vector<8x128xf32>
    %411 = arith.mulf %410, %405 : vector<8x128xf32>
    %412 = arith.addf %405, %411 : vector<8x128xf32>
    %cst_116 = arith.constant 0.797884583 : f32
    %413 = vector.broadcast %cst_116 : f32 to vector<8x128xf32>
    %414 = arith.mulf %413, %412 : vector<8x128xf32>
    %415 = math.tanh %414 : vector<8x128xf32>
    %cst_117 = arith.constant 1.000000e+00 : f32
    %416 = vector.broadcast %cst_117 : f32 to vector<8x128xf32>
    %417 = arith.addf %416, %415 : vector<8x128xf32>
    %418 = arith.mulf %407, %417 : vector<8x128xf32>
    %419 = arith.truncf %418 : vector<8x128xf32> to vector<8x128xbf16>
    %cst_118 = arith.constant dense<0.000000e+00> : vector<8x32xf32>
    %420 = tpu.matmul %419, %225, %cst_118 {dimension_numbers = #tpu.dot_dimension_numbers<[1], [0], [0], [1], [0, 0, 1, 1], [], []>} : vector<8x128xbf16>, vector<128x32xbf16>, vector<8x32xf32> -> vector<8x32xf32>
    %421 = vector.shape_cast %243 : vector<32xf32> to vector<1x32xf32>
    %422 = vector.broadcast %421 : vector<1x32xf32> to vector<8x32xf32>
    %423 = arith.addf %420, %422 : vector<8x32xf32>
    %424 = arith.addf %378, %423 : vector<8x32xf32>
    %c0_119 = arith.constant 0 : index
    %c0_120 = arith.constant 0 : index
    %c0_121 = arith.constant 0 : index
    %425 = vector.load %arg2[%c0_119, %c0_120, %c0_121] : memref<1x8x8xf32, #tpu.memory_space<vmem>>, vector<1x8x8xf32>
    %426 = vector.shape_cast %425 : vector<1x8x8xf32> to vector<8x8xf32>
    %c0_122 = arith.constant 0 : index
    %c0_123 = arith.constant 0 : index
    %427 = vector.load %arg4[%c0_122, %c0_123] : memref<8x32xbf16, #tpu.memory_space<vmem>>, vector<8x32xbf16>
    %428 = vector.extract_strided_slice %0 {offsets = [1, 0], sizes = [1, 32], strides = [1, 1]} : vector<4x32xf32> to vector<1x32xf32>
    %429 = vector.shape_cast %428 : vector<1x32xf32> to vector<32xf32>
    %430 = arith.truncf %426 : vector<8x8xf32> to vector<8x8xbf16>
    %cst_124 = arith.constant dense<0.000000e+00> : vector<8x32xf32>
    %431 = tpu.matmul %430, %427, %cst_124 {dimension_numbers = #tpu.dot_dimension_numbers<[1], [0], [0], [1], [0, 0, 1, 1], [], []>} : vector<8x8xbf16>, vector<8x32xbf16>, vector<8x32xf32> -> vector<8x32xf32>
    %432 = vector.shape_cast %429 : vector<32xf32> to vector<1x32xf32>
    %433 = vector.broadcast %432 : vector<1x32xf32> to vector<8x32xf32>
    %434 = arith.addf %431, %433 : vector<8x32xf32>
    %c0_125 = arith.constant 0 : index
    %c0_126 = arith.constant 0 : index
    %c0_127 = arith.constant 0 : index
    %435 = vector.load %arg11[%c0_125, %c0_126, %c0_127] : memref<2x32x96xbf16, #tpu.memory_space<vmem>>, vector<1x32x96xbf16>
    %436 = vector.shape_cast %435 : vector<1x32x96xbf16> to vector<32x96xbf16>
    %c0_128 = arith.constant 0 : index
    %c0_129 = arith.constant 0 : index
    %c0_130 = arith.constant 0 : index
    %437 = vector.load %arg12[%c0_128, %c0_129, %c0_130] : memref<2x32x32xbf16, #tpu.memory_space<vmem>>, vector<1x32x32xbf16>
    %438 = vector.shape_cast %437 : vector<1x32x32xbf16> to vector<32x32xbf16>
    %c0_131 = arith.constant 0 : index
    %c0_132 = arith.constant 0 : index
    %c0_133 = arith.constant 0 : index
    %439 = vector.load %arg13[%c0_131, %c0_132, %c0_133] : memref<2x32x32xbf16, #tpu.memory_space<vmem>>, vector<1x32x32xbf16>
    %440 = vector.shape_cast %439 : vector<1x32x32xbf16> to vector<32x32xbf16>
    %c0_134 = arith.constant 0 : index
    %c0_135 = arith.constant 0 : index
    %c0_136 = arith.constant 0 : index
    %441 = vector.load %arg14[%c0_134, %c0_135, %c0_136] : memref<2x32x64xbf16, #tpu.memory_space<vmem>>, vector<1x32x64xbf16>
    %442 = vector.shape_cast %441 : vector<1x32x64xbf16> to vector<32x64xbf16>
    %c0_137 = arith.constant 0 : index
    %c0_138 = arith.constant 0 : index
    %c0_139 = arith.constant 0 : index
    %443 = vector.load %arg15[%c0_137, %c0_138, %c0_139] : memref<2x32x32xbf16, #tpu.memory_space<vmem>>, vector<1x32x32xbf16>
    %444 = vector.shape_cast %443 : vector<1x32x32xbf16> to vector<32x32xbf16>
    %c0_140 = arith.constant 0 : index
    %c0_141 = arith.constant 0 : index
    %c0_142 = arith.constant 0 : index
    %445 = vector.load %arg16[%c0_140, %c0_141, %c0_142] : memref<2x32x128xbf16, #tpu.memory_space<vmem>>, vector<1x32x128xbf16>
    %446 = vector.shape_cast %445 : vector<1x32x128xbf16> to vector<32x128xbf16>
    %c0_143 = arith.constant 0 : index
    %c0_144 = arith.constant 0 : index
    %c0_145 = arith.constant 0 : index
    %447 = vector.load %arg17[%c0_143, %c0_144, %c0_145] : memref<2x128x32xbf16, #tpu.memory_space<vmem>>, vector<1x128x32xbf16>
    %448 = vector.shape_cast %447 : vector<1x128x32xbf16> to vector<128x32xbf16>
    %c0_146 = arith.constant 0 : index
    %c0_147 = arith.constant 0 : index
    %c0_148 = arith.constant 0 : index
    %449 = vector.load %arg18[%c0_146, %c0_147, %c0_148] : memref<2x13x128xf32, #tpu.memory_space<vmem>>, vector<1x13x128xf32>
    %450 = vector.shape_cast %449 : vector<1x13x128xf32> to vector<13x128xf32>
    %451 = vector.extract_strided_slice %450 {offsets = [0, 0], sizes = [1, 32], strides = [1, 1]} : vector<13x128xf32> to vector<1x32xf32>
    %452 = vector.shape_cast %451 : vector<1x32xf32> to vector<32xf32>
    %453 = vector.extract_strided_slice %450 {offsets = [1, 0], sizes = [1, 32], strides = [1, 1]} : vector<13x128xf32> to vector<1x32xf32>
    %454 = vector.shape_cast %453 : vector<1x32xf32> to vector<32xf32>
    %455 = vector.extract_strided_slice %450 {offsets = [2, 0], sizes = [1, 96], strides = [1, 1]} : vector<13x128xf32> to vector<1x96xf32>
    %456 = vector.shape_cast %455 : vector<1x96xf32> to vector<96xf32>
    %457 = vector.extract_strided_slice %450 {offsets = [3, 0], sizes = [1, 32], strides = [1, 1]} : vector<13x128xf32> to vector<1x32xf32>
    %458 = vector.shape_cast %457 : vector<1x32xf32> to vector<32xf32>
    %459 = vector.extract_strided_slice %450 {offsets = [4, 0], sizes = [1, 32], strides = [1, 1]} : vector<13x128xf32> to vector<1x32xf32>
    %460 = vector.shape_cast %459 : vector<1x32xf32> to vector<32xf32>
    %461 = vector.extract_strided_slice %450 {offsets = [5, 0], sizes = [1, 32], strides = [1, 1]} : vector<13x128xf32> to vector<1x32xf32>
    %462 = vector.shape_cast %461 : vector<1x32xf32> to vector<32xf32>
    %463 = vector.extract_strided_slice %450 {offsets = [6, 0], sizes = [1, 32], strides = [1, 1]} : vector<13x128xf32> to vector<1x32xf32>
    %464 = vector.shape_cast %463 : vector<1x32xf32> to vector<32xf32>
    %465 = vector.extract_strided_slice %450 {offsets = [7, 0], sizes = [1, 64], strides = [1, 1]} : vector<13x128xf32> to vector<1x64xf32>
    %466 = vector.shape_cast %465 : vector<1x64xf32> to vector<64xf32>
    %467 = vector.extract_strided_slice %450 {offsets = [8, 0], sizes = [1, 32], strides = [1, 1]} : vector<13x128xf32> to vector<1x32xf32>
    %468 = vector.shape_cast %467 : vector<1x32xf32> to vector<32xf32>
    %469 = vector.extract_strided_slice %450 {offsets = [9, 0], sizes = [1, 32], strides = [1, 1]} : vector<13x128xf32> to vector<1x32xf32>
    %470 = vector.shape_cast %469 : vector<1x32xf32> to vector<32xf32>
    %471 = vector.extract_strided_slice %450 {offsets = [10, 0], sizes = [1, 32], strides = [1, 1]} : vector<13x128xf32> to vector<1x32xf32>
    %472 = vector.shape_cast %471 : vector<1x32xf32> to vector<32xf32>
    %473 = vector.extract_strided_slice %450 {offsets = [11, 0], sizes = [1, 128], strides = [1, 1]} : vector<13x128xf32> to vector<1x128xf32>
    %474 = vector.shape_cast %473 : vector<1x128xf32> to vector<128xf32>
    %475 = vector.extract_strided_slice %450 {offsets = [12, 0], sizes = [1, 32], strides = [1, 1]} : vector<13x128xf32> to vector<1x32xf32>
    %476 = vector.shape_cast %475 : vector<1x32xf32> to vector<32xf32>
    %cst_149 = arith.constant dense<0.000000e+00> : vector<8xf32>
    %477 = vector.multi_reduction <add>, %434, %cst_149 [1] : vector<8x32xf32> to vector<8xf32>
    %478 = vector.shape_cast %477 : vector<8xf32> to vector<8x1xf32>
    %cst_150 = arith.constant 3.200000e+01 : f32
    %479 = vector.broadcast %cst_150 : f32 to vector<8x1xf32>
    %480 = arith.divf %478, %479 : vector<8x1xf32>
    %481 = vector.broadcast %480 : vector<8x1xf32> to vector<8x32xf32>
    %482 = arith.subf %434, %481 : vector<8x32xf32>
    %483 = arith.mulf %482, %482 : vector<8x32xf32>
    %cst_151 = arith.constant dense<0.000000e+00> : vector<8xf32>
    %484 = vector.multi_reduction <add>, %483, %cst_151 [1] : vector<8x32xf32> to vector<8xf32>
    %485 = vector.shape_cast %484 : vector<8xf32> to vector<8x1xf32>
    %cst_152 = arith.constant 3.200000e+01 : f32
    %486 = vector.broadcast %cst_152 : f32 to vector<8x1xf32>
    %487 = arith.divf %485, %486 : vector<8x1xf32>
    %cst_153 = arith.constant 9.99999974E-6 : f32
    %488 = vector.broadcast %cst_153 : f32 to vector<8x1xf32>
    %489 = arith.addf %487, %488 : vector<8x1xf32>
    %490 = math.rsqrt %489 : vector<8x1xf32>
    %491 = vector.broadcast %490 : vector<8x1xf32> to vector<8x32xf32>
    %492 = arith.mulf %482, %491 : vector<8x32xf32>
    %493 = vector.shape_cast %452 : vector<32xf32> to vector<1x32xf32>
    %494 = vector.broadcast %493 : vector<1x32xf32> to vector<8x32xf32>
    %495 = arith.mulf %492, %494 : vector<8x32xf32>
    %496 = vector.shape_cast %454 : vector<32xf32> to vector<1x32xf32>
    %497 = vector.broadcast %496 : vector<1x32xf32> to vector<8x32xf32>
    %498 = arith.addf %495, %497 : vector<8x32xf32>
    %499 = arith.truncf %498 : vector<8x32xf32> to vector<8x32xbf16>
    %cst_154 = arith.constant dense<0.000000e+00> : vector<8x96xf32>
    %500 = tpu.matmul %499, %436, %cst_154 {dimension_numbers = #tpu.dot_dimension_numbers<[1], [0], [0], [1], [0, 0, 1, 1], [], []>} : vector<8x32xbf16>, vector<32x96xbf16>, vector<8x96xf32> -> vector<8x96xf32>
    %501 = vector.shape_cast %456 : vector<96xf32> to vector<1x96xf32>
    %502 = vector.broadcast %501 : vector<1x96xf32> to vector<8x96xf32>
    %503 = arith.addf %500, %502 : vector<8x96xf32>
    %504 = vector.extract_strided_slice %503 {offsets = [0, 0], sizes = [8, 32], strides = [1, 1]} : vector<8x96xf32> to vector<8x32xf32>
    %505 = vector.extract_strided_slice %503 {offsets = [0, 32], sizes = [8, 32], strides = [1, 1]} : vector<8x96xf32> to vector<8x32xf32>
    %506 = vector.extract_strided_slice %503 {offsets = [0, 64], sizes = [8, 32], strides = [1, 1]} : vector<8x96xf32> to vector<8x32xf32>
    %507 = tpu.iota {dimensions = array<i32: 0>} : vector<8x8xi32>
    %508 = tpu.iota {dimensions = array<i32: 1>} : vector<8x8xi32>
    %509 = arith.cmpi sle, %508, %507 : vector<8x8xi32>
    %cst_155 = arith.constant 0.000000e+00 : f32
    %cst_156 = arith.constant -1.000000e+30 : f32
    %510 = vector.broadcast %cst_155 : f32 to vector<8x8xf32>
    %511 = vector.broadcast %cst_156 : f32 to vector<8x8xf32>
    %512 = arith.select %509, %510, %511 : vector<8x8xi1>, vector<8x8xf32>
    %cst_157 = arith.constant 0.000000e+00 : f32
    %513 = vector.broadcast %cst_157 : f32 to vector<8x32xf32>
    %514 = vector.extract_strided_slice %504 {offsets = [0, 0], sizes = [8, 8], strides = [1, 1]} : vector<8x32xf32> to vector<8x8xf32>
    %cst_158 = arith.constant 0.353553385 : f32
    %515 = vector.broadcast %cst_158 : f32 to vector<8x8xf32>
    %516 = arith.mulf %514, %515 : vector<8x8xf32>
    %517 = arith.truncf %516 : vector<8x8xf32> to vector<8x8xbf16>
    %518 = vector.extract_strided_slice %505 {offsets = [0, 0], sizes = [8, 8], strides = [1, 1]} : vector<8x32xf32> to vector<8x8xf32>
    %519 = arith.truncf %518 : vector<8x8xf32> to vector<8x8xbf16>
    %520 = vector.extract_strided_slice %506 {offsets = [0, 0], sizes = [8, 8], strides = [1, 1]} : vector<8x32xf32> to vector<8x8xf32>
    %521 = arith.truncf %520 : vector<8x8xf32> to vector<8x8xbf16>
    %cst_159 = arith.constant dense<0.000000e+00> : vector<8x8xf32>
    %522 = tpu.matmul %517, %519, %cst_159 {dimension_numbers = #tpu.dot_dimension_numbers<[1], [1], [0], [0], [0, 0, 1, 0], [], []>} : vector<8x8xbf16>, vector<8x8xbf16>, vector<8x8xf32> -> vector<8x8xf32>
    %523 = arith.addf %522, %512 : vector<8x8xf32>
    %cst_160 = arith.constant dense<0xFF800000> : vector<8xf32>
    %524 = vector.multi_reduction <maximumf>, %523, %cst_160 [1] : vector<8x8xf32> to vector<8xf32>
    %525 = vector.shape_cast %524 : vector<8xf32> to vector<8x1xf32>
    %526 = vector.broadcast %525 : vector<8x1xf32> to vector<8x8xf32>
    %527 = arith.subf %523, %526 : vector<8x8xf32>
    %528 = math.exp %527 : vector<8x8xf32>
    %cst_161 = arith.constant dense<0.000000e+00> : vector<8xf32>
    %529 = vector.multi_reduction <add>, %528, %cst_161 [1] : vector<8x8xf32> to vector<8xf32>
    %530 = vector.shape_cast %529 : vector<8xf32> to vector<8x1xf32>
    %531 = tpu.reciprocal %530 {approx = true} : vector<8x1xf32> -> vector<8x1xf32>
    %532 = vector.broadcast %531 : vector<8x1xf32> to vector<8x8xf32>
    %533 = arith.mulf %528, %532 : vector<8x8xf32>
    %534 = arith.truncf %533 : vector<8x8xf32> to vector<8x8xbf16>
    %cst_162 = arith.constant dense<0.000000e+00> : vector<8x8xf32>
    %535 = tpu.matmul %534, %521, %cst_162 {dimension_numbers = #tpu.dot_dimension_numbers<[1], [0], [0], [1], [0, 0, 1, 1], [], []>} : vector<8x8xbf16>, vector<8x8xbf16>, vector<8x8xf32> -> vector<8x8xf32>
    %536 = arith.truncf %535 : vector<8x8xf32> to vector<8x8xbf16>
    %537 = vector.extract_strided_slice %438 {offsets = [0, 0], sizes = [8, 32], strides = [1, 1]} : vector<32x32xbf16> to vector<8x32xbf16>
    %cst_163 = arith.constant dense<0.000000e+00> : vector<8x32xf32>
    %538 = tpu.matmul %536, %537, %cst_163 {dimension_numbers = #tpu.dot_dimension_numbers<[1], [0], [0], [1], [0, 0, 1, 1], [], []>} : vector<8x8xbf16>, vector<8x32xbf16>, vector<8x32xf32> -> vector<8x32xf32>
    %539 = arith.addf %513, %538 : vector<8x32xf32>
    %540 = vector.extract_strided_slice %504 {offsets = [0, 8], sizes = [8, 8], strides = [1, 1]} : vector<8x32xf32> to vector<8x8xf32>
    %cst_164 = arith.constant 0.353553385 : f32
    %541 = vector.broadcast %cst_164 : f32 to vector<8x8xf32>
    %542 = arith.mulf %540, %541 : vector<8x8xf32>
    %543 = arith.truncf %542 : vector<8x8xf32> to vector<8x8xbf16>
    %544 = vector.extract_strided_slice %505 {offsets = [0, 8], sizes = [8, 8], strides = [1, 1]} : vector<8x32xf32> to vector<8x8xf32>
    %545 = arith.truncf %544 : vector<8x8xf32> to vector<8x8xbf16>
    %546 = vector.extract_strided_slice %506 {offsets = [0, 8], sizes = [8, 8], strides = [1, 1]} : vector<8x32xf32> to vector<8x8xf32>
    %547 = arith.truncf %546 : vector<8x8xf32> to vector<8x8xbf16>
    %cst_165 = arith.constant dense<0.000000e+00> : vector<8x8xf32>
    %548 = tpu.matmul %543, %545, %cst_165 {dimension_numbers = #tpu.dot_dimension_numbers<[1], [1], [0], [0], [0, 0, 1, 0], [], []>} : vector<8x8xbf16>, vector<8x8xbf16>, vector<8x8xf32> -> vector<8x8xf32>
    %549 = arith.addf %548, %512 : vector<8x8xf32>
    %cst_166 = arith.constant dense<0xFF800000> : vector<8xf32>
    %550 = vector.multi_reduction <maximumf>, %549, %cst_166 [1] : vector<8x8xf32> to vector<8xf32>
    %551 = vector.shape_cast %550 : vector<8xf32> to vector<8x1xf32>
    %552 = vector.broadcast %551 : vector<8x1xf32> to vector<8x8xf32>
    %553 = arith.subf %549, %552 : vector<8x8xf32>
    %554 = math.exp %553 : vector<8x8xf32>
    %cst_167 = arith.constant dense<0.000000e+00> : vector<8xf32>
    %555 = vector.multi_reduction <add>, %554, %cst_167 [1] : vector<8x8xf32> to vector<8xf32>
    %556 = vector.shape_cast %555 : vector<8xf32> to vector<8x1xf32>
    %557 = tpu.reciprocal %556 {approx = true} : vector<8x1xf32> -> vector<8x1xf32>
    %558 = vector.broadcast %557 : vector<8x1xf32> to vector<8x8xf32>
    %559 = arith.mulf %554, %558 : vector<8x8xf32>
    %560 = arith.truncf %559 : vector<8x8xf32> to vector<8x8xbf16>
    %cst_168 = arith.constant dense<0.000000e+00> : vector<8x8xf32>
    %561 = tpu.matmul %560, %547, %cst_168 {dimension_numbers = #tpu.dot_dimension_numbers<[1], [0], [0], [1], [0, 0, 1, 1], [], []>} : vector<8x8xbf16>, vector<8x8xbf16>, vector<8x8xf32> -> vector<8x8xf32>
    %562 = arith.truncf %561 : vector<8x8xf32> to vector<8x8xbf16>
    %563 = vector.extract_strided_slice %438 {offsets = [8, 0], sizes = [8, 32], strides = [1, 1]} : vector<32x32xbf16> to vector<8x32xbf16>
    %cst_169 = arith.constant dense<0.000000e+00> : vector<8x32xf32>
    %564 = tpu.matmul %562, %563, %cst_169 {dimension_numbers = #tpu.dot_dimension_numbers<[1], [0], [0], [1], [0, 0, 1, 1], [], []>} : vector<8x8xbf16>, vector<8x32xbf16>, vector<8x32xf32> -> vector<8x32xf32>
    %565 = arith.addf %539, %564 : vector<8x32xf32>
    %566 = vector.extract_strided_slice %504 {offsets = [0, 16], sizes = [8, 8], strides = [1, 1]} : vector<8x32xf32> to vector<8x8xf32>
    %cst_170 = arith.constant 0.353553385 : f32
    %567 = vector.broadcast %cst_170 : f32 to vector<8x8xf32>
    %568 = arith.mulf %566, %567 : vector<8x8xf32>
    %569 = arith.truncf %568 : vector<8x8xf32> to vector<8x8xbf16>
    %570 = vector.extract_strided_slice %505 {offsets = [0, 16], sizes = [8, 8], strides = [1, 1]} : vector<8x32xf32> to vector<8x8xf32>
    %571 = arith.truncf %570 : vector<8x8xf32> to vector<8x8xbf16>
    %572 = vector.extract_strided_slice %506 {offsets = [0, 16], sizes = [8, 8], strides = [1, 1]} : vector<8x32xf32> to vector<8x8xf32>
    %573 = arith.truncf %572 : vector<8x8xf32> to vector<8x8xbf16>
    %cst_171 = arith.constant dense<0.000000e+00> : vector<8x8xf32>
    %574 = tpu.matmul %569, %571, %cst_171 {dimension_numbers = #tpu.dot_dimension_numbers<[1], [1], [0], [0], [0, 0, 1, 0], [], []>} : vector<8x8xbf16>, vector<8x8xbf16>, vector<8x8xf32> -> vector<8x8xf32>
    %575 = arith.addf %574, %512 : vector<8x8xf32>
    %cst_172 = arith.constant dense<0xFF800000> : vector<8xf32>
    %576 = vector.multi_reduction <maximumf>, %575, %cst_172 [1] : vector<8x8xf32> to vector<8xf32>
    %577 = vector.shape_cast %576 : vector<8xf32> to vector<8x1xf32>
    %578 = vector.broadcast %577 : vector<8x1xf32> to vector<8x8xf32>
    %579 = arith.subf %575, %578 : vector<8x8xf32>
    %580 = math.exp %579 : vector<8x8xf32>
    %cst_173 = arith.constant dense<0.000000e+00> : vector<8xf32>
    %581 = vector.multi_reduction <add>, %580, %cst_173 [1] : vector<8x8xf32> to vector<8xf32>
    %582 = vector.shape_cast %581 : vector<8xf32> to vector<8x1xf32>
    %583 = tpu.reciprocal %582 {approx = true} : vector<8x1xf32> -> vector<8x1xf32>
    %584 = vector.broadcast %583 : vector<8x1xf32> to vector<8x8xf32>
    %585 = arith.mulf %580, %584 : vector<8x8xf32>
    %586 = arith.truncf %585 : vector<8x8xf32> to vector<8x8xbf16>
    %cst_174 = arith.constant dense<0.000000e+00> : vector<8x8xf32>
    %587 = tpu.matmul %586, %573, %cst_174 {dimension_numbers = #tpu.dot_dimension_numbers<[1], [0], [0], [1], [0, 0, 1, 1], [], []>} : vector<8x8xbf16>, vector<8x8xbf16>, vector<8x8xf32> -> vector<8x8xf32>
    %588 = arith.truncf %587 : vector<8x8xf32> to vector<8x8xbf16>
    %589 = vector.extract_strided_slice %438 {offsets = [16, 0], sizes = [8, 32], strides = [1, 1]} : vector<32x32xbf16> to vector<8x32xbf16>
    %cst_175 = arith.constant dense<0.000000e+00> : vector<8x32xf32>
    %590 = tpu.matmul %588, %589, %cst_175 {dimension_numbers = #tpu.dot_dimension_numbers<[1], [0], [0], [1], [0, 0, 1, 1], [], []>} : vector<8x8xbf16>, vector<8x32xbf16>, vector<8x32xf32> -> vector<8x32xf32>
    %591 = arith.addf %565, %590 : vector<8x32xf32>
    %592 = vector.extract_strided_slice %504 {offsets = [0, 24], sizes = [8, 8], strides = [1, 1]} : vector<8x32xf32> to vector<8x8xf32>
    %cst_176 = arith.constant 0.353553385 : f32
    %593 = vector.broadcast %cst_176 : f32 to vector<8x8xf32>
    %594 = arith.mulf %592, %593 : vector<8x8xf32>
    %595 = arith.truncf %594 : vector<8x8xf32> to vector<8x8xbf16>
    %596 = vector.extract_strided_slice %505 {offsets = [0, 24], sizes = [8, 8], strides = [1, 1]} : vector<8x32xf32> to vector<8x8xf32>
    %597 = arith.truncf %596 : vector<8x8xf32> to vector<8x8xbf16>
    %598 = vector.extract_strided_slice %506 {offsets = [0, 24], sizes = [8, 8], strides = [1, 1]} : vector<8x32xf32> to vector<8x8xf32>
    %599 = arith.truncf %598 : vector<8x8xf32> to vector<8x8xbf16>
    %cst_177 = arith.constant dense<0.000000e+00> : vector<8x8xf32>
    %600 = tpu.matmul %595, %597, %cst_177 {dimension_numbers = #tpu.dot_dimension_numbers<[1], [1], [0], [0], [0, 0, 1, 0], [], []>} : vector<8x8xbf16>, vector<8x8xbf16>, vector<8x8xf32> -> vector<8x8xf32>
    %601 = arith.addf %600, %512 : vector<8x8xf32>
    %cst_178 = arith.constant dense<0xFF800000> : vector<8xf32>
    %602 = vector.multi_reduction <maximumf>, %601, %cst_178 [1] : vector<8x8xf32> to vector<8xf32>
    %603 = vector.shape_cast %602 : vector<8xf32> to vector<8x1xf32>
    %604 = vector.broadcast %603 : vector<8x1xf32> to vector<8x8xf32>
    %605 = arith.subf %601, %604 : vector<8x8xf32>
    %606 = math.exp %605 : vector<8x8xf32>
    %cst_179 = arith.constant dense<0.000000e+00> : vector<8xf32>
    %607 = vector.multi_reduction <add>, %606, %cst_179 [1] : vector<8x8xf32> to vector<8xf32>
    %608 = vector.shape_cast %607 : vector<8xf32> to vector<8x1xf32>
    %609 = tpu.reciprocal %608 {approx = true} : vector<8x1xf32> -> vector<8x1xf32>
    %610 = vector.broadcast %609 : vector<8x1xf32> to vector<8x8xf32>
    %611 = arith.mulf %606, %610 : vector<8x8xf32>
    %612 = arith.truncf %611 : vector<8x8xf32> to vector<8x8xbf16>
    %cst_180 = arith.constant dense<0.000000e+00> : vector<8x8xf32>
    %613 = tpu.matmul %612, %599, %cst_180 {dimension_numbers = #tpu.dot_dimension_numbers<[1], [0], [0], [1], [0, 0, 1, 1], [], []>} : vector<8x8xbf16>, vector<8x8xbf16>, vector<8x8xf32> -> vector<8x8xf32>
    %614 = arith.truncf %613 : vector<8x8xf32> to vector<8x8xbf16>
    %615 = vector.extract_strided_slice %438 {offsets = [24, 0], sizes = [8, 32], strides = [1, 1]} : vector<32x32xbf16> to vector<8x32xbf16>
    %cst_181 = arith.constant dense<0.000000e+00> : vector<8x32xf32>
    %616 = tpu.matmul %614, %615, %cst_181 {dimension_numbers = #tpu.dot_dimension_numbers<[1], [0], [0], [1], [0, 0, 1, 1], [], []>} : vector<8x8xbf16>, vector<8x32xbf16>, vector<8x32xf32> -> vector<8x32xf32>
    %617 = arith.addf %591, %616 : vector<8x32xf32>
    %618 = arith.addf %434, %617 : vector<8x32xf32>
    %619 = vector.shape_cast %458 : vector<32xf32> to vector<1x32xf32>
    %620 = vector.broadcast %619 : vector<1x32xf32> to vector<8x32xf32>
    %621 = arith.addf %618, %620 : vector<8x32xf32>
    %cst_182 = arith.constant dense<0.000000e+00> : vector<8xf32>
    %622 = vector.multi_reduction <add>, %621, %cst_182 [1] : vector<8x32xf32> to vector<8xf32>
    %623 = vector.shape_cast %622 : vector<8xf32> to vector<8x1xf32>
    %cst_183 = arith.constant 3.200000e+01 : f32
    %624 = vector.broadcast %cst_183 : f32 to vector<8x1xf32>
    %625 = arith.divf %623, %624 : vector<8x1xf32>
    %626 = vector.broadcast %625 : vector<8x1xf32> to vector<8x32xf32>
    %627 = arith.subf %621, %626 : vector<8x32xf32>
    %628 = arith.mulf %627, %627 : vector<8x32xf32>
    %cst_184 = arith.constant dense<0.000000e+00> : vector<8xf32>
    %629 = vector.multi_reduction <add>, %628, %cst_184 [1] : vector<8x32xf32> to vector<8xf32>
    %630 = vector.shape_cast %629 : vector<8xf32> to vector<8x1xf32>
    %cst_185 = arith.constant 3.200000e+01 : f32
    %631 = vector.broadcast %cst_185 : f32 to vector<8x1xf32>
    %632 = arith.divf %630, %631 : vector<8x1xf32>
    %cst_186 = arith.constant 9.99999974E-6 : f32
    %633 = vector.broadcast %cst_186 : f32 to vector<8x1xf32>
    %634 = arith.addf %632, %633 : vector<8x1xf32>
    %635 = math.rsqrt %634 : vector<8x1xf32>
    %636 = vector.broadcast %635 : vector<8x1xf32> to vector<8x32xf32>
    %637 = arith.mulf %627, %636 : vector<8x32xf32>
    %638 = vector.shape_cast %460 : vector<32xf32> to vector<1x32xf32>
    %639 = vector.broadcast %638 : vector<1x32xf32> to vector<8x32xf32>
    %640 = arith.mulf %637, %639 : vector<8x32xf32>
    %641 = vector.shape_cast %462 : vector<32xf32> to vector<1x32xf32>
    %642 = vector.broadcast %641 : vector<1x32xf32> to vector<8x32xf32>
    %643 = arith.addf %640, %642 : vector<8x32xf32>
    %644 = arith.truncf %643 : vector<8x32xf32> to vector<8x32xbf16>
    %cst_187 = arith.constant dense<0.000000e+00> : vector<8x32xf32>
    %645 = tpu.matmul %644, %440, %cst_187 {dimension_numbers = #tpu.dot_dimension_numbers<[1], [0], [0], [1], [0, 0, 1, 1], [], []>} : vector<8x32xbf16>, vector<32x32xbf16>, vector<8x32xf32> -> vector<8x32xf32>
    %646 = vector.shape_cast %464 : vector<32xf32> to vector<1x32xf32>
    %647 = vector.broadcast %646 : vector<1x32xf32> to vector<8x32xf32>
    %648 = arith.addf %645, %647 : vector<8x32xf32>
    %649 = arith.truncf %424 : vector<8x32xf32> to vector<8x32xbf16>
    %cst_188 = arith.constant dense<0.000000e+00> : vector<8x64xf32>
    %650 = tpu.matmul %649, %442, %cst_188 {dimension_numbers = #tpu.dot_dimension_numbers<[1], [0], [0], [1], [0, 0, 1, 1], [], []>} : vector<8x32xbf16>, vector<32x64xbf16>, vector<8x64xf32> -> vector<8x64xf32>
    %651 = vector.shape_cast %466 : vector<64xf32> to vector<1x64xf32>
    %652 = vector.broadcast %651 : vector<1x64xf32> to vector<8x64xf32>
    %653 = arith.addf %650, %652 : vector<8x64xf32>
    %654 = vector.extract_strided_slice %653 {offsets = [0, 0], sizes = [8, 32], strides = [1, 1]} : vector<8x64xf32> to vector<8x32xf32>
    %655 = vector.extract_strided_slice %653 {offsets = [0, 32], sizes = [8, 32], strides = [1, 1]} : vector<8x64xf32> to vector<8x32xf32>
    %cst_189 = arith.constant 0.000000e+00 : f32
    %656 = vector.broadcast %cst_189 : f32 to vector<8x32xf32>
    %657 = vector.extract_strided_slice %648 {offsets = [0, 0], sizes = [8, 8], strides = [1, 1]} : vector<8x32xf32> to vector<8x8xf32>
    %cst_190 = arith.constant 0.353553385 : f32
    %658 = vector.broadcast %cst_190 : f32 to vector<8x8xf32>
    %659 = arith.mulf %657, %658 : vector<8x8xf32>
    %660 = arith.truncf %659 : vector<8x8xf32> to vector<8x8xbf16>
    %661 = vector.extract_strided_slice %654 {offsets = [0, 0], sizes = [8, 8], strides = [1, 1]} : vector<8x32xf32> to vector<8x8xf32>
    %662 = arith.truncf %661 : vector<8x8xf32> to vector<8x8xbf16>
    %663 = vector.extract_strided_slice %655 {offsets = [0, 0], sizes = [8, 8], strides = [1, 1]} : vector<8x32xf32> to vector<8x8xf32>
    %664 = arith.truncf %663 : vector<8x8xf32> to vector<8x8xbf16>
    %cst_191 = arith.constant dense<0.000000e+00> : vector<8x8xf32>
    %665 = tpu.matmul %660, %662, %cst_191 {dimension_numbers = #tpu.dot_dimension_numbers<[1], [1], [0], [0], [0, 0, 1, 0], [], []>} : vector<8x8xbf16>, vector<8x8xbf16>, vector<8x8xf32> -> vector<8x8xf32>
    %cst_192 = arith.constant dense<0xFF800000> : vector<8xf32>
    %666 = vector.multi_reduction <maximumf>, %665, %cst_192 [1] : vector<8x8xf32> to vector<8xf32>
    %667 = vector.shape_cast %666 : vector<8xf32> to vector<8x1xf32>
    %668 = vector.broadcast %667 : vector<8x1xf32> to vector<8x8xf32>
    %669 = arith.subf %665, %668 : vector<8x8xf32>
    %670 = math.exp %669 : vector<8x8xf32>
    %cst_193 = arith.constant dense<0.000000e+00> : vector<8xf32>
    %671 = vector.multi_reduction <add>, %670, %cst_193 [1] : vector<8x8xf32> to vector<8xf32>
    %672 = vector.shape_cast %671 : vector<8xf32> to vector<8x1xf32>
    %673 = tpu.reciprocal %672 {approx = true} : vector<8x1xf32> -> vector<8x1xf32>
    %674 = vector.broadcast %673 : vector<8x1xf32> to vector<8x8xf32>
    %675 = arith.mulf %670, %674 : vector<8x8xf32>
    %676 = arith.truncf %675 : vector<8x8xf32> to vector<8x8xbf16>
    %cst_194 = arith.constant dense<0.000000e+00> : vector<8x8xf32>
    %677 = tpu.matmul %676, %664, %cst_194 {dimension_numbers = #tpu.dot_dimension_numbers<[1], [0], [0], [1], [0, 0, 1, 1], [], []>} : vector<8x8xbf16>, vector<8x8xbf16>, vector<8x8xf32> -> vector<8x8xf32>
    %678 = arith.truncf %677 : vector<8x8xf32> to vector<8x8xbf16>
    %679 = vector.extract_strided_slice %444 {offsets = [0, 0], sizes = [8, 32], strides = [1, 1]} : vector<32x32xbf16> to vector<8x32xbf16>
    %cst_195 = arith.constant dense<0.000000e+00> : vector<8x32xf32>
    %680 = tpu.matmul %678, %679, %cst_195 {dimension_numbers = #tpu.dot_dimension_numbers<[1], [0], [0], [1], [0, 0, 1, 1], [], []>} : vector<8x8xbf16>, vector<8x32xbf16>, vector<8x32xf32> -> vector<8x32xf32>
    %681 = arith.addf %656, %680 : vector<8x32xf32>
    %682 = vector.extract_strided_slice %648 {offsets = [0, 8], sizes = [8, 8], strides = [1, 1]} : vector<8x32xf32> to vector<8x8xf32>
    %cst_196 = arith.constant 0.353553385 : f32
    %683 = vector.broadcast %cst_196 : f32 to vector<8x8xf32>
    %684 = arith.mulf %682, %683 : vector<8x8xf32>
    %685 = arith.truncf %684 : vector<8x8xf32> to vector<8x8xbf16>
    %686 = vector.extract_strided_slice %654 {offsets = [0, 8], sizes = [8, 8], strides = [1, 1]} : vector<8x32xf32> to vector<8x8xf32>
    %687 = arith.truncf %686 : vector<8x8xf32> to vector<8x8xbf16>
    %688 = vector.extract_strided_slice %655 {offsets = [0, 8], sizes = [8, 8], strides = [1, 1]} : vector<8x32xf32> to vector<8x8xf32>
    %689 = arith.truncf %688 : vector<8x8xf32> to vector<8x8xbf16>
    %cst_197 = arith.constant dense<0.000000e+00> : vector<8x8xf32>
    %690 = tpu.matmul %685, %687, %cst_197 {dimension_numbers = #tpu.dot_dimension_numbers<[1], [1], [0], [0], [0, 0, 1, 0], [], []>} : vector<8x8xbf16>, vector<8x8xbf16>, vector<8x8xf32> -> vector<8x8xf32>
    %cst_198 = arith.constant dense<0xFF800000> : vector<8xf32>
    %691 = vector.multi_reduction <maximumf>, %690, %cst_198 [1] : vector<8x8xf32> to vector<8xf32>
    %692 = vector.shape_cast %691 : vector<8xf32> to vector<8x1xf32>
    %693 = vector.broadcast %692 : vector<8x1xf32> to vector<8x8xf32>
    %694 = arith.subf %690, %693 : vector<8x8xf32>
    %695 = math.exp %694 : vector<8x8xf32>
    %cst_199 = arith.constant dense<0.000000e+00> : vector<8xf32>
    %696 = vector.multi_reduction <add>, %695, %cst_199 [1] : vector<8x8xf32> to vector<8xf32>
    %697 = vector.shape_cast %696 : vector<8xf32> to vector<8x1xf32>
    %698 = tpu.reciprocal %697 {approx = true} : vector<8x1xf32> -> vector<8x1xf32>
    %699 = vector.broadcast %698 : vector<8x1xf32> to vector<8x8xf32>
    %700 = arith.mulf %695, %699 : vector<8x8xf32>
    %701 = arith.truncf %700 : vector<8x8xf32> to vector<8x8xbf16>
    %cst_200 = arith.constant dense<0.000000e+00> : vector<8x8xf32>
    %702 = tpu.matmul %701, %689, %cst_200 {dimension_numbers = #tpu.dot_dimension_numbers<[1], [0], [0], [1], [0, 0, 1, 1], [], []>} : vector<8x8xbf16>, vector<8x8xbf16>, vector<8x8xf32> -> vector<8x8xf32>
    %703 = arith.truncf %702 : vector<8x8xf32> to vector<8x8xbf16>
    %704 = vector.extract_strided_slice %444 {offsets = [8, 0], sizes = [8, 32], strides = [1, 1]} : vector<32x32xbf16> to vector<8x32xbf16>
    %cst_201 = arith.constant dense<0.000000e+00> : vector<8x32xf32>
    %705 = tpu.matmul %703, %704, %cst_201 {dimension_numbers = #tpu.dot_dimension_numbers<[1], [0], [0], [1], [0, 0, 1, 1], [], []>} : vector<8x8xbf16>, vector<8x32xbf16>, vector<8x32xf32> -> vector<8x32xf32>
    %706 = arith.addf %681, %705 : vector<8x32xf32>
    %707 = vector.extract_strided_slice %648 {offsets = [0, 16], sizes = [8, 8], strides = [1, 1]} : vector<8x32xf32> to vector<8x8xf32>
    %cst_202 = arith.constant 0.353553385 : f32
    %708 = vector.broadcast %cst_202 : f32 to vector<8x8xf32>
    %709 = arith.mulf %707, %708 : vector<8x8xf32>
    %710 = arith.truncf %709 : vector<8x8xf32> to vector<8x8xbf16>
    %711 = vector.extract_strided_slice %654 {offsets = [0, 16], sizes = [8, 8], strides = [1, 1]} : vector<8x32xf32> to vector<8x8xf32>
    %712 = arith.truncf %711 : vector<8x8xf32> to vector<8x8xbf16>
    %713 = vector.extract_strided_slice %655 {offsets = [0, 16], sizes = [8, 8], strides = [1, 1]} : vector<8x32xf32> to vector<8x8xf32>
    %714 = arith.truncf %713 : vector<8x8xf32> to vector<8x8xbf16>
    %cst_203 = arith.constant dense<0.000000e+00> : vector<8x8xf32>
    %715 = tpu.matmul %710, %712, %cst_203 {dimension_numbers = #tpu.dot_dimension_numbers<[1], [1], [0], [0], [0, 0, 1, 0], [], []>} : vector<8x8xbf16>, vector<8x8xbf16>, vector<8x8xf32> -> vector<8x8xf32>
    %cst_204 = arith.constant dense<0xFF800000> : vector<8xf32>
    %716 = vector.multi_reduction <maximumf>, %715, %cst_204 [1] : vector<8x8xf32> to vector<8xf32>
    %717 = vector.shape_cast %716 : vector<8xf32> to vector<8x1xf32>
    %718 = vector.broadcast %717 : vector<8x1xf32> to vector<8x8xf32>
    %719 = arith.subf %715, %718 : vector<8x8xf32>
    %720 = math.exp %719 : vector<8x8xf32>
    %cst_205 = arith.constant dense<0.000000e+00> : vector<8xf32>
    %721 = vector.multi_reduction <add>, %720, %cst_205 [1] : vector<8x8xf32> to vector<8xf32>
    %722 = vector.shape_cast %721 : vector<8xf32> to vector<8x1xf32>
    %723 = tpu.reciprocal %722 {approx = true} : vector<8x1xf32> -> vector<8x1xf32>
    %724 = vector.broadcast %723 : vector<8x1xf32> to vector<8x8xf32>
    %725 = arith.mulf %720, %724 : vector<8x8xf32>
    %726 = arith.truncf %725 : vector<8x8xf32> to vector<8x8xbf16>
    %cst_206 = arith.constant dense<0.000000e+00> : vector<8x8xf32>
    %727 = tpu.matmul %726, %714, %cst_206 {dimension_numbers = #tpu.dot_dimension_numbers<[1], [0], [0], [1], [0, 0, 1, 1], [], []>} : vector<8x8xbf16>, vector<8x8xbf16>, vector<8x8xf32> -> vector<8x8xf32>
    %728 = arith.truncf %727 : vector<8x8xf32> to vector<8x8xbf16>
    %729 = vector.extract_strided_slice %444 {offsets = [16, 0], sizes = [8, 32], strides = [1, 1]} : vector<32x32xbf16> to vector<8x32xbf16>
    %cst_207 = arith.constant dense<0.000000e+00> : vector<8x32xf32>
    %730 = tpu.matmul %728, %729, %cst_207 {dimension_numbers = #tpu.dot_dimension_numbers<[1], [0], [0], [1], [0, 0, 1, 1], [], []>} : vector<8x8xbf16>, vector<8x32xbf16>, vector<8x32xf32> -> vector<8x32xf32>
    %731 = arith.addf %706, %730 : vector<8x32xf32>
    %732 = vector.extract_strided_slice %648 {offsets = [0, 24], sizes = [8, 8], strides = [1, 1]} : vector<8x32xf32> to vector<8x8xf32>
    %cst_208 = arith.constant 0.353553385 : f32
    %733 = vector.broadcast %cst_208 : f32 to vector<8x8xf32>
    %734 = arith.mulf %732, %733 : vector<8x8xf32>
    %735 = arith.truncf %734 : vector<8x8xf32> to vector<8x8xbf16>
    %736 = vector.extract_strided_slice %654 {offsets = [0, 24], sizes = [8, 8], strides = [1, 1]} : vector<8x32xf32> to vector<8x8xf32>
    %737 = arith.truncf %736 : vector<8x8xf32> to vector<8x8xbf16>
    %738 = vector.extract_strided_slice %655 {offsets = [0, 24], sizes = [8, 8], strides = [1, 1]} : vector<8x32xf32> to vector<8x8xf32>
    %739 = arith.truncf %738 : vector<8x8xf32> to vector<8x8xbf16>
    %cst_209 = arith.constant dense<0.000000e+00> : vector<8x8xf32>
    %740 = tpu.matmul %735, %737, %cst_209 {dimension_numbers = #tpu.dot_dimension_numbers<[1], [1], [0], [0], [0, 0, 1, 0], [], []>} : vector<8x8xbf16>, vector<8x8xbf16>, vector<8x8xf32> -> vector<8x8xf32>
    %cst_210 = arith.constant dense<0xFF800000> : vector<8xf32>
    %741 = vector.multi_reduction <maximumf>, %740, %cst_210 [1] : vector<8x8xf32> to vector<8xf32>
    %742 = vector.shape_cast %741 : vector<8xf32> to vector<8x1xf32>
    %743 = vector.broadcast %742 : vector<8x1xf32> to vector<8x8xf32>
    %744 = arith.subf %740, %743 : vector<8x8xf32>
    %745 = math.exp %744 : vector<8x8xf32>
    %cst_211 = arith.constant dense<0.000000e+00> : vector<8xf32>
    %746 = vector.multi_reduction <add>, %745, %cst_211 [1] : vector<8x8xf32> to vector<8xf32>
    %747 = vector.shape_cast %746 : vector<8xf32> to vector<8x1xf32>
    %748 = tpu.reciprocal %747 {approx = true} : vector<8x1xf32> -> vector<8x1xf32>
    %749 = vector.broadcast %748 : vector<8x1xf32> to vector<8x8xf32>
    %750 = arith.mulf %745, %749 : vector<8x8xf32>
    %751 = arith.truncf %750 : vector<8x8xf32> to vector<8x8xbf16>
    %cst_212 = arith.constant dense<0.000000e+00> : vector<8x8xf32>
    %752 = tpu.matmul %751, %739, %cst_212 {dimension_numbers = #tpu.dot_dimension_numbers<[1], [0], [0], [1], [0, 0, 1, 1], [], []>} : vector<8x8xbf16>, vector<8x8xbf16>, vector<8x8xf32> -> vector<8x8xf32>
    %753 = arith.truncf %752 : vector<8x8xf32> to vector<8x8xbf16>
    %754 = vector.extract_strided_slice %444 {offsets = [24, 0], sizes = [8, 32], strides = [1, 1]} : vector<32x32xbf16> to vector<8x32xbf16>
    %cst_213 = arith.constant dense<0.000000e+00> : vector<8x32xf32>
    %755 = tpu.matmul %753, %754, %cst_213 {dimension_numbers = #tpu.dot_dimension_numbers<[1], [0], [0], [1], [0, 0, 1, 1], [], []>} : vector<8x8xbf16>, vector<8x32xbf16>, vector<8x32xf32> -> vector<8x32xf32>
    %756 = arith.addf %731, %755 : vector<8x32xf32>
    %757 = arith.addf %621, %756 : vector<8x32xf32>
    %758 = vector.shape_cast %468 : vector<32xf32> to vector<1x32xf32>
    %759 = vector.broadcast %758 : vector<1x32xf32> to vector<8x32xf32>
    %760 = arith.addf %757, %759 : vector<8x32xf32>
    %cst_214 = arith.constant dense<0.000000e+00> : vector<8xf32>
    %761 = vector.multi_reduction <add>, %760, %cst_214 [1] : vector<8x32xf32> to vector<8xf32>
    %762 = vector.shape_cast %761 : vector<8xf32> to vector<8x1xf32>
    %cst_215 = arith.constant 3.200000e+01 : f32
    %763 = vector.broadcast %cst_215 : f32 to vector<8x1xf32>
    %764 = arith.divf %762, %763 : vector<8x1xf32>
    %765 = vector.broadcast %764 : vector<8x1xf32> to vector<8x32xf32>
    %766 = arith.subf %760, %765 : vector<8x32xf32>
    %767 = arith.mulf %766, %766 : vector<8x32xf32>
    %cst_216 = arith.constant dense<0.000000e+00> : vector<8xf32>
    %768 = vector.multi_reduction <add>, %767, %cst_216 [1] : vector<8x32xf32> to vector<8xf32>
    %769 = vector.shape_cast %768 : vector<8xf32> to vector<8x1xf32>
    %cst_217 = arith.constant 3.200000e+01 : f32
    %770 = vector.broadcast %cst_217 : f32 to vector<8x1xf32>
    %771 = arith.divf %769, %770 : vector<8x1xf32>
    %cst_218 = arith.constant 9.99999974E-6 : f32
    %772 = vector.broadcast %cst_218 : f32 to vector<8x1xf32>
    %773 = arith.addf %771, %772 : vector<8x1xf32>
    %774 = math.rsqrt %773 : vector<8x1xf32>
    %775 = vector.broadcast %774 : vector<8x1xf32> to vector<8x32xf32>
    %776 = arith.mulf %766, %775 : vector<8x32xf32>
    %777 = vector.shape_cast %470 : vector<32xf32> to vector<1x32xf32>
    %778 = vector.broadcast %777 : vector<1x32xf32> to vector<8x32xf32>
    %779 = arith.mulf %776, %778 : vector<8x32xf32>
    %780 = vector.shape_cast %472 : vector<32xf32> to vector<1x32xf32>
    %781 = vector.broadcast %780 : vector<1x32xf32> to vector<8x32xf32>
    %782 = arith.addf %779, %781 : vector<8x32xf32>
    %783 = arith.truncf %782 : vector<8x32xf32> to vector<8x32xbf16>
    %cst_219 = arith.constant dense<0.000000e+00> : vector<8x128xf32>
    %784 = tpu.matmul %783, %446, %cst_219 {dimension_numbers = #tpu.dot_dimension_numbers<[1], [0], [0], [1], [0, 0, 1, 1], [], []>} : vector<8x32xbf16>, vector<32x128xbf16>, vector<8x128xf32> -> vector<8x128xf32>
    %785 = vector.shape_cast %474 : vector<128xf32> to vector<1x128xf32>
    %786 = vector.broadcast %785 : vector<1x128xf32> to vector<8x128xf32>
    %787 = arith.addf %784, %786 : vector<8x128xf32>
    %cst_220 = arith.constant 5.000000e-01 : f32
    %788 = vector.broadcast %cst_220 : f32 to vector<8x128xf32>
    %789 = arith.mulf %788, %787 : vector<8x128xf32>
    %cst_221 = arith.constant 4.471500e-02 : f32
    %790 = vector.broadcast %cst_221 : f32 to vector<8x128xf32>
    %791 = arith.mulf %790, %787 : vector<8x128xf32>
    %792 = arith.mulf %791, %787 : vector<8x128xf32>
    %793 = arith.mulf %792, %787 : vector<8x128xf32>
    %794 = arith.addf %787, %793 : vector<8x128xf32>
    %cst_222 = arith.constant 0.797884583 : f32
    %795 = vector.broadcast %cst_222 : f32 to vector<8x128xf32>
    %796 = arith.mulf %795, %794 : vector<8x128xf32>
    %797 = math.tanh %796 : vector<8x128xf32>
    %cst_223 = arith.constant 1.000000e+00 : f32
    %798 = vector.broadcast %cst_223 : f32 to vector<8x128xf32>
    %799 = arith.addf %798, %797 : vector<8x128xf32>
    %800 = arith.mulf %789, %799 : vector<8x128xf32>
    %801 = arith.truncf %800 : vector<8x128xf32> to vector<8x128xbf16>
    %cst_224 = arith.constant dense<0.000000e+00> : vector<8x32xf32>
    %802 = tpu.matmul %801, %448, %cst_224 {dimension_numbers = #tpu.dot_dimension_numbers<[1], [0], [0], [1], [0, 0, 1, 1], [], []>} : vector<8x128xbf16>, vector<128x32xbf16>, vector<8x32xf32> -> vector<8x32xf32>
    %803 = vector.shape_cast %476 : vector<32xf32> to vector<1x32xf32>
    %804 = vector.broadcast %803 : vector<1x32xf32> to vector<8x32xf32>
    %805 = arith.addf %802, %804 : vector<8x32xf32>
    %806 = arith.addf %760, %805 : vector<8x32xf32>
    %c1_225 = arith.constant 1 : index
    %c0_226 = arith.constant 0 : index
    %c0_227 = arith.constant 0 : index
    %807 = vector.load %arg11[%c1_225, %c0_226, %c0_227] : memref<2x32x96xbf16, #tpu.memory_space<vmem>>, vector<1x32x96xbf16>
    %808 = vector.shape_cast %807 : vector<1x32x96xbf16> to vector<32x96xbf16>
    %c1_228 = arith.constant 1 : index
    %c0_229 = arith.constant 0 : index
    %c0_230 = arith.constant 0 : index
    %809 = vector.load %arg12[%c1_228, %c0_229, %c0_230] : memref<2x32x32xbf16, #tpu.memory_space<vmem>>, vector<1x32x32xbf16>
    %810 = vector.shape_cast %809 : vector<1x32x32xbf16> to vector<32x32xbf16>
    %c1_231 = arith.constant 1 : index
    %c0_232 = arith.constant 0 : index
    %c0_233 = arith.constant 0 : index
    %811 = vector.load %arg13[%c1_231, %c0_232, %c0_233] : memref<2x32x32xbf16, #tpu.memory_space<vmem>>, vector<1x32x32xbf16>
    %812 = vector.shape_cast %811 : vector<1x32x32xbf16> to vector<32x32xbf16>
    %c1_234 = arith.constant 1 : index
    %c0_235 = arith.constant 0 : index
    %c0_236 = arith.constant 0 : index
    %813 = vector.load %arg14[%c1_234, %c0_235, %c0_236] : memref<2x32x64xbf16, #tpu.memory_space<vmem>>, vector<1x32x64xbf16>
    %814 = vector.shape_cast %813 : vector<1x32x64xbf16> to vector<32x64xbf16>
    %c1_237 = arith.constant 1 : index
    %c0_238 = arith.constant 0 : index
    %c0_239 = arith.constant 0 : index
    %815 = vector.load %arg15[%c1_237, %c0_238, %c0_239] : memref<2x32x32xbf16, #tpu.memory_space<vmem>>, vector<1x32x32xbf16>
    %816 = vector.shape_cast %815 : vector<1x32x32xbf16> to vector<32x32xbf16>
    %c1_240 = arith.constant 1 : index
    %c0_241 = arith.constant 0 : index
    %c0_242 = arith.constant 0 : index
    %817 = vector.load %arg16[%c1_240, %c0_241, %c0_242] : memref<2x32x128xbf16, #tpu.memory_space<vmem>>, vector<1x32x128xbf16>
    %818 = vector.shape_cast %817 : vector<1x32x128xbf16> to vector<32x128xbf16>
    %c1_243 = arith.constant 1 : index
    %c0_244 = arith.constant 0 : index
    %c0_245 = arith.constant 0 : index
    %819 = vector.load %arg17[%c1_243, %c0_244, %c0_245] : memref<2x128x32xbf16, #tpu.memory_space<vmem>>, vector<1x128x32xbf16>
    %820 = vector.shape_cast %819 : vector<1x128x32xbf16> to vector<128x32xbf16>
    %c1_246 = arith.constant 1 : index
    %c0_247 = arith.constant 0 : index
    %c0_248 = arith.constant 0 : index
    %821 = vector.load %arg18[%c1_246, %c0_247, %c0_248] : memref<2x13x128xf32, #tpu.memory_space<vmem>>, vector<1x13x128xf32>
    %822 = vector.shape_cast %821 : vector<1x13x128xf32> to vector<13x128xf32>
    %823 = vector.extract_strided_slice %822 {offsets = [0, 0], sizes = [1, 32], strides = [1, 1]} : vector<13x128xf32> to vector<1x32xf32>
    %824 = vector.shape_cast %823 : vector<1x32xf32> to vector<32xf32>
    %825 = vector.extract_strided_slice %822 {offsets = [1, 0], sizes = [1, 32], strides = [1, 1]} : vector<13x128xf32> to vector<1x32xf32>
    %826 = vector.shape_cast %825 : vector<1x32xf32> to vector<32xf32>
    %827 = vector.extract_strided_slice %822 {offsets = [2, 0], sizes = [1, 96], strides = [1, 1]} : vector<13x128xf32> to vector<1x96xf32>
    %828 = vector.shape_cast %827 : vector<1x96xf32> to vector<96xf32>
    %829 = vector.extract_strided_slice %822 {offsets = [3, 0], sizes = [1, 32], strides = [1, 1]} : vector<13x128xf32> to vector<1x32xf32>
    %830 = vector.shape_cast %829 : vector<1x32xf32> to vector<32xf32>
    %831 = vector.extract_strided_slice %822 {offsets = [4, 0], sizes = [1, 32], strides = [1, 1]} : vector<13x128xf32> to vector<1x32xf32>
    %832 = vector.shape_cast %831 : vector<1x32xf32> to vector<32xf32>
    %833 = vector.extract_strided_slice %822 {offsets = [5, 0], sizes = [1, 32], strides = [1, 1]} : vector<13x128xf32> to vector<1x32xf32>
    %834 = vector.shape_cast %833 : vector<1x32xf32> to vector<32xf32>
    %835 = vector.extract_strided_slice %822 {offsets = [6, 0], sizes = [1, 32], strides = [1, 1]} : vector<13x128xf32> to vector<1x32xf32>
    %836 = vector.shape_cast %835 : vector<1x32xf32> to vector<32xf32>
    %837 = vector.extract_strided_slice %822 {offsets = [7, 0], sizes = [1, 64], strides = [1, 1]} : vector<13x128xf32> to vector<1x64xf32>
    %838 = vector.shape_cast %837 : vector<1x64xf32> to vector<64xf32>
    %839 = vector.extract_strided_slice %822 {offsets = [8, 0], sizes = [1, 32], strides = [1, 1]} : vector<13x128xf32> to vector<1x32xf32>
    %840 = vector.shape_cast %839 : vector<1x32xf32> to vector<32xf32>
    %841 = vector.extract_strided_slice %822 {offsets = [9, 0], sizes = [1, 32], strides = [1, 1]} : vector<13x128xf32> to vector<1x32xf32>
    %842 = vector.shape_cast %841 : vector<1x32xf32> to vector<32xf32>
    %843 = vector.extract_strided_slice %822 {offsets = [10, 0], sizes = [1, 32], strides = [1, 1]} : vector<13x128xf32> to vector<1x32xf32>
    %844 = vector.shape_cast %843 : vector<1x32xf32> to vector<32xf32>
    %845 = vector.extract_strided_slice %822 {offsets = [11, 0], sizes = [1, 128], strides = [1, 1]} : vector<13x128xf32> to vector<1x128xf32>
    %846 = vector.shape_cast %845 : vector<1x128xf32> to vector<128xf32>
    %847 = vector.extract_strided_slice %822 {offsets = [12, 0], sizes = [1, 32], strides = [1, 1]} : vector<13x128xf32> to vector<1x32xf32>
    %848 = vector.shape_cast %847 : vector<1x32xf32> to vector<32xf32>
    %cst_249 = arith.constant dense<0.000000e+00> : vector<8xf32>
    %849 = vector.multi_reduction <add>, %806, %cst_249 [1] : vector<8x32xf32> to vector<8xf32>
    %850 = vector.shape_cast %849 : vector<8xf32> to vector<8x1xf32>
    %cst_250 = arith.constant 3.200000e+01 : f32
    %851 = vector.broadcast %cst_250 : f32 to vector<8x1xf32>
    %852 = arith.divf %850, %851 : vector<8x1xf32>
    %853 = vector.broadcast %852 : vector<8x1xf32> to vector<8x32xf32>
    %854 = arith.subf %806, %853 : vector<8x32xf32>
    %855 = arith.mulf %854, %854 : vector<8x32xf32>
    %cst_251 = arith.constant dense<0.000000e+00> : vector<8xf32>
    %856 = vector.multi_reduction <add>, %855, %cst_251 [1] : vector<8x32xf32> to vector<8xf32>
    %857 = vector.shape_cast %856 : vector<8xf32> to vector<8x1xf32>
    %cst_252 = arith.constant 3.200000e+01 : f32
    %858 = vector.broadcast %cst_252 : f32 to vector<8x1xf32>
    %859 = arith.divf %857, %858 : vector<8x1xf32>
    %cst_253 = arith.constant 9.99999974E-6 : f32
    %860 = vector.broadcast %cst_253 : f32 to vector<8x1xf32>
    %861 = arith.addf %859, %860 : vector<8x1xf32>
    %862 = math.rsqrt %861 : vector<8x1xf32>
    %863 = vector.broadcast %862 : vector<8x1xf32> to vector<8x32xf32>
    %864 = arith.mulf %854, %863 : vector<8x32xf32>
    %865 = vector.shape_cast %824 : vector<32xf32> to vector<1x32xf32>
    %866 = vector.broadcast %865 : vector<1x32xf32> to vector<8x32xf32>
    %867 = arith.mulf %864, %866 : vector<8x32xf32>
    %868 = vector.shape_cast %826 : vector<32xf32> to vector<1x32xf32>
    %869 = vector.broadcast %868 : vector<1x32xf32> to vector<8x32xf32>
    %870 = arith.addf %867, %869 : vector<8x32xf32>
    %871 = arith.truncf %870 : vector<8x32xf32> to vector<8x32xbf16>
    %cst_254 = arith.constant dense<0.000000e+00> : vector<8x96xf32>
    %872 = tpu.matmul %871, %808, %cst_254 {dimension_numbers = #tpu.dot_dimension_numbers<[1], [0], [0], [1], [0, 0, 1, 1], [], []>} : vector<8x32xbf16>, vector<32x96xbf16>, vector<8x96xf32> -> vector<8x96xf32>
    %873 = vector.shape_cast %828 : vector<96xf32> to vector<1x96xf32>
    %874 = vector.broadcast %873 : vector<1x96xf32> to vector<8x96xf32>
    %875 = arith.addf %872, %874 : vector<8x96xf32>
    %876 = vector.extract_strided_slice %875 {offsets = [0, 0], sizes = [8, 32], strides = [1, 1]} : vector<8x96xf32> to vector<8x32xf32>
    %877 = vector.extract_strided_slice %875 {offsets = [0, 32], sizes = [8, 32], strides = [1, 1]} : vector<8x96xf32> to vector<8x32xf32>
    %878 = vector.extract_strided_slice %875 {offsets = [0, 64], sizes = [8, 32], strides = [1, 1]} : vector<8x96xf32> to vector<8x32xf32>
    %879 = tpu.iota {dimensions = array<i32: 0>} : vector<8x8xi32>
    %880 = tpu.iota {dimensions = array<i32: 1>} : vector<8x8xi32>
    %881 = arith.cmpi sle, %880, %879 : vector<8x8xi32>
    %cst_255 = arith.constant 0.000000e+00 : f32
    %cst_256 = arith.constant -1.000000e+30 : f32
    %882 = vector.broadcast %cst_255 : f32 to vector<8x8xf32>
    %883 = vector.broadcast %cst_256 : f32 to vector<8x8xf32>
    %884 = arith.select %881, %882, %883 : vector<8x8xi1>, vector<8x8xf32>
    %cst_257 = arith.constant 0.000000e+00 : f32
    %885 = vector.broadcast %cst_257 : f32 to vector<8x32xf32>
    %886 = vector.extract_strided_slice %876 {offsets = [0, 0], sizes = [8, 8], strides = [1, 1]} : vector<8x32xf32> to vector<8x8xf32>
    %cst_258 = arith.constant 0.353553385 : f32
    %887 = vector.broadcast %cst_258 : f32 to vector<8x8xf32>
    %888 = arith.mulf %886, %887 : vector<8x8xf32>
    %889 = arith.truncf %888 : vector<8x8xf32> to vector<8x8xbf16>
    %890 = vector.extract_strided_slice %877 {offsets = [0, 0], sizes = [8, 8], strides = [1, 1]} : vector<8x32xf32> to vector<8x8xf32>
    %891 = arith.truncf %890 : vector<8x8xf32> to vector<8x8xbf16>
    %892 = vector.extract_strided_slice %878 {offsets = [0, 0], sizes = [8, 8], strides = [1, 1]} : vector<8x32xf32> to vector<8x8xf32>
    %893 = arith.truncf %892 : vector<8x8xf32> to vector<8x8xbf16>
    %cst_259 = arith.constant dense<0.000000e+00> : vector<8x8xf32>
    %894 = tpu.matmul %889, %891, %cst_259 {dimension_numbers = #tpu.dot_dimension_numbers<[1], [1], [0], [0], [0, 0, 1, 0], [], []>} : vector<8x8xbf16>, vector<8x8xbf16>, vector<8x8xf32> -> vector<8x8xf32>
    %895 = arith.addf %894, %884 : vector<8x8xf32>
    %cst_260 = arith.constant dense<0xFF800000> : vector<8xf32>
    %896 = vector.multi_reduction <maximumf>, %895, %cst_260 [1] : vector<8x8xf32> to vector<8xf32>
    %897 = vector.shape_cast %896 : vector<8xf32> to vector<8x1xf32>
    %898 = vector.broadcast %897 : vector<8x1xf32> to vector<8x8xf32>
    %899 = arith.subf %895, %898 : vector<8x8xf32>
    %900 = math.exp %899 : vector<8x8xf32>
    %cst_261 = arith.constant dense<0.000000e+00> : vector<8xf32>
    %901 = vector.multi_reduction <add>, %900, %cst_261 [1] : vector<8x8xf32> to vector<8xf32>
    %902 = vector.shape_cast %901 : vector<8xf32> to vector<8x1xf32>
    %903 = tpu.reciprocal %902 {approx = true} : vector<8x1xf32> -> vector<8x1xf32>
    %904 = vector.broadcast %903 : vector<8x1xf32> to vector<8x8xf32>
    %905 = arith.mulf %900, %904 : vector<8x8xf32>
    %906 = arith.truncf %905 : vector<8x8xf32> to vector<8x8xbf16>
    %cst_262 = arith.constant dense<0.000000e+00> : vector<8x8xf32>
    %907 = tpu.matmul %906, %893, %cst_262 {dimension_numbers = #tpu.dot_dimension_numbers<[1], [0], [0], [1], [0, 0, 1, 1], [], []>} : vector<8x8xbf16>, vector<8x8xbf16>, vector<8x8xf32> -> vector<8x8xf32>
    %908 = arith.truncf %907 : vector<8x8xf32> to vector<8x8xbf16>
    %909 = vector.extract_strided_slice %810 {offsets = [0, 0], sizes = [8, 32], strides = [1, 1]} : vector<32x32xbf16> to vector<8x32xbf16>
    %cst_263 = arith.constant dense<0.000000e+00> : vector<8x32xf32>
    %910 = tpu.matmul %908, %909, %cst_263 {dimension_numbers = #tpu.dot_dimension_numbers<[1], [0], [0], [1], [0, 0, 1, 1], [], []>} : vector<8x8xbf16>, vector<8x32xbf16>, vector<8x32xf32> -> vector<8x32xf32>
    %911 = arith.addf %885, %910 : vector<8x32xf32>
    %912 = vector.extract_strided_slice %876 {offsets = [0, 8], sizes = [8, 8], strides = [1, 1]} : vector<8x32xf32> to vector<8x8xf32>
    %cst_264 = arith.constant 0.353553385 : f32
    %913 = vector.broadcast %cst_264 : f32 to vector<8x8xf32>
    %914 = arith.mulf %912, %913 : vector<8x8xf32>
    %915 = arith.truncf %914 : vector<8x8xf32> to vector<8x8xbf16>
    %916 = vector.extract_strided_slice %877 {offsets = [0, 8], sizes = [8, 8], strides = [1, 1]} : vector<8x32xf32> to vector<8x8xf32>
    %917 = arith.truncf %916 : vector<8x8xf32> to vector<8x8xbf16>
    %918 = vector.extract_strided_slice %878 {offsets = [0, 8], sizes = [8, 8], strides = [1, 1]} : vector<8x32xf32> to vector<8x8xf32>
    %919 = arith.truncf %918 : vector<8x8xf32> to vector<8x8xbf16>
    %cst_265 = arith.constant dense<0.000000e+00> : vector<8x8xf32>
    %920 = tpu.matmul %915, %917, %cst_265 {dimension_numbers = #tpu.dot_dimension_numbers<[1], [1], [0], [0], [0, 0, 1, 0], [], []>} : vector<8x8xbf16>, vector<8x8xbf16>, vector<8x8xf32> -> vector<8x8xf32>
    %921 = arith.addf %920, %884 : vector<8x8xf32>
    %cst_266 = arith.constant dense<0xFF800000> : vector<8xf32>
    %922 = vector.multi_reduction <maximumf>, %921, %cst_266 [1] : vector<8x8xf32> to vector<8xf32>
    %923 = vector.shape_cast %922 : vector<8xf32> to vector<8x1xf32>
    %924 = vector.broadcast %923 : vector<8x1xf32> to vector<8x8xf32>
    %925 = arith.subf %921, %924 : vector<8x8xf32>
    %926 = math.exp %925 : vector<8x8xf32>
    %cst_267 = arith.constant dense<0.000000e+00> : vector<8xf32>
    %927 = vector.multi_reduction <add>, %926, %cst_267 [1] : vector<8x8xf32> to vector<8xf32>
    %928 = vector.shape_cast %927 : vector<8xf32> to vector<8x1xf32>
    %929 = tpu.reciprocal %928 {approx = true} : vector<8x1xf32> -> vector<8x1xf32>
    %930 = vector.broadcast %929 : vector<8x1xf32> to vector<8x8xf32>
    %931 = arith.mulf %926, %930 : vector<8x8xf32>
    %932 = arith.truncf %931 : vector<8x8xf32> to vector<8x8xbf16>
    %cst_268 = arith.constant dense<0.000000e+00> : vector<8x8xf32>
    %933 = tpu.matmul %932, %919, %cst_268 {dimension_numbers = #tpu.dot_dimension_numbers<[1], [0], [0], [1], [0, 0, 1, 1], [], []>} : vector<8x8xbf16>, vector<8x8xbf16>, vector<8x8xf32> -> vector<8x8xf32>
    %934 = arith.truncf %933 : vector<8x8xf32> to vector<8x8xbf16>
    %935 = vector.extract_strided_slice %810 {offsets = [8, 0], sizes = [8, 32], strides = [1, 1]} : vector<32x32xbf16> to vector<8x32xbf16>
    %cst_269 = arith.constant dense<0.000000e+00> : vector<8x32xf32>
    %936 = tpu.matmul %934, %935, %cst_269 {dimension_numbers = #tpu.dot_dimension_numbers<[1], [0], [0], [1], [0, 0, 1, 1], [], []>} : vector<8x8xbf16>, vector<8x32xbf16>, vector<8x32xf32> -> vector<8x32xf32>
    %937 = arith.addf %911, %936 : vector<8x32xf32>
    %938 = vector.extract_strided_slice %876 {offsets = [0, 16], sizes = [8, 8], strides = [1, 1]} : vector<8x32xf32> to vector<8x8xf32>
    %cst_270 = arith.constant 0.353553385 : f32
    %939 = vector.broadcast %cst_270 : f32 to vector<8x8xf32>
    %940 = arith.mulf %938, %939 : vector<8x8xf32>
    %941 = arith.truncf %940 : vector<8x8xf32> to vector<8x8xbf16>
    %942 = vector.extract_strided_slice %877 {offsets = [0, 16], sizes = [8, 8], strides = [1, 1]} : vector<8x32xf32> to vector<8x8xf32>
    %943 = arith.truncf %942 : vector<8x8xf32> to vector<8x8xbf16>
    %944 = vector.extract_strided_slice %878 {offsets = [0, 16], sizes = [8, 8], strides = [1, 1]} : vector<8x32xf32> to vector<8x8xf32>
    %945 = arith.truncf %944 : vector<8x8xf32> to vector<8x8xbf16>
    %cst_271 = arith.constant dense<0.000000e+00> : vector<8x8xf32>
    %946 = tpu.matmul %941, %943, %cst_271 {dimension_numbers = #tpu.dot_dimension_numbers<[1], [1], [0], [0], [0, 0, 1, 0], [], []>} : vector<8x8xbf16>, vector<8x8xbf16>, vector<8x8xf32> -> vector<8x8xf32>
    %947 = arith.addf %946, %884 : vector<8x8xf32>
    %cst_272 = arith.constant dense<0xFF800000> : vector<8xf32>
    %948 = vector.multi_reduction <maximumf>, %947, %cst_272 [1] : vector<8x8xf32> to vector<8xf32>
    %949 = vector.shape_cast %948 : vector<8xf32> to vector<8x1xf32>
    %950 = vector.broadcast %949 : vector<8x1xf32> to vector<8x8xf32>
    %951 = arith.subf %947, %950 : vector<8x8xf32>
    %952 = math.exp %951 : vector<8x8xf32>
    %cst_273 = arith.constant dense<0.000000e+00> : vector<8xf32>
    %953 = vector.multi_reduction <add>, %952, %cst_273 [1] : vector<8x8xf32> to vector<8xf32>
    %954 = vector.shape_cast %953 : vector<8xf32> to vector<8x1xf32>
    %955 = tpu.reciprocal %954 {approx = true} : vector<8x1xf32> -> vector<8x1xf32>
    %956 = vector.broadcast %955 : vector<8x1xf32> to vector<8x8xf32>
    %957 = arith.mulf %952, %956 : vector<8x8xf32>
    %958 = arith.truncf %957 : vector<8x8xf32> to vector<8x8xbf16>
    %cst_274 = arith.constant dense<0.000000e+00> : vector<8x8xf32>
    %959 = tpu.matmul %958, %945, %cst_274 {dimension_numbers = #tpu.dot_dimension_numbers<[1], [0], [0], [1], [0, 0, 1, 1], [], []>} : vector<8x8xbf16>, vector<8x8xbf16>, vector<8x8xf32> -> vector<8x8xf32>
    %960 = arith.truncf %959 : vector<8x8xf32> to vector<8x8xbf16>
    %961 = vector.extract_strided_slice %810 {offsets = [16, 0], sizes = [8, 32], strides = [1, 1]} : vector<32x32xbf16> to vector<8x32xbf16>
    %cst_275 = arith.constant dense<0.000000e+00> : vector<8x32xf32>
    %962 = tpu.matmul %960, %961, %cst_275 {dimension_numbers = #tpu.dot_dimension_numbers<[1], [0], [0], [1], [0, 0, 1, 1], [], []>} : vector<8x8xbf16>, vector<8x32xbf16>, vector<8x32xf32> -> vector<8x32xf32>
    %963 = arith.addf %937, %962 : vector<8x32xf32>
    %964 = vector.extract_strided_slice %876 {offsets = [0, 24], sizes = [8, 8], strides = [1, 1]} : vector<8x32xf32> to vector<8x8xf32>
    %cst_276 = arith.constant 0.353553385 : f32
    %965 = vector.broadcast %cst_276 : f32 to vector<8x8xf32>
    %966 = arith.mulf %964, %965 : vector<8x8xf32>
    %967 = arith.truncf %966 : vector<8x8xf32> to vector<8x8xbf16>
    %968 = vector.extract_strided_slice %877 {offsets = [0, 24], sizes = [8, 8], strides = [1, 1]} : vector<8x32xf32> to vector<8x8xf32>
    %969 = arith.truncf %968 : vector<8x8xf32> to vector<8x8xbf16>
    %970 = vector.extract_strided_slice %878 {offsets = [0, 24], sizes = [8, 8], strides = [1, 1]} : vector<8x32xf32> to vector<8x8xf32>
    %971 = arith.truncf %970 : vector<8x8xf32> to vector<8x8xbf16>
    %cst_277 = arith.constant dense<0.000000e+00> : vector<8x8xf32>
    %972 = tpu.matmul %967, %969, %cst_277 {dimension_numbers = #tpu.dot_dimension_numbers<[1], [1], [0], [0], [0, 0, 1, 0], [], []>} : vector<8x8xbf16>, vector<8x8xbf16>, vector<8x8xf32> -> vector<8x8xf32>
    %973 = arith.addf %972, %884 : vector<8x8xf32>
    %cst_278 = arith.constant dense<0xFF800000> : vector<8xf32>
    %974 = vector.multi_reduction <maximumf>, %973, %cst_278 [1] : vector<8x8xf32> to vector<8xf32>
    %975 = vector.shape_cast %974 : vector<8xf32> to vector<8x1xf32>
    %976 = vector.broadcast %975 : vector<8x1xf32> to vector<8x8xf32>
    %977 = arith.subf %973, %976 : vector<8x8xf32>
    %978 = math.exp %977 : vector<8x8xf32>
    %cst_279 = arith.constant dense<0.000000e+00> : vector<8xf32>
    %979 = vector.multi_reduction <add>, %978, %cst_279 [1] : vector<8x8xf32> to vector<8xf32>
    %980 = vector.shape_cast %979 : vector<8xf32> to vector<8x1xf32>
    %981 = tpu.reciprocal %980 {approx = true} : vector<8x1xf32> -> vector<8x1xf32>
    %982 = vector.broadcast %981 : vector<8x1xf32> to vector<8x8xf32>
    %983 = arith.mulf %978, %982 : vector<8x8xf32>
    %984 = arith.truncf %983 : vector<8x8xf32> to vector<8x8xbf16>
    %cst_280 = arith.constant dense<0.000000e+00> : vector<8x8xf32>
    %985 = tpu.matmul %984, %971, %cst_280 {dimension_numbers = #tpu.dot_dimension_numbers<[1], [0], [0], [1], [0, 0, 1, 1], [], []>} : vector<8x8xbf16>, vector<8x8xbf16>, vector<8x8xf32> -> vector<8x8xf32>
    %986 = arith.truncf %985 : vector<8x8xf32> to vector<8x8xbf16>
    %987 = vector.extract_strided_slice %810 {offsets = [24, 0], sizes = [8, 32], strides = [1, 1]} : vector<32x32xbf16> to vector<8x32xbf16>
    %cst_281 = arith.constant dense<0.000000e+00> : vector<8x32xf32>
    %988 = tpu.matmul %986, %987, %cst_281 {dimension_numbers = #tpu.dot_dimension_numbers<[1], [0], [0], [1], [0, 0, 1, 1], [], []>} : vector<8x8xbf16>, vector<8x32xbf16>, vector<8x32xf32> -> vector<8x32xf32>
    %989 = arith.addf %963, %988 : vector<8x32xf32>
    %990 = arith.addf %806, %989 : vector<8x32xf32>
    %991 = vector.shape_cast %830 : vector<32xf32> to vector<1x32xf32>
    %992 = vector.broadcast %991 : vector<1x32xf32> to vector<8x32xf32>
    %993 = arith.addf %990, %992 : vector<8x32xf32>
    %cst_282 = arith.constant dense<0.000000e+00> : vector<8xf32>
    %994 = vector.multi_reduction <add>, %993, %cst_282 [1] : vector<8x32xf32> to vector<8xf32>
    %995 = vector.shape_cast %994 : vector<8xf32> to vector<8x1xf32>
    %cst_283 = arith.constant 3.200000e+01 : f32
    %996 = vector.broadcast %cst_283 : f32 to vector<8x1xf32>
    %997 = arith.divf %995, %996 : vector<8x1xf32>
    %998 = vector.broadcast %997 : vector<8x1xf32> to vector<8x32xf32>
    %999 = arith.subf %993, %998 : vector<8x32xf32>
    %1000 = arith.mulf %999, %999 : vector<8x32xf32>
    %cst_284 = arith.constant dense<0.000000e+00> : vector<8xf32>
    %1001 = vector.multi_reduction <add>, %1000, %cst_284 [1] : vector<8x32xf32> to vector<8xf32>
    %1002 = vector.shape_cast %1001 : vector<8xf32> to vector<8x1xf32>
    %cst_285 = arith.constant 3.200000e+01 : f32
    %1003 = vector.broadcast %cst_285 : f32 to vector<8x1xf32>
    %1004 = arith.divf %1002, %1003 : vector<8x1xf32>
    %cst_286 = arith.constant 9.99999974E-6 : f32
    %1005 = vector.broadcast %cst_286 : f32 to vector<8x1xf32>
    %1006 = arith.addf %1004, %1005 : vector<8x1xf32>
    %1007 = math.rsqrt %1006 : vector<8x1xf32>
    %1008 = vector.broadcast %1007 : vector<8x1xf32> to vector<8x32xf32>
    %1009 = arith.mulf %999, %1008 : vector<8x32xf32>
    %1010 = vector.shape_cast %832 : vector<32xf32> to vector<1x32xf32>
    %1011 = vector.broadcast %1010 : vector<1x32xf32> to vector<8x32xf32>
    %1012 = arith.mulf %1009, %1011 : vector<8x32xf32>
    %1013 = vector.shape_cast %834 : vector<32xf32> to vector<1x32xf32>
    %1014 = vector.broadcast %1013 : vector<1x32xf32> to vector<8x32xf32>
    %1015 = arith.addf %1012, %1014 : vector<8x32xf32>
    %1016 = arith.truncf %1015 : vector<8x32xf32> to vector<8x32xbf16>
    %cst_287 = arith.constant dense<0.000000e+00> : vector<8x32xf32>
    %1017 = tpu.matmul %1016, %812, %cst_287 {dimension_numbers = #tpu.dot_dimension_numbers<[1], [0], [0], [1], [0, 0, 1, 1], [], []>} : vector<8x32xbf16>, vector<32x32xbf16>, vector<8x32xf32> -> vector<8x32xf32>
    %1018 = vector.shape_cast %836 : vector<32xf32> to vector<1x32xf32>
    %1019 = vector.broadcast %1018 : vector<1x32xf32> to vector<8x32xf32>
    %1020 = arith.addf %1017, %1019 : vector<8x32xf32>
    %1021 = arith.truncf %424 : vector<8x32xf32> to vector<8x32xbf16>
    %cst_288 = arith.constant dense<0.000000e+00> : vector<8x64xf32>
    %1022 = tpu.matmul %1021, %814, %cst_288 {dimension_numbers = #tpu.dot_dimension_numbers<[1], [0], [0], [1], [0, 0, 1, 1], [], []>} : vector<8x32xbf16>, vector<32x64xbf16>, vector<8x64xf32> -> vector<8x64xf32>
    %1023 = vector.shape_cast %838 : vector<64xf32> to vector<1x64xf32>
    %1024 = vector.broadcast %1023 : vector<1x64xf32> to vector<8x64xf32>
    %1025 = arith.addf %1022, %1024 : vector<8x64xf32>
    %1026 = vector.extract_strided_slice %1025 {offsets = [0, 0], sizes = [8, 32], strides = [1, 1]} : vector<8x64xf32> to vector<8x32xf32>
    %1027 = vector.extract_strided_slice %1025 {offsets = [0, 32], sizes = [8, 32], strides = [1, 1]} : vector<8x64xf32> to vector<8x32xf32>
    %cst_289 = arith.constant 0.000000e+00 : f32
    %1028 = vector.broadcast %cst_289 : f32 to vector<8x32xf32>
    %1029 = vector.extract_strided_slice %1020 {offsets = [0, 0], sizes = [8, 8], strides = [1, 1]} : vector<8x32xf32> to vector<8x8xf32>
    %cst_290 = arith.constant 0.353553385 : f32
    %1030 = vector.broadcast %cst_290 : f32 to vector<8x8xf32>
    %1031 = arith.mulf %1029, %1030 : vector<8x8xf32>
    %1032 = arith.truncf %1031 : vector<8x8xf32> to vector<8x8xbf16>
    %1033 = vector.extract_strided_slice %1026 {offsets = [0, 0], sizes = [8, 8], strides = [1, 1]} : vector<8x32xf32> to vector<8x8xf32>
    %1034 = arith.truncf %1033 : vector<8x8xf32> to vector<8x8xbf16>
    %1035 = vector.extract_strided_slice %1027 {offsets = [0, 0], sizes = [8, 8], strides = [1, 1]} : vector<8x32xf32> to vector<8x8xf32>
    %1036 = arith.truncf %1035 : vector<8x8xf32> to vector<8x8xbf16>
    %cst_291 = arith.constant dense<0.000000e+00> : vector<8x8xf32>
    %1037 = tpu.matmul %1032, %1034, %cst_291 {dimension_numbers = #tpu.dot_dimension_numbers<[1], [1], [0], [0], [0, 0, 1, 0], [], []>} : vector<8x8xbf16>, vector<8x8xbf16>, vector<8x8xf32> -> vector<8x8xf32>
    %cst_292 = arith.constant dense<0xFF800000> : vector<8xf32>
    %1038 = vector.multi_reduction <maximumf>, %1037, %cst_292 [1] : vector<8x8xf32> to vector<8xf32>
    %1039 = vector.shape_cast %1038 : vector<8xf32> to vector<8x1xf32>
    %1040 = vector.broadcast %1039 : vector<8x1xf32> to vector<8x8xf32>
    %1041 = arith.subf %1037, %1040 : vector<8x8xf32>
    %1042 = math.exp %1041 : vector<8x8xf32>
    %cst_293 = arith.constant dense<0.000000e+00> : vector<8xf32>
    %1043 = vector.multi_reduction <add>, %1042, %cst_293 [1] : vector<8x8xf32> to vector<8xf32>
    %1044 = vector.shape_cast %1043 : vector<8xf32> to vector<8x1xf32>
    %1045 = tpu.reciprocal %1044 {approx = true} : vector<8x1xf32> -> vector<8x1xf32>
    %1046 = vector.broadcast %1045 : vector<8x1xf32> to vector<8x8xf32>
    %1047 = arith.mulf %1042, %1046 : vector<8x8xf32>
    %1048 = arith.truncf %1047 : vector<8x8xf32> to vector<8x8xbf16>
    %cst_294 = arith.constant dense<0.000000e+00> : vector<8x8xf32>
    %1049 = tpu.matmul %1048, %1036, %cst_294 {dimension_numbers = #tpu.dot_dimension_numbers<[1], [0], [0], [1], [0, 0, 1, 1], [], []>} : vector<8x8xbf16>, vector<8x8xbf16>, vector<8x8xf32> -> vector<8x8xf32>
    %1050 = arith.truncf %1049 : vector<8x8xf32> to vector<8x8xbf16>
    %1051 = vector.extract_strided_slice %816 {offsets = [0, 0], sizes = [8, 32], strides = [1, 1]} : vector<32x32xbf16> to vector<8x32xbf16>
    %cst_295 = arith.constant dense<0.000000e+00> : vector<8x32xf32>
    %1052 = tpu.matmul %1050, %1051, %cst_295 {dimension_numbers = #tpu.dot_dimension_numbers<[1], [0], [0], [1], [0, 0, 1, 1], [], []>} : vector<8x8xbf16>, vector<8x32xbf16>, vector<8x32xf32> -> vector<8x32xf32>
    %1053 = arith.addf %1028, %1052 : vector<8x32xf32>
    %1054 = vector.extract_strided_slice %1020 {offsets = [0, 8], sizes = [8, 8], strides = [1, 1]} : vector<8x32xf32> to vector<8x8xf32>
    %cst_296 = arith.constant 0.353553385 : f32
    %1055 = vector.broadcast %cst_296 : f32 to vector<8x8xf32>
    %1056 = arith.mulf %1054, %1055 : vector<8x8xf32>
    %1057 = arith.truncf %1056 : vector<8x8xf32> to vector<8x8xbf16>
    %1058 = vector.extract_strided_slice %1026 {offsets = [0, 8], sizes = [8, 8], strides = [1, 1]} : vector<8x32xf32> to vector<8x8xf32>
    %1059 = arith.truncf %1058 : vector<8x8xf32> to vector<8x8xbf16>
    %1060 = vector.extract_strided_slice %1027 {offsets = [0, 8], sizes = [8, 8], strides = [1, 1]} : vector<8x32xf32> to vector<8x8xf32>
    %1061 = arith.truncf %1060 : vector<8x8xf32> to vector<8x8xbf16>
    %cst_297 = arith.constant dense<0.000000e+00> : vector<8x8xf32>
    %1062 = tpu.matmul %1057, %1059, %cst_297 {dimension_numbers = #tpu.dot_dimension_numbers<[1], [1], [0], [0], [0, 0, 1, 0], [], []>} : vector<8x8xbf16>, vector<8x8xbf16>, vector<8x8xf32> -> vector<8x8xf32>
    %cst_298 = arith.constant dense<0xFF800000> : vector<8xf32>
    %1063 = vector.multi_reduction <maximumf>, %1062, %cst_298 [1] : vector<8x8xf32> to vector<8xf32>
    %1064 = vector.shape_cast %1063 : vector<8xf32> to vector<8x1xf32>
    %1065 = vector.broadcast %1064 : vector<8x1xf32> to vector<8x8xf32>
    %1066 = arith.subf %1062, %1065 : vector<8x8xf32>
    %1067 = math.exp %1066 : vector<8x8xf32>
    %cst_299 = arith.constant dense<0.000000e+00> : vector<8xf32>
    %1068 = vector.multi_reduction <add>, %1067, %cst_299 [1] : vector<8x8xf32> to vector<8xf32>
    %1069 = vector.shape_cast %1068 : vector<8xf32> to vector<8x1xf32>
    %1070 = tpu.reciprocal %1069 {approx = true} : vector<8x1xf32> -> vector<8x1xf32>
    %1071 = vector.broadcast %1070 : vector<8x1xf32> to vector<8x8xf32>
    %1072 = arith.mulf %1067, %1071 : vector<8x8xf32>
    %1073 = arith.truncf %1072 : vector<8x8xf32> to vector<8x8xbf16>
    %cst_300 = arith.constant dense<0.000000e+00> : vector<8x8xf32>
    %1074 = tpu.matmul %1073, %1061, %cst_300 {dimension_numbers = #tpu.dot_dimension_numbers<[1], [0], [0], [1], [0, 0, 1, 1], [], []>} : vector<8x8xbf16>, vector<8x8xbf16>, vector<8x8xf32> -> vector<8x8xf32>
    %1075 = arith.truncf %1074 : vector<8x8xf32> to vector<8x8xbf16>
    %1076 = vector.extract_strided_slice %816 {offsets = [8, 0], sizes = [8, 32], strides = [1, 1]} : vector<32x32xbf16> to vector<8x32xbf16>
    %cst_301 = arith.constant dense<0.000000e+00> : vector<8x32xf32>
    %1077 = tpu.matmul %1075, %1076, %cst_301 {dimension_numbers = #tpu.dot_dimension_numbers<[1], [0], [0], [1], [0, 0, 1, 1], [], []>} : vector<8x8xbf16>, vector<8x32xbf16>, vector<8x32xf32> -> vector<8x32xf32>
    %1078 = arith.addf %1053, %1077 : vector<8x32xf32>
    %1079 = vector.extract_strided_slice %1020 {offsets = [0, 16], sizes = [8, 8], strides = [1, 1]} : vector<8x32xf32> to vector<8x8xf32>
    %cst_302 = arith.constant 0.353553385 : f32
    %1080 = vector.broadcast %cst_302 : f32 to vector<8x8xf32>
    %1081 = arith.mulf %1079, %1080 : vector<8x8xf32>
    %1082 = arith.truncf %1081 : vector<8x8xf32> to vector<8x8xbf16>
    %1083 = vector.extract_strided_slice %1026 {offsets = [0, 16], sizes = [8, 8], strides = [1, 1]} : vector<8x32xf32> to vector<8x8xf32>
    %1084 = arith.truncf %1083 : vector<8x8xf32> to vector<8x8xbf16>
    %1085 = vector.extract_strided_slice %1027 {offsets = [0, 16], sizes = [8, 8], strides = [1, 1]} : vector<8x32xf32> to vector<8x8xf32>
    %1086 = arith.truncf %1085 : vector<8x8xf32> to vector<8x8xbf16>
    %cst_303 = arith.constant dense<0.000000e+00> : vector<8x8xf32>
    %1087 = tpu.matmul %1082, %1084, %cst_303 {dimension_numbers = #tpu.dot_dimension_numbers<[1], [1], [0], [0], [0, 0, 1, 0], [], []>} : vector<8x8xbf16>, vector<8x8xbf16>, vector<8x8xf32> -> vector<8x8xf32>
    %cst_304 = arith.constant dense<0xFF800000> : vector<8xf32>
    %1088 = vector.multi_reduction <maximumf>, %1087, %cst_304 [1] : vector<8x8xf32> to vector<8xf32>
    %1089 = vector.shape_cast %1088 : vector<8xf32> to vector<8x1xf32>
    %1090 = vector.broadcast %1089 : vector<8x1xf32> to vector<8x8xf32>
    %1091 = arith.subf %1087, %1090 : vector<8x8xf32>
    %1092 = math.exp %1091 : vector<8x8xf32>
    %cst_305 = arith.constant dense<0.000000e+00> : vector<8xf32>
    %1093 = vector.multi_reduction <add>, %1092, %cst_305 [1] : vector<8x8xf32> to vector<8xf32>
    %1094 = vector.shape_cast %1093 : vector<8xf32> to vector<8x1xf32>
    %1095 = tpu.reciprocal %1094 {approx = true} : vector<8x1xf32> -> vector<8x1xf32>
    %1096 = vector.broadcast %1095 : vector<8x1xf32> to vector<8x8xf32>
    %1097 = arith.mulf %1092, %1096 : vector<8x8xf32>
    %1098 = arith.truncf %1097 : vector<8x8xf32> to vector<8x8xbf16>
    %cst_306 = arith.constant dense<0.000000e+00> : vector<8x8xf32>
    %1099 = tpu.matmul %1098, %1086, %cst_306 {dimension_numbers = #tpu.dot_dimension_numbers<[1], [0], [0], [1], [0, 0, 1, 1], [], []>} : vector<8x8xbf16>, vector<8x8xbf16>, vector<8x8xf32> -> vector<8x8xf32>
    %1100 = arith.truncf %1099 : vector<8x8xf32> to vector<8x8xbf16>
    %1101 = vector.extract_strided_slice %816 {offsets = [16, 0], sizes = [8, 32], strides = [1, 1]} : vector<32x32xbf16> to vector<8x32xbf16>
    %cst_307 = arith.constant dense<0.000000e+00> : vector<8x32xf32>
    %1102 = tpu.matmul %1100, %1101, %cst_307 {dimension_numbers = #tpu.dot_dimension_numbers<[1], [0], [0], [1], [0, 0, 1, 1], [], []>} : vector<8x8xbf16>, vector<8x32xbf16>, vector<8x32xf32> -> vector<8x32xf32>
    %1103 = arith.addf %1078, %1102 : vector<8x32xf32>
    %1104 = vector.extract_strided_slice %1020 {offsets = [0, 24], sizes = [8, 8], strides = [1, 1]} : vector<8x32xf32> to vector<8x8xf32>
    %cst_308 = arith.constant 0.353553385 : f32
    %1105 = vector.broadcast %cst_308 : f32 to vector<8x8xf32>
    %1106 = arith.mulf %1104, %1105 : vector<8x8xf32>
    %1107 = arith.truncf %1106 : vector<8x8xf32> to vector<8x8xbf16>
    %1108 = vector.extract_strided_slice %1026 {offsets = [0, 24], sizes = [8, 8], strides = [1, 1]} : vector<8x32xf32> to vector<8x8xf32>
    %1109 = arith.truncf %1108 : vector<8x8xf32> to vector<8x8xbf16>
    %1110 = vector.extract_strided_slice %1027 {offsets = [0, 24], sizes = [8, 8], strides = [1, 1]} : vector<8x32xf32> to vector<8x8xf32>
    %1111 = arith.truncf %1110 : vector<8x8xf32> to vector<8x8xbf16>
    %cst_309 = arith.constant dense<0.000000e+00> : vector<8x8xf32>
    %1112 = tpu.matmul %1107, %1109, %cst_309 {dimension_numbers = #tpu.dot_dimension_numbers<[1], [1], [0], [0], [0, 0, 1, 0], [], []>} : vector<8x8xbf16>, vector<8x8xbf16>, vector<8x8xf32> -> vector<8x8xf32>
    %cst_310 = arith.constant dense<0xFF800000> : vector<8xf32>
    %1113 = vector.multi_reduction <maximumf>, %1112, %cst_310 [1] : vector<8x8xf32> to vector<8xf32>
    %1114 = vector.shape_cast %1113 : vector<8xf32> to vector<8x1xf32>
    %1115 = vector.broadcast %1114 : vector<8x1xf32> to vector<8x8xf32>
    %1116 = arith.subf %1112, %1115 : vector<8x8xf32>
    %1117 = math.exp %1116 : vector<8x8xf32>
    %cst_311 = arith.constant dense<0.000000e+00> : vector<8xf32>
    %1118 = vector.multi_reduction <add>, %1117, %cst_311 [1] : vector<8x8xf32> to vector<8xf32>
    %1119 = vector.shape_cast %1118 : vector<8xf32> to vector<8x1xf32>
    %1120 = tpu.reciprocal %1119 {approx = true} : vector<8x1xf32> -> vector<8x1xf32>
    %1121 = vector.broadcast %1120 : vector<8x1xf32> to vector<8x8xf32>
    %1122 = arith.mulf %1117, %1121 : vector<8x8xf32>
    %1123 = arith.truncf %1122 : vector<8x8xf32> to vector<8x8xbf16>
    %cst_312 = arith.constant dense<0.000000e+00> : vector<8x8xf32>
    %1124 = tpu.matmul %1123, %1111, %cst_312 {dimension_numbers = #tpu.dot_dimension_numbers<[1], [0], [0], [1], [0, 0, 1, 1], [], []>} : vector<8x8xbf16>, vector<8x8xbf16>, vector<8x8xf32> -> vector<8x8xf32>
    %1125 = arith.truncf %1124 : vector<8x8xf32> to vector<8x8xbf16>
    %1126 = vector.extract_strided_slice %816 {offsets = [24, 0], sizes = [8, 32], strides = [1, 1]} : vector<32x32xbf16> to vector<8x32xbf16>
    %cst_313 = arith.constant dense<0.000000e+00> : vector<8x32xf32>
    %1127 = tpu.matmul %1125, %1126, %cst_313 {dimension_numbers = #tpu.dot_dimension_numbers<[1], [0], [0], [1], [0, 0, 1, 1], [], []>} : vector<8x8xbf16>, vector<8x32xbf16>, vector<8x32xf32> -> vector<8x32xf32>
    %1128 = arith.addf %1103, %1127 : vector<8x32xf32>
    %1129 = arith.addf %993, %1128 : vector<8x32xf32>
    %1130 = vector.shape_cast %840 : vector<32xf32> to vector<1x32xf32>
    %1131 = vector.broadcast %1130 : vector<1x32xf32> to vector<8x32xf32>
    %1132 = arith.addf %1129, %1131 : vector<8x32xf32>
    %cst_314 = arith.constant dense<0.000000e+00> : vector<8xf32>
    %1133 = vector.multi_reduction <add>, %1132, %cst_314 [1] : vector<8x32xf32> to vector<8xf32>
    %1134 = vector.shape_cast %1133 : vector<8xf32> to vector<8x1xf32>
    %cst_315 = arith.constant 3.200000e+01 : f32
    %1135 = vector.broadcast %cst_315 : f32 to vector<8x1xf32>
    %1136 = arith.divf %1134, %1135 : vector<8x1xf32>
    %1137 = vector.broadcast %1136 : vector<8x1xf32> to vector<8x32xf32>
    %1138 = arith.subf %1132, %1137 : vector<8x32xf32>
    %1139 = arith.mulf %1138, %1138 : vector<8x32xf32>
    %cst_316 = arith.constant dense<0.000000e+00> : vector<8xf32>
    %1140 = vector.multi_reduction <add>, %1139, %cst_316 [1] : vector<8x32xf32> to vector<8xf32>
    %1141 = vector.shape_cast %1140 : vector<8xf32> to vector<8x1xf32>
    %cst_317 = arith.constant 3.200000e+01 : f32
    %1142 = vector.broadcast %cst_317 : f32 to vector<8x1xf32>
    %1143 = arith.divf %1141, %1142 : vector<8x1xf32>
    %cst_318 = arith.constant 9.99999974E-6 : f32
    %1144 = vector.broadcast %cst_318 : f32 to vector<8x1xf32>
    %1145 = arith.addf %1143, %1144 : vector<8x1xf32>
    %1146 = math.rsqrt %1145 : vector<8x1xf32>
    %1147 = vector.broadcast %1146 : vector<8x1xf32> to vector<8x32xf32>
    %1148 = arith.mulf %1138, %1147 : vector<8x32xf32>
    %1149 = vector.shape_cast %842 : vector<32xf32> to vector<1x32xf32>
    %1150 = vector.broadcast %1149 : vector<1x32xf32> to vector<8x32xf32>
    %1151 = arith.mulf %1148, %1150 : vector<8x32xf32>
    %1152 = vector.shape_cast %844 : vector<32xf32> to vector<1x32xf32>
    %1153 = vector.broadcast %1152 : vector<1x32xf32> to vector<8x32xf32>
    %1154 = arith.addf %1151, %1153 : vector<8x32xf32>
    %1155 = arith.truncf %1154 : vector<8x32xf32> to vector<8x32xbf16>
    %cst_319 = arith.constant dense<0.000000e+00> : vector<8x128xf32>
    %1156 = tpu.matmul %1155, %818, %cst_319 {dimension_numbers = #tpu.dot_dimension_numbers<[1], [0], [0], [1], [0, 0, 1, 1], [], []>} : vector<8x32xbf16>, vector<32x128xbf16>, vector<8x128xf32> -> vector<8x128xf32>
    %1157 = vector.shape_cast %846 : vector<128xf32> to vector<1x128xf32>
    %1158 = vector.broadcast %1157 : vector<1x128xf32> to vector<8x128xf32>
    %1159 = arith.addf %1156, %1158 : vector<8x128xf32>
    %cst_320 = arith.constant 5.000000e-01 : f32
    %1160 = vector.broadcast %cst_320 : f32 to vector<8x128xf32>
    %1161 = arith.mulf %1160, %1159 : vector<8x128xf32>
    %cst_321 = arith.constant 4.471500e-02 : f32
    %1162 = vector.broadcast %cst_321 : f32 to vector<8x128xf32>
    %1163 = arith.mulf %1162, %1159 : vector<8x128xf32>
    %1164 = arith.mulf %1163, %1159 : vector<8x128xf32>
    %1165 = arith.mulf %1164, %1159 : vector<8x128xf32>
    %1166 = arith.addf %1159, %1165 : vector<8x128xf32>
    %cst_322 = arith.constant 0.797884583 : f32
    %1167 = vector.broadcast %cst_322 : f32 to vector<8x128xf32>
    %1168 = arith.mulf %1167, %1166 : vector<8x128xf32>
    %1169 = math.tanh %1168 : vector<8x128xf32>
    %cst_323 = arith.constant 1.000000e+00 : f32
    %1170 = vector.broadcast %cst_323 : f32 to vector<8x128xf32>
    %1171 = arith.addf %1170, %1169 : vector<8x128xf32>
    %1172 = arith.mulf %1161, %1171 : vector<8x128xf32>
    %1173 = arith.truncf %1172 : vector<8x128xf32> to vector<8x128xbf16>
    %cst_324 = arith.constant dense<0.000000e+00> : vector<8x32xf32>
    %1174 = tpu.matmul %1173, %820, %cst_324 {dimension_numbers = #tpu.dot_dimension_numbers<[1], [0], [0], [1], [0, 0, 1, 1], [], []>} : vector<8x128xbf16>, vector<128x32xbf16>, vector<8x32xf32> -> vector<8x32xf32>
    %1175 = vector.shape_cast %848 : vector<32xf32> to vector<1x32xf32>
    %1176 = vector.broadcast %1175 : vector<1x32xf32> to vector<8x32xf32>
    %1177 = arith.addf %1174, %1176 : vector<8x32xf32>
    %1178 = arith.addf %1132, %1177 : vector<8x32xf32>
    %1179 = vector.extract_strided_slice %0 {offsets = [2, 0], sizes = [1, 32], strides = [1, 1]} : vector<4x32xf32> to vector<1x32xf32>
    %1180 = vector.shape_cast %1179 : vector<1x32xf32> to vector<32xf32>
    %1181 = vector.extract_strided_slice %0 {offsets = [3, 0], sizes = [1, 32], strides = [1, 1]} : vector<4x32xf32> to vector<1x32xf32>
    %1182 = vector.shape_cast %1181 : vector<1x32xf32> to vector<32xf32>
    %cst_325 = arith.constant dense<0.000000e+00> : vector<8xf32>
    %1183 = vector.multi_reduction <add>, %1178, %cst_325 [1] : vector<8x32xf32> to vector<8xf32>
    %1184 = vector.shape_cast %1183 : vector<8xf32> to vector<8x1xf32>
    %cst_326 = arith.constant 3.200000e+01 : f32
    %1185 = vector.broadcast %cst_326 : f32 to vector<8x1xf32>
    %1186 = arith.divf %1184, %1185 : vector<8x1xf32>
    %1187 = vector.broadcast %1186 : vector<8x1xf32> to vector<8x32xf32>
    %1188 = arith.subf %1178, %1187 : vector<8x32xf32>
    %1189 = arith.mulf %1188, %1188 : vector<8x32xf32>
    %cst_327 = arith.constant dense<0.000000e+00> : vector<8xf32>
    %1190 = vector.multi_reduction <add>, %1189, %cst_327 [1] : vector<8x32xf32> to vector<8xf32>
    %1191 = vector.shape_cast %1190 : vector<8xf32> to vector<8x1xf32>
    %cst_328 = arith.constant 3.200000e+01 : f32
    %1192 = vector.broadcast %cst_328 : f32 to vector<8x1xf32>
    %1193 = arith.divf %1191, %1192 : vector<8x1xf32>
    %cst_329 = arith.constant 9.99999974E-6 : f32
    %1194 = vector.broadcast %cst_329 : f32 to vector<8x1xf32>
    %1195 = arith.addf %1193, %1194 : vector<8x1xf32>
    %1196 = math.rsqrt %1195 : vector<8x1xf32>
    %1197 = vector.broadcast %1196 : vector<8x1xf32> to vector<8x32xf32>
    %1198 = arith.mulf %1188, %1197 : vector<8x32xf32>
    %1199 = vector.shape_cast %1180 : vector<32xf32> to vector<1x32xf32>
    %1200 = vector.broadcast %1199 : vector<1x32xf32> to vector<8x32xf32>
    %1201 = arith.mulf %1198, %1200 : vector<8x32xf32>
    %1202 = vector.shape_cast %1182 : vector<32xf32> to vector<1x32xf32>
    %1203 = vector.broadcast %1202 : vector<1x32xf32> to vector<8x32xf32>
    %1204 = arith.addf %1201, %1203 : vector<8x32xf32>
    %c0_330 = arith.constant 0 : index
    %c0_331 = arith.constant 0 : index
    %c0_332 = arith.constant 0 : index
    %1205 = vector.load %arg19[%c0_330, %c0_331, %c0_332] : memref<1x8x32xf32, #tpu.memory_space<vmem>>, vector<1x8x32xf32>
    %1206 = vector.shape_cast %1205 : vector<1x8x32xf32> to vector<8x32xf32>
    %1207 = vector.shape_cast %1204 : vector<8x32xf32> to vector<1x8x32xf32>
    tpu.vector_store %arg19[%c0_330, %c0_331, %c0_332], %1207 {strides = array<i32>} : memref<1x8x32xf32, #tpu.memory_space<vmem>>, vector<1x8x32xf32>,
    return
  }
  func.func @transform_0(%arg0: i32) -> (i32, i32, i32) {
    %c0_i32 = arith.constant 0 : i32
    %c0_i32_0 = arith.constant 0 : i32
    %c0_i32_1 = arith.constant 0 : i32
    return %arg0, %c0_i32, %c0_i32_0 : i32, i32, i32
  }
  func.func @transform_1(%arg0: i32) -> (i32, i32, i32) {
    %c0_i32 = arith.constant 0 : i32
    %c0_i32_0 = arith.constant 0 : i32
    %c0_i32_1 = arith.constant 0 : i32
    return %arg0, %c0_i32, %c0_i32_0 : i32, i32, i32
  }
  func.func @transform_2(%arg0: i32) -> (i32, i32) {
    %c0_i32 = arith.constant 0 : i32
    %c0_i32_0 = arith.constant 0 : i32
    %c0_i32_1 = arith.constant 0 : i32
    return %c0_i32, %c0_i32_0 : i32, i32
  }
  func.func @transform_3(%arg0: i32) -> (i32, i32) {
    %c0_i32 = arith.constant 0 : i32
    %c0_i32_0 = arith.constant 0 : i32
    %c0_i32_1 = arith.constant 0 : i32
    return %c0_i32, %c0_i32_0 : i32, i32
  }
  func.func @transform_4(%arg0: i32) -> (i32, i32) {
    %c0_i32 = arith.constant 0 : i32
    %c0_i32_0 = arith.constant 0 : i32
    %c0_i32_1 = arith.constant 0 : i32
    return %c0_i32, %c0_i32_0 : i32, i32
  }
  func.func @transform_5(%arg0: i32) -> (i32, i32, i32) {
    %c0_i32 = arith.constant 0 : i32
    %c0_i32_0 = arith.constant 0 : i32
    %c0_i32_1 = arith.constant 0 : i32
    %c0_i32_2 = arith.constant 0 : i32
    return %c0_i32, %c0_i32_0, %c0_i32_1 : i32, i32, i32
  }
  func.func @transform_6(%arg0: i32) -> (i32, i32, i32) {
    %c0_i32 = arith.constant 0 : i32
    %c0_i32_0 = arith.constant 0 : i32
    %c0_i32_1 = arith.constant 0 : i32
    %c0_i32_2 = arith.constant 0 : i32
    return %c0_i32, %c0_i32_0, %c0_i32_1 : i32, i32, i32
  }
  func.func @transform_7(%arg0: i32) -> (i32, i32, i32) {
    %c0_i32 = arith.constant 0 : i32
    %c0_i32_0 = arith.constant 0 : i32
    %c0_i32_1 = arith.constant 0 : i32
    %c0_i32_2 = arith.constant 0 : i32
    return %c0_i32, %c0_i32_0, %c0_i32_1 : i32, i32, i32
  }
  func.func @transform_8(%arg0: i32) -> (i32, i32, i32) {
    %c0_i32 = arith.constant 0 : i32
    %c0_i32_0 = arith.constant 0 : i32
    %c0_i32_1 = arith.constant 0 : i32
    %c0_i32_2 = arith.constant 0 : i32
    return %c0_i32, %c0_i32_0, %c0_i32_1 : i32, i32, i32
  }
  func.func @transform_9(%arg0: i32) -> (i32, i32, i32) {
    %c0_i32 = arith.constant 0 : i32
    %c0_i32_0 = arith.constant 0 : i32
    %c0_i32_1 = arith.constant 0 : i32
    %c0_i32_2 = arith.constant 0 : i32
    return %c0_i32, %c0_i32_0, %c0_i32_1 : i32, i32, i32
  }
  func.func @transform_10(%arg0: i32) -> (i32, i32, i32) {
    %c0_i32 = arith.constant 0 : i32
    %c0_i32_0 = arith.constant 0 : i32
    %c0_i32_1 = arith.constant 0 : i32
    %c0_i32_2 = arith.constant 0 : i32
    return %c0_i32, %c0_i32_0, %c0_i32_1 : i32, i32, i32
  }
  func.func @transform_11(%arg0: i32) -> (i32, i32, i32) {
    %c0_i32 = arith.constant 0 : i32
    %c0_i32_0 = arith.constant 0 : i32
    %c0_i32_1 = arith.constant 0 : i32
    %c0_i32_2 = arith.constant 0 : i32
    return %c0_i32, %c0_i32_0, %c0_i32_1 : i32, i32, i32
  }
  func.func @transform_12(%arg0: i32) -> (i32, i32, i32) {
    %c0_i32 = arith.constant 0 : i32
    %c0_i32_0 = arith.constant 0 : i32
    %c0_i32_1 = arith.constant 0 : i32
    %c0_i32_2 = arith.constant 0 : i32
    return %c0_i32, %c0_i32_0, %c0_i32_1 : i32, i32, i32
  }
  func.func @transform_13(%arg0: i32) -> (i32, i32, i32) {
    %c0_i32 = arith.constant 0 : i32
    %c0_i32_0 = arith.constant 0 : i32
    %c0_i32_1 = arith.constant 0 : i32
    %c0_i32_2 = arith.constant 0 : i32
    return %c0_i32, %c0_i32_0, %c0_i32_1 : i32, i32, i32
  }
  func.func @transform_14(%arg0: i32) -> (i32, i32, i32) {
    %c0_i32 = arith.constant 0 : i32
    %c0_i32_0 = arith.constant 0 : i32
    %c0_i32_1 = arith.constant 0 : i32
    %c0_i32_2 = arith.constant 0 : i32
    return %c0_i32, %c0_i32_0, %c0_i32_1 : i32, i32, i32
  }
  func.func @transform_15(%arg0: i32) -> (i32, i32, i32) {
    %c0_i32 = arith.constant 0 : i32
    %c0_i32_0 = arith.constant 0 : i32
    %c0_i32_1 = arith.constant 0 : i32
    %c0_i32_2 = arith.constant 0 : i32
    return %c0_i32, %c0_i32_0, %c0_i32_1 : i32, i32, i32
  }
  func.func @transform_16(%arg0: i32) -> (i32, i32, i32) {
    %c0_i32 = arith.constant 0 : i32
    %c0_i32_0 = arith.constant 0 : i32
    %c0_i32_1 = arith.constant 0 : i32
    %c0_i32_2 = arith.constant 0 : i32
    return %c0_i32, %c0_i32_0, %c0_i32_1 : i32, i32, i32
  }
  func.func @transform_17(%arg0: i32) -> (i32, i32, i32) {
    %c0_i32 = arith.constant 0 : i32
    %c0_i32_0 = arith.constant 0 : i32
    %c0_i32_1 = arith.constant 0 : i32
    %c0_i32_2 = arith.constant 0 : i32
    return %c0_i32, %c0_i32_0, %c0_i32_1 : i32, i32, i32
  }
  func.func @transform_18(%arg0: i32) -> (i32, i32, i32) {
    %c0_i32 = arith.constant 0 : i32
    %c0_i32_0 = arith.constant 0 : i32
    %c0_i32_1 = arith.constant 0 : i32
    return %arg0, %c0_i32, %c0_i32_0 : i32, i32, i32
  }
}

</mosaic_0001>

<llo_original>
// kernel: transformer_with_graph2vec_forward.1
$region0: #{transformer_with_graph2vec_forward.1}
  #allocation0 [shape = 'u32[]', space=smem, size = 0x4, offset = 0x4, fixed_abs, tag = 'smem constant byte address 0x4 - core index']
  #allocation1 [shape = 'u32[144,128]{1,0:T(1,128)}', space=vmem, size = 0x12000, scoped, tag = 'internal scratch']
  %s0 = inlined_call_operand.vmem [shape: f32[2,8,16], index: 0, kind: input, shape index: {}]
  %s1 = inlined_call_operand.vmem [shape: f32[2,8,8], index: 1, kind: input, shape index: {}]
  %s2 = inlined_call_operand.vmem [shape: bf16[16,32], index: 2, kind: input, shape index: {}]
  %s3 = inlined_call_operand.vmem [shape: bf16[8,32], index: 3, kind: input, shape index: {}]
  %s4 = inlined_call_operand.vmem [shape: f32[4,32], index: 4, kind: input, shape index: {}]
  %s5 = inlined_call_operand.vmem [shape: bf16[2,32,96], index: 5, kind: input, shape index: {}]
  %s6 = inlined_call_operand.vmem [shape: bf16[2,32,32], index: 6, kind: input, shape index: {}]
  %s7 = inlined_call_operand.vmem [shape: bf16[2,32,128], index: 7, kind: input, shape index: {}]
  %s8 = inlined_call_operand.vmem [shape: bf16[2,128,32], index: 8, kind: input, shape index: {}]
  %s9 = inlined_call_operand.vmem [shape: f32[2,8,128], index: 9, kind: input, shape index: {}]
  %s10 = inlined_call_operand.vmem [shape: bf16[2,32,96], index: 10, kind: input, shape index: {}]
  %s11 = inlined_call_operand.vmem [shape: bf16[2,32,32], index: 11, kind: input, shape index: {}]
  %s12 = inlined_call_operand.vmem [shape: bf16[2,32,32], index: 12, kind: input, shape index: {}]
  %s13 = inlined_call_operand.vmem [shape: bf16[2,32,64], index: 13, kind: input, shape index: {}]
  %s14 = inlined_call_operand.vmem [shape: bf16[2,32,32], index: 14, kind: input, shape index: {}]
  %s15 = inlined_call_operand.vmem [shape: bf16[2,32,128], index: 15, kind: input, shape index: {}]
  %s16 = inlined_call_operand.vmem [shape: bf16[2,128,32], index: 16, kind: input, shape index: {}]
  %s17 = inlined_call_operand.vmem [shape: f32[2,13,128], index: 17, kind: input, shape index: {}]
  %s18 = inlined_call_operand.hbm [shape: f32[2,8,32], index: 18, kind: output, shape index: {}]
  %s19 = sld [smem:[#allocation0]]
  $region105: #{transformer_with_graph2vec_forward.1} parent=0
    _
  %s21 = ssub.s32 1, %s19
  %s22 = scalar_select 0, %s21, %s19
  $region1: #{transformer_with_graph2vec_forward.1} parent=0
    #allocation2 [shape = 'u8[8192]{0}', space=vmem, size = 0x2000, scoped, tag = 'output window, operand 0']
    #allocation3 [shape = 's32[2]{0}', space=sflag, size = 0x8, scoped, tag = 'scoped memory for transformer_with_graph2vec_forward.1']
    %23 = vsyncpa [#allocation3], 0
    %s24 = scalar_lea.sflag [#allocation3], 1
    %25 = vsyncpa %s24, 0
    loop: start=0, step=1, limit=4
    $region2: #{transformer_with_graph2vec_forward.1} parent=1 // loop_pre_header
      _
    $region3: #{transformer_with_graph2vec_forward.1} parent=1 // loop_header
      %s27 = sphi 0, %s31
      %p28 = scmp.ge.s32.totalorder %s27, 4
      %s37 = sphi 0, %s39
      %s40 = sphi 0, %s37
      %s41 = sphi 0, %s40
      %s57 = sphi 0, %s41
      %s63 = sphi 0, %s65
      %s66 = sphi 0, %s63
      %s67 = sphi 0, %s66
      %s83 = sphi 0, %s67
      %s87 = sphi 0, %s87
      %s89 = sphi 0, %s87
      %s90 = sphi 0, %s89
      %s104 = sphi 0, %s90
      %s108 = sphi 0, %s108
      %s110 = sphi 0, %s108
      %s111 = sphi 0, %s110
      %s125 = sphi 0, %s111
      %s129 = sphi 0, %s129
      %s131 = sphi 0, %s129
      %s132 = sphi 0, %s131
      %s146 = sphi 0, %s132
      %s150 = sphi 0, %s150
      %s152 = sphi 0, %s150
      %s153 = sphi 0, %s152
      %s167 = sphi 0, %s153
      %s171 = sphi 0, %s171
      %s173 = sphi 0, %s171
      %s174 = sphi 0, %s173
      %s188 = sphi 0, %s174
      %s192 = sphi 0, %s192
      %s194 = sphi 0, %s192
      %s195 = sphi 0, %s194
      %s209 = sphi 0, %s195
      %s213 = sphi 0, %s213
      %s215 = sphi 0, %s213
      %s216 = sphi 0, %s215
      %s230 = sphi 0, %s216
      %s234 = sphi 0, %s234
      %s236 = sphi 0, %s234
      %s237 = sphi 0, %s236
      %s251 = sphi 0, %s237
      %s255 = sphi 0, %s255
      %s257 = sphi 0, %s255
      %s258 = sphi 0, %s257
      %s272 = sphi 0, %s258
      %s276 = sphi 0, %s276
      %s278 = sphi 0, %s276
      %s279 = sphi 0, %s278
      %s293 = sphi 0, %s279
      %s297 = sphi 0, %s297
      %s299 = sphi 0, %s297
      %s300 = sphi 0, %s299
      %s314 = sphi 0, %s300
      %s318 = sphi 0, %s318
      %s320 = sphi 0, %s318
      %s321 = sphi 0, %s320
      %s335 = sphi 0, %s321
      %s339 = sphi 0, %s339
      %s341 = sphi 0, %s339
      %s342 = sphi 0, %s341
      %s356 = sphi 0, %s342
      %s360 = sphi 0, %s360
      %s362 = sphi 0, %s360
      %s363 = sphi 0, %s362
      %s377 = sphi 0, %s363
      %s381 = sphi 0, %s381
      %s383 = sphi 0, %s381
      %s384 = sphi 0, %s383
      %s398 = sphi 0, %s384
      %s402 = sphi 0, %s402
      %s404 = sphi 0, %s402
      %s405 = sphi 0, %s404
      %s419 = sphi 0, %s405
      %s425 = sphi 0, %s427
      %s428 = sphi 0, %s425
      %s429 = sphi 0, %s428
      %s445 = sphi 0, %s429
    $region4: #{transformer_with_graph2vec_forward.1} parent=1 // loop_header_branch
      %30 = sbr.rel (%p28) target = $region8
    $region5: #{transformer_with_graph2vec_forward.1} parent=1 // loop_body
      %s32 = ssub.s32 %s27, 1
      %s33 = ssub.s32 %s27, 2
      %s34 = sadd.s32 %s27, 1
      %s35 = ssub.s32 %s27, %s34
      %p36 = scmp.eq.s32.totalorder %s35, 0
      %s38 = sadd.s32 %s37, 1
      %s39 = scalar_select %p36, %s37, %s38
      %p42 = pneg %p36
      %p43 = scmp.eq.s32.totalorder %s27, 1
      %p44 = por %p42, %p43
      %p45 = scmp.ne.s32.totalorder %s37, %s40
      %p46 = scmp.eq.s32.totalorder %s27, 0
      %p47 = por %p45, %p46
      %p48 = scmp.ne.s32.totalorder %s37, %s40
      %p49 = scmp.eq.s32.totalorder %s32, 1
      %p50 = por %p48, %p49
      %p51 = scmp.ne.s32.totalorder %s40, %s41
      %p52 = scmp.eq.s32.totalorder %s32, 0
      %p53 = por %p51, %p52
      %p54 = scmp.ne.s32.totalorder %s40, %s41
      %p55 = scmp.eq.s32.totalorder %s33, 1
      %p56 = por %p54, %p55
      %p58 = scmp.ne.s32.totalorder %s41, %s57
      %p59 = scmp.eq.s32.totalorder %s33, 0
      %p60 = por %p58, %p59
      %s61 = ssub.s32 %s27, %s34
      %p62 = scmp.eq.s32.totalorder %s61, 0
      %s64 = sadd.s32 %s63, 1
      %s65 = scalar_select %p62, %s63, %s64
      %p68 = pneg %p62
      %p69 = scmp.eq.s32.totalorder %s27, 1
      %p70 = por %p68, %p69
      %p71 = scmp.ne.s32.totalorder %s63, %s66
      %p72 = scmp.eq.s32.totalorder %s27, 0
      %p73 = por %p71, %p72
      %p74 = scmp.ne.s32.totalorder %s63, %s66
      %p75 = scmp.eq.s32.totalorder %s32, 1
      %p76 = por %p74, %p75
      %p77 = scmp.ne.s32.totalorder %s66, %s67
      %p78 = scmp.eq.s32.totalorder %s32, 0
      %p79 = por %p77, %p78
      %p80 = scmp.ne.s32.totalorder %s66, %s67
      %p81 = scmp.eq.s32.totalorder %s33, 1
      %p82 = por %p80, %p81
      %p84 = scmp.ne.s32.totalorder %s67, %s83
      %p85 = scmp.eq.s32.totalorder %s33, 0
      %p86 = por %p84, %p85
      %s88 = sadd.s32 %s87, 1
      %p91 = scmp.eq.s32.totalorder %s27, 1
      %p92 = scmp.ne.s32.totalorder %s87, %s89
      %p93 = scmp.eq.s32.totalorder %s27, 0
      %p94 = por %p92, %p93
      %p95 = scmp.ne.s32.totalorder %s87, %s89
      %p96 = scmp.eq.s32.totalorder %s32, 1
      %p97 = por %p95, %p96
      %p98 = scmp.ne.s32.totalorder %s89, %s90
      %p99 = scmp.eq.s32.totalorder %s32, 0
      %p100 = por %p98, %p99
      %p101 = scmp.ne.s32.totalorder %s89, %s90
      %p102 = scmp.eq.s32.totalorder %s33, 1
      %p103 = por %p101, %p102
      %p105 = scmp.ne.s32.totalorder %s90, %s104
      %p106 = scmp.eq.s32.totalorder %s33, 0
      %p107 = por %p105, %p106
      %s109 = sadd.s32 %s108, 1
      %p112 = scmp.eq.s32.totalorder %s27, 1
      %p113 = scmp.ne.s32.totalorder %s108, %s110
      %p114 = scmp.eq.s32.totalorder %s27, 0
      %p115 = por %p113, %p114
      %p116 = scmp.ne.s32.totalorder %s108, %s110
      %p117 = scmp.eq.s32.totalorder %s32, 1
      %p118 = por %p116, %p117
      %p119 = scmp.ne.s32.totalorder %s110, %s111
      %p120 = scmp.eq.s32.totalorder %s32, 0
      %p121 = por %p119, %p120
      %p122 = scmp.ne.s32.totalorder %s110, %s111
      %p123 = scmp.eq.s32.totalorder %s33, 1
      %p124 = por %p122, %p123
      %p126 = scmp.ne.s32.totalorder %s111, %s125
      %p127 = scmp.eq.s32.totalorder %s33, 0
      %p128 = por %p126, %p127
      %s130 = sadd.s32 %s129, 1
      %p133 = scmp.eq.s32.totalorder %s27, 1
      %p134 = scmp.ne.s32.totalorder %s129, %s131
      %p135 = scmp.eq.s32.totalorder %s27, 0
      %p136 = por %p134, %p135
      %p137 = scmp.ne.s32.totalorder %s129, %s131
      %p138 = scmp.eq.s32.totalorder %s32, 1
      %p139 = por %p137, %p138
      %p140 = scmp.ne.s32.totalorder %s131, %s132
      %p141 = scmp.eq.s32.totalorder %s32, 0
      %p142 = por %p140, %p141
      %p143 = scmp.ne.s32.totalorder %s131, %s132
      %p144 = scmp.eq.s32.totalorder %s33, 1
      %p145 = por %p143, %p144
      %p147 = scmp.ne.s32.totalorder %s132, %s146
      %p148 = scmp.eq.s32.totalorder %s33, 0
      %p149 = por %p147, %p148
      %s151 = sadd.s32 %s150, 1
      %p154 = scmp.eq.s32.totalorder %s27, 1
      %p155 = scmp.ne.s32.totalorder %s150, %s152
      %p156 = scmp.eq.s32.totalorder %s27, 0
      %p157 = por %p155, %p156
      %p158 = scmp.ne.s32.totalorder %s150, %s152
      %p159 = scmp.eq.s32.totalorder %s32, 1
      %p160 = por %p158, %p159
      %p161 = scmp.ne.s32.totalorder %s152, %s153
      %p162 = scmp.eq.s32.totalorder %s32, 0
      %p163 = por %p161, %p162
      %p164 = scmp.ne.s32.totalorder %s152, %s153
      %p165 = scmp.eq.s32.totalorder %s33, 1
      %p166 = por %p164, %p165
      %p168 = scmp.ne.s32.totalorder %s153, %s167
      %p169 = scmp.eq.s32.totalorder %s33, 0
      %p170 = por %p168, %p169
      %s172 = sadd.s32 %s171, 1
      %p175 = scmp.eq.s32.totalorder %s27, 1
      %p176 = scmp.ne.s32.totalorder %s171, %s173
      %p177 = scmp.eq.s32.totalorder %s27, 0
      %p178 = por %p176, %p177
      %p179 = scmp.ne.s32.totalorder %s171, %s173
      %p180 = scmp.eq.s32.totalorder %s32, 1
      %p181 = por %p179, %p180
      %p182 = scmp.ne.s32.totalorder %s173, %s174
      %p183 = scmp.eq.s32.totalorder %s32, 0
      %p184 = por %p182, %p183
      %p185 = scmp.ne.s32.totalorder %s173, %s174
      %p186 = scmp.eq.s32.totalorder %s33, 1
      %p187 = por %p185, %p186
      %p189 = scmp.ne.s32.totalorder %s174, %s188
      %p190 = scmp.eq.s32.totalorder %s33, 0
      %p191 = por %p189, %p190
      %s193 = sadd.s32 %s192, 1
      %p196 = scmp.eq.s32.totalorder %s27, 1
      %p197 = scmp.ne.s32.totalorder %s192, %s194
      %p198 = scmp.eq.s32.totalorder %s27, 0
      %p199 = por %p197, %p198
      %p200 = scmp.ne.s32.totalorder %s192, %s194
      %p201 = scmp.eq.s32.totalorder %s32, 1
      %p202 = por %p200, %p201
      %p203 = scmp.ne.s32.totalorder %s194, %s195
      %p204 = scmp.eq.s32.totalorder %s32, 0
      %p205 = por %p203, %p204
      %p206 = scmp.ne.s32.totalorder %s194, %s195
      %p207 = scmp.eq.s32.totalorder %s33, 1
      %p208 = por %p206, %p207
      %p210 = scmp.ne.s32.totalorder %s195, %s209
      %p211 = scmp.eq.s32.totalorder %s33, 0
      %p212 = por %p210, %p211
      %s214 = sadd.s32 %s213, 1
      %p217 = scmp.eq.s32.totalorder %s27, 1
      %p218 = scmp.ne.s32.totalorder %s213, %s215
      %p219 = scmp.eq.s32.totalorder %s27, 0
      %p220 = por %p218, %p219
      %p221 = scmp.ne.s32.totalorder %s213, %s215
      %p222 = scmp.eq.s32.totalorder %s32, 1
      %p223 = por %p221, %p222
      %p224 = scmp.ne.s32.totalorder %s215, %s216
      %p225 = scmp.eq.s32.totalorder %s32, 0
      %p226 = por %p224, %p225
      %p227 = scmp.ne.s32.totalorder %s215, %s216
      %p228 = scmp.eq.s32.totalorder %s33, 1
      %p229 = por %p227, %p228
      %p231 = scmp.ne.s32.totalorder %s216, %s230
      %p232 = scmp.eq.s32.totalorder %s33, 0
      %p233 = por %p231, %p232
      %s235 = sadd.s32 %s234, 1
      %p238 = scmp.eq.s32.totalorder %s27, 1
      %p239 = scmp.ne.s32.totalorder %s234, %s236
      %p240 = scmp.eq.s32.totalorder %s27, 0
      %p241 = por %p239, %p240
      %p242 = scmp.ne.s32.totalorder %s234, %s236
      %p243 = scmp.eq.s32.totalorder %s32, 1
      %p244 = por %p242, %p243
      %p245 = scmp.ne.s32.totalorder %s236, %s237
      %p246 = scmp.eq.s32.totalorder %s32, 0
      %p247 = por %p245, %p246
      %p248 = scmp.ne.s32.totalorder %s236, %s237
      %p249 = scmp.eq.s32.totalorder %s33, 1
      %p250 = por %p248, %p249
      %p252 = scmp.ne.s32.totalorder %s237, %s251
      %p253 = scmp.eq.s32.totalorder %s33, 0
      %p254 = por %p252, %p253
      %s256 = sadd.s32 %s255, 1
      %p259 = scmp.eq.s32.totalorder %s27, 1
      %p260 = scmp.ne.s32.totalorder %s255, %s257
      %p261 = scmp.eq.s32.totalorder %s27, 0
      %p262 = por %p260, %p261
      %p263 = scmp.ne.s32.totalorder %s255, %s257
      %p264 = scmp.eq.s32.totalorder %s32, 1
      %p265 = por %p263, %p264
      %p266 = scmp.ne.s32.totalorder %s257, %s258
      %p267 = scmp.eq.s32.totalorder %s32, 0
      %p268 = por %p266, %p267
      %p269 = scmp.ne.s32.totalorder %s257, %s258
      %p270 = scmp.eq.s32.totalorder %s33, 1
      %p271 = por %p269, %p270
      %p273 = scmp.ne.s32.totalorder %s258, %s272
      %p274 = scmp.eq.s32.totalorder %s33, 0
      %p275 = por %p273, %p274
      %s277 = sadd.s32 %s276, 1
      %p280 = scmp.eq.s32.totalorder %s27, 1
      %p281 = scmp.ne.s32.totalorder %s276, %s278
      %p282 = scmp.eq.s32.totalorder %s27, 0
      %p283 = por %p281, %p282
      %p284 = scmp.ne.s32.totalorder %s276, %s278
      %p285 = scmp.eq.s32.totalorder %s32, 1
      %p286 = por %p284, %p285
      %p287 = scmp.ne.s32.totalorder %s278, %s279
      %p288 = scmp.eq.s32.totalorder %s32, 0
      %p289 = por %p287, %p288
      %p290 = scmp.ne.s32.totalorder %s278, %s279
      %p291 = scmp.eq.s32.totalorder %s33, 1
      %p292 = por %p290, %p291
      %p294 = scmp.ne.s32.totalorder %s279, %s293
      %p295 = scmp.eq.s32.totalorder %s33, 0
      %p296 = por %p294, %p295
      %s298 = sadd.s32 %s297, 1
      %p301 = scmp.eq.s32.totalorder %s27, 1
      %p302 = scmp.ne.s32.totalorder %s297, %s299
      %p303 = scmp.eq.s32.totalorder %s27, 0
      %p304 = por %p302, %p303
      %p305 = scmp.ne.s32.totalorder %s297, %s299
      %p306 = scmp.eq.s32.totalorder %s32, 1
      %p307 = por %p305, %p306
      %p308 = scmp.ne.s32.totalorder %s299, %s300
      %p309 = scmp.eq.s32.totalorder %s32, 0
      %p310 = por %p308, %p309
      %p311 = scmp.ne.s32.totalorder %s299, %s300
      %p312 = scmp.eq.s32.totalorder %s33, 1
      %p313 = por %p311, %p312
      %p315 = scmp.ne.s32.totalorder %s300, %s314
      %p316 = scmp.eq.s32.totalorder %s33, 0
      %p317 = por %p315, %p316
      %s319 = sadd.s32 %s318, 1
      %p322 = scmp.eq.s32.totalorder %s27, 1
      %p323 = scmp.ne.s32.totalorder %s318, %s320
      %p324 = scmp.eq.s32.totalorder %s27, 0
      %p325 = por %p323, %p324
      %p326 = scmp.ne.s32.totalorder %s318, %s320
      %p327 = scmp.eq.s32.totalorder %s32, 1
      %p328 = por %p326, %p327
      %p329 = scmp.ne.s32.totalorder %s320, %s321
      %p330 = scmp.eq.s32.totalorder %s32, 0
      %p331 = por %p329, %p330
      %p332 = scmp.ne.s32.totalorder %s320, %s321
      %p333 = scmp.eq.s32.totalorder %s33, 1
      %p334 = por %p332, %p333
      %p336 = scmp.ne.s32.totalorder %s321, %s335
      %p337 = scmp.eq.s32.totalorder %s33, 0
      %p338 = por %p336, %p337
      %s340 = sadd.s32 %s339, 1
      %p343 = scmp.eq.s32.totalorder %s27, 1
      %p344 = scmp.ne.s32.totalorder %s339, %s341
      %p345 = scmp.eq.s32.totalorder %s27, 0
      %p346 = por %p344, %p345
      %p347 = scmp.ne.s32.totalorder %s339, %s341
      %p348 = scmp.eq.s32.totalorder %s32, 1
      %p349 = por %p347, %p348
      %p350 = scmp.ne.s32.totalorder %s341, %s342
      %p351 = scmp.eq.s32.totalorder %s32, 0
      %p352 = por %p350, %p351
      %p353 = scmp.ne.s32.totalorder %s341, %s342
      %p354 = scmp.eq.s32.totalorder %s33, 1
      %p355 = por %p353, %p354
      %p357 = scmp.ne.s32.totalorder %s342, %s356
      %p358 = scmp.eq.s32.totalorder %s33, 0
      %p359 = por %p357, %p358
      %s361 = sadd.s32 %s360, 1
      %p364 = scmp.eq.s32.totalorder %s27, 1
      %p365 = scmp.ne.s32.totalorder %s360, %s362
      %p366 = scmp.eq.s32.totalorder %s27, 0
      %p367 = por %p365, %p366
      %p368 = scmp.ne.s32.totalorder %s360, %s362
      %p369 = scmp.eq.s32.totalorder %s32, 1
      %p370 = por %p368, %p369
      %p371 = scmp.ne.s32.totalorder %s362, %s363
      %p372 = scmp.eq.s32.totalorder %s32, 0
      %p373 = por %p371, %p372
      %p374 = scmp.ne.s32.totalorder %s362, %s363
      %p375 = scmp.eq.s32.totalorder %s33, 1
      %p376 = por %p374, %p375
      %p378 = scmp.ne.s32.totalorder %s363, %s377
      %p379 = scmp.eq.s32.totalorder %s33, 0
      %p380 = por %p378, %p379
      %s382 = sadd.s32 %s381, 1
      %p385 = scmp.eq.s32.totalorder %s27, 1
      %p386 = scmp.ne.s32.totalorder %s381, %s383
      %p387 = scmp.eq.s32.totalorder %s27, 0
      %p388 = por %p386, %p387
      %p389 = scmp.ne.s32.totalorder %s381, %s383
      %p390 = scmp.eq.s32.totalorder %s32, 1
      %p391 = por %p389, %p390
      %p392 = scmp.ne.s32.totalorder %s383, %s384
      %p393 = scmp.eq.s32.totalorder %s32, 0
      %p394 = por %p392, %p393
      %p395 = scmp.ne.s32.totalorder %s383, %s384
      %p396 = scmp.eq.s32.totalorder %s33, 1
      %p397 = por %p395, %p396
      %p399 = scmp.ne.s32.totalorder %s384, %s398
      %p400 = scmp.eq.s32.totalorder %s33, 0
      %p401 = por %p399, %p400
      %s403 = sadd.s32 %s402, 1
      %p406 = scmp.eq.s32.totalorder %s27, 1
      %p407 = scmp.ne.s32.totalorder %s402, %s404
      %p408 = scmp.eq.s32.totalorder %s27, 0
      %p409 = por %p407, %p408
      %p410 = scmp.ne.s32.totalorder %s402, %s404
      %p411 = scmp.eq.s32.totalorder %s32, 1
      %p412 = por %p410, %p411
      %p413 = scmp.ne.s32.totalorder %s404, %s405
      %p414 = scmp.eq.s32.totalorder %s32, 0
      %p415 = por %p413, %p414
      %p416 = scmp.ne.s32.totalorder %s404, %s405
      %p417 = scmp.eq.s32.totalorder %s33, 1
      %p418 = por %p416, %p417
      %p420 = scmp.ne.s32.totalorder %s405, %s419
      %p421 = scmp.eq.s32.totalorder %s33, 0
      %p422 = por %p420, %p421
      %s423 = ssub.s32 %s27, %s34
      %p424 = scmp.eq.s32.totalorder %s423, 0
      %s426 = sadd.s32 %s425, 1
      %s427 = scalar_select %p424, %s425, %s426
      %p430 = pneg %p424
      %p431 = scmp.eq.s32.totalorder %s27, 1
      %p432 = por %p430, %p431
      %p433 = scmp.ne.s32.totalorder %s425, %s428
      %p434 = scmp.eq.s32.totalorder %s27, 0
      %p435 = por %p433, %p434
      %p436 = scmp.ne.s32.totalorder %s425, %s428
      %p437 = scmp.eq.s32.totalorder %s32, 1
      %p438 = por %p436, %p437
      %p439 = scmp.ne.s32.totalorder %s428, %s429
      %p440 = scmp.eq.s32.totalorder %s32, 0
      %p441 = por %p439, %p440
      %p442 = scmp.ne.s32.totalorder %s428, %s429
      %p443 = scmp.eq.s32.totalorder %s33, 1
      %p444 = por %p442, %p443
      %p446 = scmp.ne.s32.totalorder %s429, %s445
      %p447 = scmp.eq.s32.totalorder %s33, 0
      %p448 = por %p446, %p447
      %p449 = scmp.le.s32.totalorder 1, %s27
      %p450 = scmp.lt.s32.totalorder %s27, 3
      %p451 = pnand %p449, %p450
      %p452 = pneg %p451
      // Predicated region
      $region9: #{transformer_with_graph2vec_forward.1} parent=5 // pred_check
        _
      $region10: #{transformer_with_graph2vec_forward.1} parent=5 // pred_check_branch
        %454 = sbr.rel (%p451) target = $region12
      $region11: #{transformer_with_graph2vec_forward.1} parent=5 // pred_region
        %s455 = ssub.s32 %s27, 1
        // Predicated region
        $region13: #{transformer_with_graph2vec_forward.1} parent=11 // pred_check
          %p456 = pneg %p100
        $region14: #{transformer_with_graph2vec_forward.1} parent=11 // pred_check_branch
          %458 = sbr.rel (%p456) target = $region16
        $region15: #{transformer_with_graph2vec_forward.1} parent=11 // pred_region
          _
        $region16: #{transformer_with_graph2vec_forward.1} parent=11 // pred_fallthru
          _
        // Predicated region
        $region17: #{transformer_with_graph2vec_forward.1} parent=11 // pred_check
          %p459 = pneg %p121
        $region18: #{transformer_with_graph2vec_forward.1} parent=11 // pred_check_branch
          %461 = sbr.rel (%p459) target = $region20
        $region19: #{transformer_with_graph2vec_forward.1} parent=11 // pred_region
          _
        $region20: #{transformer_with_graph2vec_forward.1} parent=11 // pred_fallthru
          _
        // Predicated region
        $region21: #{transformer_with_graph2vec_forward.1} parent=11 // pred_check
          %p462 = pneg %p142
        $region22: #{transformer_with_graph2vec_forward.1} parent=11 // pred_check_branch
          %464 = sbr.rel (%p462) target = $region24
        $region23: #{transformer_with_graph2vec_forward.1} parent=11 // pred_region
          _
        $region24: #{transformer_with_graph2vec_forward.1} parent=11 // pred_fallthru
          _
        // Predicated region
        $region25: #{transformer_with_graph2vec_forward.1} parent=11 // pred_check
          %p465 = pneg %p163
        $region26: #{transformer_with_graph2vec_forward.1} parent=11 // pred_check_branch
          %467 = sbr.rel (%p465) target = $region28
        $region27: #{transformer_with_graph2vec_forward.1} parent=11 // pred_region
          _
        $region28: #{transformer_with_graph2vec_forward.1} parent=11 // pred_fallthru
          _
        // Predicated region
        $region29: #{transformer_with_graph2vec_forward.1} parent=11 // pred_check
          %p468 = pneg %p184
        $region30: #{transformer_with_graph2vec_forward.1} parent=11 // pred_check_branch
          %470 = sbr.rel (%p468) target = $region32
        $region31: #{transformer_with_graph2vec_forward.1} parent=11 // pred_region
          _
        $region32: #{transformer_with_graph2vec_forward.1} parent=11 // pred_fallthru
          _
        // Predicated region
        $region33: #{transformer_with_graph2vec_forward.1} parent=11 // pred_check
          %p471 = pneg %p205
        $region34: #{transformer_with_graph2vec_forward.1} parent=11 // pred_check_branch
          %473 = sbr.rel (%p471) target = $region36
        $region35: #{transformer_with_graph2vec_forward.1} parent=11 // pred_region
          _
        $region36: #{transformer_with_graph2vec_forward.1} parent=11 // pred_fallthru
          _
        // Predicated region
        $region37: #{transformer_with_graph2vec_forward.1} parent=11 // pred_check
          %p474 = pneg %p226
        $region38: #{transformer_with_graph2vec_forward.1} parent=11 // pred_check_branch
          %476 = sbr.rel (%p474) target = $region40
        $region39: #{transformer_with_graph2vec_forward.1} parent=11 // pred_region
          _
        $region40: #{transformer_with_graph2vec_forward.1} parent=11 // pred_fallthru
          _
        // Predicated region
        $region41: #{transformer_with_graph2vec_forward.1} parent=11 // pred_check
          %p477 = pneg %p247
        $region42: #{transformer_with_graph2vec_forward.1} parent=11 // pred_check_branch
          %479 = sbr.rel (%p477) target = $region44
        $region43: #{transformer_with_graph2vec_forward.1} parent=11 // pred_region
          _
        $region44: #{transformer_with_graph2vec_forward.1} parent=11 // pred_fallthru
          _
        // Predicated region
        $region45: #{transformer_with_graph2vec_forward.1} parent=11 // pred_check
          %p480 = pneg %p268
        $region46: #{transformer_with_graph2vec_forward.1} parent=11 // pred_check_branch
          %482 = sbr.rel (%p480) target = $region48
        $region47: #{transformer_with_graph2vec_forward.1} parent=11 // pred_region
          _
        $region48: #{transformer_with_graph2vec_forward.1} parent=11 // pred_fallthru
          _
        // Predicated region
        $region49: #{transformer_with_graph2vec_forward.1} parent=11 // pred_check
          %p483 = pneg %p289
        $region50: #{transformer_with_graph2vec_forward.1} parent=11 // pred_check_branch
          %485 = sbr.rel (%p483) target = $region52
        $region51: #{transformer_with_graph2vec_forward.1} parent=11 // pred_region
          _
        $region52: #{transformer_with_graph2vec_forward.1} parent=11 // pred_fallthru
          _
        // Predicated region
        $region53: #{transformer_with_graph2vec_forward.1} parent=11 // pred_check
          %p486 = pneg %p310
        $region54: #{transformer_with_graph2vec_forward.1} parent=11 // pred_check_branch
          %488 = sbr.rel (%p486) target = $region56
        $region55: #{transformer_with_graph2vec_forward.1} parent=11 // pred_region
          _
        $region56: #{transformer_with_graph2vec_forward.1} parent=11 // pred_fallthru
          _
        // Predicated region
        $region57: #{transformer_with_graph2vec_forward.1} parent=11 // pred_check
          %p489 = pneg %p331
        $region58: #{transformer_with_graph2vec_forward.1} parent=11 // pred_check_branch
          %491 = sbr.rel (%p489) target = $region60
        $region59: #{transformer_with_graph2vec_forward.1} parent=11 // pred_region
          _
        $region60: #{transformer_with_graph2vec_forward.1} parent=11 // pred_fallthru
          _
        // Predicated region
        $region61: #{transformer_with_graph2vec_forward.1} parent=11 // pred_check
          %p492 = pneg %p352
        $region62: #{transformer_with_graph2vec_forward.1} parent=11 // pred_check_branch
          %494 = sbr.rel (%p492) target = $region64
        $region63: #{transformer_with_graph2vec_forward.1} parent=11 // pred_region
          _
        $region64: #{transformer_with_graph2vec_forward.1} parent=11 // pred_fallthru
          _
        // Predicated region
        $region65: #{transformer_with_graph2vec_forward.1} parent=11 // pred_check
          %p495 = pneg %p373
        $region66: #{transformer_with_graph2vec_forward.1} parent=11 // pred_check_branch
          %497 = sbr.rel (%p495) target = $region68
        $region67: #{transformer_with_graph2vec_forward.1} parent=11 // pred_region
          _
        $region68: #{transformer_with_graph2vec_forward.1} parent=11 // pred_fallthru
          _
        // Predicated region
        $region69: #{transformer_with_graph2vec_forward.1} parent=11 // pred_check
          %p498 = pneg %p394
        $region70: #{transformer_with_graph2vec_forward.1} parent=11 // pred_check_branch
          %500 = sbr.rel (%p498) target = $region72
        $region71: #{transformer_with_graph2vec_forward.1} parent=11 // pred_region
          _
        $region72: #{transformer_with_graph2vec_forward.1} parent=11 // pred_fallthru
          _
        // Predicated region
        $region73: #{transformer_with_graph2vec_forward.1} parent=11 // pred_check
          %p501 = pneg %p415
        $region74: #{transformer_with_graph2vec_forward.1} parent=11 // pred_check_branch
          %503 = sbr.rel (%p501) target = $region76
        $region75: #{transformer_with_graph2vec_forward.1} parent=11 // pred_region
          _
        $region76: #{transformer_with_graph2vec_forward.1} parent=11 // pred_fallthru
          _
      $region12: #{transformer_with_graph2vec_forward.1} parent=5 // pred_fallthru
        _
      %p504 = scmp.lt.s32.totalorder %s27, 2
      // Predicated region
      $region77: #{transformer_with_graph2vec_forward.1} parent=5 // pred_check
        %p505 = pneg %p504
      $region78: #{transformer_with_graph2vec_forward.1} parent=5 // pred_check_branch
        %507 = sbr.rel (%p505) target = $region80
      $region79: #{transformer_with_graph2vec_forward.1} parent=5 // pred_region
        // Predicated region
        $region81: #{transformer_with_graph2vec_forward.1} parent=79 // pred_check
          %p508 = pneg %p47
        $region82: #{transformer_with_graph2vec_forward.1} parent=79 // pred_check_branch
          %510 = sbr.rel (%p508) target = $region84
        $region83: #{transformer_with_graph2vec_forward.1} parent=79 // pred_region
          %p511 = scmp.lt.s32.totalorder %s27, 1
          %s512 = scalar_select %p511, %s27, 1
          %s513 = smul.addr %s512, 8
          %s514 = scalar_lea.vmem %s0, %s513
        $region84: #{transformer_with_graph2vec_forward.1} parent=79 // pred_fallthru
          _
        // Predicated region
        $region85: #{transformer_with_graph2vec_forward.1} parent=79 // pred_check
          %p515 = pneg %p73
        $region86: #{transformer_with_graph2vec_forward.1} parent=79 // pred_check_branch
          %517 = sbr.rel (%p515) target = $region88
        $region87: #{transformer_with_graph2vec_forward.1} parent=79 // pred_region
          %p518 = scmp.lt.s32.totalorder %s27, 1
          %s519 = scalar_select %p518, %s27, 1
          %s520 = smul.addr %s519, 8
          %s521 = scalar_lea.vmem %s1, %s520
        $region88: #{transformer_with_graph2vec_forward.1} parent=79 // pred_fallthru
          _
      $region80: #{transformer_with_graph2vec_forward.1} parent=5 // pred_fallthru
        _
      %p522 = scmp.le.s32.totalorder 1, %s27
      %p523 = scmp.lt.s32.totalorder %s27, 3
      %p524 = pnand %p522, %p523
      %p525 = pneg %p524
      // Predicated region
      $region89: #{transformer_with_graph2vec_forward.1} parent=5 // pred_check
        _
      $region90: #{transformer_with_graph2vec_forward.1} parent=5 // pred_check_branch
        %527 = sbr.rel (%p524) target = $region92
      $region91: #{transformer_with_graph2vec_forward.1} parent=5 // pred_region
        %s528 = ssub.s32 %s27, 1
        %p529 = scmp.lt.s32.totalorder %s32, 1
        %s530 = scalar_select %p529, %s32, 1
        %s531 = smul.addr %s530, 8
        %s532 = scalar_lea.vmem %s0, %s531
        %p533 = pneg %p53
        %p534 = pneg %p50
        %p535 = scmp.lt.s32.totalorder %s32, 1
        %s536 = scalar_select %p535, %s32, 1
        %s537 = smul.addr %s536, 8
        %s538 = scalar_lea.vmem %s1, %s537
        %p539 = pneg %p79
        %p540 = pneg %p76
        %p541 = pneg %p100
        %p542 = pneg %p97
        %p543 = pneg %p121
        %p544 = pneg %p118
        %p545 = pneg %p142
        %p546 = pneg %p139
        %p547 = pneg %p163
        %p548 = pneg %p160
        %p549 = pneg %p184
        %p550 = pneg %p181
        %p551 = pneg %p205
        %p552 = pneg %p202
        %p553 = pneg %p226
        %p554 = pneg %p223
        %p555 = pneg %p247
        %p556 = pneg %p244
        %p557 = pneg %p268
        %p558 = pneg %p265
        %p559 = pneg %p289
        %p560 = pneg %p286
        %p561 = pneg %p310
        %p562 = pneg %p307
        %p563 = pneg %p331
        %p564 = pneg %p328
        %p565 = pneg %p352
        %p566 = pneg %p349
        %p567 = pneg %p373
        %p568 = pneg %p370
        %p569 = pneg %p394
        %p570 = pneg %p391
        %p571 = pneg %p415
        %p572 = pneg %p412
        %p573 = pneg %p441
        %p574 = pneg %p438
        %s575 = sand.u32 %s428, 1
        %s576 = scalar_lea.sflag [#allocation3], %s575
        %s577 = sand.u32 %s428, 1
        %s578 = smul.addr %s577, 8
        %s579 = scalar_lea.vmem [#allocation2], %s578
        %p580 = scmp.lt.s32.totalorder %s32, 1
        %s581 = scalar_select %p580, %s32, 1
        %s582 = smul.addr %s581, 8
        %s583 = scalar_lea.vmem %s0, %s582
        %p584 = scmp.lt.s32.totalorder %s32, 1
        %s585 = scalar_select %p584, %s32, 1
        %s586 = smul.addr %s585, 8
        %s587 = scalar_lea.vmem %s1, %s586
        %v589 = vld [vmem:[%s4] sm:$0xf]
        %v590 = vld [vmem:[%s583] sm:$0xff]
        %v591 = vld [vmem:[%s2] sm:$0xf]
        %v592 = vld [vmem:[%s2 + $0x4] sm:$0xf]
        %v593 = vpack.c.bf16 %v590, %v590
        %v594 = vlaneseq
        %v595 = vshrl.u32 %v594, 7
        %v596 = vsub.s32 0, %v595
        %v597 = vrot.slane %v589, %v596
        %v600 = vunpack.c.l.b16 %v591
        %v601 = vunpack.c.l.b16 %v592
        %v602 = vpack.c.b16 %v601, %v600
        %vm604 = vcmask 130048
        %v606 = vsel %vm604, %v593, 0
        %608 = vmatprep.subr.bf16.mxu0 0
        %609 = vmatpush1.bf16.msra.mxu0 %v602
        %610 = vmatprep.subr.bf16.mxu0 0
        %611 = vmatpush1.bf16.msra.mxu0 0
        %612 = vmatprep.subr.bf16.mxu0 0
        %613 = vmatpush1.bf16.msra.mxu0 0
        %614 = vmatprep.subr.bf16.mxu0 0
        %615 = vmatpush1.bf16.msra.mxu0 0
        %616 = vmatprep.subr.bf16.mxu0 0
        %617 = vmatpush1.bf16.msra.mxu0 0
        %618 = vmatprep.subr.bf16.mxu0 0
        %619 = vmatpush1.bf16.msra.mxu0 0
        %620 = vmatprep.subr.bf16.mxu0 0
        %621 = vmatpush1.bf16.msra.mxu0 0
        %622 = vmatprep.subr.bf16.mxu0 0
        %623 = vmatpush1.bf16.msra.mxu0 0
        %624 = vmatprep.subr.bf16.mxu0 0
        %625 = vmatpush1.bf16.msra.mxu0 0
        %626 = vmatprep.subr.bf16.mxu0 0
        %627 = vmatpush1.bf16.msra.mxu0 0
        %628 = vmatprep.subr.bf16.mxu0 0
        %629 = vmatpush1.bf16.msra.mxu0 0
        %630 = vmatprep.subr.bf16.mxu0 0
        %631 = vmatpush1.bf16.msra.mxu0 0
        %632 = vmatprep.subr.bf16.mxu0 0
        %633 = vmatpush1.bf16.msra.mxu0 0
        %634 = vmatprep.subr.bf16.mxu0 0
        %635 = vmatpush1.bf16.msra.mxu0 0
        %636 = vmatprep.subr.bf16.mxu0 0
        %637 = vmatpush1.bf16.msra.mxu0 0
        %638 = vmatprep.subr.bf16.mxu0 0
        %639 = vmatpush1.bf16.msra.mxu0 0
        %640 = vmatprep.mubr.bf16.mxu0 0
        %641 = vmatmul.mubr.bf16.gmra.mrb[0].mxu0 %v606
        %v642 = vpop.f32.mrb[0].mxu0
        %v643 = vadd.f32 %v597, %v642
        %v644 = vpop.f32.mrb[0].mxu0
        %v645 = vpop.f32.mrb[0].mxu0
        %v646 = vpop.f32.mrb[0].mxu0
        %647 = vdwg.mxu0
        %v648 = vld [vmem:[%s5] sm:$0xf]
        %v649 = vld [vmem:[%s5 + $0x4] sm:$0xf]
        %v650 = vld [vmem:[%s5 + $0x8] sm:$0xf]
        %v651 = vld [vmem:[%s5 + $0xc] sm:$0xf]
        %v652 = vld [vmem:[%s6] sm:$0xf]
        %v653 = vld [vmem:[%s6 + $0x4] sm:$0xf]
        %v654 = vld [vmem:[%s6 + $0x8] sm:$0xf]
        %v655 = vld [vmem:[%s6 + $0xc] sm:$0xf]
        %v656 = vld [vmem:[%s7] sm:$0xf]
        %v657 = vld [vmem:[%s7 + $0x4] sm:$0xf]
        %v658 = vld [vmem:[%s7 + $0x8] sm:$0xf]
        %v659 = vld [vmem:[%s7 + $0xc] sm:$0xf]
        %v660 = vld [vmem:[%s8] sm:$0xf]
        %v661 = vld [vmem:[%s8 + $0x4] sm:$0xf]
        %v662 = vld [vmem:[%s8 + $0x8] sm:$0xf]
        %v663 = vld [vmem:[%s8 + $0xc] sm:$0xf]
        %v664 = vld [vmem:[%s8 + $0x10] sm:$0xf]
        %v665 = vld [vmem:[%s8 + $0x14] sm:$0xf]
        %v666 = vld [vmem:[%s8 + $0x18] sm:$0xf]
        %v667 = vld [vmem:[%s8 + $0x1c] sm:$0xf]
        %v668 = vld [vmem:[%s8 + $0x20] sm:$0xf]
        %v669 = vld [vmem:[%s8 + $0x24] sm:$0xf]
        %v670 = vld [vmem:[%s8 + $0x28] sm:$0xf]
        %v671 = vld [vmem:[%s8 + $0x2c] sm:$0xf]
        %v672 = vld [vmem:[%s8 + $0x30] sm:$0xf]
        %v673 = vld [vmem:[%s8 + $0x34] sm:$0xf]
        %v674 = vld [vmem:[%s8 + $0x38] sm:$0xf]
        %v675 = vld [vmem:[%s8 + $0x3c] sm:$0xf]
        %v676 = vld [vmem:[%s9] sm:$0xff]
        %vm677 = vcmask 261120
        %v678 = vsel %vm677, %v643, 0.0
        %679 = vadd.xlane.f32.xlu0 %v678
        %v680 = vpop.xlane.xlu0 %679
        %v681 = vrcp.pop 32.0
        %v682 = vmul.f32 %v680, %v681
        %v683 = vsub.f32 %v643, %v682
        %v684 = vmul.f32 %v683, %v683
        %v685 = vsel %vm677, %v684, 0.0
        %686 = vadd.xlane.f32.xlu0 %v685
        %v687 = vpop.xlane.xlu0 %686
        %v688 = vmul.f32 %v687, %v681
        %v689 = vadd.f32 %v688, 1e-05
        %v690 = vrsqrt.pop %v689
        %v691 = vmul.f32 %v683, %v690
        %v692 = vlaneseq
        %v693 = vshrl.u32 %v692, 7
        %v694 = vsub.s32 0, %v693
        %v695 = vrot.slane %v676, %v694
        %v696 = vmul.f32 %v691, %v695
        %v697 = vlaneseq
        %v698 = vshrl.u32 %v697, 7
        %v699 = vsub.s32 1, %v698
        %v700 = vrot.slane %v676, %v699
        %v701 = vadd.f32 %v696, %v700
        %v702 = vpack.c.bf16 %v701, %v701
        %v703 = vlaneseq
        %v704 = vshrl.u32 %v703, 7
        %v705 = vsub.s32 2, %v704
        %v706 = vrot.slane %v676, %v705
        %v711 = vunpack.c.l.b16 %v648
        %v712 = vunpack.c.l.b16 %v649
        %v713 = vunpack.c.l.b16 %v650
        %v714 = vunpack.c.l.b16 %v651
        %v715 = vpack.c.b16 %v712, %v711
        %v716 = vpack.c.b16 %v714, %v713
        %v720 = vsel %vm677, %v702, 0
        %722 = vmatprep.subr.bf16.mxu0 0
        %723 = vmatpush1.bf16.msra.mxu0 %v715
        %724 = vmatprep.subr.bf16.mxu0 0
        %725 = vmatpush1.bf16.msra.mxu0 %v716
        %726 = vmatprep.subr.bf16.mxu0 0
        %727 = vmatpush1.bf16.msra.mxu0 0
        %728 = vmatprep.subr.bf16.mxu0 0
        %729 = vmatpush1.bf16.msra.mxu0 0
        %730 = vmatprep.subr.bf16.mxu0 0
        %731 = vmatpush1.bf16.msra.mxu0 0
        %732 = vmatprep.subr.bf16.mxu0 0
        %733 = vmatpush1.bf16.msra.mxu0 0
        %734 = vmatprep.subr.bf16.mxu0 0
        %735 = vmatpush1.bf16.msra.mxu0 0
        %736 = vmatprep.subr.bf16.mxu0 0
        %737 = vmatpush1.bf16.msra.mxu0 0
        %738 = vmatprep.subr.bf16.mxu0 0
        %739 = vmatpush1.bf16.msra.mxu0 0
        %740 = vmatprep.subr.bf16.mxu0 0
        %741 = vmatpush1.bf16.msra.mxu0 0
        %742 = vmatprep.subr.bf16.mxu0 0
        %743 = vmatpush1.bf16.msra.mxu0 0
        %744 = vmatprep.subr.bf16.mxu0 0
        %745 = vmatpush1.bf16.msra.mxu0 0
        %746 = vmatprep.subr.bf16.mxu0 0
        %747 = vmatpush1.bf16.msra.mxu0 0
        %748 = vmatprep.subr.bf16.mxu0 0
        %749 = vmatpush1.bf16.msra.mxu0 0
        %750 = vmatprep.subr.bf16.mxu0 0
        %751 = vmatpush1.bf16.msra.mxu0 0
        %752 = vmatprep.subr.bf16.mxu0 0
        %753 = vmatpush1.bf16.msra.mxu0 0
        %754 = vmatprep.mubr.bf16.mxu0 0
        %755 = vmatmul.mubr.bf16.gmra.mrb[0].mxu0 %v720
        %v756 = vpop.f32.mrb[0].mxu0
        %v757 = vadd.f32 %v706, %v756
        %v758 = vpop.f32.mrb[0].mxu0
        %v759 = vpop.f32.mrb[0].mxu0
        %v760 = vpop.f32.mrb[0].mxu0
        %761 = vdwg.mxu0
        %v762 = vmul.f32 %v757, 0.35355338
        %v763 = vpack.c.bf16 %v762, %v762
        %v764 = vpack.c.bf16 %v757, %v757
        %766 = vrot.lane.b32.xlu0 %v764, 96
        %v767 = vpop.permute.xlu0 %766
        %vm768 = vcmask 64512
        %v770 = vsel %vm768, %v763, 0
        %v773 = vsel %vm768, %v767, 0
        %775 = vmatprep.subr.bf16.mxu0 0
        %776 = vmatpush1.bf16.xpose.msra.mxu0 %v773
        %777 = vmatprep.subr.bf16.mxu0 0
        %778 = vmatpush1.bf16.xpose.msra.mxu0 0
        %779 = vmatprep.subr.bf16.mxu0 0
        %780 = vmatpush1.bf16.xpose.msra.mxu0 0
        %781 = vmatprep.subr.bf16.mxu0 0
        %782 = vmatpush1.bf16.xpose.msra.mxu0 0
        %783 = vmatprep.subr.bf16.mxu0 0
        %784 = vmatpush1.bf16.xpose.msra.mxu0 0
        %785 = vmatprep.subr.bf16.mxu0 0
        %786 = vmatpush1.bf16.xpose.msra.mxu0 0
        %787 = vmatprep.subr.bf16.mxu0 0
        %788 = vmatpush1.bf16.xpose.msra.mxu0 0
        %789 = vmatprep.subr.bf16.mxu0 0
        %790 = vmatpush1.bf16.xpose.msra.mxu0 0
        %791 = vmatprep.subr.bf16.mxu0 0
        %792 = vmatpush1.bf16.xpose.msra.mxu0 0
        %793 = vmatprep.subr.bf16.mxu0 0
        %794 = vmatpush1.bf16.xpose.msra.mxu0 0
        %795 = vmatprep.subr.bf16.mxu0 0
        %796 = vmatpush1.bf16.xpose.msra.mxu0 0
        %797 = vmatprep.subr.bf16.mxu0 0
        %798 = vmatpush1.bf16.xpose.msra.mxu0 0
        %799 = vmatprep.subr.bf16.mxu0 0
        %800 = vmatpush1.bf16.xpose.msra.mxu0 0
        %801 = vmatprep.subr.bf16.mxu0 0
        %802 = vmatpush1.bf16.xpose.msra.mxu0 0
        %803 = vmatprep.subr.bf16.mxu0 0
        %804 = vmatpush1.bf16.xpose.msra.mxu0 0
        %805 = vmatprep.subr.bf16.mxu0 0
        %806 = vmatpush1.bf16.xpose.msra.mxu0 0
        %807 = vmatprep.mubr.bf16.mxu0 0
        %808 = vmatmul.mubr.bf16.gmra.mrb[0].mxu0 %v770
        %v809 = vpop.f32.mrb[0].mxu0
        %v810 = vadd.f32 0.0, %v809
        %v811 = vpop.f32.mrb[0].mxu0
        %v812 = vpop.f32.mrb[0].mxu0
        %v813 = vpop.f32.mrb[0].mxu0
        %814 = vdwg.mxu0
        %v815 = vsel %vm768, %v810, -inf
        %816 = vmax.xlane.f32.xlu0 %v815
        %v817 = vpop.xlane.xlu0 %816
        %v818 = vsub.f32 %v810, %v817
        %v819 = vmul.f32 %v818, 1.442695
        %v820 = vpow.pop %v819
        %v821 = vsel %vm768, %v820, 0.0
        %822 = vadd.xlane.f32.xlu0 %v821
        %v823 = vpop.xlane.xlu0 %822
        %v824 = vrcp.pop %v823
        %v825 = vmul.f32 %v820, %v824
        %v826 = vpack.c.bf16 %v825, %v825
        %827 = vrot.lane.b32.xlu0 %v764, 64
        %v828 = vpop.permute.xlu0 %827
        %v830 = vsel %vm768, %v826, 0
        %vm832 = vcmask 1043456
        %v834 = vsel %vm832, %v828, 0
        %836 = vmatprep.subr.bf16.mxu0 0
        %837 = vmatpush1.bf16.msra.mxu0 %v834
        %838 = vmatprep.subr.bf16.mxu0 0
        %839 = vmatpush1.bf16.msra.mxu0 0
        %840 = vmatprep.subr.bf16.mxu0 0
        %841 = vmatpush1.bf16.msra.mxu0 0
        %842 = vmatprep.subr.bf16.mxu0 0
        %843 = vmatpush1.bf16.msra.mxu0 0
        %844 = vmatprep.subr.bf16.mxu0 0
        %845 = vmatpush1.bf16.msra.mxu0 0
        %846 = vmatprep.subr.bf16.mxu0 0
        %847 = vmatpush1.bf16.msra.mxu0 0
        %848 = vmatprep.subr.bf16.mxu0 0
        %849 = vmatpush1.bf16.msra.mxu0 0
        %850 = vmatprep.subr.bf16.mxu0 0
        %851 = vmatpush1.bf16.msra.mxu0 0
        %852 = vmatprep.subr.bf16.mxu0 0
        %853 = vmatpush1.bf16.msra.mxu0 0
        %854 = vmatprep.subr.bf16.mxu0 0
        %855 = vmatpush1.bf16.msra.mxu0 0
        %856 = vmatprep.subr.bf16.mxu0 0
        %857 = vmatpush1.bf16.msra.mxu0 0
        %858 = vmatprep.subr.bf16.mxu0 0
        %859 = vmatpush1.bf16.msra.mxu0 0
        %860 = vmatprep.subr.bf16.mxu0 0
        %861 = vmatpush1.bf16.msra.mxu0 0
        %862 = vmatprep.subr.bf16.mxu0 0
        %863 = vmatpush1.bf16.msra.mxu0 0
        %864 = vmatprep.subr.bf16.mxu0 0
        %865 = vmatpush1.bf16.msra.mxu0 0
        %866 = vmatprep.subr.bf16.mxu0 0
        %867 = vmatpush1.bf16.msra.mxu0 0
        %868 = vmatprep.mubr.bf16.mxu0 0
        %869 = vmatmul.mubr.bf16.gmra.mrb[0].mxu0 %v830
        %v870 = vpop.f32.mrb[0].mxu0
        %v871 = vadd.f32 0.0, %v870
        %v872 = vpop.f32.mrb[0].mxu0
        %v873 = vpop.f32.mrb[0].mxu0
        %v874 = vpop.f32.mrb[0].mxu0
        %875 = vdwg.mxu0
        %v876 = vpack.c.bf16 %v871, %v871
        %878 = vrot.lane.b32.xlu0 %v763, 120
        %v879 = vpop.permute.xlu0 %878
        %880 = vrot.lane.b32.xlu0 %v764, 88
        %v881 = vpop.permute.xlu0 %880
        %v883 = vsel %vm768, %v879, 0
        %v886 = vsel %vm768, %v881, 0
        %888 = vmatprep.subr.bf16.mxu0 0
        %889 = vmatpush1.bf16.xpose.msra.mxu0 %v886
        %890 = vmatprep.subr.bf16.mxu0 0
        %891 = vmatpush1.bf16.xpose.msra.mxu0 0
        %892 = vmatprep.subr.bf16.mxu0 0
        %893 = vmatpush1.bf16.xpose.msra.mxu0 0
        %894 = vmatprep.subr.bf16.mxu0 0
        %895 = vmatpush1.bf16.xpose.msra.mxu0 0
        %896 = vmatprep.subr.bf16.mxu0 0
        %897 = vmatpush1.bf16.xpose.msra.mxu0 0
        %898 = vmatprep.subr.bf16.mxu0 0
        %899 = vmatpush1.bf16.xpose.msra.mxu0 0
        %900 = vmatprep.subr.bf16.mxu0 0
        %901 = vmatpush1.bf16.xpose.msra.mxu0 0
        %902 = vmatprep.subr.bf16.mxu0 0
        %903 = vmatpush1.bf16.xpose.msra.mxu0 0
        %904 = vmatprep.subr.bf16.mxu0 0
        %905 = vmatpush1.bf16.xpose.msra.mxu0 0
        %906 = vmatprep.subr.bf16.mxu0 0
        %907 = vmatpush1.bf16.xpose.msra.mxu0 0
        %908 = vmatprep.subr.bf16.mxu0 0
        %909 = vmatpush1.bf16.xpose.msra.mxu0 0
        %910 = vmatprep.subr.bf16.mxu0 0
        %911 = vmatpush1.bf16.xpose.msra.mxu0 0
        %912 = vmatprep.subr.bf16.mxu0 0
        %913 = vmatpush1.bf16.xpose.msra.mxu0 0
        %914 = vmatprep.subr.bf16.mxu0 0
        %915 = vmatpush1.bf16.xpose.msra.mxu0 0
        %916 = vmatprep.subr.bf16.mxu0 0
        %917 = vmatpush1.bf16.xpose.msra.mxu0 0
        %918 = vmatprep.subr.bf16.mxu0 0
        %919 = vmatpush1.bf16.xpose.msra.mxu0 0
        %920 = vmatprep.mubr.bf16.mxu0 0
        %921 = vmatmul.mubr.bf16.gmra.mrb[0].mxu0 %v883
        %v922 = vpop.f32.mrb[0].mxu0
        %v923 = vadd.f32 0.0, %v922
        %v924 = vpop.f32.mrb[0].mxu0
        %v925 = vpop.f32.mrb[0].mxu0
        %v926 = vpop.f32.mrb[0].mxu0
        %927 = vdwg.mxu0
        %v928 = vsel %vm768, %v923, -inf
        %929 = vmax.xlane.f32.xlu0 %v928
        %v930 = vpop.xlane.xlu0 %929
        %v931 = vsub.f32 %v923, %v930
        %v932 = vmul.f32 %v931, 1.442695
        %v933 = vpow.pop %v932
        %v934 = vsel %vm768, %v933, 0.0
        %935 = vadd.xlane.f32.xlu0 %v934
        %v936 = vpop.xlane.xlu0 %935
        %v937 = vrcp.pop %v936
        %v938 = vmul.f32 %v933, %v937
        %v939 = vpack.c.bf16 %v938, %v938
        %940 = vrot.lane.b32.xlu0 %v764, 56
        %v941 = vpop.permute.xlu0 %940
        %v943 = vsel %vm768, %v939, 0
        %v946 = vsel %vm832, %v941, 0
        %948 = vmatprep.subr.bf16.mxu0 0
        %949 = vmatpush1.bf16.msra.mxu0 %v946
        %950 = vmatprep.subr.bf16.mxu0 0
        %951 = vmatpush1.bf16.msra.mxu0 0
        %952 = vmatprep.subr.bf16.mxu0 0
        %953 = vmatpush1.bf16.msra.mxu0 0
        %954 = vmatprep.subr.bf16.mxu0 0
        %955 = vmatpush1.bf16.msra.mxu0 0
        %956 = vmatprep.subr.bf16.mxu0 0
        %957 = vmatpush1.bf16.msra.mxu0 0
        %958 = vmatprep.subr.bf16.mxu0 0
        %959 = vmatpush1.bf16.msra.mxu0 0
        %960 = vmatprep.subr.bf16.mxu0 0
        %961 = vmatpush1.bf16.msra.mxu0 0
        %962 = vmatprep.subr.bf16.mxu0 0
        %963 = vmatpush1.bf16.msra.mxu0 0
        %964 = vmatprep.subr.bf16.mxu0 0
        %965 = vmatpush1.bf16.msra.mxu0 0
        %966 = vmatprep.subr.bf16.mxu0 0
        %967 = vmatpush1.bf16.msra.mxu0 0
        %968 = vmatprep.subr.bf16.mxu0 0
        %969 = vmatpush1.bf16.msra.mxu0 0
        %970 = vmatprep.subr.bf16.mxu0 0
        %971 = vmatpush1.bf16.msra.mxu0 0
        %972 = vmatprep.subr.bf16.mxu0 0
        %973 = vmatpush1.bf16.msra.mxu0 0
        %974 = vmatprep.subr.bf16.mxu0 0
        %975 = vmatpush1.bf16.msra.mxu0 0
        %976 = vmatprep.subr.bf16.mxu0 0
        %977 = vmatpush1.bf16.msra.mxu0 0
        %978 = vmatprep.subr.bf16.mxu0 0
        %979 = vmatpush1.bf16.msra.mxu0 0
        %980 = vmatprep.mubr.bf16.mxu0 0
        %981 = vmatmul.mubr.bf16.gmra.mrb[0].mxu0 %v943
        %v982 = vpop.f32.mrb[0].mxu0
        %v983 = vadd.f32 0.0, %v982
        %v984 = vpop.f32.mrb[0].mxu0
        %v985 = vpop.f32.mrb[0].mxu0
        %v986 = vpop.f32.mrb[0].mxu0
        %987 = vdwg.mxu0
        %v988 = vpack.c.bf16 %v983, %v983
        %v990 = vsel %vm768, %v988, 0
        %v993 = vsel %vm832, %v653, 0
        %995 = vmatprep.subr.bf16.mxu0 0
        %996 = vmatpush1.bf16.msra.mxu0 %v993
        %997 = vmatprep.subr.bf16.mxu0 0
        %998 = vmatpush1.bf16.msra.mxu0 0
        %999 = vmatprep.subr.bf16.mxu0 0
        %1000 = vmatpush1.bf16.msra.mxu0 0
        %1001 = vmatprep.subr.bf16.mxu0 0
        %1002 = vmatpush1.bf16.msra.mxu0 0
        %1003 = vmatprep.subr.bf16.mxu0 0
        %1004 = vmatpush1.bf16.msra.mxu0 0
        %1005 = vmatprep.subr.bf16.mxu0 0
        %1006 = vmatpush1.bf16.msra.mxu0 0
        %1007 = vmatprep.subr.bf16.mxu0 0
        %1008 = vmatpush1.bf16.msra.mxu0 0
        %1009 = vmatprep.subr.bf16.mxu0 0
        %1010 = vmatpush1.bf16.msra.mxu0 0
        %1011 = vmatprep.subr.bf16.mxu0 0
        %1012 = vmatpush1.bf16.msra.mxu0 0
        %1013 = vmatprep.subr.bf16.mxu0 0
        %1014 = vmatpush1.bf16.msra.mxu0 0
        %1015 = vmatprep.subr.bf16.mxu0 0
        %1016 = vmatpush1.bf16.msra.mxu0 0
        %1017 = vmatprep.subr.bf16.mxu0 0
        %1018 = vmatpush1.bf16.msra.mxu0 0
        %1019 = vmatprep.subr.bf16.mxu0 0
        %1020 = vmatpush1.bf16.msra.mxu0 0
        %1021 = vmatprep.subr.bf16.mxu0 0
        %1022 = vmatpush1.bf16.msra.mxu0 0
        %1023 = vmatprep.subr.bf16.mxu0 0
        %1024 = vmatpush1.bf16.msra.mxu0 0
        %1025 = vmatprep.subr.bf16.mxu0 0
        %1026 = vmatpush1.bf16.msra.mxu0 0
        %1027 = vmatprep.mubr.bf16.mxu0 0
        %1028 = vmatmul.mubr.bf16.gmra.mrb[0].mxu0 %v990
        %v1029 = vpop.f32.mrb[0].mxu0
        %v1030 = vadd.f32 0.0, %v1029
        %v1031 = vpop.f32.mrb[0].mxu0
        %v1032 = vpop.f32.mrb[0].mxu0
        %v1033 = vpop.f32.mrb[0].mxu0
        %1034 = vdwg.mxu0
        %v1036 = vsel %vm768, %v876, 0
        %v1039 = vsel %vm832, %v652, 0
        %1041 = vmatprep.subr.bf16.mxu0 0
        %1042 = vmatpush1.bf16.msra.mxu0 %v1039
        %1043 = vmatprep.subr.bf16.mxu0 0
        %1044 = vmatpush1.bf16.msra.mxu0 0
        %1045 = vmatprep.subr.bf16.mxu0 0
        %1046 = vmatpush1.bf16.msra.mxu0 0
        %1047 = vmatprep.subr.bf16.mxu0 0
        %1048 = vmatpush1.bf16.msra.mxu0 0
        %1049 = vmatprep.subr.bf16.mxu0 0
        %1050 = vmatpush1.bf16.msra.mxu0 0
        %1051 = vmatprep.subr.bf16.mxu0 0
        %1052 = vmatpush1.bf16.msra.mxu0 0
        %1053 = vmatprep.subr.bf16.mxu0 0
        %1054 = vmatpush1.bf16.msra.mxu0 0
        %1055 = vmatprep.subr.bf16.mxu0 0
        %1056 = vmatpush1.bf16.msra.mxu0 0
        %1057 = vmatprep.subr.bf16.mxu0 0
        %1058 = vmatpush1.bf16.msra.mxu0 0
        %1059 = vmatprep.subr.bf16.mxu0 0
        %1060 = vmatpush1.bf16.msra.mxu0 0
        %1061 = vmatprep.subr.bf16.mxu0 0
        %1062 = vmatpush1.bf16.msra.mxu0 0
        %1063 = vmatprep.subr.bf16.mxu0 0
        %1064 = vmatpush1.bf16.msra.mxu0 0
        %1065 = vmatprep.subr.bf16.mxu0 0
        %1066 = vmatpush1.bf16.msra.mxu0 0
        %1067 = vmatprep.subr.bf16.mxu0 0
        %1068 = vmatpush1.bf16.msra.mxu0 0
        %1069 = vmatprep.subr.bf16.mxu0 0
        %1070 = vmatpush1.bf16.msra.mxu0 0
        %1071 = vmatprep.subr.bf16.mxu0 0
        %1072 = vmatpush1.bf16.msra.mxu0 0
        %1073 = vmatprep.mubr.bf16.mxu0 0
        %1074 = vmatmul.mubr.bf16.gmra.mrb[0].mxu0 %v1036
        %v1075 = vpop.f32.mrb[0].mxu0
        %v1076 = vadd.f32 %v1030, %v1075
        %v1077 = vpop.f32.mrb[0].mxu0
        %v1078 = vpop.f32.mrb[0].mxu0
        %v1079 = vpop.f32.mrb[0].mxu0
        %1080 = vdwg.mxu0
        %1081 = vrot.lane.b32.xlu0 %v763, 112
        %v1082 = vpop.permute.xlu0 %1081
        %1083 = vrot.lane.b32.xlu0 %v764, 80
        %v1084 = vpop.permute.xlu0 %1083
        %v1086 = vsel %vm768, %v1082, 0
        %v1089 = vsel %vm768, %v1084, 0
        %1091 = vmatprep.subr.bf16.mxu0 0
        %1092 = vmatpush1.bf16.xpose.msra.mxu0 %v1089
        %1093 = vmatprep.subr.bf16.mxu0 0
        %1094 = vmatpush1.bf16.xpose.msra.mxu0 0
        %1095 = vmatprep.subr.bf16.mxu0 0
        %1096 = vmatpush1.bf16.xpose.msra.mxu0 0
        %1097 = vmatprep.subr.bf16.mxu0 0
        %1098 = vmatpush1.bf16.xpose.msra.mxu0 0
        %1099 = vmatprep.subr.bf16.mxu0 0
        %1100 = vmatpush1.bf16.xpose.msra.mxu0 0
        %1101 = vmatprep.subr.bf16.mxu0 0
        %1102 = vmatpush1.bf16.xpose.msra.mxu0 0
        %1103 = vmatprep.subr.bf16.mxu0 0
        %1104 = vmatpush1.bf16.xpose.msra.mxu0 0
        %1105 = vmatprep.subr.bf16.mxu0 0
        %1106 = vmatpush1.bf16.xpose.msra.mxu0 0
        %1107 = vmatprep.subr.bf16.mxu0 0
        %1108 = vmatpush1.bf16.xpose.msra.mxu0 0
        %1109 = vmatprep.subr.bf16.mxu0 0
        %1110 = vmatpush1.bf16.xpose.msra.mxu0 0
        %1111 = vmatprep.subr.bf16.mxu0 0
        %1112 = vmatpush1.bf16.xpose.msra.mxu0 0
        %1113 = vmatprep.subr.bf16.mxu0 0
        %1114 = vmatpush1.bf16.xpose.msra.mxu0 0
        %1115 = vmatprep.subr.bf16.mxu0 0
        %1116 = vmatpush1.bf16.xpose.msra.mxu0 0
        %1117 = vmatprep.subr.bf16.mxu0 0
        %1118 = vmatpush1.bf16.xpose.msra.mxu0 0
        %1119 = vmatprep.subr.bf16.mxu0 0
        %1120 = vmatpush1.bf16.xpose.msra.mxu0 0
        %1121 = vmatprep.subr.bf16.mxu0 0
        %1122 = vmatpush1.bf16.xpose.msra.mxu0 0
        %1123 = vmatprep.mubr.bf16.mxu0 0
        %1124 = vmatmul.mubr.bf16.gmra.mrb[0].mxu0 %v1086
        %v1125 = vpop.f32.mrb[0].mxu0
        %v1126 = vadd.f32 0.0, %v1125
        %v1127 = vpop.f32.mrb[0].mxu0
        %v1128 = vpop.f32.mrb[0].mxu0
        %v1129 = vpop.f32.mrb[0].mxu0
        %1130 = vdwg.mxu0
        %v1131 = vsel %vm768, %v1126, -inf
        %1132 = vmax.xlane.f32.xlu0 %v1131
        %v1133 = vpop.xlane.xlu0 %1132
        %v1134 = vsub.f32 %v1126, %v1133
        %v1135 = vmul.f32 %v1134, 1.442695
        %v1136 = vpow.pop %v1135
        %v1137 = vsel %vm768, %v1136, 0.0
        %1138 = vadd.xlane.f32.xlu0 %v1137
        %v1139 = vpop.xlane.xlu0 %1138
        %v1140 = vrcp.pop %v1139
        %v1141 = vmul.f32 %v1136, %v1140
        %v1142 = vpack.c.bf16 %v1141, %v1141
        %1143 = vrot.lane.b32.xlu0 %v764, 48
        %v1144 = vpop.permute.xlu0 %1143
        %v1146 = vsel %vm768, %v1142, 0
        %v1149 = vsel %vm832, %v1144, 0
        %1151 = vmatprep.subr.bf16.mxu0 0
        %1152 = vmatpush1.bf16.msra.mxu0 %v1149
        %1153 = vmatprep.subr.bf16.mxu0 0
        %1154 = vmatpush1.bf16.msra.mxu0 0
        %1155 = vmatprep.subr.bf16.mxu0 0
        %1156 = vmatpush1.bf16.msra.mxu0 0
        %1157 = vmatprep.subr.bf16.mxu0 0
        %1158 = vmatpush1.bf16.msra.mxu0 0
        %1159 = vmatprep.subr.bf16.mxu0 0
        %1160 = vmatpush1.bf16.msra.mxu0 0
        %1161 = vmatprep.subr.bf16.mxu0 0
        %1162 = vmatpush1.bf16.msra.mxu0 0
        %1163 = vmatprep.subr.bf16.mxu0 0
        %1164 = vmatpush1.bf16.msra.mxu0 0
        %1165 = vmatprep.subr.bf16.mxu0 0
        %1166 = vmatpush1.bf16.msra.mxu0 0
        %1167 = vmatprep.subr.bf16.mxu0 0
        %1168 = vmatpush1.bf16.msra.mxu0 0
        %1169 = vmatprep.subr.bf16.mxu0 0
        %1170 = vmatpush1.bf16.msra.mxu0 0
        %1171 = vmatprep.subr.bf16.mxu0 0
        %1172 = vmatpush1.bf16.msra.mxu0 0
        %1173 = vmatprep.subr.bf16.mxu0 0
        %1174 = vmatpush1.bf16.msra.mxu0 0
        %1175 = vmatprep.subr.bf16.mxu0 0
        %1176 = vmatpush1.bf16.msra.mxu0 0
        %1177 = vmatprep.subr.bf16.mxu0 0
        %1178 = vmatpush1.bf16.msra.mxu0 0
        %1179 = vmatprep.subr.bf16.mxu0 0
        %1180 = vmatpush1.bf16.msra.mxu0 0
        %1181 = vmatprep.subr.bf16.mxu0 0
        %1182 = vmatpush1.bf16.msra.mxu0 0
        %1183 = vmatprep.mubr.bf16.mxu0 0
        %1184 = vmatmul.mubr.bf16.gmra.mrb[0].mxu0 %v1146
        %v1185 = vpop.f32.mrb[0].mxu0
        %v1186 = vadd.f32 0.0, %v1185
        %v1187 = vpop.f32.mrb[0].mxu0
        %v1188 = vpop.f32.mrb[0].mxu0
        %v1189 = vpop.f32.mrb[0].mxu0
        %1190 = vdwg.mxu0
        %v1191 = vpack.c.bf16 %v1186, %v1186
        %v1193 = vsel %vm768, %v1191, 0
        %v1196 = vsel %vm832, %v654, 0
        %1198 = vmatprep.subr.bf16.mxu0 0
        %1199 = vmatpush1.bf16.msra.mxu0 %v1196
        %1200 = vmatprep.subr.bf16.mxu0 0
        %1201 = vmatpush1.bf16.msra.mxu0 0
        %1202 = vmatprep.subr.bf16.mxu0 0
        %1203 = vmatpush1.bf16.msra.mxu0 0
        %1204 = vmatprep.subr.bf16.mxu0 0
        %1205 = vmatpush1.bf16.msra.mxu0 0
        %1206 = vmatprep.subr.bf16.mxu0 0
        %1207 = vmatpush1.bf16.msra.mxu0 0
        %1208 = vmatprep.subr.bf16.mxu0 0
        %1209 = vmatpush1.bf16.msra.mxu0 0
        %1210 = vmatprep.subr.bf16.mxu0 0
        %1211 = vmatpush1.bf16.msra.mxu0 0
        %1212 = vmatprep.subr.bf16.mxu0 0
        %1213 = vmatpush1.bf16.msra.mxu0 0
        %1214 = vmatprep.subr.bf16.mxu0 0
        %1215 = vmatpush1.bf16.msra.mxu0 0
        %1216 = vmatprep.subr.bf16.mxu0 0
        %1217 = vmatpush1.bf16.msra.mxu0 0
        %1218 = vmatprep.subr.bf16.mxu0 0
        %1219 = vmatpush1.bf16.msra.mxu0 0
        %1220 = vmatprep.subr.bf16.mxu0 0
        %1221 = vmatpush1.bf16.msra.mxu0 0
        %1222 = vmatprep.subr.bf16.mxu0 0
        %1223 = vmatpush1.bf16.msra.mxu0 0
        %1224 = vmatprep.subr.bf16.mxu0 0
        %1225 = vmatpush1.bf16.msra.mxu0 0
        %1226 = vmatprep.subr.bf16.mxu0 0
        %1227 = vmatpush1.bf16.msra.mxu0 0
        %1228 = vmatprep.subr.bf16.mxu0 0
        %1229 = vmatpush1.bf16.msra.mxu0 0
        %1230 = vmatprep.mubr.bf16.mxu0 0
        %1231 = vmatmul.mubr.bf16.gmra.mrb[0].mxu0 %v1193
        %v1232 = vpop.f32.mrb[0].mxu0
        %v1233 = vadd.f32 0.0, %v1232
        %v1234 = vpop.f32.mrb[0].mxu0
        %v1235 = vpop.f32.mrb[0].mxu0
        %v1236 = vpop.f32.mrb[0].mxu0
        %1237 = vdwg.mxu0
        %v1238 = vadd.f32 %v1076, %v1233
        %1239 = vrot.lane.b32.xlu0 %v763, 104
        %v1240 = vpop.permute.xlu0 %1239
        %1241 = vrot.lane.b32.xlu0 %v764, 72
        %v1242 = vpop.permute.xlu0 %1241
        %v1244 = vsel %vm768, %v1240, 0
        %v1247 = vsel %vm768, %v1242, 0
        %1249 = vmatprep.subr.bf16.mxu0 0
        %1250 = vmatpush1.bf16.xpose.msra.mxu0 %v1247
        %1251 = vmatprep.subr.bf16.mxu0 0
        %1252 = vmatpush1.bf16.xpose.msra.mxu0 0
        %1253 = vmatprep.subr.bf16.mxu0 0
        %1254 = vmatpush1.bf16.xpose.msra.mxu0 0
        %1255 = vmatprep.subr.bf16.mxu0 0
        %1256 = vmatpush1.bf16.xpose.msra.mxu0 0
        %1257 = vmatprep.subr.bf16.mxu0 0
        %1258 = vmatpush1.bf16.xpose.msra.mxu0 0
        %1259 = vmatprep.subr.bf16.mxu0 0
        %1260 = vmatpush1.bf16.xpose.msra.mxu0 0
        %1261 = vmatprep.subr.bf16.mxu0 0
        %1262 = vmatpush1.bf16.xpose.msra.mxu0 0
        %1263 = vmatprep.subr.bf16.mxu0 0
        %1264 = vmatpush1.bf16.xpose.msra.mxu0 0
        %1265 = vmatprep.subr.bf16.mxu0 0
        %1266 = vmatpush1.bf16.xpose.msra.mxu0 0
        %1267 = vmatprep.subr.bf16.mxu0 0
        %1268 = vmatpush1.bf16.xpose.msra.mxu0 0
        %1269 = vmatprep.subr.bf16.mxu0 0
        %1270 = vmatpush1.bf16.xpose.msra.mxu0 0
        %1271 = vmatprep.subr.bf16.mxu0 0
        %1272 = vmatpush1.bf16.xpose.msra.mxu0 0
        %1273 = vmatprep.subr.bf16.mxu0 0
        %1274 = vmatpush1.bf16.xpose.msra.mxu0 0
        %1275 = vmatprep.subr.bf16.mxu0 0
        %1276 = vmatpush1.bf16.xpose.msra.mxu0 0
        %1277 = vmatprep.subr.bf16.mxu0 0
        %1278 = vmatpush1.bf16.xpose.msra.mxu0 0
        %1279 = vmatprep.subr.bf16.mxu0 0
        %1280 = vmatpush1.bf16.xpose.msra.mxu0 0
        %1281 = vmatprep.mubr.bf16.mxu0 0
        %1282 = vmatmul.mubr.bf16.gmra.mrb[0].mxu0 %v1244
        %v1283 = vpop.f32.mrb[0].mxu0
        %v1284 = vadd.f32 0.0, %v1283
        %v1285 = vpop.f32.mrb[0].mxu0
        %v1286 = vpop.f32.mrb[0].mxu0
        %v1287 = vpop.f32.mrb[0].mxu0
        %1288 = vdwg.mxu0
        %v1289 = vsel %vm768, %v1284, -inf
        %1290 = vmax.xlane.f32.xlu0 %v1289
        %v1291 = vpop.xlane.xlu0 %1290
        %v1292 = vsub.f32 %v1284, %v1291
        %v1293 = vmul.f32 %v1292, 1.442695
        %v1294 = vpow.pop %v1293
        %v1295 = vsel %vm768, %v1294, 0.0
        %1296 = vadd.xlane.f32.xlu0 %v1295
        %v1297 = vpop.xlane.xlu0 %1296
        %v1298 = vrcp.pop %v1297
        %v1299 = vmul.f32 %v1294, %v1298
        %v1300 = vpack.c.bf16 %v1299, %v1299
        %1301 = vrot.lane.b32.xlu0 %v764, 40
        %v1302 = vpop.permute.xlu0 %1301
        %v1304 = vsel %vm768, %v1300, 0
        %v1307 = vsel %vm832, %v1302, 0
        %1309 = vmatprep.subr.bf16.mxu0 0
        %1310 = vmatpush1.bf16.msra.mxu0 %v1307
        %1311 = vmatprep.subr.bf16.mxu0 0
        %1312 = vmatpush1.bf16.msra.mxu0 0
        %1313 = vmatprep.subr.bf16.mxu0 0
        %1314 = vmatpush1.bf16.msra.mxu0 0
        %1315 = vmatprep.subr.bf16.mxu0 0
        %1316 = vmatpush1.bf16.msra.mxu0 0
        %1317 = vmatprep.subr.bf16.mxu0 0
        %1318 = vmatpush1.bf16.msra.mxu0 0
        %1319 = vmatprep.subr.bf16.mxu0 0
        %1320 = vmatpush1.bf16.msra.mxu0 0
        %1321 = vmatprep.subr.bf16.mxu0 0
        %1322 = vmatpush1.bf16.msra.mxu0 0
        %1323 = vmatprep.subr.bf16.mxu0 0
        %1324 = vmatpush1.bf16.msra.mxu0 0
        %1325 = vmatprep.subr.bf16.mxu0 0
        %1326 = vmatpush1.bf16.msra.mxu0 0
        %1327 = vmatprep.subr.bf16.mxu0 0
        %1328 = vmatpush1.bf16.msra.mxu0 0
        %1329 = vmatprep.subr.bf16.mxu0 0
        %1330 = vmatpush1.bf16.msra.mxu0 0
        %1331 = vmatprep.subr.bf16.mxu0 0
        %1332 = vmatpush1.bf16.msra.mxu0 0
        %1333 = vmatprep.subr.bf16.mxu0 0
        %1334 = vmatpush1.bf16.msra.mxu0 0
        %1335 = vmatprep.subr.bf16.mxu0 0
        %1336 = vmatpush1.bf16.msra.mxu0 0
        %1337 = vmatprep.subr.bf16.mxu0 0
        %1338 = vmatpush1.bf16.msra.mxu0 0
        %1339 = vmatprep.subr.bf16.mxu0 0
        %1340 = vmatpush1.bf16.msra.mxu0 0
        %1341 = vmatprep.mubr.bf16.mxu0 0
        %1342 = vmatmul.mubr.bf16.gmra.mrb[0].mxu0 %v1304
        %v1343 = vpop.f32.mrb[0].mxu0
        %v1344 = vadd.f32 0.0, %v1343
        %v1345 = vpop.f32.mrb[0].mxu0
        %v1346 = vpop.f32.mrb[0].mxu0
        %v1347 = vpop.f32.mrb[0].mxu0
        %1348 = vdwg.mxu0
        %v1349 = vpack.c.bf16 %v1344, %v1344
        %v1351 = vsel %vm768, %v1349, 0
        %v1354 = vsel %vm832, %v655, 0
        %1356 = vmatprep.subr.bf16.mxu0 0
        %1357 = vmatpush1.bf16.msra.mxu0 %v1354
        %1358 = vmatprep.subr.bf16.mxu0 0
        %1359 = vmatpush1.bf16.msra.mxu0 0
        %1360 = vmatprep.subr.bf16.mxu0 0
        %1361 = vmatpush1.bf16.msra.mxu0 0
        %1362 = vmatprep.subr.bf16.mxu0 0
        %1363 = vmatpush1.bf16.msra.mxu0 0
        %1364 = vmatprep.subr.bf16.mxu0 0
        %1365 = vmatpush1.bf16.msra.mxu0 0
        %1366 = vmatprep.subr.bf16.mxu0 0
        %1367 = vmatpush1.bf16.msra.mxu0 0
        %1368 = vmatprep.subr.bf16.mxu0 0
        %1369 = vmatpush1.bf16.msra.mxu0 0
        %1370 = vmatprep.subr.bf16.mxu0 0
        %1371 = vmatpush1.bf16.msra.mxu0 0
        %1372 = vmatprep.subr.bf16.mxu0 0
        %1373 = vmatpush1.bf16.msra.mxu0 0
        %1374 = vmatprep.subr.bf16.mxu0 0
        %1375 = vmatpush1.bf16.msra.mxu0 0
        %1376 = vmatprep.subr.bf16.mxu0 0
        %1377 = vmatpush1.bf16.msra.mxu0 0
        %1378 = vmatprep.subr.bf16.mxu0 0
        %1379 = vmatpush1.bf16.msra.mxu0 0
        %1380 = vmatprep.subr.bf16.mxu0 0
        %1381 = vmatpush1.bf16.msra.mxu0 0
        %1382 = vmatprep.subr.bf16.mxu0 0
        %1383 = vmatpush1.bf16.msra.mxu0 0
        %1384 = vmatprep.subr.bf16.mxu0 0
        %1385 = vmatpush1.bf16.msra.mxu0 0
        %1386 = vmatprep.subr.bf16.mxu0 0
        %1387 = vmatpush1.bf16.msra.mxu0 0
        %1388 = vmatprep.mubr.bf16.mxu0 0
        %1389 = vmatmul.mubr.bf16.gmra.mrb[0].mxu0 %v1351
        %v1390 = vpop.f32.mrb[0].mxu0
        %v1391 = vadd.f32 0.0, %v1390
        %v1392 = vpop.f32.mrb[0].mxu0
        %v1393 = vpop.f32.mrb[0].mxu0
        %v1394 = vpop.f32.mrb[0].mxu0
        %1395 = vdwg.mxu0
        %v1396 = vadd.f32 %v1238, %v1391
        %v1397 = vadd.f32 %v643, %v1396
        %v1398 = vlaneseq
        %v1399 = vshrl.u32 %v1398, 7
        %v1400 = vsub.s32 3, %v1399
        %v1401 = vrot.slane %v676, %v1400
        %v1402 = vadd.f32 %v1397, %v1401
        %v1403 = vsel %vm677, %v1402, 0.0
        %1404 = vadd.xlane.f32.xlu0 %v1403
        %v1405 = vpop.xlane.xlu0 %1404
        %v1406 = vmul.f32 %v1405, %v681
        %v1407 = vsub.f32 %v1402, %v1406
        %v1408 = vmul.f32 %v1407, %v1407
        %v1409 = vsel %vm677, %v1408, 0.0
        %1410 = vadd.xlane.f32.xlu0 %v1409
        %v1411 = vpop.xlane.xlu0 %1410
        %v1412 = vmul.f32 %v1411, %v681
        %v1413 = vadd.f32 %v1412, 1e-05
        %v1414 = vrsqrt.pop %v1413
        %v1415 = vmul.f32 %v1407, %v1414
        %v1416 = vlaneseq
        %v1417 = vshrl.u32 %v1416, 7
        %v1418 = vsub.s32 4, %v1417
        %v1419 = vrot.slane %v676, %v1418
        %v1420 = vmul.f32 %v1415, %v1419
        %v1421 = vlaneseq
        %v1422 = vshrl.u32 %v1421, 7
        %v1423 = vsub.s32 5, %v1422
        %v1424 = vrot.slane %v676, %v1423
        %v1425 = vadd.f32 %v1420, %v1424
        %v1426 = vpack.c.bf16 %v1425, %v1425
        %v1427 = vlaneseq
        %v1428 = vshrl.u32 %v1427, 7
        %v1429 = vsub.s32 6, %v1428
        %v1430 = vrot.slane %v676, %v1429
        %v1435 = vunpack.c.l.b16 %v656
        %v1436 = vunpack.c.l.b16 %v657
        %v1437 = vunpack.c.l.b16 %v658
        %v1438 = vunpack.c.l.b16 %v659
        %v1439 = vpack.c.b16 %v1436, %v1435
        %v1440 = vpack.c.b16 %v1438, %v1437
        %v1444 = vsel %vm677, %v1426, 0
        %1446 = vmatprep.subr.bf16.mxu0 0
        %1447 = vmatpush1.bf16.msra.mxu0 %v1439
        %1448 = vmatprep.subr.bf16.mxu0 0
        %1449 = vmatpush1.bf16.msra.mxu0 %v1440
        %1450 = vmatprep.subr.bf16.mxu0 0
        %1451 = vmatpush1.bf16.msra.mxu0 0
        %1452 = vmatprep.subr.bf16.mxu0 0
        %1453 = vmatpush1.bf16.msra.mxu0 0
        %1454 = vmatprep.subr.bf16.mxu0 0
        %1455 = vmatpush1.bf16.msra.mxu0 0
        %1456 = vmatprep.subr.bf16.mxu0 0
        %1457 = vmatpush1.bf16.msra.mxu0 0
        %1458 = vmatprep.subr.bf16.mxu0 0
        %1459 = vmatpush1.bf16.msra.mxu0 0
        %1460 = vmatprep.subr.bf16.mxu0 0
        %1461 = vmatpush1.bf16.msra.mxu0 0
        %1462 = vmatprep.subr.bf16.mxu0 0
        %1463 = vmatpush1.bf16.msra.mxu0 0
        %1464 = vmatprep.subr.bf16.mxu0 0
        %1465 = vmatpush1.bf16.msra.mxu0 0
        %1466 = vmatprep.subr.bf16.mxu0 0
        %1467 = vmatpush1.bf16.msra.mxu0 0
        %1468 = vmatprep.subr.bf16.mxu0 0
        %1469 = vmatpush1.bf16.msra.mxu0 0
        %1470 = vmatprep.subr.bf16.mxu0 0
        %1471 = vmatpush1.bf16.msra.mxu0 0
        %1472 = vmatprep.subr.bf16.mxu0 0
        %1473 = vmatpush1.bf16.msra.mxu0 0
        %1474 = vmatprep.subr.bf16.mxu0 0
        %1475 = vmatpush1.bf16.msra.mxu0 0
        %1476 = vmatprep.subr.bf16.mxu0 0
        %1477 = vmatpush1.bf16.msra.mxu0 0
        %1478 = vmatprep.mubr.bf16.mxu0 0
        %1479 = vmatmul.mubr.bf16.gmra.mrb[0].mxu0 %v1444
        %v1480 = vpop.f32.mrb[0].mxu0
        %v1481 = vadd.f32 %v1430, %v1480
        %v1482 = vpop.f32.mrb[0].mxu0
        %v1483 = vpop.f32.mrb[0].mxu0
        %v1484 = vpop.f32.mrb[0].mxu0
        %1485 = vdwg.mxu0
        %v1486 = vmul.f32 %v1481, 0.5
        %v1487 = vmul.f32 %v1481, 0.044715
        %v1488 = vmul.f32 %v1487, %v1481
        %v1489 = vmul.f32 %v1488, %v1481
        %v1490 = vadd.f32 %v1481, %v1489
        %v1491 = vmul.f32 %v1490, 0.7978846
        %v1492 = vtanh.pop %v1491
        %v1493 = vadd.f32 %v1492, 1.0
        %v1494 = vmul.f32 %v1486, %v1493
        %v1495 = vpack.c.bf16 %v1494, %v1494
        %v1496 = vlaneseq
        %v1497 = vshrl.u32 %v1496, 7
        %v1498 = vsub.s32 7, %v1497
        %v1499 = vrot.slane %v676, %v1498
        %v1516 = vunpack.c.l.b16 %v660
        %v1517 = vunpack.c.l.b16 %v661
        %v1518 = vunpack.c.l.b16 %v662
        %v1519 = vunpack.c.l.b16 %v663
        %v1520 = vunpack.c.l.b16 %v664
        %v1521 = vunpack.c.l.b16 %v665
        %v1522 = vunpack.c.l.b16 %v666
        %v1523 = vunpack.c.l.b16 %v667
        %v1524 = vunpack.c.l.b16 %v668
        %v1525 = vunpack.c.l.b16 %v669
        %v1526 = vunpack.c.l.b16 %v670
        %v1527 = vunpack.c.l.b16 %v671
        %v1528 = vunpack.c.l.b16 %v672
        %v1529 = vunpack.c.l.b16 %v673
        %v1530 = vunpack.c.l.b16 %v674
        %v1531 = vunpack.c.l.b16 %v675
        %v1532 = vpack.c.b16 %v1517, %v1516
        %v1533 = vpack.c.b16 %v1519, %v1518
        %v1534 = vpack.c.b16 %v1521, %v1520
        %v1535 = vpack.c.b16 %v1523, %v1522
        %v1536 = vpack.c.b16 %v1525, %v1524
        %v1537 = vpack.c.b16 %v1527, %v1526
        %v1538 = vpack.c.b16 %v1529, %v1528
        %v1539 = vpack.c.b16 %v1531, %v1530
        %1548 = vmatprep.subr.bf16.mxu0 0
        %1549 = vmatpush1.bf16.msra.mxu0 %v1532
        %1550 = vmatprep.subr.bf16.mxu0 0
        %1551 = vmatpush1.bf16.msra.mxu0 %v1533
        %1552 = vmatprep.subr.bf16.mxu0 0
        %1553 = vmatpush1.bf16.msra.mxu0 %v1534
        %1554 = vmatprep.subr.bf16.mxu0 0
        %1555 = vmatpush1.bf16.msra.mxu0 %v1535
        %1556 = vmatprep.subr.bf16.mxu0 0
        %1557 = vmatpush1.bf16.msra.mxu0 %v1536
        %1558 = vmatprep.subr.bf16.mxu0 0
        %1559 = vmatpush1.bf16.msra.mxu0 %v1537
        %1560 = vmatprep.subr.bf16.mxu0 0
        %1561 = vmatpush1.bf16.msra.mxu0 %v1538
        %1562 = vmatprep.subr.bf16.mxu0 0
        %1563 = vmatpush1.bf16.msra.mxu0 %v1539
        %1564 = vmatprep.subr.bf16.mxu0 0
        %1565 = vmatpush1.bf16.msra.mxu0 0
        %1566 = vmatprep.subr.bf16.mxu0 0
        %1567 = vmatpush1.bf16.msra.mxu0 0
        %1568 = vmatprep.subr.bf16.mxu0 0
        %1569 = vmatpush1.bf16.msra.mxu0 0
        %1570 = vmatprep.subr.bf16.mxu0 0
        %1571 = vmatpush1.bf16.msra.mxu0 0
        %1572 = vmatprep.subr.bf16.mxu0 0
        %1573 = vmatpush1.bf16.msra.mxu0 0
        %1574 = vmatprep.subr.bf16.mxu0 0
        %1575 = vmatpush1.bf16.msra.mxu0 0
        %1576 = vmatprep.subr.bf16.mxu0 0
        %1577 = vmatpush1.bf16.msra.mxu0 0
        %1578 = vmatprep.subr.bf16.mxu0 0
        %1579 = vmatpush1.bf16.msra.mxu0 0
        %1580 = vmatprep.mubr.bf16.mxu0 0
        %1581 = vmatmul.mubr.bf16.gmra.mrb[0].mxu0 %v1495
        %v1582 = vpop.f32.mrb[0].mxu0
        %v1583 = vadd.f32 %v1499, %v1582
        %v1584 = vpop.f32.mrb[0].mxu0
        %v1585 = vpop.f32.mrb[0].mxu0
        %v1586 = vpop.f32.mrb[0].mxu0
        %1587 = vdwg.mxu0
        %v1588 = vadd.f32 %v1402, %v1583
        %s1589 = scalar_lea.vmem %s5, 16
        %v1590 = vld [vmem:[%s1589] sm:$0xf]
        %v1591 = vld [vmem:[%s1589 + $0x4] sm:$0xf]
        %v1592 = vld [vmem:[%s1589 + $0x8] sm:$0xf]
        %v1593 = vld [vmem:[%s1589 + $0xc] sm:$0xf]
        %s1594 = scalar_lea.vmem %s6, 16
        %v1595 = vld [vmem:[%s1594] sm:$0xf]
        %v1596 = vld [vmem:[%s1594 + $0x4] sm:$0xf]
        %v1597 = vld [vmem:[%s1594 + $0x8] sm:$0xf]
        %v1598 = vld [vmem:[%s1594 + $0xc] sm:$0xf]
        %s1599 = scalar_lea.vmem %s7, 16
        %v1600 = vld [vmem:[%s1599] sm:$0xf]
        %v1601 = vld [vmem:[%s1599 + $0x4] sm:$0xf]
        %v1602 = vld [vmem:[%s1599 + $0x8] sm:$0xf]
        %v1603 = vld [vmem:[%s1599 + $0xc] sm:$0xf]
        %s1604 = scalar_lea.vmem %s8, 64
        %v1605 = vld [vmem:[%s1604] sm:$0xf]
        %v1606 = vld [vmem:[%s1604 + $0x4] sm:$0xf]
        %v1607 = vld [vmem:[%s1604 + $0x8] sm:$0xf]
        %v1608 = vld [vmem:[%s1604 + $0xc] sm:$0xf]
        %v1609 = vld [vmem:[%s1604 + $0x10] sm:$0xf]
        %v1610 = vld [vmem:[%s1604 + $0x14] sm:$0xf]
        %v1611 = vld [vmem:[%s1604 + $0x18] sm:$0xf]
        %v1612 = vld [vmem:[%s1604 + $0x1c] sm:$0xf]
        %v1613 = vld [vmem:[%s1604 + $0x20] sm:$0xf]
        %v1614 = vld [vmem:[%s1604 + $0x24] sm:$0xf]
        %v1615 = vld [vmem:[%s1604 + $0x28] sm:$0xf]
        %v1616 = vld [vmem:[%s1604 + $0x2c] sm:$0xf]
        %v1617 = vld [vmem:[%s1604 + $0x30] sm:$0xf]
        %v1618 = vld [vmem:[%s1604 + $0x34] sm:$0xf]
        %v1619 = vld [vmem:[%s1604 + $0x38] sm:$0xf]
        %v1620 = vld [vmem:[%s1604 + $0x3c] sm:$0xf]
        %s1621 = scalar_lea.vmem %s9, 8
        %v1622 = vld [vmem:[%s1621] sm:$0xff]
        %v1623 = vsel %vm677, %v1588, 0.0
        %1624 = vadd.xlane.f32.xlu0 %v1623
        %v1625 = vpop.xlane.xlu0 %1624
        %v1626 = vmul.f32 %v1625, %v681
        %v1627 = vsub.f32 %v1588, %v1626
        %v1628 = vmul.f32 %v1627, %v1627
        %v1629 = vsel %vm677, %v1628, 0.0
        %1630 = vadd.xlane.f32.xlu0 %v1629
        %v1631 = vpop.xlane.xlu0 %1630
        %v1632 = vmul.f32 %v1631, %v681
        %v1633 = vadd.f32 %v1632, 1e-05
        %v1634 = vrsqrt.pop %v1633
        %v1635 = vmul.f32 %v1627, %v1634
        %v1636 = vlaneseq
        %v1637 = vshrl.u32 %v1636, 7
        %v1638 = vsub.s32 0, %v1637
        %v1639 = vrot.slane %v1622, %v1638
        %v1640 = vmul.f32 %v1635, %v1639
        %v1641 = vlaneseq
        %v1642 = vshrl.u32 %v1641, 7
        %v1643 = vsub.s32 1, %v1642
        %v1644 = vrot.slane %v1622, %v1643
        %v1645 = vadd.f32 %v1640, %v1644
        %v1646 = vpack.c.bf16 %v1645, %v1645
        %v1647 = vlaneseq
        %v1648 = vshrl.u32 %v1647, 7
        %v1649 = vsub.s32 2, %v1648
        %v1650 = vrot.slane %v1622, %v1649
        %v1655 = vunpack.c.l.b16 %v1590
        %v1656 = vunpack.c.l.b16 %v1591
        %v1657 = vunpack.c.l.b16 %v1592
        %v1658 = vunpack.c.l.b16 %v1593
        %v1659 = vpack.c.b16 %v1656, %v1655
        %v1660 = vpack.c.b16 %v1658, %v1657
        %v1664 = vsel %vm677, %v1646, 0
        %1666 = vmatprep.subr.bf16.mxu0 0
        %1667 = vmatpush1.bf16.msra.mxu0 %v1659
        %1668 = vmatprep.subr.bf16.mxu0 0
        %1669 = vmatpush1.bf16.msra.mxu0 %v1660
        %1670 = vmatprep.subr.bf16.mxu0 0
        %1671 = vmatpush1.bf16.msra.mxu0 0
        %1672 = vmatprep.subr.bf16.mxu0 0
        %1673 = vmatpush1.bf16.msra.mxu0 0
        %1674 = vmatprep.subr.bf16.mxu0 0
        %1675 = vmatpush1.bf16.msra.mxu0 0
        %1676 = vmatprep.subr.bf16.mxu0 0
        %1677 = vmatpush1.bf16.msra.mxu0 0
        %1678 = vmatprep.subr.bf16.mxu0 0
        %1679 = vmatpush1.bf16.msra.mxu0 0
        %1680 = vmatprep.subr.bf16.mxu0 0
        %1681 = vmatpush1.bf16.msra.mxu0 0
        %1682 = vmatprep.subr.bf16.mxu0 0
        %1683 = vmatpush1.bf16.msra.mxu0 0
        %1684 = vmatprep.subr.bf16.mxu0 0
        %1685 = vmatpush1.bf16.msra.mxu0 0
        %1686 = vmatprep.subr.bf16.mxu0 0
        %1687 = vmatpush1.bf16.msra.mxu0 0
        %1688 = vmatprep.subr.bf16.mxu0 0
        %1689 = vmatpush1.bf16.msra.mxu0 0
        %1690 = vmatprep.subr.bf16.mxu0 0
        %1691 = vmatpush1.bf16.msra.mxu0 0
        %1692 = vmatprep.subr.bf16.mxu0 0
        %1693 = vmatpush1.bf16.msra.mxu0 0
        %1694 = vmatprep.subr.bf16.mxu0 0
        %1695 = vmatpush1.bf16.msra.mxu0 0
        %1696 = vmatprep.subr.bf16.mxu0 0
        %1697 = vmatpush1.bf16.msra.mxu0 0
        %1698 = vmatprep.mubr.bf16.mxu0 0
        %1699 = vmatmul.mubr.bf16.gmra.mrb[0].mxu0 %v1664
        %v1700 = vpop.f32.mrb[0].mxu0
        %v1701 = vadd.f32 %v1650, %v1700
        %v1702 = vpop.f32.mrb[0].mxu0
        %v1703 = vpop.f32.mrb[0].mxu0
        %v1704 = vpop.f32.mrb[0].mxu0
        %1705 = vdwg.mxu0
        %v1706 = vmul.f32 %v1701, 0.35355338
        %v1707 = vpack.c.bf16 %v1706, %v1706
        %v1708 = vpack.c.bf16 %v1701, %v1701
        %1710 = vrot.lane.b32.xlu0 %v1708, 96
        %v1711 = vpop.permute.xlu0 %1710
        %v1713 = vsel %vm768, %v1707, 0
        %v1716 = vsel %vm768, %v1711, 0
        %1718 = vmatprep.subr.bf16.mxu0 0
        %1719 = vmatpush1.bf16.xpose.msra.mxu0 %v1716
        %1720 = vmatprep.subr.bf16.mxu0 0
        %1721 = vmatpush1.bf16.xpose.msra.mxu0 0
        %1722 = vmatprep.subr.bf16.mxu0 0
        %1723 = vmatpush1.bf16.xpose.msra.mxu0 0
        %1724 = vmatprep.subr.bf16.mxu0 0
        %1725 = vmatpush1.bf16.xpose.msra.mxu0 0
        %1726 = vmatprep.subr.bf16.mxu0 0
        %1727 = vmatpush1.bf16.xpose.msra.mxu0 0
        %1728 = vmatprep.subr.bf16.mxu0 0
        %1729 = vmatpush1.bf16.xpose.msra.mxu0 0
        %1730 = vmatprep.subr.bf16.mxu0 0
        %1731 = vmatpush1.bf16.xpose.msra.mxu0 0
        %1732 = vmatprep.subr.bf16.mxu0 0
        %1733 = vmatpush1.bf16.xpose.msra.mxu0 0
        %1734 = vmatprep.subr.bf16.mxu0 0
        %1735 = vmatpush1.bf16.xpose.msra.mxu0 0
        %1736 = vmatprep.subr.bf16.mxu0 0
        %1737 = vmatpush1.bf16.xpose.msra.mxu0 0
        %1738 = vmatprep.subr.bf16.mxu0 0
        %1739 = vmatpush1.bf16.xpose.msra.mxu0 0
        %1740 = vmatprep.subr.bf16.mxu0 0
        %1741 = vmatpush1.bf16.xpose.msra.mxu0 0
        %1742 = vmatprep.subr.bf16.mxu0 0
        %1743 = vmatpush1.bf16.xpose.msra.mxu0 0
        %1744 = vmatprep.subr.bf16.mxu0 0
        %1745 = vmatpush1.bf16.xpose.msra.mxu0 0
        %1746 = vmatprep.subr.bf16.mxu0 0
        %1747 = vmatpush1.bf16.xpose.msra.mxu0 0
        %1748 = vmatprep.subr.bf16.mxu0 0
        %1749 = vmatpush1.bf16.xpose.msra.mxu0 0
        %1750 = vmatprep.mubr.bf16.mxu0 0
        %1751 = vmatmul.mubr.bf16.gmra.mrb[0].mxu0 %v1713
        %v1752 = vpop.f32.mrb[0].mxu0
        %v1753 = vadd.f32 0.0, %v1752
        %v1754 = vpop.f32.mrb[0].mxu0
        %v1755 = vpop.f32.mrb[0].mxu0
        %v1756 = vpop.f32.mrb[0].mxu0
        %1757 = vdwg.mxu0
        %v1758 = vsel %vm768, %v1753, -inf
        %1759 = vmax.xlane.f32.xlu0 %v1758
        %v1760 = vpop.xlane.xlu0 %1759
        %v1761 = vsub.f32 %v1753, %v1760
        %v1762 = vmul.f32 %v1761, 1.442695
        %v1763 = vpow.pop %v1762
        %v1764 = vsel %vm768, %v1763, 0.0
        %1765 = vadd.xlane.f32.xlu0 %v1764
        %v1766 = vpop.xlane.xlu0 %1765
        %v1767 = vrcp.pop %v1766
        %v1768 = vmul.f32 %v1763, %v1767
        %v1769 = vpack.c.bf16 %v1768, %v1768
        %1770 = vrot.lane.b32.xlu0 %v1708, 64
        %v1771 = vpop.permute.xlu0 %1770
        %v1773 = vsel %vm768, %v1769, 0
        %v1776 = vsel %vm832, %v1771, 0
        %1778 = vmatprep.subr.bf16.mxu0 0
        %1779 = vmatpush1.bf16.msra.mxu0 %v1776
        %1780 = vmatprep.subr.bf16.mxu0 0
        %1781 = vmatpush1.bf16.msra.mxu0 0
        %1782 = vmatprep.subr.bf16.mxu0 0
        %1783 = vmatpush1.bf16.msra.mxu0 0
        %1784 = vmatprep.subr.bf16.mxu0 0
        %1785 = vmatpush1.bf16.msra.mxu0 0
        %1786 = vmatprep.subr.bf16.mxu0 0
        %1787 = vmatpush1.bf16.msra.mxu0 0
        %1788 = vmatprep.subr.bf16.mxu0 0
        %1789 = vmatpush1.bf16.msra.mxu0 0
        %1790 = vmatprep.subr.bf16.mxu0 0
        %1791 = vmatpush1.bf16.msra.mxu0 0
        %1792 = vmatprep.subr.bf16.mxu0 0
        %1793 = vmatpush1.bf16.msra.mxu0 0
        %1794 = vmatprep.subr.bf16.mxu0 0
        %1795 = vmatpush1.bf16.msra.mxu0 0
        %1796 = vmatprep.subr.bf16.mxu0 0
        %1797 = vmatpush1.bf16.msra.mxu0 0
        %1798 = vmatprep.subr.bf16.mxu0 0
        %1799 = vmatpush1.bf16.msra.mxu0 0
        %1800 = vmatprep.subr.bf16.mxu0 0
        %1801 = vmatpush1.bf16.msra.mxu0 0
        %1802 = vmatprep.subr.bf16.mxu0 0
        %1803 = vmatpush1.bf16.msra.mxu0 0
        %1804 = vmatprep.subr.bf16.mxu0 0
        %1805 = vmatpush1.bf16.msra.mxu0 0
        %1806 = vmatprep.subr.bf16.mxu0 0
        %1807 = vmatpush1.bf16.msra.mxu0 0
        %1808 = vmatprep.subr.bf16.mxu0 0
        %1809 = vmatpush1.bf16.msra.mxu0 0
        %1810 = vmatprep.mubr.bf16.mxu0 0
        %1811 = vmatmul.mubr.bf16.gmra.mrb[0].mxu0 %v1773
        %v1812 = vpop.f32.mrb[0].mxu0
        %v1813 = vadd.f32 0.0, %v1812
        %v1814 = vpop.f32.mrb[0].mxu0
        %v1815 = vpop.f32.mrb[0].mxu0
        %v1816 = vpop.f32.mrb[0].mxu0
        %1817 = vdwg.mxu0
        %v1818 = vpack.c.bf16 %v1813, %v1813
        %1820 = vrot.lane.b32.xlu0 %v1707, 120
        %v1821 = vpop.permute.xlu0 %1820
        %1822 = vrot.lane.b32.xlu0 %v1708, 88
        %v1823 = vpop.permute.xlu0 %1822
        %v1825 = vsel %vm768, %v1821, 0
        %v1828 = vsel %vm768, %v1823, 0
        %1830 = vmatprep.subr.bf16.mxu0 0
        %1831 = vmatpush1.bf16.xpose.msra.mxu0 %v1828
        %1832 = vmatprep.subr.bf16.mxu0 0
        %1833 = vmatpush1.bf16.xpose.msra.mxu0 0
        %1834 = vmatprep.subr.bf16.mxu0 0
        %1835 = vmatpush1.bf16.xpose.msra.mxu0 0
        %1836 = vmatprep.subr.bf16.mxu0 0
        %1837 = vmatpush1.bf16.xpose.msra.mxu0 0
        %1838 = vmatprep.subr.bf16.mxu0 0
        %1839 = vmatpush1.bf16.xpose.msra.mxu0 0
        %1840 = vmatprep.subr.bf16.mxu0 0
        %1841 = vmatpush1.bf16.xpose.msra.mxu0 0
        %1842 = vmatprep.subr.bf16.mxu0 0
        %1843 = vmatpush1.bf16.xpose.msra.mxu0 0
        %1844 = vmatprep.subr.bf16.mxu0 0
        %1845 = vmatpush1.bf16.xpose.msra.mxu0 0
        %1846 = vmatprep.subr.bf16.mxu0 0
        %1847 = vmatpush1.bf16.xpose.msra.mxu0 0
        %1848 = vmatprep.subr.bf16.mxu0 0
        %1849 = vmatpush1.bf16.xpose.msra.mxu0 0
        %1850 = vmatprep.subr.bf16.mxu0 0
        %1851 = vmatpush1.bf16.xpose.msra.mxu0 0
        %1852 = vmatprep.subr.bf16.mxu0 0
        %1853 = vmatpush1.bf16.xpose.msra.mxu0 0
        %1854 = vmatprep.subr.bf16.mxu0 0
        %1855 = vmatpush1.bf16.xpose.msra.mxu0 0
        %1856 = vmatprep.subr.bf16.mxu0 0
        %1857 = vmatpush1.bf16.xpose.msra.mxu0 0
        %1858 = vmatprep.subr.bf16.mxu0 0
        %1859 = vmatpush1.bf16.xpose.msra.mxu0 0
        %1860 = vmatprep.subr.bf16.mxu0 0
        %1861 = vmatpush1.bf16.xpose.msra.mxu0 0
        %1862 = vmatprep.mubr.bf16.mxu0 0
        %1863 = vmatmul.mubr.bf16.gmra.mrb[0].mxu0 %v1825
        %v1864 = vpop.f32.mrb[0].mxu0
        %v1865 = vadd.f32 0.0, %v1864
        %v1866 = vpop.f32.mrb[0].mxu0
        %v1867 = vpop.f32.mrb[0].mxu0
        %v1868 = vpop.f32.mrb[0].mxu0
        %1869 = vdwg.mxu0
        %v1870 = vsel %vm768, %v1865, -inf
        %1871 = vmax.xlane.f32.xlu0 %v1870
        %v1872 = vpop.xlane.xlu0 %1871
        %v1873 = vsub.f32 %v1865, %v1872
        %v1874 = vmul.f32 %v1873, 1.442695
        %v1875 = vpow.pop %v1874
        %v1876 = vsel %vm768, %v1875, 0.0
        %1877 = vadd.xlane.f32.xlu0 %v1876
        %v1878 = vpop.xlane.xlu0 %1877
        %v1879 = vrcp.pop %v1878
        %v1880 = vmul.f32 %v1875, %v1879
        %v1881 = vpack.c.bf16 %v1880, %v1880
        %1882 = vrot.lane.b32.xlu0 %v1708, 56
        %v1883 = vpop.permute.xlu0 %1882
        %v1885 = vsel %vm768, %v1881, 0
        %v1888 = vsel %vm832, %v1883, 0
        %1890 = vmatprep.subr.bf16.mxu0 0
        %1891 = vmatpush1.bf16.msra.mxu0 %v1888
        %1892 = vmatprep.subr.bf16.mxu0 0
        %1893 = vmatpush1.bf16.msra.mxu0 0
        %1894 = vmatprep.subr.bf16.mxu0 0
        %1895 = vmatpush1.bf16.msra.mxu0 0
        %1896 = vmatprep.subr.bf16.mxu0 0
        %1897 = vmatpush1.bf16.msra.mxu0 0
        %1898 = vmatprep.subr.bf16.mxu0 0
        %1899 = vmatpush1.bf16.msra.mxu0 0
        %1900 = vmatprep.subr.bf16.mxu0 0
        %1901 = vmatpush1.bf16.msra.mxu0 0
        %1902 = vmatprep.subr.bf16.mxu0 0
        %1903 = vmatpush1.bf16.msra.mxu0 0
        %1904 = vmatprep.subr.bf16.mxu0 0
        %1905 = vmatpush1.bf16.msra.mxu0 0
        %1906 = vmatprep.subr.bf16.mxu0 0
        %1907 = vmatpush1.bf16.msra.mxu0 0
        %1908 = vmatprep.subr.bf16.mxu0 0
        %1909 = vmatpush1.bf16.msra.mxu0 0
        %1910 = vmatprep.subr.bf16.mxu0 0
        %1911 = vmatpush1.bf16.msra.mxu0 0
        %1912 = vmatprep.subr.bf16.mxu0 0
        %1913 = vmatpush1.bf16.msra.mxu0 0
        %1914 = vmatprep.subr.bf16.mxu0 0
        %1915 = vmatpush1.bf16.msra.mxu0 0
        %1916 = vmatprep.subr.bf16.mxu0 0
        %1917 = vmatpush1.bf16.msra.mxu0 0
        %1918 = vmatprep.subr.bf16.mxu0 0
        %1919 = vmatpush1.bf16.msra.mxu0 0
        %1920 = vmatprep.subr.bf16.mxu0 0
        %1921 = vmatpush1.bf16.msra.mxu0 0
        %1922 = vmatprep.mubr.bf16.mxu0 0
        %1923 = vmatmul.mubr.bf16.gmra.mrb[0].mxu0 %v1885
        %v1924 = vpop.f32.mrb[0].mxu0
        %v1925 = vadd.f32 0.0, %v1924
        %v1926 = vpop.f32.mrb[0].mxu0
        %v1927 = vpop.f32.mrb[0].mxu0
        %v1928 = vpop.f32.mrb[0].mxu0
        %1929 = vdwg.mxu0
        %v1930 = vpack.c.bf16 %v1925, %v1925
        %v1932 = vsel %vm768, %v1930, 0
        %v1935 = vsel %vm832, %v1596, 0
        %1937 = vmatprep.subr.bf16.mxu0 0
        %1938 = vmatpush1.bf16.msra.mxu0 %v1935
        %1939 = vmatprep.subr.bf16.mxu0 0
        %1940 = vmatpush1.bf16.msra.mxu0 0
        %1941 = vmatprep.subr.bf16.mxu0 0
        %1942 = vmatpush1.bf16.msra.mxu0 0
        %1943 = vmatprep.subr.bf16.mxu0 0
        %1944 = vmatpush1.bf16.msra.mxu0 0
        %1945 = vmatprep.subr.bf16.mxu0 0
        %1946 = vmatpush1.bf16.msra.mxu0 0
        %1947 = vmatprep.subr.bf16.mxu0 0
        %1948 = vmatpush1.bf16.msra.mxu0 0
        %1949 = vmatprep.subr.bf16.mxu0 0
        %1950 = vmatpush1.bf16.msra.mxu0 0
        %1951 = vmatprep.subr.bf16.mxu0 0
        %1952 = vmatpush1.bf16.msra.mxu0 0
        %1953 = vmatprep.subr.bf16.mxu0 0
        %1954 = vmatpush1.bf16.msra.mxu0 0
        %1955 = vmatprep.subr.bf16.mxu0 0
        %1956 = vmatpush1.bf16.msra.mxu0 0
        %1957 = vmatprep.subr.bf16.mxu0 0
        %1958 = vmatpush1.bf16.msra.mxu0 0
        %1959 = vmatprep.subr.bf16.mxu0 0
        %1960 = vmatpush1.bf16.msra.mxu0 0
        %1961 = vmatprep.subr.bf16.mxu0 0
        %1962 = vmatpush1.bf16.msra.mxu0 0
        %1963 = vmatprep.subr.bf16.mxu0 0
        %1964 = vmatpush1.bf16.msra.mxu0 0
        %1965 = vmatprep.subr.bf16.mxu0 0
        %1966 = vmatpush1.bf16.msra.mxu0 0
        %1967 = vmatprep.subr.bf16.mxu0 0
        %1968 = vmatpush1.bf16.msra.mxu0 0
        %1969 = vmatprep.mubr.bf16.mxu0 0
        %1970 = vmatmul.mubr.bf16.gmra.mrb[0].mxu0 %v1932
        %v1971 = vpop.f32.mrb[0].mxu0
        %v1972 = vadd.f32 0.0, %v1971
        %v1973 = vpop.f32.mrb[0].mxu0
        %v1974 = vpop.f32.mrb[0].mxu0
        %v1975 = vpop.f32.mrb[0].mxu0
        %1976 = vdwg.mxu0
        %v1978 = vsel %vm768, %v1818, 0
        %v1981 = vsel %vm832, %v1595, 0
        %1983 = vmatprep.subr.bf16.mxu0 0
        %1984 = vmatpush1.bf16.msra.mxu0 %v1981
        %1985 = vmatprep.subr.bf16.mxu0 0
        %1986 = vmatpush1.bf16.msra.mxu0 0
        %1987 = vmatprep.subr.bf16.mxu0 0
        %1988 = vmatpush1.bf16.msra.mxu0 0
        %1989 = vmatprep.subr.bf16.mxu0 0
        %1990 = vmatpush1.bf16.msra.mxu0 0
        %1991 = vmatprep.subr.bf16.mxu0 0
        %1992 = vmatpush1.bf16.msra.mxu0 0
        %1993 = vmatprep.subr.bf16.mxu0 0
        %1994 = vmatpush1.bf16.msra.mxu0 0
        %1995 = vmatprep.subr.bf16.mxu0 0
        %1996 = vmatpush1.bf16.msra.mxu0 0
        %1997 = vmatprep.subr.bf16.mxu0 0
        %1998 = vmatpush1.bf16.msra.mxu0 0
        %1999 = vmatprep.subr.bf16.mxu0 0
        %2000 = vmatpush1.bf16.msra.mxu0 0
        %2001 = vmatprep.subr.bf16.mxu0 0
        %2002 = vmatpush1.bf16.msra.mxu0 0
        %2003 = vmatprep.subr.bf16.mxu0 0
        %2004 = vmatpush1.bf16.msra.mxu0 0
        %2005 = vmatprep.subr.bf16.mxu0 0
        %2006 = vmatpush1.bf16.msra.mxu0 0
        %2007 = vmatprep.subr.bf16.mxu0 0
        %2008 = vmatpush1.bf16.msra.mxu0 0
        %2009 = vmatprep.subr.bf16.mxu0 0
        %2010 = vmatpush1.bf16.msra.mxu0 0
        %2011 = vmatprep.subr.bf16.mxu0 0
        %2012 = vmatpush1.bf16.msra.mxu0 0
        %2013 = vmatprep.subr.bf16.mxu0 0
        %2014 = vmatpush1.bf16.msra.mxu0 0
        %2015 = vmatprep.mubr.bf16.mxu0 0
        %2016 = vmatmul.mubr.bf16.gmra.mrb[0].mxu0 %v1978
        %v2017 = vpop.f32.mrb[0].mxu0
        %v2018 = vadd.f32 %v1972, %v2017
        %v2019 = vpop.f32.mrb[0].mxu0
        %v2020 = vpop.f32.mrb[0].mxu0
        %v2021 = vpop.f32.mrb[0].mxu0
        %2022 = vdwg.mxu0
        %2023 = vrot.lane.b32.xlu0 %v1707, 112
        %v2024 = vpop.permute.xlu0 %2023
        %2025 = vrot.lane.b32.xlu0 %v1708, 80
        %v2026 = vpop.permute.xlu0 %2025
        %v2028 = vsel %vm768, %v2024, 0
        %v2031 = vsel %vm768, %v2026, 0
        %2033 = vmatprep.subr.bf16.mxu0 0
        %2034 = vmatpush1.bf16.xpose.msra.mxu0 %v2031
        %2035 = vmatprep.subr.bf16.mxu0 0
        %2036 = vmatpush1.bf16.xpose.msra.mxu0 0
        %2037 = vmatprep.subr.bf16.mxu0 0
        %2038 = vmatpush1.bf16.xpose.msra.mxu0 0
        %2039 = vmatprep.subr.bf16.mxu0 0
        %2040 = vmatpush1.bf16.xpose.msra.mxu0 0
        %2041 = vmatprep.subr.bf16.mxu0 0
        %2042 = vmatpush1.bf16.xpose.msra.mxu0 0
        %2043 = vmatprep.subr.bf16.mxu0 0
        %2044 = vmatpush1.bf16.xpose.msra.mxu0 0
        %2045 = vmatprep.subr.bf16.mxu0 0
        %2046 = vmatpush1.bf16.xpose.msra.mxu0 0
        %2047 = vmatprep.subr.bf16.mxu0 0
        %2048 = vmatpush1.bf16.xpose.msra.mxu0 0
        %2049 = vmatprep.subr.bf16.mxu0 0
        %2050 = vmatpush1.bf16.xpose.msra.mxu0 0
        %2051 = vmatprep.subr.bf16.mxu0 0
        %2052 = vmatpush1.bf16.xpose.msra.mxu0 0
        %2053 = vmatprep.subr.bf16.mxu0 0
        %2054 = vmatpush1.bf16.xpose.msra.mxu0 0
        %2055 = vmatprep.subr.bf16.mxu0 0
        %2056 = vmatpush1.bf16.xpose.msra.mxu0 0
        %2057 = vmatprep.subr.bf16.mxu0 0
        %2058 = vmatpush1.bf16.xpose.msra.mxu0 0
        %2059 = vmatprep.subr.bf16.mxu0 0
        %2060 = vmatpush1.bf16.xpose.msra.mxu0 0
        %2061 = vmatprep.subr.bf16.mxu0 0
        %2062 = vmatpush1.bf16.xpose.msra.mxu0 0
        %2063 = vmatprep.subr.bf16.mxu0 0
        %2064 = vmatpush1.bf16.xpose.msra.mxu0 0
        %2065 = vmatprep.mubr.bf16.mxu0 0
        %2066 = vmatmul.mubr.bf16.gmra.mrb[0].mxu0 %v2028
        %v2067 = vpop.f32.mrb[0].mxu0
        %v2068 = vadd.f32 0.0, %v2067
        %v2069 = vpop.f32.mrb[0].mxu0
        %v2070 = vpop.f32.mrb[0].mxu0
        %v2071 = vpop.f32.mrb[0].mxu0
        %2072 = vdwg.mxu0
        %v2073 = vsel %vm768, %v2068, -inf
        %2074 = vmax.xlane.f32.xlu0 %v2073
        %v2075 = vpop.xlane.xlu0 %2074
        %v2076 = vsub.f32 %v2068, %v2075
        %v2077 = vmul.f32 %v2076, 1.442695
        %v2078 = vpow.pop %v2077
        %v2079 = vsel %vm768, %v2078, 0.0
        %2080 = vadd.xlane.f32.xlu0 %v2079
        %v2081 = vpop.xlane.xlu0 %2080
        %v2082 = vrcp.pop %v2081
        %v2083 = vmul.f32 %v2078, %v2082
        %v2084 = vpack.c.bf16 %v2083, %v2083
        %2085 = vrot.lane.b32.xlu0 %v1708, 48
        %v2086 = vpop.permute.xlu0 %2085
        %v2088 = vsel %vm768, %v2084, 0
        %v2091 = vsel %vm832, %v2086, 0
        %2093 = vmatprep.subr.bf16.mxu0 0
        %2094 = vmatpush1.bf16.msra.mxu0 %v2091
        %2095 = vmatprep.subr.bf16.mxu0 0
        %2096 = vmatpush1.bf16.msra.mxu0 0
        %2097 = vmatprep.subr.bf16.mxu0 0
        %2098 = vmatpush1.bf16.msra.mxu0 0
        %2099 = vmatprep.subr.bf16.mxu0 0
        %2100 = vmatpush1.bf16.msra.mxu0 0
        %2101 = vmatprep.subr.bf16.mxu0 0
        %2102 = vmatpush1.bf16.msra.mxu0 0
        %2103 = vmatprep.subr.bf16.mxu0 0
        %2104 = vmatpush1.bf16.msra.mxu0 0
        %2105 = vmatprep.subr.bf16.mxu0 0
        %2106 = vmatpush1.bf16.msra.mxu0 0
        %2107 = vmatprep.subr.bf16.mxu0 0
        %2108 = vmatpush1.bf16.msra.mxu0 0
        %2109 = vmatprep.subr.bf16.mxu0 0
        %2110 = vmatpush1.bf16.msra.mxu0 0
        %2111 = vmatprep.subr.bf16.mxu0 0
        %2112 = vmatpush1.bf16.msra.mxu0 0
        %2113 = vmatprep.subr.bf16.mxu0 0
        %2114 = vmatpush1.bf16.msra.mxu0 0
        %2115 = vmatprep.subr.bf16.mxu0 0
        %2116 = vmatpush1.bf16.msra.mxu0 0
        %2117 = vmatprep.subr.bf16.mxu0 0
        %2118 = vmatpush1.bf16.msra.mxu0 0
        %2119 = vmatprep.subr.bf16.mxu0 0
        %2120 = vmatpush1.bf16.msra.mxu0 0
        %2121 = vmatprep.subr.bf16.mxu0 0
        %2122 = vmatpush1.bf16.msra.mxu0 0
        %2123 = vmatprep.subr.bf16.mxu0 0
        %2124 = vmatpush1.bf16.msra.mxu0 0
        %2125 = vmatprep.mubr.bf16.mxu0 0
        %2126 = vmatmul.mubr.bf16.gmra.mrb[0].mxu0 %v2088
        %v2127 = vpop.f32.mrb[0].mxu0
        %v2128 = vadd.f32 0.0, %v2127
        %v2129 = vpop.f32.mrb[0].mxu0
        %v2130 = vpop.f32.mrb[0].mxu0
        %v2131 = vpop.f32.mrb[0].mxu0
        %2132 = vdwg.mxu0
        %v2133 = vpack.c.bf16 %v2128, %v2128
        %v2135 = vsel %vm768, %v2133, 0
        %v2138 = vsel %vm832, %v1597, 0
        %2140 = vmatprep.subr.bf16.mxu0 0
        %2141 = vmatpush1.bf16.msra.mxu0 %v2138
        %2142 = vmatprep.subr.bf16.mxu0 0
        %2143 = vmatpush1.bf16.msra.mxu0 0
        %2144 = vmatprep.subr.bf16.mxu0 0
        %2145 = vmatpush1.bf16.msra.mxu0 0
        %2146 = vmatprep.subr.bf16.mxu0 0
        %2147 = vmatpush1.bf16.msra.mxu0 0
        %2148 = vmatprep.subr.bf16.mxu0 0
        %2149 = vmatpush1.bf16.msra.mxu0 0
        %2150 = vmatprep.subr.bf16.mxu0 0
        %2151 = vmatpush1.bf16.msra.mxu0 0
        %2152 = vmatprep.subr.bf16.mxu0 0
        %2153 = vmatpush1.bf16.msra.mxu0 0
        %2154 = vmatprep.subr.bf16.mxu0 0
        %2155 = vmatpush1.bf16.msra.mxu0 0
        %2156 = vmatprep.subr.bf16.mxu0 0
        %2157 = vmatpush1.bf16.msra.mxu0 0
        %2158 = vmatprep.subr.bf16.mxu0 0
        %2159 = vmatpush1.bf16.msra.mxu0 0
        %2160 = vmatprep.subr.bf16.mxu0 0
        %2161 = vmatpush1.bf16.msra.mxu0 0
        %2162 = vmatprep.subr.bf16.mxu0 0
        %2163 = vmatpush1.bf16.msra.mxu0 0
        %2164 = vmatprep.subr.bf16.mxu0 0
        %2165 = vmatpush1.bf16.msra.mxu0 0
        %2166 = vmatprep.subr.bf16.mxu0 0
        %2167 = vmatpush1.bf16.msra.mxu0 0
        %2168 = vmatprep.subr.bf16.mxu0 0
        %2169 = vmatpush1.bf16.msra.mxu0 0
        %2170 = vmatprep.subr.bf16.mxu0 0
        %2171 = vmatpush1.bf16.msra.mxu0 0
        %2172 = vmatprep.mubr.bf16.mxu0 0
        %2173 = vmatmul.mubr.bf16.gmra.mrb[0].mxu0 %v2135
        %v2174 = vpop.f32.mrb[0].mxu0
        %v2175 = vadd.f32 0.0, %v2174
        %v2176 = vpop.f32.mrb[0].mxu0
        %v2177 = vpop.f32.mrb[0].mxu0
        %v2178 = vpop.f32.mrb[0].mxu0
        %2179 = vdwg.mxu0
        %v2180 = vadd.f32 %v2018, %v2175
        %2181 = vrot.lane.b32.xlu0 %v1707, 104
        %v2182 = vpop.permute.xlu0 %2181
        %2183 = vrot.lane.b32.xlu0 %v1708, 72
        %v2184 = vpop.permute.xlu0 %2183
        %v2186 = vsel %vm768, %v2182, 0
        %v2189 = vsel %vm768, %v2184, 0
        %2191 = vmatprep.subr.bf16.mxu0 0
        %2192 = vmatpush1.bf16.xpose.msra.mxu0 %v2189
        %2193 = vmatprep.subr.bf16.mxu0 0
        %2194 = vmatpush1.bf16.xpose.msra.mxu0 0
        %2195 = vmatprep.subr.bf16.mxu0 0
        %2196 = vmatpush1.bf16.xpose.msra.mxu0 0
        %2197 = vmatprep.subr.bf16.mxu0 0
        %2198 = vmatpush1.bf16.xpose.msra.mxu0 0
        %2199 = vmatprep.subr.bf16.mxu0 0
        %2200 = vmatpush1.bf16.xpose.msra.mxu0 0
        %2201 = vmatprep.subr.bf16.mxu0 0
        %2202 = vmatpush1.bf16.xpose.msra.mxu0 0
        %2203 = vmatprep.subr.bf16.mxu0 0
        %2204 = vmatpush1.bf16.xpose.msra.mxu0 0
        %2205 = vmatprep.subr.bf16.mxu0 0
        %2206 = vmatpush1.bf16.xpose.msra.mxu0 0
        %2207 = vmatprep.subr.bf16.mxu0 0
        %2208 = vmatpush1.bf16.xpose.msra.mxu0 0
        %2209 = vmatprep.subr.bf16.mxu0 0
        %2210 = vmatpush1.bf16.xpose.msra.mxu0 0
        %2211 = vmatprep.subr.bf16.mxu0 0
        %2212 = vmatpush1.bf16.xpose.msra.mxu0 0
        %2213 = vmatprep.subr.bf16.mxu0 0
        %2214 = vmatpush1.bf16.xpose.msra.mxu0 0
        %2215 = vmatprep.subr.bf16.mxu0 0
        %2216 = vmatpush1.bf16.xpose.msra.mxu0 0
        %2217 = vmatprep.subr.bf16.mxu0 0
        %2218 = vmatpush1.bf16.xpose.msra.mxu0 0
        %2219 = vmatprep.subr.bf16.mxu0 0
        %2220 = vmatpush1.bf16.xpose.msra.mxu0 0
        %2221 = vmatprep.subr.bf16.mxu0 0
        %2222 = vmatpush1.bf16.xpose.msra.mxu0 0
        %2223 = vmatprep.mubr.bf16.mxu0 0
        %2224 = vmatmul.mubr.bf16.gmra.mrb[0].mxu0 %v2186
        %v2225 = vpop.f32.mrb[0].mxu0
        %v2226 = vadd.f32 0.0, %v2225
        %v2227 = vpop.f32.mrb[0].mxu0
        %v2228 = vpop.f32.mrb[0].mxu0
        %v2229 = vpop.f32.mrb[0].mxu0
        %2230 = vdwg.mxu0
        %v2231 = vsel %vm768, %v2226, -inf
        %2232 = vmax.xlane.f32.xlu0 %v2231
        %v2233 = vpop.xlane.xlu0 %2232
        %v2234 = vsub.f32 %v2226, %v2233
        %v2235 = vmul.f32 %v2234, 1.442695
        %v2236 = vpow.pop %v2235
        %v2237 = vsel %vm768, %v2236, 0.0
        %2238 = vadd.xlane.f32.xlu0 %v2237
        %v2239 = vpop.xlane.xlu0 %2238
        %v2240 = vrcp.pop %v2239
        %v2241 = vmul.f32 %v2236, %v2240
        %v2242 = vpack.c.bf16 %v2241, %v2241
        %2243 = vrot.lane.b32.xlu0 %v1708, 40
        %v2244 = vpop.permute.xlu0 %2243
        %v2246 = vsel %vm768, %v2242, 0
        %v2249 = vsel %vm832, %v2244, 0
        %2251 = vmatprep.subr.bf16.mxu0 0
        %2252 = vmatpush1.bf16.msra.mxu0 %v2249
        %2253 = vmatprep.subr.bf16.mxu0 0
        %2254 = vmatpush1.bf16.msra.mxu0 0
        %2255 = vmatprep.subr.bf16.mxu0 0
        %2256 = vmatpush1.bf16.msra.mxu0 0
        %2257 = vmatprep.subr.bf16.mxu0 0
        %2258 = vmatpush1.bf16.msra.mxu0 0
        %2259 = vmatprep.subr.bf16.mxu0 0
        %2260 = vmatpush1.bf16.msra.mxu0 0
        %2261 = vmatprep.subr.bf16.mxu0 0
        %2262 = vmatpush1.bf16.msra.mxu0 0
        %2263 = vmatprep.subr.bf16.mxu0 0
        %2264 = vmatpush1.bf16.msra.mxu0 0
        %2265 = vmatprep.subr.bf16.mxu0 0
        %2266 = vmatpush1.bf16.msra.mxu0 0
        %2267 = vmatprep.subr.bf16.mxu0 0
        %2268 = vmatpush1.bf16.msra.mxu0 0
        %2269 = vmatprep.subr.bf16.mxu0 0
        %2270 = vmatpush1.bf16.msra.mxu0 0
        %2271 = vmatprep.subr.bf16.mxu0 0
        %2272 = vmatpush1.bf16.msra.mxu0 0
        %2273 = vmatprep.subr.bf16.mxu0 0
        %2274 = vmatpush1.bf16.msra.mxu0 0
        %2275 = vmatprep.subr.bf16.mxu0 0
        %2276 = vmatpush1.bf16.msra.mxu0 0
        %2277 = vmatprep.subr.bf16.mxu0 0
        %2278 = vmatpush1.bf16.msra.mxu0 0
        %2279 = vmatprep.subr.bf16.mxu0 0
        %2280 = vmatpush1.bf16.msra.mxu0 0
        %2281 = vmatprep.subr.bf16.mxu0 0
        %2282 = vmatpush1.bf16.msra.mxu0 0
        %2283 = vmatprep.mubr.bf16.mxu0 0
        %2284 = vmatmul.mubr.bf16.gmra.mrb[0].mxu0 %v2246
        %v2285 = vpop.f32.mrb[0].mxu0
        %v2286 = vadd.f32 0.0, %v2285
        %v2287 = vpop.f32.mrb[0].mxu0
        %v2288 = vpop.f32.mrb[0].mxu0
        %v2289 = vpop.f32.mrb[0].mxu0
        %2290 = vdwg.mxu0
        %v2291 = vpack.c.bf16 %v2286, %v2286
        %v2293 = vsel %vm768, %v2291, 0
        %v2296 = vsel %vm832, %v1598, 0
        %2298 = vmatprep.subr.bf16.mxu0 0
        %2299 = vmatpush1.bf16.msra.mxu0 %v2296
        %2300 = vmatprep.subr.bf16.mxu0 0
        %2301 = vmatpush1.bf16.msra.mxu0 0
        %2302 = vmatprep.subr.bf16.mxu0 0
        %2303 = vmatpush1.bf16.msra.mxu0 0
        %2304 = vmatprep.subr.bf16.mxu0 0
        %2305 = vmatpush1.bf16.msra.mxu0 0
        %2306 = vmatprep.subr.bf16.mxu0 0
        %2307 = vmatpush1.bf16.msra.mxu0 0
        %2308 = vmatprep.subr.bf16.mxu0 0
        %2309 = vmatpush1.bf16.msra.mxu0 0
        %2310 = vmatprep.subr.bf16.mxu0 0
        %2311 = vmatpush1.bf16.msra.mxu0 0
        %2312 = vmatprep.subr.bf16.mxu0 0
        %2313 = vmatpush1.bf16.msra.mxu0 0
        %2314 = vmatprep.subr.bf16.mxu0 0
        %2315 = vmatpush1.bf16.msra.mxu0 0
        %2316 = vmatprep.subr.bf16.mxu0 0
        %2317 = vmatpush1.bf16.msra.mxu0 0
        %2318 = vmatprep.subr.bf16.mxu0 0
        %2319 = vmatpush1.bf16.msra.mxu0 0
        %2320 = vmatprep.subr.bf16.mxu0 0
        %2321 = vmatpush1.bf16.msra.mxu0 0
        %2322 = vmatprep.subr.bf16.mxu0 0
        %2323 = vmatpush1.bf16.msra.mxu0 0
        %2324 = vmatprep.subr.bf16.mxu0 0
        %2325 = vmatpush1.bf16.msra.mxu0 0
        %2326 = vmatprep.subr.bf16.mxu0 0
        %2327 = vmatpush1.bf16.msra.mxu0 0
        %2328 = vmatprep.subr.bf16.mxu0 0
        %2329 = vmatpush1.bf16.msra.mxu0 0
        %2330 = vmatprep.mubr.bf16.mxu0 0
        %2331 = vmatmul.mubr.bf16.gmra.mrb[0].mxu0 %v2293
        %v2332 = vpop.f32.mrb[0].mxu0
        %v2333 = vadd.f32 0.0, %v2332
        %v2334 = vpop.f32.mrb[0].mxu0
        %v2335 = vpop.f32.mrb[0].mxu0
        %v2336 = vpop.f32.mrb[0].mxu0
        %2337 = vdwg.mxu0
        %v2338 = vadd.f32 %v2180, %v2333
        %v2339 = vadd.f32 %v1588, %v2338
        %v2340 = vlaneseq
        %v2341 = vshrl.u32 %v2340, 7
        %v2342 = vsub.s32 3, %v2341
        %v2343 = vrot.slane %v1622, %v2342
        %v2344 = vadd.f32 %v2339, %v2343
        %v2345 = vsel %vm677, %v2344, 0.0
        %2346 = vadd.xlane.f32.xlu0 %v2345
        %v2347 = vpop.xlane.xlu0 %2346
        %v2348 = vmul.f32 %v2347, %v681
        %v2349 = vsub.f32 %v2344, %v2348
        %v2350 = vmul.f32 %v2349, %v2349
        %v2351 = vsel %vm677, %v2350, 0.0
        %2352 = vadd.xlane.f32.xlu0 %v2351
        %v2353 = vpop.xlane.xlu0 %2352
        %v2354 = vmul.f32 %v2353, %v681
        %v2355 = vadd.f32 %v2354, 1e-05
        %v2356 = vrsqrt.pop %v2355
        %v2357 = vmul.f32 %v2349, %v2356
        %v2358 = vlaneseq
        %v2359 = vshrl.u32 %v2358, 7
        %v2360 = vsub.s32 4, %v2359
        %v2361 = vrot.slane %v1622, %v2360
        %v2362 = vmul.f32 %v2357, %v2361
        %v2363 = vlaneseq
        %v2364 = vshrl.u32 %v2363, 7
        %v2365 = vsub.s32 5, %v2364
        %v2366 = vrot.slane %v1622, %v2365
        %v2367 = vadd.f32 %v2362, %v2366
        %v2368 = vpack.c.bf16 %v2367, %v2367
        %v2369 = vlaneseq
        %v2370 = vshrl.u32 %v2369, 7
        %v2371 = vsub.s32 6, %v2370
        %v2372 = vrot.slane %v1622, %v2371
        %v2377 = vunpack.c.l.b16 %v1600
        %v2378 = vunpack.c.l.b16 %v1601
        %v2379 = vunpack.c.l.b16 %v1602
        %v2380 = vunpack.c.l.b16 %v1603
        %v2381 = vpack.c.b16 %v2378, %v2377
        %v2382 = vpack.c.b16 %v2380, %v2379
        %v2386 = vsel %vm677, %v2368, 0
        %2388 = vmatprep.subr.bf16.mxu0 0
        %2389 = vmatpush1.bf16.msra.mxu0 %v2381
        %2390 = vmatprep.subr.bf16.mxu0 0
        %2391 = vmatpush1.bf16.msra.mxu0 %v2382
        %2392 = vmatprep.subr.bf16.mxu0 0
        %2393 = vmatpush1.bf16.msra.mxu0 0
        %2394 = vmatprep.subr.bf16.mxu0 0
        %2395 = vmatpush1.bf16.msra.mxu0 0
        %2396 = vmatprep.subr.bf16.mxu0 0
        %2397 = vmatpush1.bf16.msra.mxu0 0
        %2398 = vmatprep.subr.bf16.mxu0 0
        %2399 = vmatpush1.bf16.msra.mxu0 0
        %2400 = vmatprep.subr.bf16.mxu0 0
        %2401 = vmatpush1.bf16.msra.mxu0 0
        %2402 = vmatprep.subr.bf16.mxu0 0
        %2403 = vmatpush1.bf16.msra.mxu0 0
        %2404 = vmatprep.subr.bf16.mxu0 0
        %2405 = vmatpush1.bf16.msra.mxu0 0
        %2406 = vmatprep.subr.bf16.mxu0 0
        %2407 = vmatpush1.bf16.msra.mxu0 0
        %2408 = vmatprep.subr.bf16.mxu0 0
        %2409 = vmatpush1.bf16.msra.mxu0 0
        %2410 = vmatprep.subr.bf16.mxu0 0
        %2411 = vmatpush1.bf16.msra.mxu0 0
        %2412 = vmatprep.subr.bf16.mxu0 0
        %2413 = vmatpush1.bf16.msra.mxu0 0
        %2414 = vmatprep.subr.bf16.mxu0 0
        %2415 = vmatpush1.bf16.msra.mxu0 0
        %2416 = vmatprep.subr.bf16.mxu0 0
        %2417 = vmatpush1.bf16.msra.mxu0 0
        %2418 = vmatprep.subr.bf16.mxu0 0
        %2419 = vmatpush1.bf16.msra.mxu0 0
        %2420 = vmatprep.mubr.bf16.mxu0 0
        %2421 = vmatmul.mubr.bf16.gmra.mrb[0].mxu0 %v2386
        %v2422 = vpop.f32.mrb[0].mxu0
        %v2423 = vadd.f32 %v2372, %v2422
        %v2424 = vpop.f32.mrb[0].mxu0
        %v2425 = vpop.f32.mrb[0].mxu0
        %v2426 = vpop.f32.mrb[0].mxu0
        %2427 = vdwg.mxu0
        %v2428 = vmul.f32 %v2423, 0.5
        %v2429 = vmul.f32 %v2423, 0.044715
        %v2430 = vmul.f32 %v2429, %v2423
        %v2431 = vmul.f32 %v2430, %v2423
        %v2432 = vadd.f32 %v2423, %v2431
        %v2433 = vmul.f32 %v2432, 0.7978846
        %v2434 = vtanh.pop %v2433
        %v2435 = vadd.f32 %v2434, 1.0
        %v2436 = vmul.f32 %v2428, %v2435
        %v2437 = vpack.c.bf16 %v2436, %v2436
        %v2438 = vlaneseq
        %v2439 = vshrl.u32 %v2438, 7
        %v2440 = vsub.s32 7, %v2439
        %v2441 = vrot.slane %v1622, %v2440
        %v2458 = vunpack.c.l.b16 %v1605
        %v2459 = vunpack.c.l.b16 %v1606
        %v2460 = vunpack.c.l.b16 %v1607
        %v2461 = vunpack.c.l.b16 %v1608
        %v2462 = vunpack.c.l.b16 %v1609
        %v2463 = vunpack.c.l.b16 %v1610
        %v2464 = vunpack.c.l.b16 %v1611
        %v2465 = vunpack.c.l.b16 %v1612
        %v2466 = vunpack.c.l.b16 %v1613
        %v2467 = vunpack.c.l.b16 %v1614
        %v2468 = vunpack.c.l.b16 %v1615
        %v2469 = vunpack.c.l.b16 %v1616
        %v2470 = vunpack.c.l.b16 %v1617
        %v2471 = vunpack.c.l.b16 %v1618
        %v2472 = vunpack.c.l.b16 %v1619
        %v2473 = vunpack.c.l.b16 %v1620
        %v2474 = vpack.c.b16 %v2459, %v2458
        %v2475 = vpack.c.b16 %v2461, %v2460
        %v2476 = vpack.c.b16 %v2463, %v2462
        %v2477 = vpack.c.b16 %v2465, %v2464
        %v2478 = vpack.c.b16 %v2467, %v2466
        %v2479 = vpack.c.b16 %v2469, %v2468
        %v2480 = vpack.c.b16 %v2471, %v2470
        %v2481 = vpack.c.b16 %v2473, %v2472
        %2490 = vmatprep.subr.bf16.mxu0 0
        %2491 = vmatpush1.bf16.msra.mxu0 %v2474
        %2492 = vmatprep.subr.bf16.mxu0 0
        %2493 = vmatpush1.bf16.msra.mxu0 %v2475
        %2494 = vmatprep.subr.bf16.mxu0 0
        %2495 = vmatpush1.bf16.msra.mxu0 %v2476
        %2496 = vmatprep.subr.bf16.mxu0 0
        %2497 = vmatpush1.bf16.msra.mxu0 %v2477
        %2498 = vmatprep.subr.bf16.mxu0 0
        %2499 = vmatpush1.bf16.msra.mxu0 %v2478
        %2500 = vmatprep.subr.bf16.mxu0 0
        %2501 = vmatpush1.bf16.msra.mxu0 %v2479
        %2502 = vmatprep.subr.bf16.mxu0 0
        %2503 = vmatpush1.bf16.msra.mxu0 %v2480
        %2504 = vmatprep.subr.bf16.mxu0 0
        %2505 = vmatpush1.bf16.msra.mxu0 %v2481
        %2506 = vmatprep.subr.bf16.mxu0 0
        %2507 = vmatpush1.bf16.msra.mxu0 0
        %2508 = vmatprep.subr.bf16.mxu0 0
        %2509 = vmatpush1.bf16.msra.mxu0 0
        %2510 = vmatprep.subr.bf16.mxu0 0
        %2511 = vmatpush1.bf16.msra.mxu0 0
        %2512 = vmatprep.subr.bf16.mxu0 0
        %2513 = vmatpush1.bf16.msra.mxu0 0
        %2514 = vmatprep.subr.bf16.mxu0 0
        %2515 = vmatpush1.bf16.msra.mxu0 0
        %2516 = vmatprep.subr.bf16.mxu0 0
        %2517 = vmatpush1.bf16.msra.mxu0 0
        %2518 = vmatprep.subr.bf16.mxu0 0
        %2519 = vmatpush1.bf16.msra.mxu0 0
        %2520 = vmatprep.subr.bf16.mxu0 0
        %2521 = vmatpush1.bf16.msra.mxu0 0
        %2522 = vmatprep.mubr.bf16.mxu0 0
        %2523 = vmatmul.mubr.bf16.gmra.mrb[0].mxu0 %v2437
        %v2524 = vpop.f32.mrb[0].mxu0
        %v2525 = vadd.f32 %v2441, %v2524
        %v2526 = vpop.f32.mrb[0].mxu0
        %v2527 = vpop.f32.mrb[0].mxu0
        %v2528 = vpop.f32.mrb[0].mxu0
        %2529 = vdwg.mxu0
        %v2530 = vadd.f32 %v2344, %v2525
        %v2531 = vld [vmem:[%s587] sm:$0xff]
        %v2532 = vld [vmem:[%s3] sm:$0xf]
        %v2533 = vpack.c.bf16 %v2531, %v2531
        %v2534 = vlaneseq
        %v2535 = vshrl.u32 %v2534, 7
        %v2536 = vsub.s32 1, %v2535
        %v2537 = vrot.slane %v589, %v2536
        %v2539 = vsel %vm768, %v2533, 0
        %v2542 = vsel %vm832, %v2532, 0
        %2544 = vmatprep.subr.bf16.mxu0 0
        %2545 = vmatpush1.bf16.msra.mxu0 %v2542
        %2546 = vmatprep.subr.bf16.mxu0 0
        %2547 = vmatpush1.bf16.msra.mxu0 0
        %2548 = vmatprep.subr.bf16.mxu0 0
        %2549 = vmatpush1.bf16.msra.mxu0 0
        %2550 = vmatprep.subr.bf16.mxu0 0
        %2551 = vmatpush1.bf16.msra.mxu0 0
        %2552 = vmatprep.subr.bf16.mxu0 0
        %2553 = vmatpush1.bf16.msra.mxu0 0
        %2554 = vmatprep.subr.bf16.mxu0 0
        %2555 = vmatpush1.bf16.msra.mxu0 0
        %2556 = vmatprep.subr.bf16.mxu0 0
        %2557 = vmatpush1.bf16.msra.mxu0 0
        %2558 = vmatprep.subr.bf16.mxu0 0
        %2559 = vmatpush1.bf16.msra.mxu0 0
        %2560 = vmatprep.subr.bf16.mxu0 0
        %2561 = vmatpush1.bf16.msra.mxu0 0
        %2562 = vmatprep.subr.bf16.mxu0 0
        %2563 = vmatpush1.bf16.msra.mxu0 0
        %2564 = vmatprep.subr.bf16.mxu0 0
        %2565 = vmatpush1.bf16.msra.mxu0 0
        %2566 = vmatprep.subr.bf16.mxu0 0
        %2567 = vmatpush1.bf16.msra.mxu0 0
        %2568 = vmatprep.subr.bf16.mxu0 0
        %2569 = vmatpush1.bf16.msra.mxu0 0
        %2570 = vmatprep.subr.bf16.mxu0 0
        %2571 = vmatpush1.bf16.msra.mxu0 0
        %2572 = vmatprep.subr.bf16.mxu0 0
        %2573 = vmatpush1.bf16.msra.mxu0 0
        %2574 = vmatprep.subr.bf16.mxu0 0
        %2575 = vmatpush1.bf16.msra.mxu0 0
        %2576 = vmatprep.mubr.bf16.mxu0 0
        %2577 = vmatmul.mubr.bf16.gmra.mrb[0].mxu0 %v2539
        %v2578 = vpop.f32.mrb[0].mxu0
        %v2579 = vadd.f32 %v2537, %v2578
        %v2580 = vpop.f32.mrb[0].mxu0
        %v2581 = vpop.f32.mrb[0].mxu0
        %v2582 = vpop.f32.mrb[0].mxu0
        %2583 = vdwg.mxu0
        %v2584 = vld [vmem:[%s10] sm:$0xf]
        %v2585 = vld [vmem:[%s10 + $0x4] sm:$0xf]
        %v2586 = vld [vmem:[%s10 + $0x8] sm:$0xf]
        %v2587 = vld [vmem:[%s10 + $0xc] sm:$0xf]
        %v2588 = vld [vmem:[%s11] sm:$0xf]
        %v2589 = vld [vmem:[%s11 + $0x4] sm:$0xf]
        %v2590 = vld [vmem:[%s11 + $0x8] sm:$0xf]
        %v2591 = vld [vmem:[%s11 + $0xc] sm:$0xf]
        %v2592 = vld [vmem:[%s12] sm:$0xf]
        %v2593 = vld [vmem:[%s12 + $0x4] sm:$0xf]
        %v2594 = vld [vmem:[%s12 + $0x8] sm:$0xf]
        %v2595 = vld [vmem:[%s12 + $0xc] sm:$0xf]
        %v2596 = vld [vmem:[%s13] sm:$0xf]
        %v2597 = vld [vmem:[%s13 + $0x4] sm:$0xf]
        %v2598 = vld [vmem:[%s13 + $0x8] sm:$0xf]
        %v2599 = vld [vmem:[%s13 + $0xc] sm:$0xf]
        %v2600 = vld [vmem:[%s14] sm:$0xf]
        %v2601 = vld [vmem:[%s14 + $0x4] sm:$0xf]
        %v2602 = vld [vmem:[%s14 + $0x8] sm:$0xf]
        %v2603 = vld [vmem:[%s14 + $0xc] sm:$0xf]
        %v2604 = vld [vmem:[%s15] sm:$0xf]
        %v2605 = vld [vmem:[%s15 + $0x4] sm:$0xf]
        %v2606 = vld [vmem:[%s15 + $0x8] sm:$0xf]
        %v2607 = vld [vmem:[%s15 + $0xc] sm:$0xf]
        %v2608 = vld [vmem:[%s16] sm:$0xf]
        %v2609 = vld [vmem:[%s16 + $0x4] sm:$0xf]
        %v2610 = vld [vmem:[%s16 + $0x8] sm:$0xf]
        %v2611 = vld [vmem:[%s16 + $0xc] sm:$0xf]
        %v2612 = vld [vmem:[%s16 + $0x10] sm:$0xf]
        %v2613 = vld [vmem:[%s16 + $0x14] sm:$0xf]
        %v2614 = vld [vmem:[%s16 + $0x18] sm:$0xf]
        %v2615 = vld [vmem:[%s16 + $0x1c] sm:$0xf]
        %v2616 = vld [vmem:[%s16 + $0x20] sm:$0xf]
        %v2617 = vld [vmem:[%s16 + $0x24] sm:$0xf]
        %v2618 = vld [vmem:[%s16 + $0x28] sm:$0xf]
        %v2619 = vld [vmem:[%s16 + $0x2c] sm:$0xf]
        %v2620 = vld [vmem:[%s16 + $0x30] sm:$0xf]
        %v2621 = vld [vmem:[%s16 + $0x34] sm:$0xf]
        %v2622 = vld [vmem:[%s16 + $0x38] sm:$0xf]
        %v2623 = vld [vmem:[%s16 + $0x3c] sm:$0xf]
        %v2624 = vld [vmem:[%s17] sm:$0xff]
        %v2625 = vld [vmem:[%s17 + $0x8] sm:$0x1f]
        %v2626 = vsel %vm677, %v2579, 0.0
        %2627 = vadd.xlane.f32.xlu0 %v2626
        %v2628 = vpop.xlane.xlu0 %2627
        %v2629 = vmul.f32 %v2628, %v681
        %v2630 = vsub.f32 %v2579, %v2629
        %v2631 = vmul.f32 %v2630, %v2630
        %v2632 = vsel %vm677, %v2631, 0.0
        %2633 = vadd.xlane.f32.xlu0 %v2632
        %v2634 = vpop.xlane.xlu0 %2633
        %v2635 = vmul.f32 %v2634, %v681
        %v2636 = vadd.f32 %v2635, 1e-05
        %v2637 = vrsqrt.pop %v2636
        %v2638 = vmul.f32 %v2630, %v2637
        %v2639 = vlaneseq
        %v2640 = vshrl.u32 %v2639, 7
        %v2641 = vsub.s32 0, %v2640
        %v2642 = vrot.slane %v2624, %v2641
        %v2643 = vmul.f32 %v2638, %v2642
        %v2644 = vlaneseq
        %v2645 = vshrl.u32 %v2644, 7
        %v2646 = vsub.s32 1, %v2645
        %v2647 = vrot.slane %v2624, %v2646
        %v2648 = vadd.f32 %v2643, %v2647
        %v2649 = vpack.c.bf16 %v2648, %v2648
        %v2650 = vlaneseq
        %v2651 = vshrl.u32 %v2650, 7
        %v2652 = vsub.s32 2, %v2651
        %v2653 = vrot.slane %v2624, %v2652
        %v2658 = vunpack.c.l.b16 %v2584
        %v2659 = vunpack.c.l.b16 %v2585
        %v2660 = vunpack.c.l.b16 %v2586
        %v2661 = vunpack.c.l.b16 %v2587
        %v2662 = vpack.c.b16 %v2659, %v2658
        %v2663 = vpack.c.b16 %v2661, %v2660
        %v2667 = vsel %vm677, %v2649, 0
        %2669 = vmatprep.subr.bf16.mxu0 0
        %2670 = vmatpush1.bf16.msra.mxu0 %v2662
        %2671 = vmatprep.subr.bf16.mxu0 0
        %2672 = vmatpush1.bf16.msra.mxu0 %v2663
        %2673 = vmatprep.subr.bf16.mxu0 0
        %2674 = vmatpush1.bf16.msra.mxu0 0
        %2675 = vmatprep.subr.bf16.mxu0 0
        %2676 = vmatpush1.bf16.msra.mxu0 0
        %2677 = vmatprep.subr.bf16.mxu0 0
        %2678 = vmatpush1.bf16.msra.mxu0 0
        %2679 = vmatprep.subr.bf16.mxu0 0
        %2680 = vmatpush1.bf16.msra.mxu0 0
        %2681 = vmatprep.subr.bf16.mxu0 0
        %2682 = vmatpush1.bf16.msra.mxu0 0
        %2683 = vmatprep.subr.bf16.mxu0 0
        %2684 = vmatpush1.bf16.msra.mxu0 0
        %2685 = vmatprep.subr.bf16.mxu0 0
        %2686 = vmatpush1.bf16.msra.mxu0 0
        %2687 = vmatprep.subr.bf16.mxu0 0
        %2688 = vmatpush1.bf16.msra.mxu0 0
        %2689 = vmatprep.subr.bf16.mxu0 0
        %2690 = vmatpush1.bf16.msra.mxu0 0
        %2691 = vmatprep.subr.bf16.mxu0 0
        %2692 = vmatpush1.bf16.msra.mxu0 0
        %2693 = vmatprep.subr.bf16.mxu0 0
        %2694 = vmatpush1.bf16.msra.mxu0 0
        %2695 = vmatprep.subr.bf16.mxu0 0
        %2696 = vmatpush1.bf16.msra.mxu0 0
        %2697 = vmatprep.subr.bf16.mxu0 0
        %2698 = vmatpush1.bf16.msra.mxu0 0
        %2699 = vmatprep.subr.bf16.mxu0 0
        %2700 = vmatpush1.bf16.msra.mxu0 0
        %2701 = vmatprep.mubr.bf16.mxu0 0
        %2702 = vmatmul.mubr.bf16.gmra.mrb[0].mxu0 %v2667
        %v2703 = vpop.f32.mrb[0].mxu0
        %v2704 = vadd.f32 %v2653, %v2703
        %v2705 = vpop.f32.mrb[0].mxu0
        %v2706 = vpop.f32.mrb[0].mxu0
        %v2707 = vpop.f32.mrb[0].mxu0
        %2708 = vdwg.mxu0
        %v2709 = vlaneseq
        %v2710 = vshrl.u32 %v2709, 7
        %v2711 = vlaneseq
        %v2712 = vand.u32 %v2711, 127
        %vm2713 = vcmp.le.s32.totalorder %v2712, %v2710
        %v2714 = vsel %vm2713, 0.0, -1e+30
        %v2715 = vmul.f32 %v2704, 0.35355338
        %v2716 = vpack.c.bf16 %v2715, %v2715
        %v2717 = vpack.c.bf16 %v2704, %v2704
        %2719 = vrot.lane.b32.xlu0 %v2717, 96
        %v2720 = vpop.permute.xlu0 %2719
        %v2722 = vsel %vm768, %v2716, 0
        %v2725 = vsel %vm768, %v2720, 0
        %2727 = vmatprep.subr.bf16.mxu0 0
        %2728 = vmatpush1.bf16.xpose.msra.mxu0 %v2725
        %2729 = vmatprep.subr.bf16.mxu0 0
        %2730 = vmatpush1.bf16.xpose.msra.mxu0 0
        %2731 = vmatprep.subr.bf16.mxu0 0
        %2732 = vmatpush1.bf16.xpose.msra.mxu0 0
        %2733 = vmatprep.subr.bf16.mxu0 0
        %2734 = vmatpush1.bf16.xpose.msra.mxu0 0
        %2735 = vmatprep.subr.bf16.mxu0 0
        %2736 = vmatpush1.bf16.xpose.msra.mxu0 0
        %2737 = vmatprep.subr.bf16.mxu0 0
        %2738 = vmatpush1.bf16.xpose.msra.mxu0 0
        %2739 = vmatprep.subr.bf16.mxu0 0
        %2740 = vmatpush1.bf16.xpose.msra.mxu0 0
        %2741 = vmatprep.subr.bf16.mxu0 0
        %2742 = vmatpush1.bf16.xpose.msra.mxu0 0
        %2743 = vmatprep.subr.bf16.mxu0 0
        %2744 = vmatpush1.bf16.xpose.msra.mxu0 0
        %2745 = vmatprep.subr.bf16.mxu0 0
        %2746 = vmatpush1.bf16.xpose.msra.mxu0 0
        %2747 = vmatprep.subr.bf16.mxu0 0
        %2748 = vmatpush1.bf16.xpose.msra.mxu0 0
        %2749 = vmatprep.subr.bf16.mxu0 0
        %2750 = vmatpush1.bf16.xpose.msra.mxu0 0
        %2751 = vmatprep.subr.bf16.mxu0 0
        %2752 = vmatpush1.bf16.xpose.msra.mxu0 0
        %2753 = vmatprep.subr.bf16.mxu0 0
        %2754 = vmatpush1.bf16.xpose.msra.mxu0 0
        %2755 = vmatprep.subr.bf16.mxu0 0
        %2756 = vmatpush1.bf16.xpose.msra.mxu0 0
        %2757 = vmatprep.subr.bf16.mxu0 0
        %2758 = vmatpush1.bf16.xpose.msra.mxu0 0
        %2759 = vmatprep.mubr.bf16.mxu0 0
        %2760 = vmatmul.mubr.bf16.gmra.mrb[0].mxu0 %v2722
        %v2761 = vpop.f32.mrb[0].mxu0
        %v2762 = vadd.f32 %v2714, %v2761
        %v2763 = vpop.f32.mrb[0].mxu0
        %v2764 = vpop.f32.mrb[0].mxu0
        %v2765 = vpop.f32.mrb[0].mxu0
        %2766 = vdwg.mxu0
        %v2767 = vsel %vm768, %v2762, -inf
        %2768 = vmax.xlane.f32.xlu0 %v2767
        %v2769 = vpop.xlane.xlu0 %2768
        %v2770 = vsub.f32 %v2762, %v2769
        %v2771 = vmul.f32 %v2770, 1.442695
        %v2772 = vpow.pop %v2771
        %v2773 = vsel %vm768, %v2772, 0.0
        %2774 = vadd.xlane.f32.xlu0 %v2773
        %v2775 = vpop.xlane.xlu0 %2774
        %v2776 = vrcp.pop %v2775
        %v2777 = vmul.f32 %v2772, %v2776
        %v2778 = vpack.c.bf16 %v2777, %v2777
        %2779 = vrot.lane.b32.xlu0 %v2717, 64
        %v2780 = vpop.permute.xlu0 %2779
        %v2782 = vsel %vm768, %v2778, 0
        %v2785 = vsel %vm832, %v2780, 0
        %2787 = vmatprep.subr.bf16.mxu0 0
        %2788 = vmatpush1.bf16.msra.mxu0 %v2785
        %2789 = vmatprep.subr.bf16.mxu0 0
        %2790 = vmatpush1.bf16.msra.mxu0 0
        %2791 = vmatprep.subr.bf16.mxu0 0
        %2792 = vmatpush1.bf16.msra.mxu0 0
        %2793 = vmatprep.subr.bf16.mxu0 0
        %2794 = vmatpush1.bf16.msra.mxu0 0
        %2795 = vmatprep.subr.bf16.mxu0 0
        %2796 = vmatpush1.bf16.msra.mxu0 0
        %2797 = vmatprep.subr.bf16.mxu0 0
        %2798 = vmatpush1.bf16.msra.mxu0 0
        %2799 = vmatprep.subr.bf16.mxu0 0
        %2800 = vmatpush1.bf16.msra.mxu0 0
        %2801 = vmatprep.subr.bf16.mxu0 0
        %2802 = vmatpush1.bf16.msra.mxu0 0
        %2803 = vmatprep.subr.bf16.mxu0 0
        %2804 = vmatpush1.bf16.msra.mxu0 0
        %2805 = vmatprep.subr.bf16.mxu0 0
        %2806 = vmatpush1.bf16.msra.mxu0 0
        %2807 = vmatprep.subr.bf16.mxu0 0
        %2808 = vmatpush1.bf16.msra.mxu0 0
        %2809 = vmatprep.subr.bf16.mxu0 0
        %2810 = vmatpush1.bf16.msra.mxu0 0
        %2811 = vmatprep.subr.bf16.mxu0 0
        %2812 = vmatpush1.bf16.msra.mxu0 0
        %2813 = vmatprep.subr.bf16.mxu0 0
        %2814 = vmatpush1.bf16.msra.mxu0 0
        %2815 = vmatprep.subr.bf16.mxu0 0
        %2816 = vmatpush1.bf16.msra.mxu0 0
        %2817 = vmatprep.subr.bf16.mxu0 0
        %2818 = vmatpush1.bf16.msra.mxu0 0
        %2819 = vmatprep.mubr.bf16.mxu0 0
        %2820 = vmatmul.mubr.bf16.gmra.mrb[0].mxu0 %v2782
        %v2821 = vpop.f32.mrb[0].mxu0
        %v2822 = vadd.f32 0.0, %v2821
        %v2823 = vpop.f32.mrb[0].mxu0
        %v2824 = vpop.f32.mrb[0].mxu0
        %v2825 = vpop.f32.mrb[0].mxu0
        %2826 = vdwg.mxu0
        %v2827 = vpack.c.bf16 %v2822, %v2822
        %2829 = vrot.lane.b32.xlu0 %v2716, 120
        %v2830 = vpop.permute.xlu0 %2829
        %2831 = vrot.lane.b32.xlu0 %v2717, 88
        %v2832 = vpop.permute.xlu0 %2831
        %v2834 = vsel %vm768, %v2830, 0
        %v2837 = vsel %vm768, %v2832, 0
        %2839 = vmatprep.subr.bf16.mxu0 0
        %2840 = vmatpush1.bf16.xpose.msra.mxu0 %v2837
        %2841 = vmatprep.subr.bf16.mxu0 0
        %2842 = vmatpush1.bf16.xpose.msra.mxu0 0
        %2843 = vmatprep.subr.bf16.mxu0 0
        %2844 = vmatpush1.bf16.xpose.msra.mxu0 0
        %2845 = vmatprep.subr.bf16.mxu0 0
        %2846 = vmatpush1.bf16.xpose.msra.mxu0 0
        %2847 = vmatprep.subr.bf16.mxu0 0
        %2848 = vmatpush1.bf16.xpose.msra.mxu0 0
        %2849 = vmatprep.subr.bf16.mxu0 0
        %2850 = vmatpush1.bf16.xpose.msra.mxu0 0
        %2851 = vmatprep.subr.bf16.mxu0 0
        %2852 = vmatpush1.bf16.xpose.msra.mxu0 0
        %2853 = vmatprep.subr.bf16.mxu0 0
        %2854 = vmatpush1.bf16.xpose.msra.mxu0 0
        %2855 = vmatprep.subr.bf16.mxu0 0
        %2856 = vmatpush1.bf16.xpose.msra.mxu0 0
        %2857 = vmatprep.subr.bf16.mxu0 0
        %2858 = vmatpush1.bf16.xpose.msra.mxu0 0
        %2859 = vmatprep.subr.bf16.mxu0 0
        %2860 = vmatpush1.bf16.xpose.msra.mxu0 0
        %2861 = vmatprep.subr.bf16.mxu0 0
        %2862 = vmatpush1.bf16.xpose.msra.mxu0 0
        %2863 = vmatprep.subr.bf16.mxu0 0
        %2864 = vmatpush1.bf16.xpose.msra.mxu0 0
        %2865 = vmatprep.subr.bf16.mxu0 0
        %2866 = vmatpush1.bf16.xpose.msra.mxu0 0
        %2867 = vmatprep.subr.bf16.mxu0 0
        %2868 = vmatpush1.bf16.xpose.msra.mxu0 0
        %2869 = vmatprep.subr.bf16.mxu0 0
        %2870 = vmatpush1.bf16.xpose.msra.mxu0 0
        %2871 = vmatprep.mubr.bf16.mxu0 0
        %2872 = vmatmul.mubr.bf16.gmra.mrb[0].mxu0 %v2834
        %v2873 = vpop.f32.mrb[0].mxu0
        %v2874 = vadd.f32 %v2714, %v2873
        %v2875 = vpop.f32.mrb[0].mxu0
        %v2876 = vpop.f32.mrb[0].mxu0
        %v2877 = vpop.f32.mrb[0].mxu0
        %2878 = vdwg.mxu0
        %v2879 = vsel %vm768, %v2874, -inf
        %2880 = vmax.xlane.f32.xlu0 %v2879
        %v2881 = vpop.xlane.xlu0 %2880
        %v2882 = vsub.f32 %v2874, %v2881
        %v2883 = vmul.f32 %v2882, 1.442695
        %v2884 = vpow.pop %v2883
        %v2885 = vsel %vm768, %v2884, 0.0
        %2886 = vadd.xlane.f32.xlu0 %v2885
        %v2887 = vpop.xlane.xlu0 %2886
        %v2888 = vrcp.pop %v2887
        %v2889 = vmul.f32 %v2884, %v2888
        %v2890 = vpack.c.bf16 %v2889, %v2889
        %2891 = vrot.lane.b32.xlu0 %v2717, 56
        %v2892 = vpop.permute.xlu0 %2891
        %v2894 = vsel %vm768, %v2890, 0
        %v2897 = vsel %vm832, %v2892, 0
        %2899 = vmatprep.subr.bf16.mxu0 0
        %2900 = vmatpush1.bf16.msra.mxu0 %v2897
        %2901 = vmatprep.subr.bf16.mxu0 0
        %2902 = vmatpush1.bf16.msra.mxu0 0
        %2903 = vmatprep.subr.bf16.mxu0 0
        %2904 = vmatpush1.bf16.msra.mxu0 0
        %2905 = vmatprep.subr.bf16.mxu0 0
        %2906 = vmatpush1.bf16.msra.mxu0 0
        %2907 = vmatprep.subr.bf16.mxu0 0
        %2908 = vmatpush1.bf16.msra.mxu0 0
        %2909 = vmatprep.subr.bf16.mxu0 0
        %2910 = vmatpush1.bf16.msra.mxu0 0
        %2911 = vmatprep.subr.bf16.mxu0 0
        %2912 = vmatpush1.bf16.msra.mxu0 0
        %2913 = vmatprep.subr.bf16.mxu0 0
        %2914 = vmatpush1.bf16.msra.mxu0 0
        %2915 = vmatprep.subr.bf16.mxu0 0
        %2916 = vmatpush1.bf16.msra.mxu0 0
        %2917 = vmatprep.subr.bf16.mxu0 0
        %2918 = vmatpush1.bf16.msra.mxu0 0
        %2919 = vmatprep.subr.bf16.mxu0 0
        %2920 = vmatpush1.bf16.msra.mxu0 0
        %2921 = vmatprep.subr.bf16.mxu0 0
        %2922 = vmatpush1.bf16.msra.mxu0 0
        %2923 = vmatprep.subr.bf16.mxu0 0
        %2924 = vmatpush1.bf16.msra.mxu0 0
        %2925 = vmatprep.subr.bf16.mxu0 0
        %2926 = vmatpush1.bf16.msra.mxu0 0
        %2927 = vmatprep.subr.bf16.mxu0 0
        %2928 = vmatpush1.bf16.msra.mxu0 0
        %2929 = vmatprep.subr.bf16.mxu0 0
        %2930 = vmatpush1.bf16.msra.mxu0 0
        %2931 = vmatprep.mubr.bf16.mxu0 0
        %2932 = vmatmul.mubr.bf16.gmra.mrb[0].mxu0 %v2894
        %v2933 = vpop.f32.mrb[0].mxu0
        %v2934 = vadd.f32 0.0, %v2933
        %v2935 = vpop.f32.mrb[0].mxu0
        %v2936 = vpop.f32.mrb[0].mxu0
        %v2937 = vpop.f32.mrb[0].mxu0
        %2938 = vdwg.mxu0
        %v2939 = vpack.c.bf16 %v2934, %v2934
        %v2941 = vsel %vm768, %v2939, 0
        %v2944 = vsel %vm832, %v2589, 0
        %2946 = vmatprep.subr.bf16.mxu0 0
        %2947 = vmatpush1.bf16.msra.mxu0 %v2944
        %2948 = vmatprep.subr.bf16.mxu0 0
        %2949 = vmatpush1.bf16.msra.mxu0 0
        %2950 = vmatprep.subr.bf16.mxu0 0
        %2951 = vmatpush1.bf16.msra.mxu0 0
        %2952 = vmatprep.subr.bf16.mxu0 0
        %2953 = vmatpush1.bf16.msra.mxu0 0
        %2954 = vmatprep.subr.bf16.mxu0 0
        %2955 = vmatpush1.bf16.msra.mxu0 0
        %2956 = vmatprep.subr.bf16.mxu0 0
        %2957 = vmatpush1.bf16.msra.mxu0 0
        %2958 = vmatprep.subr.bf16.mxu0 0
        %2959 = vmatpush1.bf16.msra.mxu0 0
        %2960 = vmatprep.subr.bf16.mxu0 0
        %2961 = vmatpush1.bf16.msra.mxu0 0
        %2962 = vmatprep.subr.bf16.mxu0 0
        %2963 = vmatpush1.bf16.msra.mxu0 0
        %2964 = vmatprep.subr.bf16.mxu0 0
        %2965 = vmatpush1.bf16.msra.mxu0 0
        %2966 = vmatprep.subr.bf16.mxu0 0
        %2967 = vmatpush1.bf16.msra.mxu0 0
        %2968 = vmatprep.subr.bf16.mxu0 0
        %2969 = vmatpush1.bf16.msra.mxu0 0
        %2970 = vmatprep.subr.bf16.mxu0 0
        %2971 = vmatpush1.bf16.msra.mxu0 0
        %2972 = vmatprep.subr.bf16.mxu0 0
        %2973 = vmatpush1.bf16.msra.mxu0 0
        %2974 = vmatprep.subr.bf16.mxu0 0
        %2975 = vmatpush1.bf16.msra.mxu0 0
        %2976 = vmatprep.subr.bf16.mxu0 0
        %2977 = vmatpush1.bf16.msra.mxu0 0
        %2978 = vmatprep.mubr.bf16.mxu0 0
        %2979 = vmatmul.mubr.bf16.gmra.mrb[0].mxu0 %v2941
        %v2980 = vpop.f32.mrb[0].mxu0
        %v2981 = vadd.f32 0.0, %v2980
        %v2982 = vpop.f32.mrb[0].mxu0
        %v2983 = vpop.f32.mrb[0].mxu0
        %v2984 = vpop.f32.mrb[0].mxu0
        %2985 = vdwg.mxu0
        %v2987 = vsel %vm768, %v2827, 0
        %v2990 = vsel %vm832, %v2588, 0
        %2992 = vmatprep.subr.bf16.mxu0 0
        %2993 = vmatpush1.bf16.msra.mxu0 %v2990
        %2994 = vmatprep.subr.bf16.mxu0 0
        %2995 = vmatpush1.bf16.msra.mxu0 0
        %2996 = vmatprep.subr.bf16.mxu0 0
        %2997 = vmatpush1.bf16.msra.mxu0 0
        %2998 = vmatprep.subr.bf16.mxu0 0
        %2999 = vmatpush1.bf16.msra.mxu0 0
        %3000 = vmatprep.subr.bf16.mxu0 0
        %3001 = vmatpush1.bf16.msra.mxu0 0
        %3002 = vmatprep.subr.bf16.mxu0 0
        %3003 = vmatpush1.bf16.msra.mxu0 0
        %3004 = vmatprep.subr.bf16.mxu0 0
        %3005 = vmatpush1.bf16.msra.mxu0 0
        %3006 = vmatprep.subr.bf16.mxu0 0
        %3007 = vmatpush1.bf16.msra.mxu0 0
        %3008 = vmatprep.subr.bf16.mxu0 0
        %3009 = vmatpush1.bf16.msra.mxu0 0
        %3010 = vmatprep.subr.bf16.mxu0 0
        %3011 = vmatpush1.bf16.msra.mxu0 0
        %3012 = vmatprep.subr.bf16.mxu0 0
        %3013 = vmatpush1.bf16.msra.mxu0 0
        %3014 = vmatprep.subr.bf16.mxu0 0
        %3015 = vmatpush1.bf16.msra.mxu0 0
        %3016 = vmatprep.subr.bf16.mxu0 0
        %3017 = vmatpush1.bf16.msra.mxu0 0
        %3018 = vmatprep.subr.bf16.mxu0 0
        %3019 = vmatpush1.bf16.msra.mxu0 0
        %3020 = vmatprep.subr.bf16.mxu0 0
        %3021 = vmatpush1.bf16.msra.mxu0 0
        %3022 = vmatprep.subr.bf16.mxu0 0
        %3023 = vmatpush1.bf16.msra.mxu0 0
        %3024 = vmatprep.mubr.bf16.mxu0 0
        %3025 = vmatmul.mubr.bf16.gmra.mrb[0].mxu0 %v2987
        %v3026 = vpop.f32.mrb[0].mxu0
        %v3027 = vadd.f32 %v2981, %v3026
        %v3028 = vpop.f32.mrb[0].mxu0
        %v3029 = vpop.f32.mrb[0].mxu0
        %v3030 = vpop.f32.mrb[0].mxu0
        %3031 = vdwg.mxu0
        %3032 = vrot.lane.b32.xlu0 %v2716, 112
        %v3033 = vpop.permute.xlu0 %3032
        %3034 = vrot.lane.b32.xlu0 %v2717, 80
        %v3035 = vpop.permute.xlu0 %3034
        %v3037 = vsel %vm768, %v3033, 0
        %v3040 = vsel %vm768, %v3035, 0
        %3042 = vmatprep.subr.bf16.mxu0 0
        %3043 = vmatpush1.bf16.xpose.msra.mxu0 %v3040
        %3044 = vmatprep.subr.bf16.mxu0 0
        %3045 = vmatpush1.bf16.xpose.msra.mxu0 0
        %3046 = vmatprep.subr.bf16.mxu0 0
        %3047 = vmatpush1.bf16.xpose.msra.mxu0 0
        %3048 = vmatprep.subr.bf16.mxu0 0
        %3049 = vmatpush1.bf16.xpose.msra.mxu0 0
        %3050 = vmatprep.subr.bf16.mxu0 0
        %3051 = vmatpush1.bf16.xpose.msra.mxu0 0
        %3052 = vmatprep.subr.bf16.mxu0 0
        %3053 = vmatpush1.bf16.xpose.msra.mxu0 0
        %3054 = vmatprep.subr.bf16.mxu0 0
        %3055 = vmatpush1.bf16.xpose.msra.mxu0 0
        %3056 = vmatprep.subr.bf16.mxu0 0
        %3057 = vmatpush1.bf16.xpose.msra.mxu0 0
        %3058 = vmatprep.subr.bf16.mxu0 0
        %3059 = vmatpush1.bf16.xpose.msra.mxu0 0
        %3060 = vmatprep.subr.bf16.mxu0 0
        %3061 = vmatpush1.bf16.xpose.msra.mxu0 0
        %3062 = vmatprep.subr.bf16.mxu0 0
        %3063 = vmatpush1.bf16.xpose.msra.mxu0 0
        %3064 = vmatprep.subr.bf16.mxu0 0
        %3065 = vmatpush1.bf16.xpose.msra.mxu0 0
        %3066 = vmatprep.subr.bf16.mxu0 0
        %3067 = vmatpush1.bf16.xpose.msra.mxu0 0
        %3068 = vmatprep.subr.bf16.mxu0 0
        %3069 = vmatpush1.bf16.xpose.msra.mxu0 0
        %3070 = vmatprep.subr.bf16.mxu0 0
        %3071 = vmatpush1.bf16.xpose.msra.mxu0 0
        %3072 = vmatprep.subr.bf16.mxu0 0
        %3073 = vmatpush1.bf16.xpose.msra.mxu0 0
        %3074 = vmatprep.mubr.bf16.mxu0 0
        %3075 = vmatmul.mubr.bf16.gmra.mrb[0].mxu0 %v3037
        %v3076 = vpop.f32.mrb[0].mxu0
        %v3077 = vadd.f32 %v2714, %v3076
        %v3078 = vpop.f32.mrb[0].mxu0
        %v3079 = vpop.f32.mrb[0].mxu0
        %v3080 = vpop.f32.mrb[0].mxu0
        %3081 = vdwg.mxu0
        %v3082 = vsel %vm768, %v3077, -inf
        %3083 = vmax.xlane.f32.xlu0 %v3082
        %v3084 = vpop.xlane.xlu0 %3083
        %v3085 = vsub.f32 %v3077, %v3084
        %v3086 = vmul.f32 %v3085, 1.442695
        %v3087 = vpow.pop %v3086
        %v3088 = vsel %vm768, %v3087, 0.0
        %3089 = vadd.xlane.f32.xlu0 %v3088
        %v3090 = vpop.xlane.xlu0 %3089
        %v3091 = vrcp.pop %v3090
        %v3092 = vmul.f32 %v3087, %v3091
        %v3093 = vpack.c.bf16 %v3092, %v3092
        %3094 = vrot.lane.b32.xlu0 %v2717, 48
        %v3095 = vpop.permute.xlu0 %3094
        %v3097 = vsel %vm768, %v3093, 0
        %v3100 = vsel %vm832, %v3095, 0
        %3102 = vmatprep.subr.bf16.mxu0 0
        %3103 = vmatpush1.bf16.msra.mxu0 %v3100
        %3104 = vmatprep.subr.bf16.mxu0 0
        %3105 = vmatpush1.bf16.msra.mxu0 0
        %3106 = vmatprep.subr.bf16.mxu0 0
        %3107 = vmatpush1.bf16.msra.mxu0 0
        %3108 = vmatprep.subr.bf16.mxu0 0
        %3109 = vmatpush1.bf16.msra.mxu0 0
        %3110 = vmatprep.subr.bf16.mxu0 0
        %3111 = vmatpush1.bf16.msra.mxu0 0
        %3112 = vmatprep.subr.bf16.mxu0 0
        %3113 = vmatpush1.bf16.msra.mxu0 0
        %3114 = vmatprep.subr.bf16.mxu0 0
        %3115 = vmatpush1.bf16.msra.mxu0 0
        %3116 = vmatprep.subr.bf16.mxu0 0
        %3117 = vmatpush1.bf16.msra.mxu0 0
        %3118 = vmatprep.subr.bf16.mxu0 0
        %3119 = vmatpush1.bf16.msra.mxu0 0
        %3120 = vmatprep.subr.bf16.mxu0 0
        %3121 = vmatpush1.bf16.msra.mxu0 0
        %3122 = vmatprep.subr.bf16.mxu0 0
        %3123 = vmatpush1.bf16.msra.mxu0 0
        %3124 = vmatprep.subr.bf16.mxu0 0
        %3125 = vmatpush1.bf16.msra.mxu0 0
        %3126 = vmatprep.subr.bf16.mxu0 0
        %3127 = vmatpush1.bf16.msra.mxu0 0
        %3128 = vmatprep.subr.bf16.mxu0 0
        %3129 = vmatpush1.bf16.msra.mxu0 0
        %3130 = vmatprep.subr.bf16.mxu0 0
        %3131 = vmatpush1.bf16.msra.mxu0 0
        %3132 = vmatprep.subr.bf16.mxu0 0
        %3133 = vmatpush1.bf16.msra.mxu0 0
        %3134 = vmatprep.mubr.bf16.mxu0 0
        %3135 = vmatmul.mubr.bf16.gmra.mrb[0].mxu0 %v3097
        %v3136 = vpop.f32.mrb[0].mxu0
        %v3137 = vadd.f32 0.0, %v3136
        %v3138 = vpop.f32.mrb[0].mxu0
        %v3139 = vpop.f32.mrb[0].mxu0
        %v3140 = vpop.f32.mrb[0].mxu0
        %3141 = vdwg.mxu0
        %v3142 = vpack.c.bf16 %v3137, %v3137
        %v3144 = vsel %vm768, %v3142, 0
        %v3147 = vsel %vm832, %v2590, 0
        %3149 = vmatprep.subr.bf16.mxu0 0
        %3150 = vmatpush1.bf16.msra.mxu0 %v3147
        %3151 = vmatprep.subr.bf16.mxu0 0
        %3152 = vmatpush1.bf16.msra.mxu0 0
        %3153 = vmatprep.subr.bf16.mxu0 0
        %3154 = vmatpush1.bf16.msra.mxu0 0
        %3155 = vmatprep.subr.bf16.mxu0 0
        %3156 = vmatpush1.bf16.msra.mxu0 0
        %3157 = vmatprep.subr.bf16.mxu0 0
        %3158 = vmatpush1.bf16.msra.mxu0 0
        %3159 = vmatprep.subr.bf16.mxu0 0
        %3160 = vmatpush1.bf16.msra.mxu0 0
        %3161 = vmatprep.subr.bf16.mxu0 0
        %3162 = vmatpush1.bf16.msra.mxu0 0
        %3163 = vmatprep.subr.bf16.mxu0 0
        %3164 = vmatpush1.bf16.msra.mxu0 0
        %3165 = vmatprep.subr.bf16.mxu0 0
        %3166 = vmatpush1.bf16.msra.mxu0 0
        %3167 = vmatprep.subr.bf16.mxu0 0
        %3168 = vmatpush1.bf16.msra.mxu0 0
        %3169 = vmatprep.subr.bf16.mxu0 0
        %3170 = vmatpush1.bf16.msra.mxu0 0
        %3171 = vmatprep.subr.bf16.mxu0 0
        %3172 = vmatpush1.bf16.msra.mxu0 0
        %3173 = vmatprep.subr.bf16.mxu0 0
        %3174 = vmatpush1.bf16.msra.mxu0 0
        %3175 = vmatprep.subr.bf16.mxu0 0
        %3176 = vmatpush1.bf16.msra.mxu0 0
        %3177 = vmatprep.subr.bf16.mxu0 0
        %3178 = vmatpush1.bf16.msra.mxu0 0
        %3179 = vmatprep.subr.bf16.mxu0 0
        %3180 = vmatpush1.bf16.msra.mxu0 0
        %3181 = vmatprep.mubr.bf16.mxu0 0
        %3182 = vmatmul.mubr.bf16.gmra.mrb[0].mxu0 %v3144
        %v3183 = vpop.f32.mrb[0].mxu0
        %v3184 = vadd.f32 0.0, %v3183
        %v3185 = vpop.f32.mrb[0].mxu0
        %v3186 = vpop.f32.mrb[0].mxu0
        %v3187 = vpop.f32.mrb[0].mxu0
        %3188 = vdwg.mxu0
        %v3189 = vadd.f32 %v3027, %v3184
        %3190 = vrot.lane.b32.xlu0 %v2716, 104
        %v3191 = vpop.permute.xlu0 %3190
        %3192 = vrot.lane.b32.xlu0 %v2717, 72
        %v3193 = vpop.permute.xlu0 %3192
        %v3195 = vsel %vm768, %v3191, 0
        %v3198 = vsel %vm768, %v3193, 0
        %3200 = vmatprep.subr.bf16.mxu0 0
        %3201 = vmatpush1.bf16.xpose.msra.mxu0 %v3198
        %3202 = vmatprep.subr.bf16.mxu0 0
        %3203 = vmatpush1.bf16.xpose.msra.mxu0 0
        %3204 = vmatprep.subr.bf16.mxu0 0
        %3205 = vmatpush1.bf16.xpose.msra.mxu0 0
        %3206 = vmatprep.subr.bf16.mxu0 0
        %3207 = vmatpush1.bf16.xpose.msra.mxu0 0
        %3208 = vmatprep.subr.bf16.mxu0 0
        %3209 = vmatpush1.bf16.xpose.msra.mxu0 0
        %3210 = vmatprep.subr.bf16.mxu0 0
        %3211 = vmatpush1.bf16.xpose.msra.mxu0 0
        %3212 = vmatprep.subr.bf16.mxu0 0
        %3213 = vmatpush1.bf16.xpose.msra.mxu0 0
        %3214 = vmatprep.subr.bf16.mxu0 0
        %3215 = vmatpush1.bf16.xpose.msra.mxu0 0
        %3216 = vmatprep.subr.bf16.mxu0 0
        %3217 = vmatpush1.bf16.xpose.msra.mxu0 0
        %3218 = vmatprep.subr.bf16.mxu0 0
        %3219 = vmatpush1.bf16.xpose.msra.mxu0 0
        %3220 = vmatprep.subr.bf16.mxu0 0
        %3221 = vmatpush1.bf16.xpose.msra.mxu0 0
        %3222 = vmatprep.subr.bf16.mxu0 0
        %3223 = vmatpush1.bf16.xpose.msra.mxu0 0
        %3224 = vmatprep.subr.bf16.mxu0 0
        %3225 = vmatpush1.bf16.xpose.msra.mxu0 0
        %3226 = vmatprep.subr.bf16.mxu0 0
        %3227 = vmatpush1.bf16.xpose.msra.mxu0 0
        %3228 = vmatprep.subr.bf16.mxu0 0
        %3229 = vmatpush1.bf16.xpose.msra.mxu0 0
        %3230 = vmatprep.subr.bf16.mxu0 0
        %3231 = vmatpush1.bf16.xpose.msra.mxu0 0
        %3232 = vmatprep.mubr.bf16.mxu0 0
        %3233 = vmatmul.mubr.bf16.gmra.mrb[0].mxu0 %v3195
        %v3234 = vpop.f32.mrb[0].mxu0
        %v3235 = vadd.f32 %v2714, %v3234
        %v3236 = vpop.f32.mrb[0].mxu0
        %v3237 = vpop.f32.mrb[0].mxu0
        %v3238 = vpop.f32.mrb[0].mxu0
        %3239 = vdwg.mxu0
        %v3240 = vsel %vm768, %v3235, -inf
        %3241 = vmax.xlane.f32.xlu0 %v3240
        %v3242 = vpop.xlane.xlu0 %3241
        %v3243 = vsub.f32 %v3235, %v3242
        %v3244 = vmul.f32 %v3243, 1.442695
        %v3245 = vpow.pop %v3244
        %v3246 = vsel %vm768, %v3245, 0.0
        %3247 = vadd.xlane.f32.xlu0 %v3246
        %v3248 = vpop.xlane.xlu0 %3247
        %v3249 = vrcp.pop %v3248
        %v3250 = vmul.f32 %v3245, %v3249
        %v3251 = vpack.c.bf16 %v3250, %v3250
        %3252 = vrot.lane.b32.xlu0 %v2717, 40
        %v3253 = vpop.permute.xlu0 %3252
        %v3255 = vsel %vm768, %v3251, 0
        %v3258 = vsel %vm832, %v3253, 0
        %3260 = vmatprep.subr.bf16.mxu0 0
        %3261 = vmatpush1.bf16.msra.mxu0 %v3258
        %3262 = vmatprep.subr.bf16.mxu0 0
        %3263 = vmatpush1.bf16.msra.mxu0 0
        %3264 = vmatprep.subr.bf16.mxu0 0
        %3265 = vmatpush1.bf16.msra.mxu0 0
        %3266 = vmatprep.subr.bf16.mxu0 0
        %3267 = vmatpush1.bf16.msra.mxu0 0
        %3268 = vmatprep.subr.bf16.mxu0 0
        %3269 = vmatpush1.bf16.msra.mxu0 0
        %3270 = vmatprep.subr.bf16.mxu0 0
        %3271 = vmatpush1.bf16.msra.mxu0 0
        %3272 = vmatprep.subr.bf16.mxu0 0
        %3273 = vmatpush1.bf16.msra.mxu0 0
        %3274 = vmatprep.subr.bf16.mxu0 0
        %3275 = vmatpush1.bf16.msra.mxu0 0
        %3276 = vmatprep.subr.bf16.mxu0 0
        %3277 = vmatpush1.bf16.msra.mxu0 0
        %3278 = vmatprep.subr.bf16.mxu0 0
        %3279 = vmatpush1.bf16.msra.mxu0 0
        %3280 = vmatprep.subr.bf16.mxu0 0
        %3281 = vmatpush1.bf16.msra.mxu0 0
        %3282 = vmatprep.subr.bf16.mxu0 0
        %3283 = vmatpush1.bf16.msra.mxu0 0
        %3284 = vmatprep.subr.bf16.mxu0 0
        %3285 = vmatpush1.bf16.msra.mxu0 0
        %3286 = vmatprep.subr.bf16.mxu0 0
        %3287 = vmatpush1.bf16.msra.mxu0 0
        %3288 = vmatprep.subr.bf16.mxu0 0
        %3289 = vmatpush1.bf16.msra.mxu0 0
        %3290 = vmatprep.subr.bf16.mxu0 0
        %3291 = vmatpush1.bf16.msra.mxu0 0
        %3292 = vmatprep.mubr.bf16.mxu0 0
        %3293 = vmatmul.mubr.bf16.gmra.mrb[0].mxu0 %v3255
        %v3294 = vpop.f32.mrb[0].mxu0
        %v3295 = vadd.f32 0.0, %v3294
        %v3296 = vpop.f32.mrb[0].mxu0
        %v3297 = vpop.f32.mrb[0].mxu0
        %v3298 = vpop.f32.mrb[0].mxu0
        %3299 = vdwg.mxu0
        %v3300 = vpack.c.bf16 %v3295, %v3295
        %v3302 = vsel %vm768, %v3300, 0
        %v3305 = vsel %vm832, %v2591, 0
        %3307 = vmatprep.subr.bf16.mxu0 0
        %3308 = vmatpush1.bf16.msra.mxu0 %v3305
        %3309 = vmatprep.subr.bf16.mxu0 0
        %3310 = vmatpush1.bf16.msra.mxu0 0
        %3311 = vmatprep.subr.bf16.mxu0 0
        %3312 = vmatpush1.bf16.msra.mxu0 0
        %3313 = vmatprep.subr.bf16.mxu0 0
        %3314 = vmatpush1.bf16.msra.mxu0 0
        %3315 = vmatprep.subr.bf16.mxu0 0
        %3316 = vmatpush1.bf16.msra.mxu0 0
        %3317 = vmatprep.subr.bf16.mxu0 0
        %3318 = vmatpush1.bf16.msra.mxu0 0
        %3319 = vmatprep.subr.bf16.mxu0 0
        %3320 = vmatpush1.bf16.msra.mxu0 0
        %3321 = vmatprep.subr.bf16.mxu0 0
        %3322 = vmatpush1.bf16.msra.mxu0 0
        %3323 = vmatprep.subr.bf16.mxu0 0
        %3324 = vmatpush1.bf16.msra.mxu0 0
        %3325 = vmatprep.subr.bf16.mxu0 0
        %3326 = vmatpush1.bf16.msra.mxu0 0
        %3327 = vmatprep.subr.bf16.mxu0 0
        %3328 = vmatpush1.bf16.msra.mxu0 0
        %3329 = vmatprep.subr.bf16.mxu0 0
        %3330 = vmatpush1.bf16.msra.mxu0 0
        %3331 = vmatprep.subr.bf16.mxu0 0
        %3332 = vmatpush1.bf16.msra.mxu0 0
        %3333 = vmatprep.subr.bf16.mxu0 0
        %3334 = vmatpush1.bf16.msra.mxu0 0
        %3335 = vmatprep.subr.bf16.mxu0 0
        %3336 = vmatpush1.bf16.msra.mxu0 0
        %3337 = vmatprep.subr.bf16.mxu0 0
        %3338 = vmatpush1.bf16.msra.mxu0 0
        %3339 = vmatprep.mubr.bf16.mxu0 0
        %3340 = vmatmul.mubr.bf16.gmra.mrb[0].mxu0 %v3302
        %v3341 = vpop.f32.mrb[0].mxu0
        %v3342 = vadd.f32 0.0, %v3341
        %v3343 = vpop.f32.mrb[0].mxu0
        %v3344 = vpop.f32.mrb[0].mxu0
        %v3345 = vpop.f32.mrb[0].mxu0
        %3346 = vdwg.mxu0
        %v3347 = vadd.f32 %v3189, %v3342
        %v3348 = vadd.f32 %v2579, %v3347
        %v3349 = vlaneseq
        %v3350 = vshrl.u32 %v3349, 7
        %v3351 = vsub.s32 3, %v3350
        %v3352 = vrot.slane %v2624, %v3351
        %v3353 = vadd.f32 %v3348, %v3352
        %v3354 = vsel %vm677, %v3353, 0.0
        %3355 = vadd.xlane.f32.xlu0 %v3354
        %v3356 = vpop.xlane.xlu0 %3355
        %v3357 = vmul.f32 %v3356, %v681
        %v3358 = vsub.f32 %v3353, %v3357
        %v3359 = vmul.f32 %v3358, %v3358
        %v3360 = vsel %vm677, %v3359, 0.0
        %3361 = vadd.xlane.f32.xlu0 %v3360
        %v3362 = vpop.xlane.xlu0 %3361
        %v3363 = vmul.f32 %v3362, %v681
        %v3364 = vadd.f32 %v3363, 1e-05
        %v3365 = vrsqrt.pop %v3364
        %v3366 = vmul.f32 %v3358, %v3365
        %v3367 = vlaneseq
        %v3368 = vshrl.u32 %v3367, 7
        %v3369 = vsub.s32 4, %v3368
        %v3370 = vrot.slane %v2624, %v3369
        %v3371 = vmul.f32 %v3366, %v3370
        %v3372 = vlaneseq
        %v3373 = vshrl.u32 %v3372, 7
        %v3374 = vsub.s32 5, %v3373
        %v3375 = vrot.slane %v2624, %v3374
        %v3376 = vadd.f32 %v3371, %v3375
        %v3377 = vpack.c.bf16 %v3376, %v3376
        %v3378 = vlaneseq
        %v3379 = vshrl.u32 %v3378, 7
        %v3380 = vsub.s32 6, %v3379
        %v3381 = vrot.slane %v2624, %v3380
        %v3386 = vunpack.c.l.b16 %v2592
        %v3387 = vunpack.c.l.b16 %v2593
        %v3388 = vunpack.c.l.b16 %v2594
        %v3389 = vunpack.c.l.b16 %v2595
        %v3390 = vpack.c.b16 %v3387, %v3386
        %v3391 = vpack.c.b16 %v3389, %v3388
        %v3395 = vsel %vm677, %v3377, 0
        %3397 = vmatprep.subr.bf16.mxu0 0
        %3398 = vmatpush1.bf16.msra.mxu0 %v3390
        %3399 = vmatprep.subr.bf16.mxu0 0
        %3400 = vmatpush1.bf16.msra.mxu0 %v3391
        %3401 = vmatprep.subr.bf16.mxu0 0
        %3402 = vmatpush1.bf16.msra.mxu0 0
        %3403 = vmatprep.subr.bf16.mxu0 0
        %3404 = vmatpush1.bf16.msra.mxu0 0
        %3405 = vmatprep.subr.bf16.mxu0 0
        %3406 = vmatpush1.bf16.msra.mxu0 0
        %3407 = vmatprep.subr.bf16.mxu0 0
        %3408 = vmatpush1.bf16.msra.mxu0 0
        %3409 = vmatprep.subr.bf16.mxu0 0
        %3410 = vmatpush1.bf16.msra.mxu0 0
        %3411 = vmatprep.subr.bf16.mxu0 0
        %3412 = vmatpush1.bf16.msra.mxu0 0
        %3413 = vmatprep.subr.bf16.mxu0 0
        %3414 = vmatpush1.bf16.msra.mxu0 0
        %3415 = vmatprep.subr.bf16.mxu0 0
        %3416 = vmatpush1.bf16.msra.mxu0 0
        %3417 = vmatprep.subr.bf16.mxu0 0
        %3418 = vmatpush1.bf16.msra.mxu0 0
        %3419 = vmatprep.subr.bf16.mxu0 0
        %3420 = vmatpush1.bf16.msra.mxu0 0
        %3421 = vmatprep.subr.bf16.mxu0 0
        %3422 = vmatpush1.bf16.msra.mxu0 0
        %3423 = vmatprep.subr.bf16.mxu0 0
        %3424 = vmatpush1.bf16.msra.mxu0 0
        %3425 = vmatprep.subr.bf16.mxu0 0
        %3426 = vmatpush1.bf16.msra.mxu0 0
        %3427 = vmatprep.subr.bf16.mxu0 0
        %3428 = vmatpush1.bf16.msra.mxu0 0
        %3429 = vmatprep.mubr.bf16.mxu0 0
        %3430 = vmatmul.mubr.bf16.gmra.mrb[0].mxu0 %v3395
        %v3431 = vpop.f32.mrb[0].mxu0
        %v3432 = vadd.f32 %v3381, %v3431
        %v3433 = vpop.f32.mrb[0].mxu0
        %v3434 = vpop.f32.mrb[0].mxu0
        %v3435 = vpop.f32.mrb[0].mxu0
        %3436 = vdwg.mxu0
        %v3437 = vpack.c.bf16 %v2530, %v2530
        %v3438 = vlaneseq
        %v3439 = vshrl.u32 %v3438, 7
        %v3440 = vsub.s32 7, %v3439
        %v3441 = vrot.slane %v2624, %v3440
        %v3446 = vunpack.c.l.b16 %v2596
        %v3447 = vunpack.c.l.b16 %v2597
        %v3448 = vunpack.c.l.b16 %v2598
        %v3449 = vunpack.c.l.b16 %v2599
        %v3450 = vpack.c.b16 %v3447, %v3446
        %v3451 = vpack.c.b16 %v3449, %v3448
        %v3455 = vsel %vm677, %v3437, 0
        %3457 = vmatprep.subr.bf16.mxu0 0
        %3458 = vmatpush1.bf16.msra.mxu0 %v3450
        %3459 = vmatprep.subr.bf16.mxu0 0
        %3460 = vmatpush1.bf16.msra.mxu0 %v3451
        %3461 = vmatprep.subr.bf16.mxu0 0
        %3462 = vmatpush1.bf16.msra.mxu0 0
        %3463 = vmatprep.subr.bf16.mxu0 0
        %3464 = vmatpush1.bf16.msra.mxu0 0
        %3465 = vmatprep.subr.bf16.mxu0 0
        %3466 = vmatpush1.bf16.msra.mxu0 0
        %3467 = vmatprep.subr.bf16.mxu0 0
        %3468 = vmatpush1.bf16.msra.mxu0 0
        %3469 = vmatprep.subr.bf16.mxu0 0
        %3470 = vmatpush1.bf16.msra.mxu0 0
        %3471 = vmatprep.subr.bf16.mxu0 0
        %3472 = vmatpush1.bf16.msra.mxu0 0
        %3473 = vmatprep.subr.bf16.mxu0 0
        %3474 = vmatpush1.bf16.msra.mxu0 0
        %3475 = vmatprep.subr.bf16.mxu0 0
        %3476 = vmatpush1.bf16.msra.mxu0 0
        %3477 = vmatprep.subr.bf16.mxu0 0
        %3478 = vmatpush1.bf16.msra.mxu0 0
        %3479 = vmatprep.subr.bf16.mxu0 0
        %3480 = vmatpush1.bf16.msra.mxu0 0
        %3481 = vmatprep.subr.bf16.mxu0 0
        %3482 = vmatpush1.bf16.msra.mxu0 0
        %3483 = vmatprep.subr.bf16.mxu0 0
        %3484 = vmatpush1.bf16.msra.mxu0 0
        %3485 = vmatprep.subr.bf16.mxu0 0
        %3486 = vmatpush1.bf16.msra.mxu0 0
        %3487 = vmatprep.subr.bf16.mxu0 0
        %3488 = vmatpush1.bf16.msra.mxu0 0
        %3489 = vmatprep.mubr.bf16.mxu0 0
        %3490 = vmatmul.mubr.bf16.gmra.mrb[0].mxu0 %v3455
        %v3491 = vpop.f32.mrb[0].mxu0
        %v3492 = vadd.f32 %v3441, %v3491
        %v3493 = vpop.f32.mrb[0].mxu0
        %v3494 = vpop.f32.mrb[0].mxu0
        %v3495 = vpop.f32.mrb[0].mxu0
        %3496 = vdwg.mxu0
        %v3497 = vmul.f32 %v3432, 0.35355338
        %v3498 = vpack.c.bf16 %v3497, %v3497
        %v3499 = vpack.c.bf16 %v3492, %v3492
        %v3501 = vsel %vm768, %v3498, 0
        %v3504 = vsel %vm768, %v3499, 0
        %3506 = vmatprep.subr.bf16.mxu0 0
        %3507 = vmatpush1.bf16.xpose.msra.mxu0 %v3504
        %3508 = vmatprep.subr.bf16.mxu0 0
        %3509 = vmatpush1.bf16.xpose.msra.mxu0 0
        %3510 = vmatprep.subr.bf16.mxu0 0
        %3511 = vmatpush1.bf16.xpose.msra.mxu0 0
        %3512 = vmatprep.subr.bf16.mxu0 0
        %3513 = vmatpush1.bf16.xpose.msra.mxu0 0
        %3514 = vmatprep.subr.bf16.mxu0 0
        %3515 = vmatpush1.bf16.xpose.msra.mxu0 0
        %3516 = vmatprep.subr.bf16.mxu0 0
        %3517 = vmatpush1.bf16.xpose.msra.mxu0 0
        %3518 = vmatprep.subr.bf16.mxu0 0
        %3519 = vmatpush1.bf16.xpose.msra.mxu0 0
        %3520 = vmatprep.subr.bf16.mxu0 0
        %3521 = vmatpush1.bf16.xpose.msra.mxu0 0
        %3522 = vmatprep.subr.bf16.mxu0 0
        %3523 = vmatpush1.bf16.xpose.msra.mxu0 0
        %3524 = vmatprep.subr.bf16.mxu0 0
        %3525 = vmatpush1.bf16.xpose.msra.mxu0 0
        %3526 = vmatprep.subr.bf16.mxu0 0
        %3527 = vmatpush1.bf16.xpose.msra.mxu0 0
        %3528 = vmatprep.subr.bf16.mxu0 0
        %3529 = vmatpush1.bf16.xpose.msra.mxu0 0
        %3530 = vmatprep.subr.bf16.mxu0 0
        %3531 = vmatpush1.bf16.xpose.msra.mxu0 0
        %3532 = vmatprep.subr.bf16.mxu0 0
        %3533 = vmatpush1.bf16.xpose.msra.mxu0 0
        %3534 = vmatprep.subr.bf16.mxu0 0
        %3535 = vmatpush1.bf16.xpose.msra.mxu0 0
        %3536 = vmatprep.subr.bf16.mxu0 0
        %3537 = vmatpush1.bf16.xpose.msra.mxu0 0
        %3538 = vmatprep.mubr.bf16.mxu0 0
        %3539 = vmatmul.mubr.bf16.gmra.mrb[0].mxu0 %v3501
        %v3540 = vpop.f32.mrb[0].mxu0
        %v3541 = vadd.f32 0.0, %v3540
        %v3542 = vpop.f32.mrb[0].mxu0
        %v3543 = vpop.f32.mrb[0].mxu0
        %v3544 = vpop.f32.mrb[0].mxu0
        %3545 = vdwg.mxu0
        %v3546 = vsel %vm768, %v3541, -inf
        %3547 = vmax.xlane.f32.xlu0 %v3546
        %v3548 = vpop.xlane.xlu0 %3547
        %v3549 = vsub.f32 %v3541, %v3548
        %v3550 = vmul.f32 %v3549, 1.442695
        %v3551 = vpow.pop %v3550
        %v3552 = vsel %vm768, %v3551, 0.0
        %3553 = vadd.xlane.f32.xlu0 %v3552
        %v3554 = vpop.xlane.xlu0 %3553
        %v3555 = vrcp.pop %v3554
        %v3556 = vmul.f32 %v3551, %v3555
        %v3557 = vpack.c.bf16 %v3556, %v3556
        %3559 = vrot.lane.b32.xlu0 %v3499, 96
        %v3560 = vpop.permute.xlu0 %3559
        %v3562 = vsel %vm768, %v3557, 0
        %v3565 = vsel %vm832, %v3560, 0
        %3567 = vmatprep.subr.bf16.mxu0 0
        %3568 = vmatpush1.bf16.msra.mxu0 %v3565
        %3569 = vmatprep.subr.bf16.mxu0 0
        %3570 = vmatpush1.bf16.msra.mxu0 0
        %3571 = vmatprep.subr.bf16.mxu0 0
        %3572 = vmatpush1.bf16.msra.mxu0 0
        %3573 = vmatprep.subr.bf16.mxu0 0
        %3574 = vmatpush1.bf16.msra.mxu0 0
        %3575 = vmatprep.subr.bf16.mxu0 0
        %3576 = vmatpush1.bf16.msra.mxu0 0
        %3577 = vmatprep.subr.bf16.mxu0 0
        %3578 = vmatpush1.bf16.msra.mxu0 0
        %3579 = vmatprep.subr.bf16.mxu0 0
        %3580 = vmatpush1.bf16.msra.mxu0 0
        %3581 = vmatprep.subr.bf16.mxu0 0
        %3582 = vmatpush1.bf16.msra.mxu0 0
        %3583 = vmatprep.subr.bf16.mxu0 0
        %3584 = vmatpush1.bf16.msra.mxu0 0
        %3585 = vmatprep.subr.bf16.mxu0 0
        %3586 = vmatpush1.bf16.msra.mxu0 0
        %3587 = vmatprep.subr.bf16.mxu0 0
        %3588 = vmatpush1.bf16.msra.mxu0 0
        %3589 = vmatprep.subr.bf16.mxu0 0
        %3590 = vmatpush1.bf16.msra.mxu0 0
        %3591 = vmatprep.subr.bf16.mxu0 0
        %3592 = vmatpush1.bf16.msra.mxu0 0
        %3593 = vmatprep.subr.bf16.mxu0 0
        %3594 = vmatpush1.bf16.msra.mxu0 0
        %3595 = vmatprep.subr.bf16.mxu0 0
        %3596 = vmatpush1.bf16.msra.mxu0 0
        %3597 = vmatprep.subr.bf16.mxu0 0
        %3598 = vmatpush1.bf16.msra.mxu0 0
        %3599 = vmatprep.mubr.bf16.mxu0 0
        %3600 = vmatmul.mubr.bf16.gmra.mrb[0].mxu0 %v3562
        %v3601 = vpop.f32.mrb[0].mxu0
        %v3602 = vadd.f32 0.0, %v3601
        %v3603 = vpop.f32.mrb[0].mxu0
        %v3604 = vpop.f32.mrb[0].mxu0
        %v3605 = vpop.f32.mrb[0].mxu0
        %3606 = vdwg.mxu0
        %v3607 = vpack.c.bf16 %v3602, %v3602
        %3609 = vrot.lane.b32.xlu0 %v3498, 120
        %v3610 = vpop.permute.xlu0 %3609
        %3611 = vrot.lane.b32.xlu0 %v3499, 120
        %v3612 = vpop.permute.xlu0 %3611
        %v3614 = vsel %vm768, %v3610, 0
        %v3617 = vsel %vm768, %v3612, 0
        %3619 = vmatprep.subr.bf16.mxu0 0
        %3620 = vmatpush1.bf16.xpose.msra.mxu0 %v3617
        %3621 = vmatprep.subr.bf16.mxu0 0
        %3622 = vmatpush1.bf16.xpose.msra.mxu0 0
        %3623 = vmatprep.subr.bf16.mxu0 0
        %3624 = vmatpush1.bf16.xpose.msra.mxu0 0
        %3625 = vmatprep.subr.bf16.mxu0 0
        %3626 = vmatpush1.bf16.xpose.msra.mxu0 0
        %3627 = vmatprep.subr.bf16.mxu0 0
        %3628 = vmatpush1.bf16.xpose.msra.mxu0 0
        %3629 = vmatprep.subr.bf16.mxu0 0
        %3630 = vmatpush1.bf16.xpose.msra.mxu0 0
        %3631 = vmatprep.subr.bf16.mxu0 0
        %3632 = vmatpush1.bf16.xpose.msra.mxu0 0
        %3633 = vmatprep.subr.bf16.mxu0 0
        %3634 = vmatpush1.bf16.xpose.msra.mxu0 0
        %3635 = vmatprep.subr.bf16.mxu0 0
        %3636 = vmatpush1.bf16.xpose.msra.mxu0 0
        %3637 = vmatprep.subr.bf16.mxu0 0
        %3638 = vmatpush1.bf16.xpose.msra.mxu0 0
        %3639 = vmatprep.subr.bf16.mxu0 0
        %3640 = vmatpush1.bf16.xpose.msra.mxu0 0
        %3641 = vmatprep.subr.bf16.mxu0 0
        %3642 = vmatpush1.bf16.xpose.msra.mxu0 0
        %3643 = vmatprep.subr.bf16.mxu0 0
        %3644 = vmatpush1.bf16.xpose.msra.mxu0 0
        %3645 = vmatprep.subr.bf16.mxu0 0
        %3646 = vmatpush1.bf16.xpose.msra.mxu0 0
        %3647 = vmatprep.subr.bf16.mxu0 0
        %3648 = vmatpush1.bf16.xpose.msra.mxu0 0
        %3649 = vmatprep.subr.bf16.mxu0 0
        %3650 = vmatpush1.bf16.xpose.msra.mxu0 0
        %3651 = vmatprep.mubr.bf16.mxu0 0
        %3652 = vmatmul.mubr.bf16.gmra.mrb[0].mxu0 %v3614
        %v3653 = vpop.f32.mrb[0].mxu0
        %v3654 = vadd.f32 0.0, %v3653
        %v3655 = vpop.f32.mrb[0].mxu0
        %v3656 = vpop.f32.mrb[0].mxu0
        %v3657 = vpop.f32.mrb[0].mxu0
        %3658 = vdwg.mxu0
        %v3659 = vsel %vm768, %v3654, -inf
        %3660 = vmax.xlane.f32.xlu0 %v3659
        %v3661 = vpop.xlane.xlu0 %3660
        %v3662 = vsub.f32 %v3654, %v3661
        %v3663 = vmul.f32 %v3662, 1.442695
        %v3664 = vpow.pop %v3663
        %v3665 = vsel %vm768, %v3664, 0.0
        %3666 = vadd.xlane.f32.xlu0 %v3665
        %v3667 = vpop.xlane.xlu0 %3666
        %v3668 = vrcp.pop %v3667
        %v3669 = vmul.f32 %v3664, %v3668
        %v3670 = vpack.c.bf16 %v3669, %v3669
        %3671 = vrot.lane.b32.xlu0 %v3499, 88
        %v3672 = vpop.permute.xlu0 %3671
        %v3674 = vsel %vm768, %v3670, 0
        %v3677 = vsel %vm832, %v3672, 0
        %3679 = vmatprep.subr.bf16.mxu0 0
        %3680 = vmatpush1.bf16.msra.mxu0 %v3677
        %3681 = vmatprep.subr.bf16.mxu0 0
        %3682 = vmatpush1.bf16.msra.mxu0 0
        %3683 = vmatprep.subr.bf16.mxu0 0
        %3684 = vmatpush1.bf16.msra.mxu0 0
        %3685 = vmatprep.subr.bf16.mxu0 0
        %3686 = vmatpush1.bf16.msra.mxu0 0
        %3687 = vmatprep.subr.bf16.mxu0 0
        %3688 = vmatpush1.bf16.msra.mxu0 0
        %3689 = vmatprep.subr.bf16.mxu0 0
        %3690 = vmatpush1.bf16.msra.mxu0 0
        %3691 = vmatprep.subr.bf16.mxu0 0
        %3692 = vmatpush1.bf16.msra.mxu0 0
        %3693 = vmatprep.subr.bf16.mxu0 0
        %3694 = vmatpush1.bf16.msra.mxu0 0
        %3695 = vmatprep.subr.bf16.mxu0 0
        %3696 = vmatpush1.bf16.msra.mxu0 0
        %3697 = vmatprep.subr.bf16.mxu0 0
        %3698 = vmatpush1.bf16.msra.mxu0 0
        %3699 = vmatprep.subr.bf16.mxu0 0
        %3700 = vmatpush1.bf16.msra.mxu0 0
        %3701 = vmatprep.subr.bf16.mxu0 0
        %3702 = vmatpush1.bf16.msra.mxu0 0
        %3703 = vmatprep.subr.bf16.mxu0 0
        %3704 = vmatpush1.bf16.msra.mxu0 0
        %3705 = vmatprep.subr.bf16.mxu0 0
        %3706 = vmatpush1.bf16.msra.mxu0 0
        %3707 = vmatprep.subr.bf16.mxu0 0
        %3708 = vmatpush1.bf16.msra.mxu0 0
        %3709 = vmatprep.subr.bf16.mxu0 0
        %3710 = vmatpush1.bf16.msra.mxu0 0
        %3711 = vmatprep.mubr.bf16.mxu0 0
        %3712 = vmatmul.mubr.bf16.gmra.mrb[0].mxu0 %v3674
        %v3713 = vpop.f32.mrb[0].mxu0
        %v3714 = vadd.f32 0.0, %v3713
        %v3715 = vpop.f32.mrb[0].mxu0
        %v3716 = vpop.f32.mrb[0].mxu0
        %v3717 = vpop.f32.mrb[0].mxu0
        %3718 = vdwg.mxu0
        %v3719 = vpack.c.bf16 %v3714, %v3714
        %v3721 = vsel %vm768, %v3719, 0
        %v3724 = vsel %vm832, %v2601, 0
        %3726 = vmatprep.subr.bf16.mxu0 0
        %3727 = vmatpush1.bf16.msra.mxu0 %v3724
        %3728 = vmatprep.subr.bf16.mxu0 0
        %3729 = vmatpush1.bf16.msra.mxu0 0
        %3730 = vmatprep.subr.bf16.mxu0 0
        %3731 = vmatpush1.bf16.msra.mxu0 0
        %3732 = vmatprep.subr.bf16.mxu0 0
        %3733 = vmatpush1.bf16.msra.mxu0 0
        %3734 = vmatprep.subr.bf16.mxu0 0
        %3735 = vmatpush1.bf16.msra.mxu0 0
        %3736 = vmatprep.subr.bf16.mxu0 0
        %3737 = vmatpush1.bf16.msra.mxu0 0
        %3738 = vmatprep.subr.bf16.mxu0 0
        %3739 = vmatpush1.bf16.msra.mxu0 0
        %3740 = vmatprep.subr.bf16.mxu0 0
        %3741 = vmatpush1.bf16.msra.mxu0 0
        %3742 = vmatprep.subr.bf16.mxu0 0
        %3743 = vmatpush1.bf16.msra.mxu0 0
        %3744 = vmatprep.subr.bf16.mxu0 0
        %3745 = vmatpush1.bf16.msra.mxu0 0
        %3746 = vmatprep.subr.bf16.mxu0 0
        %3747 = vmatpush1.bf16.msra.mxu0 0
        %3748 = vmatprep.subr.bf16.mxu0 0
        %3749 = vmatpush1.bf16.msra.mxu0 0
        %3750 = vmatprep.subr.bf16.mxu0 0
        %3751 = vmatpush1.bf16.msra.mxu0 0
        %3752 = vmatprep.subr.bf16.mxu0 0
        %3753 = vmatpush1.bf16.msra.mxu0 0
        %3754 = vmatprep.subr.bf16.mxu0 0
        %3755 = vmatpush1.bf16.msra.mxu0 0
        %3756 = vmatprep.subr.bf16.mxu0 0
        %3757 = vmatpush1.bf16.msra.mxu0 0
        %3758 = vmatprep.mubr.bf16.mxu0 0
        %3759 = vmatmul.mubr.bf16.gmra.mrb[0].mxu0 %v3721
        %v3760 = vpop.f32.mrb[0].mxu0
        %v3761 = vadd.f32 0.0, %v3760
        %v3762 = vpop.f32.mrb[0].mxu0
        %v3763 = vpop.f32.mrb[0].mxu0
        %v3764 = vpop.f32.mrb[0].mxu0
        %3765 = vdwg.mxu0
        %v3767 = vsel %vm768, %v3607, 0
        %v3770 = vsel %vm832, %v2600, 0
        %3772 = vmatprep.subr.bf16.mxu0 0
        %3773 = vmatpush1.bf16.msra.mxu0 %v3770
        %3774 = vmatprep.subr.bf16.mxu0 0
        %3775 = vmatpush1.bf16.msra.mxu0 0
        %3776 = vmatprep.subr.bf16.mxu0 0
        %3777 = vmatpush1.bf16.msra.mxu0 0
        %3778 = vmatprep.subr.bf16.mxu0 0
        %3779 = vmatpush1.bf16.msra.mxu0 0
        %3780 = vmatprep.subr.bf16.mxu0 0
        %3781 = vmatpush1.bf16.msra.mxu0 0
        %3782 = vmatprep.subr.bf16.mxu0 0
        %3783 = vmatpush1.bf16.msra.mxu0 0
        %3784 = vmatprep.subr.bf16.mxu0 0
        %3785 = vmatpush1.bf16.msra.mxu0 0
        %3786 = vmatprep.subr.bf16.mxu0 0
        %3787 = vmatpush1.bf16.msra.mxu0 0
        %3788 = vmatprep.subr.bf16.mxu0 0
        %3789 = vmatpush1.bf16.msra.mxu0 0
        %3790 = vmatprep.subr.bf16.mxu0 0
        %3791 = vmatpush1.bf16.msra.mxu0 0
        %3792 = vmatprep.subr.bf16.mxu0 0
        %3793 = vmatpush1.bf16.msra.mxu0 0
        %3794 = vmatprep.subr.bf16.mxu0 0
        %3795 = vmatpush1.bf16.msra.mxu0 0
        %3796 = vmatprep.subr.bf16.mxu0 0
        %3797 = vmatpush1.bf16.msra.mxu0 0
        %3798 = vmatprep.subr.bf16.mxu0 0
        %3799 = vmatpush1.bf16.msra.mxu0 0
        %3800 = vmatprep.subr.bf16.mxu0 0
        %3801 = vmatpush1.bf16.msra.mxu0 0
        %3802 = vmatprep.subr.bf16.mxu0 0
        %3803 = vmatpush1.bf16.msra.mxu0 0
        %3804 = vmatprep.mubr.bf16.mxu0 0
        %3805 = vmatmul.mubr.bf16.gmra.mrb[0].mxu0 %v3767
        %v3806 = vpop.f32.mrb[0].mxu0
        %v3807 = vadd.f32 %v3761, %v3806
        %v3808 = vpop.f32.mrb[0].mxu0
        %v3809 = vpop.f32.mrb[0].mxu0
        %v3810 = vpop.f32.mrb[0].mxu0
        %3811 = vdwg.mxu0
        %3812 = vrot.lane.b32.xlu0 %v3498, 112
        %v3813 = vpop.permute.xlu0 %3812
        %3814 = vrot.lane.b32.xlu0 %v3499, 112
        %v3815 = vpop.permute.xlu0 %3814
        %v3817 = vsel %vm768, %v3813, 0
        %v3820 = vsel %vm768, %v3815, 0
        %3822 = vmatprep.subr.bf16.mxu0 0
        %3823 = vmatpush1.bf16.xpose.msra.mxu0 %v3820
        %3824 = vmatprep.subr.bf16.mxu0 0
        %3825 = vmatpush1.bf16.xpose.msra.mxu0 0
        %3826 = vmatprep.subr.bf16.mxu0 0
        %3827 = vmatpush1.bf16.xpose.msra.mxu0 0
        %3828 = vmatprep.subr.bf16.mxu0 0
        %3829 = vmatpush1.bf16.xpose.msra.mxu0 0
        %3830 = vmatprep.subr.bf16.mxu0 0
        %3831 = vmatpush1.bf16.xpose.msra.mxu0 0
        %3832 = vmatprep.subr.bf16.mxu0 0
        %3833 = vmatpush1.bf16.xpose.msra.mxu0 0
        %3834 = vmatprep.subr.bf16.mxu0 0
        %3835 = vmatpush1.bf16.xpose.msra.mxu0 0
        %3836 = vmatprep.subr.bf16.mxu0 0
        %3837 = vmatpush1.bf16.xpose.msra.mxu0 0
        %3838 = vmatprep.subr.bf16.mxu0 0
        %3839 = vmatpush1.bf16.xpose.msra.mxu0 0
        %3840 = vmatprep.subr.bf16.mxu0 0
        %3841 = vmatpush1.bf16.xpose.msra.mxu0 0
        %3842 = vmatprep.subr.bf16.mxu0 0
        %3843 = vmatpush1.bf16.xpose.msra.mxu0 0
        %3844 = vmatprep.subr.bf16.mxu0 0
        %3845 = vmatpush1.bf16.xpose.msra.mxu0 0
        %3846 = vmatprep.subr.bf16.mxu0 0
        %3847 = vmatpush1.bf16.xpose.msra.mxu0 0
        %3848 = vmatprep.subr.bf16.mxu0 0
        %3849 = vmatpush1.bf16.xpose.msra.mxu0 0
        %3850 = vmatprep.subr.bf16.mxu0 0
        %3851 = vmatpush1.bf16.xpose.msra.mxu0 0
        %3852 = vmatprep.subr.bf16.mxu0 0
        %3853 = vmatpush1.bf16.xpose.msra.mxu0 0
        %3854 = vmatprep.mubr.bf16.mxu0 0
        %3855 = vmatmul.mubr.bf16.gmra.mrb[0].mxu0 %v3817
        %v3856 = vpop.f32.mrb[0].mxu0
        %v3857 = vadd.f32 0.0, %v3856
        %v3858 = vpop.f32.mrb[0].mxu0
        %v3859 = vpop.f32.mrb[0].mxu0
        %v3860 = vpop.f32.mrb[0].mxu0
        %3861 = vdwg.mxu0
        %v3862 = vsel %vm768, %v3857, -inf
        %3863 = vmax.xlane.f32.xlu0 %v3862
        %v3864 = vpop.xlane.xlu0 %3863
        %v3865 = vsub.f32 %v3857, %v3864
        %v3866 = vmul.f32 %v3865, 1.442695
        %v3867 = vpow.pop %v3866
        %v3868 = vsel %vm768, %v3867, 0.0
        %3869 = vadd.xlane.f32.xlu0 %v3868
        %v3870 = vpop.xlane.xlu0 %3869
        %v3871 = vrcp.pop %v3870
        %v3872 = vmul.f32 %v3867, %v3871
        %v3873 = vpack.c.bf16 %v3872, %v3872
        %3874 = vrot.lane.b32.xlu0 %v3499, 80
        %v3875 = vpop.permute.xlu0 %3874
        %v3877 = vsel %vm768, %v3873, 0
        %v3880 = vsel %vm832, %v3875, 0
        %3882 = vmatprep.subr.bf16.mxu0 0
        %3883 = vmatpush1.bf16.msra.mxu0 %v3880
        %3884 = vmatprep.subr.bf16.mxu0 0
        %3885 = vmatpush1.bf16.msra.mxu0 0
        %3886 = vmatprep.subr.bf16.mxu0 0
        %3887 = vmatpush1.bf16.msra.mxu0 0
        %3888 = vmatprep.subr.bf16.mxu0 0
        %3889 = vmatpush1.bf16.msra.mxu0 0
        %3890 = vmatprep.subr.bf16.mxu0 0
        %3891 = vmatpush1.bf16.msra.mxu0 0
        %3892 = vmatprep.subr.bf16.mxu0 0
        %3893 = vmatpush1.bf16.msra.mxu0 0
        %3894 = vmatprep.subr.bf16.mxu0 0
        %3895 = vmatpush1.bf16.msra.mxu0 0
        %3896 = vmatprep.subr.bf16.mxu0 0
        %3897 = vmatpush1.bf16.msra.mxu0 0
        %3898 = vmatprep.subr.bf16.mxu0 0
        %3899 = vmatpush1.bf16.msra.mxu0 0
        %3900 = vmatprep.subr.bf16.mxu0 0
        %3901 = vmatpush1.bf16.msra.mxu0 0
        %3902 = vmatprep.subr.bf16.mxu0 0
        %3903 = vmatpush1.bf16.msra.mxu0 0
        %3904 = vmatprep.subr.bf16.mxu0 0
        %3905 = vmatpush1.bf16.msra.mxu0 0
        %3906 = vmatprep.subr.bf16.mxu0 0
        %3907 = vmatpush1.bf16.msra.mxu0 0
        %3908 = vmatprep.subr.bf16.mxu0 0
        %3909 = vmatpush1.bf16.msra.mxu0 0
        %3910 = vmatprep.subr.bf16.mxu0 0
        %3911 = vmatpush1.bf16.msra.mxu0 0
        %3912 = vmatprep.subr.bf16.mxu0 0
        %3913 = vmatpush1.bf16.msra.mxu0 0
        %3914 = vmatprep.mubr.bf16.mxu0 0
        %3915 = vmatmul.mubr.bf16.gmra.mrb[0].mxu0 %v3877
        %v3916 = vpop.f32.mrb[0].mxu0
        %v3917 = vadd.f32 0.0, %v3916
        %v3918 = vpop.f32.mrb[0].mxu0
        %v3919 = vpop.f32.mrb[0].mxu0
        %v3920 = vpop.f32.mrb[0].mxu0
        %3921 = vdwg.mxu0
        %v3922 = vpack.c.bf16 %v3917, %v3917
        %v3924 = vsel %vm768, %v3922, 0
        %v3927 = vsel %vm832, %v2602, 0
        %3929 = vmatprep.subr.bf16.mxu0 0
        %3930 = vmatpush1.bf16.msra.mxu0 %v3927
        %3931 = vmatprep.subr.bf16.mxu0 0
        %3932 = vmatpush1.bf16.msra.mxu0 0
        %3933 = vmatprep.subr.bf16.mxu0 0
        %3934 = vmatpush1.bf16.msra.mxu0 0
        %3935 = vmatprep.subr.bf16.mxu0 0
        %3936 = vmatpush1.bf16.msra.mxu0 0
        %3937 = vmatprep.subr.bf16.mxu0 0
        %3938 = vmatpush1.bf16.msra.mxu0 0
        %3939 = vmatprep.subr.bf16.mxu0 0
        %3940 = vmatpush1.bf16.msra.mxu0 0
        %3941 = vmatprep.subr.bf16.mxu0 0
        %3942 = vmatpush1.bf16.msra.mxu0 0
        %3943 = vmatprep.subr.bf16.mxu0 0
        %3944 = vmatpush1.bf16.msra.mxu0 0
        %3945 = vmatprep.subr.bf16.mxu0 0
        %3946 = vmatpush1.bf16.msra.mxu0 0
        %3947 = vmatprep.subr.bf16.mxu0 0
        %3948 = vmatpush1.bf16.msra.mxu0 0
        %3949 = vmatprep.subr.bf16.mxu0 0
        %3950 = vmatpush1.bf16.msra.mxu0 0
        %3951 = vmatprep.subr.bf16.mxu0 0
        %3952 = vmatpush1.bf16.msra.mxu0 0
        %3953 = vmatprep.subr.bf16.mxu0 0
        %3954 = vmatpush1.bf16.msra.mxu0 0
        %3955 = vmatprep.subr.bf16.mxu0 0
        %3956 = vmatpush1.bf16.msra.mxu0 0
        %3957 = vmatprep.subr.bf16.mxu0 0
        %3958 = vmatpush1.bf16.msra.mxu0 0
        %3959 = vmatprep.subr.bf16.mxu0 0
        %3960 = vmatpush1.bf16.msra.mxu0 0
        %3961 = vmatprep.mubr.bf16.mxu0 0
        %3962 = vmatmul.mubr.bf16.gmra.mrb[0].mxu0 %v3924
        %v3963 = vpop.f32.mrb[0].mxu0
        %v3964 = vadd.f32 0.0, %v3963
        %v3965 = vpop.f32.mrb[0].mxu0
        %v3966 = vpop.f32.mrb[0].mxu0
        %v3967 = vpop.f32.mrb[0].mxu0
        %3968 = vdwg.mxu0
        %v3969 = vadd.f32 %v3807, %v3964
        %3970 = vrot.lane.b32.xlu0 %v3498, 104
        %v3971 = vpop.permute.xlu0 %3970
        %3972 = vrot.lane.b32.xlu0 %v3499, 104
        %v3973 = vpop.permute.xlu0 %3972
        %v3975 = vsel %vm768, %v3971, 0
        %v3978 = vsel %vm768, %v3973, 0
        %3980 = vmatprep.subr.bf16.mxu0 0
        %3981 = vmatpush1.bf16.xpose.msra.mxu0 %v3978
        %3982 = vmatprep.subr.bf16.mxu0 0
        %3983 = vmatpush1.bf16.xpose.msra.mxu0 0
        %3984 = vmatprep.subr.bf16.mxu0 0
        %3985 = vmatpush1.bf16.xpose.msra.mxu0 0
        %3986 = vmatprep.subr.bf16.mxu0 0
        %3987 = vmatpush1.bf16.xpose.msra.mxu0 0
        %3988 = vmatprep.subr.bf16.mxu0 0
        %3989 = vmatpush1.bf16.xpose.msra.mxu0 0
        %3990 = vmatprep.subr.bf16.mxu0 0
        %3991 = vmatpush1.bf16.xpose.msra.mxu0 0
        %3992 = vmatprep.subr.bf16.mxu0 0
        %3993 = vmatpush1.bf16.xpose.msra.mxu0 0
        %3994 = vmatprep.subr.bf16.mxu0 0
        %3995 = vmatpush1.bf16.xpose.msra.mxu0 0
        %3996 = vmatprep.subr.bf16.mxu0 0
        %3997 = vmatpush1.bf16.xpose.msra.mxu0 0
        %3998 = vmatprep.subr.bf16.mxu0 0
        %3999 = vmatpush1.bf16.xpose.msra.mxu0 0
        %4000 = vmatprep.subr.bf16.mxu0 0
        %4001 = vmatpush1.bf16.xpose.msra.mxu0 0
        %4002 = vmatprep.subr.bf16.mxu0 0
        %4003 = vmatpush1.bf16.xpose.msra.mxu0 0
        %4004 = vmatprep.subr.bf16.mxu0 0
        %4005 = vmatpush1.bf16.xpose.msra.mxu0 0
        %4006 = vmatprep.subr.bf16.mxu0 0
        %4007 = vmatpush1.bf16.xpose.msra.mxu0 0
        %4008 = vmatprep.subr.bf16.mxu0 0
        %4009 = vmatpush1.bf16.xpose.msra.mxu0 0
        %4010 = vmatprep.subr.bf16.mxu0 0
        %4011 = vmatpush1.bf16.xpose.msra.mxu0 0
        %4012 = vmatprep.mubr.bf16.mxu0 0
        %4013 = vmatmul.mubr.bf16.gmra.mrb[0].mxu0 %v3975
        %v4014 = vpop.f32.mrb[0].mxu0
        %v4015 = vadd.f32 0.0, %v4014
        %v4016 = vpop.f32.mrb[0].mxu0
        %v4017 = vpop.f32.mrb[0].mxu0
        %v4018 = vpop.f32.mrb[0].mxu0
        %4019 = vdwg.mxu0
        %v4020 = vsel %vm768, %v4015, -inf
        %4021 = vmax.xlane.f32.xlu0 %v4020
        %v4022 = vpop.xlane.xlu0 %4021
        %v4023 = vsub.f32 %v4015, %v4022
        %v4024 = vmul.f32 %v4023, 1.442695
        %v4025 = vpow.pop %v4024
        %v4026 = vsel %vm768, %v4025, 0.0
        %4027 = vadd.xlane.f32.xlu0 %v4026
        %v4028 = vpop.xlane.xlu0 %4027
        %v4029 = vrcp.pop %v4028
        %v4030 = vmul.f32 %v4025, %v4029
        %v4031 = vpack.c.bf16 %v4030, %v4030
        %4032 = vrot.lane.b32.xlu0 %v3499, 72
        %v4033 = vpop.permute.xlu0 %4032
        %v4035 = vsel %vm768, %v4031, 0
        %v4038 = vsel %vm832, %v4033, 0
        %4040 = vmatprep.subr.bf16.mxu0 0
        %4041 = vmatpush1.bf16.msra.mxu0 %v4038
        %4042 = vmatprep.subr.bf16.mxu0 0
        %4043 = vmatpush1.bf16.msra.mxu0 0
        %4044 = vmatprep.subr.bf16.mxu0 0
        %4045 = vmatpush1.bf16.msra.mxu0 0
        %4046 = vmatprep.subr.bf16.mxu0 0
        %4047 = vmatpush1.bf16.msra.mxu0 0
        %4048 = vmatprep.subr.bf16.mxu0 0
        %4049 = vmatpush1.bf16.msra.mxu0 0
        %4050 = vmatprep.subr.bf16.mxu0 0
        %4051 = vmatpush1.bf16.msra.mxu0 0
        %4052 = vmatprep.subr.bf16.mxu0 0
        %4053 = vmatpush1.bf16.msra.mxu0 0
        %4054 = vmatprep.subr.bf16.mxu0 0
        %4055 = vmatpush1.bf16.msra.mxu0 0
        %4056 = vmatprep.subr.bf16.mxu0 0
        %4057 = vmatpush1.bf16.msra.mxu0 0
        %4058 = vmatprep.subr.bf16.mxu0 0
        %4059 = vmatpush1.bf16.msra.mxu0 0
        %4060 = vmatprep.subr.bf16.mxu0 0
        %4061 = vmatpush1.bf16.msra.mxu0 0
        %4062 = vmatprep.subr.bf16.mxu0 0
        %4063 = vmatpush1.bf16.msra.mxu0 0
        %4064 = vmatprep.subr.bf16.mxu0 0
        %4065 = vmatpush1.bf16.msra.mxu0 0
        %4066 = vmatprep.subr.bf16.mxu0 0
        %4067 = vmatpush1.bf16.msra.mxu0 0
        %4068 = vmatprep.subr.bf16.mxu0 0
        %4069 = vmatpush1.bf16.msra.mxu0 0
        %4070 = vmatprep.subr.bf16.mxu0 0
        %4071 = vmatpush1.bf16.msra.mxu0 0
        %4072 = vmatprep.mubr.bf16.mxu0 0
        %4073 = vmatmul.mubr.bf16.gmra.mrb[0].mxu0 %v4035
        %v4074 = vpop.f32.mrb[0].mxu0
        %v4075 = vadd.f32 0.0, %v4074
        %v4076 = vpop.f32.mrb[0].mxu0
        %v4077 = vpop.f32.mrb[0].mxu0
        %v4078 = vpop.f32.mrb[0].mxu0
        %4079 = vdwg.mxu0
        %v4080 = vpack.c.bf16 %v4075, %v4075
        %v4082 = vsel %vm768, %v4080, 0
        %v4085 = vsel %vm832, %v2603, 0
        %4087 = vmatprep.subr.bf16.mxu0 0
        %4088 = vmatpush1.bf16.msra.mxu0 %v4085
        %4089 = vmatprep.subr.bf16.mxu0 0
        %4090 = vmatpush1.bf16.msra.mxu0 0
        %4091 = vmatprep.subr.bf16.mxu0 0
        %4092 = vmatpush1.bf16.msra.mxu0 0
        %4093 = vmatprep.subr.bf16.mxu0 0
        %4094 = vmatpush1.bf16.msra.mxu0 0
        %4095 = vmatprep.subr.bf16.mxu0 0
        %4096 = vmatpush1.bf16.msra.mxu0 0
        %4097 = vmatprep.subr.bf16.mxu0 0
        %4098 = vmatpush1.bf16.msra.mxu0 0
        %4099 = vmatprep.subr.bf16.mxu0 0
        %4100 = vmatpush1.bf16.msra.mxu0 0
        %4101 = vmatprep.subr.bf16.mxu0 0
        %4102 = vmatpush1.bf16.msra.mxu0 0
        %4103 = vmatprep.subr.bf16.mxu0 0
        %4104 = vmatpush1.bf16.msra.mxu0 0
        %4105 = vmatprep.subr.bf16.mxu0 0
        %4106 = vmatpush1.bf16.msra.mxu0 0
        %4107 = vmatprep.subr.bf16.mxu0 0
        %4108 = vmatpush1.bf16.msra.mxu0 0
        %4109 = vmatprep.subr.bf16.mxu0 0
        %4110 = vmatpush1.bf16.msra.mxu0 0
        %4111 = vmatprep.subr.bf16.mxu0 0
        %4112 = vmatpush1.bf16.msra.mxu0 0
        %4113 = vmatprep.subr.bf16.mxu0 0
        %4114 = vmatpush1.bf16.msra.mxu0 0
        %4115 = vmatprep.subr.bf16.mxu0 0
        %4116 = vmatpush1.bf16.msra.mxu0 0
        %4117 = vmatprep.subr.bf16.mxu0 0
        %4118 = vmatpush1.bf16.msra.mxu0 0
        %4119 = vmatprep.mubr.bf16.mxu0 0
        %4120 = vmatmul.mubr.bf16.gmra.mrb[0].mxu0 %v4082
        %v4121 = vpop.f32.mrb[0].mxu0
        %v4122 = vadd.f32 0.0, %v4121
        %v4123 = vpop.f32.mrb[0].mxu0
        %v4124 = vpop.f32.mrb[0].mxu0
        %v4125 = vpop.f32.mrb[0].mxu0
        %4126 = vdwg.mxu0
        %v4127 = vadd.f32 %v3969, %v4122
        %v4128 = vadd.f32 %v3353, %v4127
        %v4129 = vlaneseq
        %v4130 = vshrl.u32 %v4129, 7
        %v4131 = vsub.s32 0, %v4130
        %v4132 = vrot.slane %v2625, %v4131
        %v4133 = vadd.f32 %v4128, %v4132
        %v4134 = vsel %vm677, %v4133, 0.0
        %4135 = vadd.xlane.f32.xlu0 %v4134
        %v4136 = vpop.xlane.xlu0 %4135
        %v4137 = vmul.f32 %v4136, %v681
        %v4138 = vsub.f32 %v4133, %v4137
        %v4139 = vmul.f32 %v4138, %v4138
        %v4140 = vsel %vm677, %v4139, 0.0
        %4141 = vadd.xlane.f32.xlu0 %v4140
        %v4142 = vpop.xlane.xlu0 %4141
        %v4143 = vmul.f32 %v4142, %v681
        %v4144 = vadd.f32 %v4143, 1e-05
        %v4145 = vrsqrt.pop %v4144
        %v4146 = vmul.f32 %v4138, %v4145
        %v4147 = vlaneseq
        %v4148 = vshrl.u32 %v4147, 7
        %v4149 = vsub.s32 1, %v4148
        %v4150 = vrot.slane %v2625, %v4149
        %v4151 = vmul.f32 %v4146, %v4150
        %v4152 = vlaneseq
        %v4153 = vshrl.u32 %v4152, 7
        %v4154 = vsub.s32 2, %v4153
        %v4155 = vrot.slane %v2625, %v4154
        %v4156 = vadd.f32 %v4151, %v4155
        %v4157 = vpack.c.bf16 %v4156, %v4156
        %v4158 = vlaneseq
        %v4159 = vshrl.u32 %v4158, 7
        %v4160 = vsub.s32 3, %v4159
        %v4161 = vrot.slane %v2625, %v4160
        %v4166 = vunpack.c.l.b16 %v2604
        %v4167 = vunpack.c.l.b16 %v2605
        %v4168 = vunpack.c.l.b16 %v2606
        %v4169 = vunpack.c.l.b16 %v2607
        %v4170 = vpack.c.b16 %v4167, %v4166
        %v4171 = vpack.c.b16 %v4169, %v4168
        %v4175 = vsel %vm677, %v4157, 0
        %4177 = vmatprep.subr.bf16.mxu0 0
        %4178 = vmatpush1.bf16.msra.mxu0 %v4170
        %4179 = vmatprep.subr.bf16.mxu0 0
        %4180 = vmatpush1.bf16.msra.mxu0 %v4171
        %4181 = vmatprep.subr.bf16.mxu0 0
        %4182 = vmatpush1.bf16.msra.mxu0 0
        %4183 = vmatprep.subr.bf16.mxu0 0
        %4184 = vmatpush1.bf16.msra.mxu0 0
        %4185 = vmatprep.subr.bf16.mxu0 0
        %4186 = vmatpush1.bf16.msra.mxu0 0
        %4187 = vmatprep.subr.bf16.mxu0 0
        %4188 = vmatpush1.bf16.msra.mxu0 0
        %4189 = vmatprep.subr.bf16.mxu0 0
        %4190 = vmatpush1.bf16.msra.mxu0 0
        %4191 = vmatprep.subr.bf16.mxu0 0
        %4192 = vmatpush1.bf16.msra.mxu0 0
        %4193 = vmatprep.subr.bf16.mxu0 0
        %4194 = vmatpush1.bf16.msra.mxu0 0
        %4195 = vmatprep.subr.bf16.mxu0 0
        %4196 = vmatpush1.bf16.msra.mxu0 0
        %4197 = vmatprep.subr.bf16.mxu0 0
        %4198 = vmatpush1.bf16.msra.mxu0 0
        %4199 = vmatprep.subr.bf16.mxu0 0
        %4200 = vmatpush1.bf16.msra.mxu0 0
        %4201 = vmatprep.subr.bf16.mxu0 0
        %4202 = vmatpush1.bf16.msra.mxu0 0
        %4203 = vmatprep.subr.bf16.mxu0 0
        %4204 = vmatpush1.bf16.msra.mxu0 0
        %4205 = vmatprep.subr.bf16.mxu0 0
        %4206 = vmatpush1.bf16.msra.mxu0 0
        %4207 = vmatprep.subr.bf16.mxu0 0
        %4208 = vmatpush1.bf16.msra.mxu0 0
        %4209 = vmatprep.mubr.bf16.mxu0 0
        %4210 = vmatmul.mubr.bf16.gmra.mrb[0].mxu0 %v4175
        %v4211 = vpop.f32.mrb[0].mxu0
        %v4212 = vadd.f32 %v4161, %v4211
        %v4213 = vpop.f32.mrb[0].mxu0
        %v4214 = vpop.f32.mrb[0].mxu0
        %v4215 = vpop.f32.mrb[0].mxu0
        %4216 = vdwg.mxu0
        %v4217 = vmul.f32 %v4212, 0.5
        %v4218 = vmul.f32 %v4212, 0.044715
        %v4219 = vmul.f32 %v4218, %v4212
        %v4220 = vmul.f32 %v4219, %v4212
        %v4221 = vadd.f32 %v4212, %v4220
        %v4222 = vmul.f32 %v4221, 0.7978846
        %v4223 = vtanh.pop %v4222
        %v4224 = vadd.f32 %v4223, 1.0
        %v4225 = vmul.f32 %v4217, %v4224
        %v4226 = vpack.c.bf16 %v4225, %v4225
        %v4227 = vlaneseq
        %v4228 = vshrl.u32 %v4227, 7
        %v4229 = vsub.s32 4, %v4228
        %v4230 = vrot.slane %v2625, %v4229
        %v4247 = vunpack.c.l.b16 %v2608
        %v4248 = vunpack.c.l.b16 %v2609
        %v4249 = vunpack.c.l.b16 %v2610
        %v4250 = vunpack.c.l.b16 %v2611
        %v4251 = vunpack.c.l.b16 %v2612
        %v4252 = vunpack.c.l.b16 %v2613
        %v4253 = vunpack.c.l.b16 %v2614
        %v4254 = vunpack.c.l.b16 %v2615
        %v4255 = vunpack.c.l.b16 %v2616
        %v4256 = vunpack.c.l.b16 %v2617
        %v4257 = vunpack.c.l.b16 %v2618
        %v4258 = vunpack.c.l.b16 %v2619
        %v4259 = vunpack.c.l.b16 %v2620
        %v4260 = vunpack.c.l.b16 %v2621
        %v4261 = vunpack.c.l.b16 %v2622
        %v4262 = vunpack.c.l.b16 %v2623
        %v4263 = vpack.c.b16 %v4248, %v4247
        %v4264 = vpack.c.b16 %v4250, %v4249
        %v4265 = vpack.c.b16 %v4252, %v4251
        %v4266 = vpack.c.b16 %v4254, %v4253
        %v4267 = vpack.c.b16 %v4256, %v4255
        %v4268 = vpack.c.b16 %v4258, %v4257
        %v4269 = vpack.c.b16 %v4260, %v4259
        %v4270 = vpack.c.b16 %v4262, %v4261
        %4279 = vmatprep.subr.bf16.mxu0 0
        %4280 = vmatpush1.bf16.msra.mxu0 %v4263
        %4281 = vmatprep.subr.bf16.mxu0 0
        %4282 = vmatpush1.bf16.msra.mxu0 %v4264
        %4283 = vmatprep.subr.bf16.mxu0 0
        %4284 = vmatpush1.bf16.msra.mxu0 %v4265
        %4285 = vmatprep.subr.bf16.mxu0 0
        %4286 = vmatpush1.bf16.msra.mxu0 %v4266
        %4287 = vmatprep.subr.bf16.mxu0 0
        %4288 = vmatpush1.bf16.msra.mxu0 %v4267
        %4289 = vmatprep.subr.bf16.mxu0 0
        %4290 = vmatpush1.bf16.msra.mxu0 %v4268
        %4291 = vmatprep.subr.bf16.mxu0 0
        %4292 = vmatpush1.bf16.msra.mxu0 %v4269
        %4293 = vmatprep.subr.bf16.mxu0 0
        %4294 = vmatpush1.bf16.msra.mxu0 %v4270
        %4295 = vmatprep.subr.bf16.mxu0 0
        %4296 = vmatpush1.bf16.msra.mxu0 0
        %4297 = vmatprep.subr.bf16.mxu0 0
        %4298 = vmatpush1.bf16.msra.mxu0 0
        %4299 = vmatprep.subr.bf16.mxu0 0
        %4300 = vmatpush1.bf16.msra.mxu0 0
        %4301 = vmatprep.subr.bf16.mxu0 0
        %4302 = vmatpush1.bf16.msra.mxu0 0
        %4303 = vmatprep.subr.bf16.mxu0 0
        %4304 = vmatpush1.bf16.msra.mxu0 0
        %4305 = vmatprep.subr.bf16.mxu0 0
        %4306 = vmatpush1.bf16.msra.mxu0 0
        %4307 = vmatprep.subr.bf16.mxu0 0
        %4308 = vmatpush1.bf16.msra.mxu0 0
        %4309 = vmatprep.subr.bf16.mxu0 0
        %4310 = vmatpush1.bf16.msra.mxu0 0
        %4311 = vmatprep.mubr.bf16.mxu0 0
        %4312 = vmatmul.mubr.bf16.gmra.mrb[0].mxu0 %v4226
        %v4313 = vpop.f32.mrb[0].mxu0
        %v4314 = vadd.f32 %v4230, %v4313
        %v4315 = vpop.f32.mrb[0].mxu0
        %v4316 = vpop.f32.mrb[0].mxu0
        %v4317 = vpop.f32.mrb[0].mxu0
        %4318 = vdwg.mxu0
        %v4319 = vadd.f32 %v4133, %v4314
        %s4320 = scalar_lea.vmem %s10, 16
        %v4321 = vld [vmem:[%s4320] sm:$0xf]
        %v4322 = vld [vmem:[%s4320 + $0x4] sm:$0xf]
        %v4323 = vld [vmem:[%s4320 + $0x8] sm:$0xf]
        %v4324 = vld [vmem:[%s4320 + $0xc] sm:$0xf]
        %s4325 = scalar_lea.vmem %s11, 16
        %v4326 = vld [vmem:[%s4325] sm:$0xf]
        %v4327 = vld [vmem:[%s4325 + $0x4] sm:$0xf]
        %v4328 = vld [vmem:[%s4325 + $0x8] sm:$0xf]
        %v4329 = vld [vmem:[%s4325 + $0xc] sm:$0xf]
        %s4330 = scalar_lea.vmem %s12, 16
        %v4331 = vld [vmem:[%s4330] sm:$0xf]
        %v4332 = vld [vmem:[%s4330 + $0x4] sm:$0xf]
        %v4333 = vld [vmem:[%s4330 + $0x8] sm:$0xf]
        %v4334 = vld [vmem:[%s4330 + $0xc] sm:$0xf]
        %s4335 = scalar_lea.vmem %s13, 16
        %v4336 = vld [vmem:[%s4335] sm:$0xf]
        %v4337 = vld [vmem:[%s4335 + $0x4] sm:$0xf]
        %v4338 = vld [vmem:[%s4335 + $0x8] sm:$0xf]
        %v4339 = vld [vmem:[%s4335 + $0xc] sm:$0xf]
        %s4340 = scalar_lea.vmem %s14, 16
        %v4341 = vld [vmem:[%s4340] sm:$0xf]
        %v4342 = vld [vmem:[%s4340 + $0x4] sm:$0xf]
        %v4343 = vld [vmem:[%s4340 + $0x8] sm:$0xf]
        %v4344 = vld [vmem:[%s4340 + $0xc] sm:$0xf]
        %s4345 = scalar_lea.vmem %s15, 16
        %v4346 = vld [vmem:[%s4345] sm:$0xf]
        %v4347 = vld [vmem:[%s4345 + $0x4] sm:$0xf]
        %v4348 = vld [vmem:[%s4345 + $0x8] sm:$0xf]
        %v4349 = vld [vmem:[%s4345 + $0xc] sm:$0xf]
        %s4350 = scalar_lea.vmem %s16, 64
        %v4351 = vld [vmem:[%s4350] sm:$0xf]
        %v4352 = vld [vmem:[%s4350 + $0x4] sm:$0xf]
        %v4353 = vld [vmem:[%s4350 + $0x8] sm:$0xf]
        %v4354 = vld [vmem:[%s4350 + $0xc] sm:$0xf]
        %v4355 = vld [vmem:[%s4350 + $0x10] sm:$0xf]
        %v4356 = vld [vmem:[%s4350 + $0x14] sm:$0xf]
        %v4357 = vld [vmem:[%s4350 + $0x18] sm:$0xf]
        %v4358 = vld [vmem:[%s4350 + $0x1c] sm:$0xf]
        %v4359 = vld [vmem:[%s4350 + $0x20] sm:$0xf]
        %v4360 = vld [vmem:[%s4350 + $0x24] sm:$0xf]
        %v4361 = vld [vmem:[%s4350 + $0x28] sm:$0xf]
        %v4362 = vld [vmem:[%s4350 + $0x2c] sm:$0xf]
        %v4363 = vld [vmem:[%s4350 + $0x30] sm:$0xf]
        %v4364 = vld [vmem:[%s4350 + $0x34] sm:$0xf]
        %v4365 = vld [vmem:[%s4350 + $0x38] sm:$0xf]
        %v4366 = vld [vmem:[%s4350 + $0x3c] sm:$0xf]
        %s4367 = scalar_lea.vmem %s17, 16
        %v4368 = vld [vmem:[%s4367] sm:$0xff]
        %v4369 = vld [vmem:[%s4367 + $0x8] sm:$0x1f]
        %v4370 = vsel %vm677, %v4319, 0.0
        %4371 = vadd.xlane.f32.xlu0 %v4370
        %v4372 = vpop.xlane.xlu0 %4371
        %v4373 = vmul.f32 %v4372, %v681
        %v4374 = vsub.f32 %v4319, %v4373
        %v4375 = vmul.f32 %v4374, %v4374
        %v4376 = vsel %vm677, %v4375, 0.0
        %4377 = vadd.xlane.f32.xlu0 %v4376
        %v4378 = vpop.xlane.xlu0 %4377
        %v4379 = vmul.f32 %v4378, %v681
        %v4380 = vadd.f32 %v4379, 1e-05
        %v4381 = vrsqrt.pop %v4380
        %v4382 = vmul.f32 %v4374, %v4381
        %v4383 = vlaneseq
        %v4384 = vshrl.u32 %v4383, 7
        %v4385 = vsub.s32 0, %v4384
        %v4386 = vrot.slane %v4368, %v4385
        %v4387 = vmul.f32 %v4382, %v4386
        %v4388 = vlaneseq
        %v4389 = vshrl.u32 %v4388, 7
        %v4390 = vsub.s32 1, %v4389
        %v4391 = vrot.slane %v4368, %v4390
        %v4392 = vadd.f32 %v4387, %v4391
        %v4393 = vpack.c.bf16 %v4392, %v4392
        %v4394 = vlaneseq
        %v4395 = vshrl.u32 %v4394, 7
        %v4396 = vsub.s32 2, %v4395
        %v4397 = vrot.slane %v4368, %v4396
        %v4402 = vunpack.c.l.b16 %v4321
        %v4403 = vunpack.c.l.b16 %v4322
        %v4404 = vunpack.c.l.b16 %v4323
        %v4405 = vunpack.c.l.b16 %v4324
        %v4406 = vpack.c.b16 %v4403, %v4402
        %v4407 = vpack.c.b16 %v4405, %v4404
        %v4411 = vsel %vm677, %v4393, 0
        %4413 = vmatprep.subr.bf16.mxu0 0
        %4414 = vmatpush1.bf16.msra.mxu0 %v4406
        %4415 = vmatprep.subr.bf16.mxu0 0
        %4416 = vmatpush1.bf16.msra.mxu0 %v4407
        %4417 = vmatprep.subr.bf16.mxu0 0
        %4418 = vmatpush1.bf16.msra.mxu0 0
        %4419 = vmatprep.subr.bf16.mxu0 0
        %4420 = vmatpush1.bf16.msra.mxu0 0
        %4421 = vmatprep.subr.bf16.mxu0 0
        %4422 = vmatpush1.bf16.msra.mxu0 0
        %4423 = vmatprep.subr.bf16.mxu0 0
        %4424 = vmatpush1.bf16.msra.mxu0 0
        %4425 = vmatprep.subr.bf16.mxu0 0
        %4426 = vmatpush1.bf16.msra.mxu0 0
        %4427 = vmatprep.subr.bf16.mxu0 0
        %4428 = vmatpush1.bf16.msra.mxu0 0
        %4429 = vmatprep.subr.bf16.mxu0 0
        %4430 = vmatpush1.bf16.msra.mxu0 0
        %4431 = vmatprep.subr.bf16.mxu0 0
        %4432 = vmatpush1.bf16.msra.mxu0 0
        %4433 = vmatprep.subr.bf16.mxu0 0
        %4434 = vmatpush1.bf16.msra.mxu0 0
        %4435 = vmatprep.subr.bf16.mxu0 0
        %4436 = vmatpush1.bf16.msra.mxu0 0
        %4437 = vmatprep.subr.bf16.mxu0 0
        %4438 = vmatpush1.bf16.msra.mxu0 0
        %4439 = vmatprep.subr.bf16.mxu0 0
        %4440 = vmatpush1.bf16.msra.mxu0 0
        %4441 = vmatprep.subr.bf16.mxu0 0
        %4442 = vmatpush1.bf16.msra.mxu0 0
        %4443 = vmatprep.subr.bf16.mxu0 0
        %4444 = vmatpush1.bf16.msra.mxu0 0
        %4445 = vmatprep.mubr.bf16.mxu0 0
        %4446 = vmatmul.mubr.bf16.gmra.mrb[0].mxu0 %v4411
        %v4447 = vpop.f32.mrb[0].mxu0
        %v4448 = vadd.f32 %v4397, %v4447
        %v4449 = vpop.f32.mrb[0].mxu0
        %v4450 = vpop.f32.mrb[0].mxu0
        %v4451 = vpop.f32.mrb[0].mxu0
        %4452 = vdwg.mxu0
        %v4453 = vmul.f32 %v4448, 0.35355338
        %v4454 = vpack.c.bf16 %v4453, %v4453
        %v4455 = vpack.c.bf16 %v4448, %v4448
        %4457 = vrot.lane.b32.xlu0 %v4455, 96
        %v4458 = vpop.permute.xlu0 %4457
        %v4460 = vsel %vm768, %v4454, 0
        %v4463 = vsel %vm768, %v4458, 0
        %4465 = vmatprep.subr.bf16.mxu0 0
        %4466 = vmatpush1.bf16.xpose.msra.mxu0 %v4463
        %4467 = vmatprep.subr.bf16.mxu0 0
        %4468 = vmatpush1.bf16.xpose.msra.mxu0 0
        %4469 = vmatprep.subr.bf16.mxu0 0
        %4470 = vmatpush1.bf16.xpose.msra.mxu0 0
        %4471 = vmatprep.subr.bf16.mxu0 0
        %4472 = vmatpush1.bf16.xpose.msra.mxu0 0
        %4473 = vmatprep.subr.bf16.mxu0 0
        %4474 = vmatpush1.bf16.xpose.msra.mxu0 0
        %4475 = vmatprep.subr.bf16.mxu0 0
        %4476 = vmatpush1.bf16.xpose.msra.mxu0 0
        %4477 = vmatprep.subr.bf16.mxu0 0
        %4478 = vmatpush1.bf16.xpose.msra.mxu0 0
        %4479 = vmatprep.subr.bf16.mxu0 0
        %4480 = vmatpush1.bf16.xpose.msra.mxu0 0
        %4481 = vmatprep.subr.bf16.mxu0 0
        %4482 = vmatpush1.bf16.xpose.msra.mxu0 0
        %4483 = vmatprep.subr.bf16.mxu0 0
        %4484 = vmatpush1.bf16.xpose.msra.mxu0 0
        %4485 = vmatprep.subr.bf16.mxu0 0
        %4486 = vmatpush1.bf16.xpose.msra.mxu0 0
        %4487 = vmatprep.subr.bf16.mxu0 0
        %4488 = vmatpush1.bf16.xpose.msra.mxu0 0
        %4489 = vmatprep.subr.bf16.mxu0 0
        %4490 = vmatpush1.bf16.xpose.msra.mxu0 0
        %4491 = vmatprep.subr.bf16.mxu0 0
        %4492 = vmatpush1.bf16.xpose.msra.mxu0 0
        %4493 = vmatprep.subr.bf16.mxu0 0
        %4494 = vmatpush1.bf16.xpose.msra.mxu0 0
        %4495 = vmatprep.subr.bf16.mxu0 0
        %4496 = vmatpush1.bf16.xpose.msra.mxu0 0
        %4497 = vmatprep.mubr.bf16.mxu0 0
        %4498 = vmatmul.mubr.bf16.gmra.mrb[0].mxu0 %v4460
        %v4499 = vpop.f32.mrb[0].mxu0
        %v4500 = vadd.f32 %v2714, %v4499
        %v4501 = vpop.f32.mrb[0].mxu0
        %v4502 = vpop.f32.mrb[0].mxu0
        %v4503 = vpop.f32.mrb[0].mxu0
        %4504 = vdwg.mxu0
        %v4505 = vsel %vm768, %v4500, -inf
        %4506 = vmax.xlane.f32.xlu0 %v4505
        %v4507 = vpop.xlane.xlu0 %4506
        %v4508 = vsub.f32 %v4500, %v4507
        %v4509 = vmul.f32 %v4508, 1.442695
        %v4510 = vpow.pop %v4509
        %v4511 = vsel %vm768, %v4510, 0.0
        %4512 = vadd.xlane.f32.xlu0 %v4511
        %v4513 = vpop.xlane.xlu0 %4512
        %v4514 = vrcp.pop %v4513
        %v4515 = vmul.f32 %v4510, %v4514
        %v4516 = vpack.c.bf16 %v4515, %v4515
        %4517 = vrot.lane.b32.xlu0 %v4455, 64
        %v4518 = vpop.permute.xlu0 %4517
        %v4520 = vsel %vm768, %v4516, 0
        %v4523 = vsel %vm832, %v4518, 0
        %4525 = vmatprep.subr.bf16.mxu0 0
        %4526 = vmatpush1.bf16.msra.mxu0 %v4523
        %4527 = vmatprep.subr.bf16.mxu0 0
        %4528 = vmatpush1.bf16.msra.mxu0 0
        %4529 = vmatprep.subr.bf16.mxu0 0
        %4530 = vmatpush1.bf16.msra.mxu0 0
        %4531 = vmatprep.subr.bf16.mxu0 0
        %4532 = vmatpush1.bf16.msra.mxu0 0
        %4533 = vmatprep.subr.bf16.mxu0 0
        %4534 = vmatpush1.bf16.msra.mxu0 0
        %4535 = vmatprep.subr.bf16.mxu0 0
        %4536 = vmatpush1.bf16.msra.mxu0 0
        %4537 = vmatprep.subr.bf16.mxu0 0
        %4538 = vmatpush1.bf16.msra.mxu0 0
        %4539 = vmatprep.subr.bf16.mxu0 0
        %4540 = vmatpush1.bf16.msra.mxu0 0
        %4541 = vmatprep.subr.bf16.mxu0 0
        %4542 = vmatpush1.bf16.msra.mxu0 0
        %4543 = vmatprep.subr.bf16.mxu0 0
        %4544 = vmatpush1.bf16.msra.mxu0 0
        %4545 = vmatprep.subr.bf16.mxu0 0
        %4546 = vmatpush1.bf16.msra.mxu0 0
        %4547 = vmatprep.subr.bf16.mxu0 0
        %4548 = vmatpush1.bf16.msra.mxu0 0
        %4549 = vmatprep.subr.bf16.mxu0 0
        %4550 = vmatpush1.bf16.msra.mxu0 0
        %4551 = vmatprep.subr.bf16.mxu0 0
        %4552 = vmatpush1.bf16.msra.mxu0 0
        %4553 = vmatprep.subr.bf16.mxu0 0
        %4554 = vmatpush1.bf16.msra.mxu0 0
        %4555 = vmatprep.subr.bf16.mxu0 0
        %4556 = vmatpush1.bf16.msra.mxu0 0
        %4557 = vmatprep.mubr.bf16.mxu0 0
        %4558 = vmatmul.mubr.bf16.gmra.mrb[0].mxu0 %v4520
        %v4559 = vpop.f32.mrb[0].mxu0
        %v4560 = vadd.f32 0.0, %v4559
        %v4561 = vpop.f32.mrb[0].mxu0
        %v4562 = vpop.f32.mrb[0].mxu0
        %v4563 = vpop.f32.mrb[0].mxu0
        %4564 = vdwg.mxu0
        %v4565 = vpack.c.bf16 %v4560, %v4560
        %4567 = vrot.lane.b32.xlu0 %v4454, 120
        %v4568 = vpop.permute.xlu0 %4567
        %4569 = vrot.lane.b32.xlu0 %v4455, 88
        %v4570 = vpop.permute.xlu0 %4569
        %v4572 = vsel %vm768, %v4568, 0
        %v4575 = vsel %vm768, %v4570, 0
        %4577 = vmatprep.subr.bf16.mxu0 0
        %4578 = vmatpush1.bf16.xpose.msra.mxu0 %v4575
        %4579 = vmatprep.subr.bf16.mxu0 0
        %4580 = vmatpush1.bf16.xpose.msra.mxu0 0
        %4581 = vmatprep.subr.bf16.mxu0 0
        %4582 = vmatpush1.bf16.xpose.msra.mxu0 0
        %4583 = vmatprep.subr.bf16.mxu0 0
        %4584 = vmatpush1.bf16.xpose.msra.mxu0 0
        %4585 = vmatprep.subr.bf16.mxu0 0
        %4586 = vmatpush1.bf16.xpose.msra.mxu0 0
        %4587 = vmatprep.subr.bf16.mxu0 0
        %4588 = vmatpush1.bf16.xpose.msra.mxu0 0
        %4589 = vmatprep.subr.bf16.mxu0 0
        %4590 = vmatpush1.bf16.xpose.msra.mxu0 0
        %4591 = vmatprep.subr.bf16.mxu0 0
        %4592 = vmatpush1.bf16.xpose.msra.mxu0 0
        %4593 = vmatprep.subr.bf16.mxu0 0
        %4594 = vmatpush1.bf16.xpose.msra.mxu0 0
        %4595 = vmatprep.subr.bf16.mxu0 0
        %4596 = vmatpush1.bf16.xpose.msra.mxu0 0
        %4597 = vmatprep.subr.bf16.mxu0 0
        %4598 = vmatpush1.bf16.xpose.msra.mxu0 0
        %4599 = vmatprep.subr.bf16.mxu0 0
        %4600 = vmatpush1.bf16.xpose.msra.mxu0 0
        %4601 = vmatprep.subr.bf16.mxu0 0
        %4602 = vmatpush1.bf16.xpose.msra.mxu0 0
        %4603 = vmatprep.subr.bf16.mxu0 0
        %4604 = vmatpush1.bf16.xpose.msra.mxu0 0
        %4605 = vmatprep.subr.bf16.mxu0 0
        %4606 = vmatpush1.bf16.xpose.msra.mxu0 0
        %4607 = vmatprep.subr.bf16.mxu0 0
        %4608 = vmatpush1.bf16.xpose.msra.mxu0 0
        %4609 = vmatprep.mubr.bf16.mxu0 0
        %4610 = vmatmul.mubr.bf16.gmra.mrb[0].mxu0 %v4572
        %v4611 = vpop.f32.mrb[0].mxu0
        %v4612 = vadd.f32 %v2714, %v4611
        %v4613 = vpop.f32.mrb[0].mxu0
        %v4614 = vpop.f32.mrb[0].mxu0
        %v4615 = vpop.f32.mrb[0].mxu0
        %4616 = vdwg.mxu0
        %v4617 = vsel %vm768, %v4612, -inf
        %4618 = vmax.xlane.f32.xlu0 %v4617
        %v4619 = vpop.xlane.xlu0 %4618
        %v4620 = vsub.f32 %v4612, %v4619
        %v4621 = vmul.f32 %v4620, 1.442695
        %v4622 = vpow.pop %v4621
        %v4623 = vsel %vm768, %v4622, 0.0
        %4624 = vadd.xlane.f32.xlu0 %v4623
        %v4625 = vpop.xlane.xlu0 %4624
        %v4626 = vrcp.pop %v4625
        %v4627 = vmul.f32 %v4622, %v4626
        %v4628 = vpack.c.bf16 %v4627, %v4627
        %4629 = vrot.lane.b32.xlu0 %v4455, 56
        %v4630 = vpop.permute.xlu0 %4629
        %v4632 = vsel %vm768, %v4628, 0
        %v4635 = vsel %vm832, %v4630, 0
        %4637 = vmatprep.subr.bf16.mxu0 0
        %4638 = vmatpush1.bf16.msra.mxu0 %v4635
        %4639 = vmatprep.subr.bf16.mxu0 0
        %4640 = vmatpush1.bf16.msra.mxu0 0
        %4641 = vmatprep.subr.bf16.mxu0 0
        %4642 = vmatpush1.bf16.msra.mxu0 0
        %4643 = vmatprep.subr.bf16.mxu0 0
        %4644 = vmatpush1.bf16.msra.mxu0 0
        %4645 = vmatprep.subr.bf16.mxu0 0
        %4646 = vmatpush1.bf16.msra.mxu0 0
        %4647 = vmatprep.subr.bf16.mxu0 0
        %4648 = vmatpush1.bf16.msra.mxu0 0
        %4649 = vmatprep.subr.bf16.mxu0 0
        %4650 = vmatpush1.bf16.msra.mxu0 0
        %4651 = vmatprep.subr.bf16.mxu0 0
        %4652 = vmatpush1.bf16.msra.mxu0 0
        %4653 = vmatprep.subr.bf16.mxu0 0
        %4654 = vmatpush1.bf16.msra.mxu0 0
        %4655 = vmatprep.subr.bf16.mxu0 0
        %4656 = vmatpush1.bf16.msra.mxu0 0
        %4657 = vmatprep.subr.bf16.mxu0 0
        %4658 = vmatpush1.bf16.msra.mxu0 0
        %4659 = vmatprep.subr.bf16.mxu0 0
        %4660 = vmatpush1.bf16.msra.mxu0 0
        %4661 = vmatprep.subr.bf16.mxu0 0
        %4662 = vmatpush1.bf16.msra.mxu0 0
        %4663 = vmatprep.subr.bf16.mxu0 0
        %4664 = vmatpush1.bf16.msra.mxu0 0
        %4665 = vmatprep.subr.bf16.mxu0 0
        %4666 = vmatpush1.bf16.msra.mxu0 0
        %4667 = vmatprep.subr.bf16.mxu0 0
        %4668 = vmatpush1.bf16.msra.mxu0 0
        %4669 = vmatprep.mubr.bf16.mxu0 0
        %4670 = vmatmul.mubr.bf16.gmra.mrb[0].mxu0 %v4632
        %v4671 = vpop.f32.mrb[0].mxu0
        %v4672 = vadd.f32 0.0, %v4671
        %v4673 = vpop.f32.mrb[0].mxu0
        %v4674 = vpop.f32.mrb[0].mxu0
        %v4675 = vpop.f32.mrb[0].mxu0
        %4676 = vdwg.mxu0
        %v4677 = vpack.c.bf16 %v4672, %v4672
        %v4679 = vsel %vm768, %v4677, 0
        %v4682 = vsel %vm832, %v4327, 0
        %4684 = vmatprep.subr.bf16.mxu0 0
        %4685 = vmatpush1.bf16.msra.mxu0 %v4682
        %4686 = vmatprep.subr.bf16.mxu0 0
        %4687 = vmatpush1.bf16.msra.mxu0 0
        %4688 = vmatprep.subr.bf16.mxu0 0
        %4689 = vmatpush1.bf16.msra.mxu0 0
        %4690 = vmatprep.subr.bf16.mxu0 0
        %4691 = vmatpush1.bf16.msra.mxu0 0
        %4692 = vmatprep.subr.bf16.mxu0 0
        %4693 = vmatpush1.bf16.msra.mxu0 0
        %4694 = vmatprep.subr.bf16.mxu0 0
        %4695 = vmatpush1.bf16.msra.mxu0 0
        %4696 = vmatprep.subr.bf16.mxu0 0
        %4697 = vmatpush1.bf16.msra.mxu0 0
        %4698 = vmatprep.subr.bf16.mxu0 0
        %4699 = vmatpush1.bf16.msra.mxu0 0
        %4700 = vmatprep.subr.bf16.mxu0 0
        %4701 = vmatpush1.bf16.msra.mxu0 0
        %4702 = vmatprep.subr.bf16.mxu0 0
        %4703 = vmatpush1.bf16.msra.mxu0 0
        %4704 = vmatprep.subr.bf16.mxu0 0
        %4705 = vmatpush1.bf16.msra.mxu0 0
        %4706 = vmatprep.subr.bf16.mxu0 0
        %4707 = vmatpush1.bf16.msra.mxu0 0
        %4708 = vmatprep.subr.bf16.mxu0 0
        %4709 = vmatpush1.bf16.msra.mxu0 0
        %4710 = vmatprep.subr.bf16.mxu0 0
        %4711 = vmatpush1.bf16.msra.mxu0 0
        %4712 = vmatprep.subr.bf16.mxu0 0
        %4713 = vmatpush1.bf16.msra.mxu0 0
        %4714 = vmatprep.subr.bf16.mxu0 0
        %4715 = vmatpush1.bf16.msra.mxu0 0
        %4716 = vmatprep.mubr.bf16.mxu0 0
        %4717 = vmatmul.mubr.bf16.gmra.mrb[0].mxu0 %v4679
        %v4718 = vpop.f32.mrb[0].mxu0
        %v4719 = vadd.f32 0.0, %v4718
        %v4720 = vpop.f32.mrb[0].mxu0
        %v4721 = vpop.f32.mrb[0].mxu0
        %v4722 = vpop.f32.mrb[0].mxu0
        %4723 = vdwg.mxu0
        %v4725 = vsel %vm768, %v4565, 0
        %v4728 = vsel %vm832, %v4326, 0
        %4730 = vmatprep.subr.bf16.mxu0 0
        %4731 = vmatpush1.bf16.msra.mxu0 %v4728
        %4732 = vmatprep.subr.bf16.mxu0 0
        %4733 = vmatpush1.bf16.msra.mxu0 0
        %4734 = vmatprep.subr.bf16.mxu0 0
        %4735 = vmatpush1.bf16.msra.mxu0 0
        %4736 = vmatprep.subr.bf16.mxu0 0
        %4737 = vmatpush1.bf16.msra.mxu0 0
        %4738 = vmatprep.subr.bf16.mxu0 0
        %4739 = vmatpush1.bf16.msra.mxu0 0
        %4740 = vmatprep.subr.bf16.mxu0 0
        %4741 = vmatpush1.bf16.msra.mxu0 0
        %4742 = vmatprep.subr.bf16.mxu0 0
        %4743 = vmatpush1.bf16.msra.mxu0 0
        %4744 = vmatprep.subr.bf16.mxu0 0
        %4745 = vmatpush1.bf16.msra.mxu0 0
        %4746 = vmatprep.subr.bf16.mxu0 0
        %4747 = vmatpush1.bf16.msra.mxu0 0
        %4748 = vmatprep.subr.bf16.mxu0 0
        %4749 = vmatpush1.bf16.msra.mxu0 0
        %4750 = vmatprep.subr.bf16.mxu0 0
        %4751 = vmatpush1.bf16.msra.mxu0 0
        %4752 = vmatprep.subr.bf16.mxu0 0
        %4753 = vmatpush1.bf16.msra.mxu0 0
        %4754 = vmatprep.subr.bf16.mxu0 0
        %4755 = vmatpush1.bf16.msra.mxu0 0
        %4756 = vmatprep.subr.bf16.mxu0 0
        %4757 = vmatpush1.bf16.msra.mxu0 0
        %4758 = vmatprep.subr.bf16.mxu0 0
        %4759 = vmatpush1.bf16.msra.mxu0 0
        %4760 = vmatprep.subr.bf16.mxu0 0
        %4761 = vmatpush1.bf16.msra.mxu0 0
        %4762 = vmatprep.mubr.bf16.mxu0 0
        %4763 = vmatmul.mubr.bf16.gmra.mrb[0].mxu0 %v4725
        %v4764 = vpop.f32.mrb[0].mxu0
        %v4765 = vadd.f32 %v4719, %v4764
        %v4766 = vpop.f32.mrb[0].mxu0
        %v4767 = vpop.f32.mrb[0].mxu0
        %v4768 = vpop.f32.mrb[0].mxu0
        %4769 = vdwg.mxu0
        %4770 = vrot.lane.b32.xlu0 %v4454, 112
        %v4771 = vpop.permute.xlu0 %4770
        %4772 = vrot.lane.b32.xlu0 %v4455, 80
        %v4773 = vpop.permute.xlu0 %4772
        %v4775 = vsel %vm768, %v4771, 0
        %v4778 = vsel %vm768, %v4773, 0
        %4780 = vmatprep.subr.bf16.mxu0 0
        %4781 = vmatpush1.bf16.xpose.msra.mxu0 %v4778
        %4782 = vmatprep.subr.bf16.mxu0 0
        %4783 = vmatpush1.bf16.xpose.msra.mxu0 0
        %4784 = vmatprep.subr.bf16.mxu0 0
        %4785 = vmatpush1.bf16.xpose.msra.mxu0 0
        %4786 = vmatprep.subr.bf16.mxu0 0
        %4787 = vmatpush1.bf16.xpose.msra.mxu0 0
        %4788 = vmatprep.subr.bf16.mxu0 0
        %4789 = vmatpush1.bf16.xpose.msra.mxu0 0
        %4790 = vmatprep.subr.bf16.mxu0 0
        %4791 = vmatpush1.bf16.xpose.msra.mxu0 0
        %4792 = vmatprep.subr.bf16.mxu0 0
        %4793 = vmatpush1.bf16.xpose.msra.mxu0 0
        %4794 = vmatprep.subr.bf16.mxu0 0
        %4795 = vmatpush1.bf16.xpose.msra.mxu0 0
        %4796 = vmatprep.subr.bf16.mxu0 0
        %4797 = vmatpush1.bf16.xpose.msra.mxu0 0
        %4798 = vmatprep.subr.bf16.mxu0 0
        %4799 = vmatpush1.bf16.xpose.msra.mxu0 0
        %4800 = vmatprep.subr.bf16.mxu0 0
        %4801 = vmatpush1.bf16.xpose.msra.mxu0 0
        %4802 = vmatprep.subr.bf16.mxu0 0
        %4803 = vmatpush1.bf16.xpose.msra.mxu0 0
        %4804 = vmatprep.subr.bf16.mxu0 0
        %4805 = vmatpush1.bf16.xpose.msra.mxu0 0
        %4806 = vmatprep.subr.bf16.mxu0 0
        %4807 = vmatpush1.bf16.xpose.msra.mxu0 0
        %4808 = vmatprep.subr.bf16.mxu0 0
        %4809 = vmatpush1.bf16.xpose.msra.mxu0 0
        %4810 = vmatprep.subr.bf16.mxu0 0
        %4811 = vmatpush1.bf16.xpose.msra.mxu0 0
        %4812 = vmatprep.mubr.bf16.mxu0 0
        %4813 = vmatmul.mubr.bf16.gmra.mrb[0].mxu0 %v4775
        %v4814 = vpop.f32.mrb[0].mxu0
        %v4815 = vadd.f32 %v2714, %v4814
        %v4816 = vpop.f32.mrb[0].mxu0
        %v4817 = vpop.f32.mrb[0].mxu0
        %v4818 = vpop.f32.mrb[0].mxu0
        %4819 = vdwg.mxu0
        %v4820 = vsel %vm768, %v4815, -inf
        %4821 = vmax.xlane.f32.xlu0 %v4820
        %v4822 = vpop.xlane.xlu0 %4821
        %v4823 = vsub.f32 %v4815, %v4822
        %v4824 = vmul.f32 %v4823, 1.442695
        %v4825 = vpow.pop %v4824
        %v4826 = vsel %vm768, %v4825, 0.0
        %4827 = vadd.xlane.f32.xlu0 %v4826
        %v4828 = vpop.xlane.xlu0 %4827
        %v4829 = vrcp.pop %v4828
        %v4830 = vmul.f32 %v4825, %v4829
        %v4831 = vpack.c.bf16 %v4830, %v4830
        %4832 = vrot.lane.b32.xlu0 %v4455, 48
        %v4833 = vpop.permute.xlu0 %4832
        %v4835 = vsel %vm768, %v4831, 0
        %v4838 = vsel %vm832, %v4833, 0
        %4840 = vmatprep.subr.bf16.mxu0 0
        %4841 = vmatpush1.bf16.msra.mxu0 %v4838
        %4842 = vmatprep.subr.bf16.mxu0 0
        %4843 = vmatpush1.bf16.msra.mxu0 0
        %4844 = vmatprep.subr.bf16.mxu0 0
        %4845 = vmatpush1.bf16.msra.mxu0 0
        %4846 = vmatprep.subr.bf16.mxu0 0
        %4847 = vmatpush1.bf16.msra.mxu0 0
        %4848 = vmatprep.subr.bf16.mxu0 0
        %4849 = vmatpush1.bf16.msra.mxu0 0
        %4850 = vmatprep.subr.bf16.mxu0 0
        %4851 = vmatpush1.bf16.msra.mxu0 0
        %4852 = vmatprep.subr.bf16.mxu0 0
        %4853 = vmatpush1.bf16.msra.mxu0 0
        %4854 = vmatprep.subr.bf16.mxu0 0
        %4855 = vmatpush1.bf16.msra.mxu0 0
        %4856 = vmatprep.subr.bf16.mxu0 0
        %4857 = vmatpush1.bf16.msra.mxu0 0
        %4858 = vmatprep.subr.bf16.mxu0 0
        %4859 = vmatpush1.bf16.msra.mxu0 0
        %4860 = vmatprep.subr.bf16.mxu0 0
        %4861 = vmatpush1.bf16.msra.mxu0 0
        %4862 = vmatprep.subr.bf16.mxu0 0
        %4863 = vmatpush1.bf16.msra.mxu0 0
        %4864 = vmatprep.subr.bf16.mxu0 0
        %4865 = vmatpush1.bf16.msra.mxu0 0
        %4866 = vmatprep.subr.bf16.mxu0 0
        %4867 = vmatpush1.bf16.msra.mxu0 0
        %4868 = vmatprep.subr.bf16.mxu0 0
        %4869 = vmatpush1.bf16.msra.mxu0 0
        %4870 = vmatprep.subr.bf16.mxu0 0
        %4871 = vmatpush1.bf16.msra.mxu0 0
        %4872 = vmatprep.mubr.bf16.mxu0 0
        %4873 = vmatmul.mubr.bf16.gmra.mrb[0].mxu0 %v4835
        %v4874 = vpop.f32.mrb[0].mxu0
        %v4875 = vadd.f32 0.0, %v4874
        %v4876 = vpop.f32.mrb[0].mxu0
        %v4877 = vpop.f32.mrb[0].mxu0
        %v4878 = vpop.f32.mrb[0].mxu0
        %4879 = vdwg.mxu0
        %v4880 = vpack.c.bf16 %v4875, %v4875
        %v4882 = vsel %vm768, %v4880, 0
        %v4885 = vsel %vm832, %v4328, 0
        %4887 = vmatprep.subr.bf16.mxu0 0
        %4888 = vmatpush1.bf16.msra.mxu0 %v4885
        %4889 = vmatprep.subr.bf16.mxu0 0
        %4890 = vmatpush1.bf16.msra.mxu0 0
        %4891 = vmatprep.subr.bf16.mxu0 0
        %4892 = vmatpush1.bf16.msra.mxu0 0
        %4893 = vmatprep.subr.bf16.mxu0 0
        %4894 = vmatpush1.bf16.msra.mxu0 0
        %4895 = vmatprep.subr.bf16.mxu0 0
        %4896 = vmatpush1.bf16.msra.mxu0 0
        %4897 = vmatprep.subr.bf16.mxu0 0
        %4898 = vmatpush1.bf16.msra.mxu0 0
        %4899 = vmatprep.subr.bf16.mxu0 0
        %4900 = vmatpush1.bf16.msra.mxu0 0
        %4901 = vmatprep.subr.bf16.mxu0 0
        %4902 = vmatpush1.bf16.msra.mxu0 0
        %4903 = vmatprep.subr.bf16.mxu0 0
        %4904 = vmatpush1.bf16.msra.mxu0 0
        %4905 = vmatprep.subr.bf16.mxu0 0
        %4906 = vmatpush1.bf16.msra.mxu0 0
        %4907 = vmatprep.subr.bf16.mxu0 0
        %4908 = vmatpush1.bf16.msra.mxu0 0
        %4909 = vmatprep.subr.bf16.mxu0 0
        %4910 = vmatpush1.bf16.msra.mxu0 0
        %4911 = vmatprep.subr.bf16.mxu0 0
        %4912 = vmatpush1.bf16.msra.mxu0 0
        %4913 = vmatprep.subr.bf16.mxu0 0
        %4914 = vmatpush1.bf16.msra.mxu0 0
        %4915 = vmatprep.subr.bf16.mxu0 0
        %4916 = vmatpush1.bf16.msra.mxu0 0
        %4917 = vmatprep.subr.bf16.mxu0 0
        %4918 = vmatpush1.bf16.msra.mxu0 0
        %4919 = vmatprep.mubr.bf16.mxu0 0
        %4920 = vmatmul.mubr.bf16.gmra.mrb[0].mxu0 %v4882
        %v4921 = vpop.f32.mrb[0].mxu0
        %v4922 = vadd.f32 0.0, %v4921
        %v4923 = vpop.f32.mrb[0].mxu0
        %v4924 = vpop.f32.mrb[0].mxu0
        %v4925 = vpop.f32.mrb[0].mxu0
        %4926 = vdwg.mxu0
        %v4927 = vadd.f32 %v4765, %v4922
        %4928 = vrot.lane.b32.xlu0 %v4454, 104
        %v4929 = vpop.permute.xlu0 %4928
        %4930 = vrot.lane.b32.xlu0 %v4455, 72
        %v4931 = vpop.permute.xlu0 %4930
        %v4933 = vsel %vm768, %v4929, 0
        %v4936 = vsel %vm768, %v4931, 0
        %4938 = vmatprep.subr.bf16.mxu0 0
        %4939 = vmatpush1.bf16.xpose.msra.mxu0 %v4936
        %4940 = vmatprep.subr.bf16.mxu0 0
        %4941 = vmatpush1.bf16.xpose.msra.mxu0 0
        %4942 = vmatprep.subr.bf16.mxu0 0
        %4943 = vmatpush1.bf16.xpose.msra.mxu0 0
        %4944 = vmatprep.subr.bf16.mxu0 0
        %4945 = vmatpush1.bf16.xpose.msra.mxu0 0
        %4946 = vmatprep.subr.bf16.mxu0 0
        %4947 = vmatpush1.bf16.xpose.msra.mxu0 0
        %4948 = vmatprep.subr.bf16.mxu0 0
        %4949 = vmatpush1.bf16.xpose.msra.mxu0 0
        %4950 = vmatprep.subr.bf16.mxu0 0
        %4951 = vmatpush1.bf16.xpose.msra.mxu0 0
        %4952 = vmatprep.subr.bf16.mxu0 0
        %4953 = vmatpush1.bf16.xpose.msra.mxu0 0
        %4954 = vmatprep.subr.bf16.mxu0 0
        %4955 = vmatpush1.bf16.xpose.msra.mxu0 0
        %4956 = vmatprep.subr.bf16.mxu0 0
        %4957 = vmatpush1.bf16.xpose.msra.mxu0 0
        %4958 = vmatprep.subr.bf16.mxu0 0
        %4959 = vmatpush1.bf16.xpose.msra.mxu0 0
        %4960 = vmatprep.subr.bf16.mxu0 0
        %4961 = vmatpush1.bf16.xpose.msra.mxu0 0
        %4962 = vmatprep.subr.bf16.mxu0 0
        %4963 = vmatpush1.bf16.xpose.msra.mxu0 0
        %4964 = vmatprep.subr.bf16.mxu0 0
        %4965 = vmatpush1.bf16.xpose.msra.mxu0 0
        %4966 = vmatprep.subr.bf16.mxu0 0
        %4967 = vmatpush1.bf16.xpose.msra.mxu0 0
        %4968 = vmatprep.subr.bf16.mxu0 0
        %4969 = vmatpush1.bf16.xpose.msra.mxu0 0
        %4970 = vmatprep.mubr.bf16.mxu0 0
        %4971 = vmatmul.mubr.bf16.gmra.mrb[0].mxu0 %v4933
        %v4972 = vpop.f32.mrb[0].mxu0
        %v4973 = vadd.f32 %v2714, %v4972
        %v4974 = vpop.f32.mrb[0].mxu0
        %v4975 = vpop.f32.mrb[0].mxu0
        %v4976 = vpop.f32.mrb[0].mxu0
        %4977 = vdwg.mxu0
        %v4978 = vsel %vm768, %v4973, -inf
        %4979 = vmax.xlane.f32.xlu0 %v4978
        %v4980 = vpop.xlane.xlu0 %4979
        %v4981 = vsub.f32 %v4973, %v4980
        %v4982 = vmul.f32 %v4981, 1.442695
        %v4983 = vpow.pop %v4982
        %v4984 = vsel %vm768, %v4983, 0.0
        %4985 = vadd.xlane.f32.xlu0 %v4984
        %v4986 = vpop.xlane.xlu0 %4985
        %v4987 = vrcp.pop %v4986
        %v4988 = vmul.f32 %v4983, %v4987
        %v4989 = vpack.c.bf16 %v4988, %v4988
        %4990 = vrot.lane.b32.xlu0 %v4455, 40
        %v4991 = vpop.permute.xlu0 %4990
        %v4993 = vsel %vm768, %v4989, 0
        %v4996 = vsel %vm832, %v4991, 0
        %4998 = vmatprep.subr.bf16.mxu0 0
        %4999 = vmatpush1.bf16.msra.mxu0 %v4996
        %5000 = vmatprep.subr.bf16.mxu0 0
        %5001 = vmatpush1.bf16.msra.mxu0 0
        %5002 = vmatprep.subr.bf16.mxu0 0
        %5003 = vmatpush1.bf16.msra.mxu0 0
        %5004 = vmatprep.subr.bf16.mxu0 0
        %5005 = vmatpush1.bf16.msra.mxu0 0
        %5006 = vmatprep.subr.bf16.mxu0 0
        %5007 = vmatpush1.bf16.msra.mxu0 0
        %5008 = vmatprep.subr.bf16.mxu0 0
        %5009 = vmatpush1.bf16.msra.mxu0 0
        %5010 = vmatprep.subr.bf16.mxu0 0
        %5011 = vmatpush1.bf16.msra.mxu0 0
        %5012 = vmatprep.subr.bf16.mxu0 0
        %5013 = vmatpush1.bf16.msra.mxu0 0
        %5014 = vmatprep.subr.bf16.mxu0 0
        %5015 = vmatpush1.bf16.msra.mxu0 0
        %5016 = vmatprep.subr.bf16.mxu0 0
        %5017 = vmatpush1.bf16.msra.mxu0 0
        %5018 = vmatprep.subr.bf16.mxu0 0
        %5019 = vmatpush1.bf16.msra.mxu0 0
        %5020 = vmatprep.subr.bf16.mxu0 0
        %5021 = vmatpush1.bf16.msra.mxu0 0
        %5022 = vmatprep.subr.bf16.mxu0 0
        %5023 = vmatpush1.bf16.msra.mxu0 0
        %5024 = vmatprep.subr.bf16.mxu0 0
        %5025 = vmatpush1.bf16.msra.mxu0 0
        %5026 = vmatprep.subr.bf16.mxu0 0
        %5027 = vmatpush1.bf16.msra.mxu0 0
        %5028 = vmatprep.subr.bf16.mxu0 0
        %5029 = vmatpush1.bf16.msra.mxu0 0
        %5030 = vmatprep.mubr.bf16.mxu0 0
        %5031 = vmatmul.mubr.bf16.gmra.mrb[0].mxu0 %v4993
        %v5032 = vpop.f32.mrb[0].mxu0
        %v5033 = vadd.f32 0.0, %v5032
        %v5034 = vpop.f32.mrb[0].mxu0
        %v5035 = vpop.f32.mrb[0].mxu0
        %v5036 = vpop.f32.mrb[0].mxu0
        %5037 = vdwg.mxu0
        %v5038 = vpack.c.bf16 %v5033, %v5033
        %v5040 = vsel %vm768, %v5038, 0
        %v5043 = vsel %vm832, %v4329, 0
        %5045 = vmatprep.subr.bf16.mxu0 0
        %5046 = vmatpush1.bf16.msra.mxu0 %v5043
        %5047 = vmatprep.subr.bf16.mxu0 0
        %5048 = vmatpush1.bf16.msra.mxu0 0
        %5049 = vmatprep.subr.bf16.mxu0 0
        %5050 = vmatpush1.bf16.msra.mxu0 0
        %5051 = vmatprep.subr.bf16.mxu0 0
        %5052 = vmatpush1.bf16.msra.mxu0 0
        %5053 = vmatprep.subr.bf16.mxu0 0
        %5054 = vmatpush1.bf16.msra.mxu0 0
        %5055 = vmatprep.subr.bf16.mxu0 0
        %5056 = vmatpush1.bf16.msra.mxu0 0
        %5057 = vmatprep.subr.bf16.mxu0 0
        %5058 = vmatpush1.bf16.msra.mxu0 0
        %5059 = vmatprep.subr.bf16.mxu0 0
        %5060 = vmatpush1.bf16.msra.mxu0 0
        %5061 = vmatprep.subr.bf16.mxu0 0
        %5062 = vmatpush1.bf16.msra.mxu0 0
        %5063 = vmatprep.subr.bf16.mxu0 0
        %5064 = vmatpush1.bf16.msra.mxu0 0
        %5065 = vmatprep.subr.bf16.mxu0 0
        %5066 = vmatpush1.bf16.msra.mxu0 0
        %5067 = vmatprep.subr.bf16.mxu0 0
        %5068 = vmatpush1.bf16.msra.mxu0 0
        %5069 = vmatprep.subr.bf16.mxu0 0
        %5070 = vmatpush1.bf16.msra.mxu0 0
        %5071 = vmatprep.subr.bf16.mxu0 0
        %5072 = vmatpush1.bf16.msra.mxu0 0
        %5073 = vmatprep.subr.bf16.mxu0 0
        %5074 = vmatpush1.bf16.msra.mxu0 0
        %5075 = vmatprep.subr.bf16.mxu0 0
        %5076 = vmatpush1.bf16.msra.mxu0 0
        %5077 = vmatprep.mubr.bf16.mxu0 0
        %5078 = vmatmul.mubr.bf16.gmra.mrb[0].mxu0 %v5040
        %v5079 = vpop.f32.mrb[0].mxu0
        %v5080 = vadd.f32 0.0, %v5079
        %v5081 = vpop.f32.mrb[0].mxu0
        %v5082 = vpop.f32.mrb[0].mxu0
        %v5083 = vpop.f32.mrb[0].mxu0
        %5084 = vdwg.mxu0
        %v5085 = vadd.f32 %v4927, %v5080
        %v5086 = vadd.f32 %v4319, %v5085
        %v5087 = vlaneseq
        %v5088 = vshrl.u32 %v5087, 7
        %v5089 = vsub.s32 3, %v5088
        %v5090 = vrot.slane %v4368, %v5089
        %v5091 = vadd.f32 %v5086, %v5090
        %v5092 = vsel %vm677, %v5091, 0.0
        %5093 = vadd.xlane.f32.xlu0 %v5092
        %v5094 = vpop.xlane.xlu0 %5093
        %v5095 = vmul.f32 %v5094, %v681
        %v5096 = vsub.f32 %v5091, %v5095
        %v5097 = vmul.f32 %v5096, %v5096
        %v5098 = vsel %vm677, %v5097, 0.0
        %5099 = vadd.xlane.f32.xlu0 %v5098
        %v5100 = vpop.xlane.xlu0 %5099
        %v5101 = vmul.f32 %v5100, %v681
        %v5102 = vadd.f32 %v5101, 1e-05
        %v5103 = vrsqrt.pop %v5102
        %v5104 = vmul.f32 %v5096, %v5103
        %v5105 = vlaneseq
        %v5106 = vshrl.u32 %v5105, 7
        %v5107 = vsub.s32 4, %v5106
        %v5108 = vrot.slane %v4368, %v5107
        %v5109 = vmul.f32 %v5104, %v5108
        %v5110 = vlaneseq
        %v5111 = vshrl.u32 %v5110, 7
        %v5112 = vsub.s32 5, %v5111
        %v5113 = vrot.slane %v4368, %v5112
        %v5114 = vadd.f32 %v5109, %v5113
        %v5115 = vpack.c.bf16 %v5114, %v5114
        %v5116 = vlaneseq
        %v5117 = vshrl.u32 %v5116, 7
        %v5118 = vsub.s32 6, %v5117
        %v5119 = vrot.slane %v4368, %v5118
        %v5124 = vunpack.c.l.b16 %v4331
        %v5125 = vunpack.c.l.b16 %v4332
        %v5126 = vunpack.c.l.b16 %v4333
        %v5127 = vunpack.c.l.b16 %v4334
        %v5128 = vpack.c.b16 %v5125, %v5124
        %v5129 = vpack.c.b16 %v5127, %v5126
        %v5133 = vsel %vm677, %v5115, 0
        %5135 = vmatprep.subr.bf16.mxu0 0
        %5136 = vmatpush1.bf16.msra.mxu0 %v5128
        %5137 = vmatprep.subr.bf16.mxu0 0
        %5138 = vmatpush1.bf16.msra.mxu0 %v5129
        %5139 = vmatprep.subr.bf16.mxu0 0
        %5140 = vmatpush1.bf16.msra.mxu0 0
        %5141 = vmatprep.subr.bf16.mxu0 0
        %5142 = vmatpush1.bf16.msra.mxu0 0
        %5143 = vmatprep.subr.bf16.mxu0 0
        %5144 = vmatpush1.bf16.msra.mxu0 0
        %5145 = vmatprep.subr.bf16.mxu0 0
        %5146 = vmatpush1.bf16.msra.mxu0 0
        %5147 = vmatprep.subr.bf16.mxu0 0
        %5148 = vmatpush1.bf16.msra.mxu0 0
        %5149 = vmatprep.subr.bf16.mxu0 0
        %5150 = vmatpush1.bf16.msra.mxu0 0
        %5151 = vmatprep.subr.bf16.mxu0 0
        %5152 = vmatpush1.bf16.msra.mxu0 0
        %5153 = vmatprep.subr.bf16.mxu0 0
        %5154 = vmatpush1.bf16.msra.mxu0 0
        %5155 = vmatprep.subr.bf16.mxu0 0
        %5156 = vmatpush1.bf16.msra.mxu0 0
        %5157 = vmatprep.subr.bf16.mxu0 0
        %5158 = vmatpush1.bf16.msra.mxu0 0
        %5159 = vmatprep.subr.bf16.mxu0 0
        %5160 = vmatpush1.bf16.msra.mxu0 0
        %5161 = vmatprep.subr.bf16.mxu0 0
        %5162 = vmatpush1.bf16.msra.mxu0 0
        %5163 = vmatprep.subr.bf16.mxu0 0
        %5164 = vmatpush1.bf16.msra.mxu0 0
        %5165 = vmatprep.subr.bf16.mxu0 0
        %5166 = vmatpush1.bf16.msra.mxu0 0
        %5167 = vmatprep.mubr.bf16.mxu0 0
        %5168 = vmatmul.mubr.bf16.gmra.mrb[0].mxu0 %v5133
        %v5169 = vpop.f32.mrb[0].mxu0
        %v5170 = vadd.f32 %v5119, %v5169
        %v5171 = vpop.f32.mrb[0].mxu0
        %v5172 = vpop.f32.mrb[0].mxu0
        %v5173 = vpop.f32.mrb[0].mxu0
        %5174 = vdwg.mxu0
        %v5175 = vlaneseq
        %v5176 = vshrl.u32 %v5175, 7
        %v5177 = vsub.s32 7, %v5176
        %v5178 = vrot.slane %v4368, %v5177
        %v5183 = vunpack.c.l.b16 %v4336
        %v5184 = vunpack.c.l.b16 %v4337
        %v5185 = vunpack.c.l.b16 %v4338
        %v5186 = vunpack.c.l.b16 %v4339
        %v5187 = vpack.c.b16 %v5184, %v5183
        %v5188 = vpack.c.b16 %v5186, %v5185
        %5191 = vmatprep.subr.bf16.mxu0 0
        %5192 = vmatpush1.bf16.msra.mxu0 %v5187
        %5193 = vmatprep.subr.bf16.mxu0 0
        %5194 = vmatpush1.bf16.msra.mxu0 %v5188
        %5195 = vmatprep.subr.bf16.mxu0 0
        %5196 = vmatpush1.bf16.msra.mxu0 0
        %5197 = vmatprep.subr.bf16.mxu0 0
        %5198 = vmatpush1.bf16.msra.mxu0 0
        %5199 = vmatprep.subr.bf16.mxu0 0
        %5200 = vmatpush1.bf16.msra.mxu0 0
        %5201 = vmatprep.subr.bf16.mxu0 0
        %5202 = vmatpush1.bf16.msra.mxu0 0
        %5203 = vmatprep.subr.bf16.mxu0 0
        %5204 = vmatpush1.bf16.msra.mxu0 0
        %5205 = vmatprep.subr.bf16.mxu0 0
        %5206 = vmatpush1.bf16.msra.mxu0 0
        %5207 = vmatprep.subr.bf16.mxu0 0
        %5208 = vmatpush1.bf16.msra.mxu0 0
        %5209 = vmatprep.subr.bf16.mxu0 0
        %5210 = vmatpush1.bf16.msra.mxu0 0
        %5211 = vmatprep.subr.bf16.mxu0 0
        %5212 = vmatpush1.bf16.msra.mxu0 0
        %5213 = vmatprep.subr.bf16.mxu0 0
        %5214 = vmatpush1.bf16.msra.mxu0 0
        %5215 = vmatprep.subr.bf16.mxu0 0
        %5216 = vmatpush1.bf16.msra.mxu0 0
        %5217 = vmatprep.subr.bf16.mxu0 0
        %5218 = vmatpush1.bf16.msra.mxu0 0
        %5219 = vmatprep.subr.bf16.mxu0 0
        %5220 = vmatpush1.bf16.msra.mxu0 0
        %5221 = vmatprep.subr.bf16.mxu0 0
        %5222 = vmatpush1.bf16.msra.mxu0 0
        %5223 = vmatprep.mubr.bf16.mxu0 0
        %5224 = vmatmul.mubr.bf16.gmra.mrb[0].mxu0 %v3455
        %v5225 = vpop.f32.mrb[0].mxu0
        %v5226 = vadd.f32 %v5178, %v5225
        %v5227 = vpop.f32.mrb[0].mxu0
        %v5228 = vpop.f32.mrb[0].mxu0
        %v5229 = vpop.f32.mrb[0].mxu0
        %5230 = vdwg.mxu0
        %v5231 = vmul.f32 %v5170, 0.35355338
        %v5232 = vpack.c.bf16 %v5231, %v5231
        %v5233 = vpack.c.bf16 %v5226, %v5226
        %v5235 = vsel %vm768, %v5232, 0
        %v5238 = vsel %vm768, %v5233, 0
        %5240 = vmatprep.subr.bf16.mxu0 0
        %5241 = vmatpush1.bf16.xpose.msra.mxu0 %v5238
        %5242 = vmatprep.subr.bf16.mxu0 0
        %5243 = vmatpush1.bf16.xpose.msra.mxu0 0
        %5244 = vmatprep.subr.bf16.mxu0 0
        %5245 = vmatpush1.bf16.xpose.msra.mxu0 0
        %5246 = vmatprep.subr.bf16.mxu0 0
        %5247 = vmatpush1.bf16.xpose.msra.mxu0 0
        %5248 = vmatprep.subr.bf16.mxu0 0
        %5249 = vmatpush1.bf16.xpose.msra.mxu0 0
        %5250 = vmatprep.subr.bf16.mxu0 0
        %5251 = vmatpush1.bf16.xpose.msra.mxu0 0
        %5252 = vmatprep.subr.bf16.mxu0 0
        %5253 = vmatpush1.bf16.xpose.msra.mxu0 0
        %5254 = vmatprep.subr.bf16.mxu0 0
        %5255 = vmatpush1.bf16.xpose.msra.mxu0 0
        %5256 = vmatprep.subr.bf16.mxu0 0
        %5257 = vmatpush1.bf16.xpose.msra.mxu0 0
        %5258 = vmatprep.subr.bf16.mxu0 0
        %5259 = vmatpush1.bf16.xpose.msra.mxu0 0
        %5260 = vmatprep.subr.bf16.mxu0 0
        %5261 = vmatpush1.bf16.xpose.msra.mxu0 0
        %5262 = vmatprep.subr.bf16.mxu0 0
        %5263 = vmatpush1.bf16.xpose.msra.mxu0 0
        %5264 = vmatprep.subr.bf16.mxu0 0
        %5265 = vmatpush1.bf16.xpose.msra.mxu0 0
        %5266 = vmatprep.subr.bf16.mxu0 0
        %5267 = vmatpush1.bf16.xpose.msra.mxu0 0
        %5268 = vmatprep.subr.bf16.mxu0 0
        %5269 = vmatpush1.bf16.xpose.msra.mxu0 0
        %5270 = vmatprep.subr.bf16.mxu0 0
        %5271 = vmatpush1.bf16.xpose.msra.mxu0 0
        %5272 = vmatprep.mubr.bf16.mxu0 0
        %5273 = vmatmul.mubr.bf16.gmra.mrb[0].mxu0 %v5235
        %v5274 = vpop.f32.mrb[0].mxu0
        %v5275 = vadd.f32 0.0, %v5274
        %v5276 = vpop.f32.mrb[0].mxu0
        %v5277 = vpop.f32.mrb[0].mxu0
        %v5278 = vpop.f32.mrb[0].mxu0
        %5279 = vdwg.mxu0
        %v5280 = vsel %vm768, %v5275, -inf
        %5281 = vmax.xlane.f32.xlu0 %v5280
        %v5282 = vpop.xlane.xlu0 %5281
        %v5283 = vsub.f32 %v5275, %v5282
        %v5284 = vmul.f32 %v5283, 1.442695
        %v5285 = vpow.pop %v5284
        %v5286 = vsel %vm768, %v5285, 0.0
        %5287 = vadd.xlane.f32.xlu0 %v5286
        %v5288 = vpop.xlane.xlu0 %5287
        %v5289 = vrcp.pop %v5288
        %v5290 = vmul.f32 %v5285, %v5289
        %v5291 = vpack.c.bf16 %v5290, %v5290
        %5293 = vrot.lane.b32.xlu0 %v5233, 96
        %v5294 = vpop.permute.xlu0 %5293
        %v5296 = vsel %vm768, %v5291, 0
        %v5299 = vsel %vm832, %v5294, 0
        %5301 = vmatprep.subr.bf16.mxu0 0
        %5302 = vmatpush1.bf16.msra.mxu0 %v5299
        %5303 = vmatprep.subr.bf16.mxu0 0
        %5304 = vmatpush1.bf16.msra.mxu0 0
        %5305 = vmatprep.subr.bf16.mxu0 0
        %5306 = vmatpush1.bf16.msra.mxu0 0
        %5307 = vmatprep.subr.bf16.mxu0 0
        %5308 = vmatpush1.bf16.msra.mxu0 0
        %5309 = vmatprep.subr.bf16.mxu0 0
        %5310 = vmatpush1.bf16.msra.mxu0 0
        %5311 = vmatprep.subr.bf16.mxu0 0
        %5312 = vmatpush1.bf16.msra.mxu0 0
        %5313 = vmatprep.subr.bf16.mxu0 0
        %5314 = vmatpush1.bf16.msra.mxu0 0
        %5315 = vmatprep.subr.bf16.mxu0 0
        %5316 = vmatpush1.bf16.msra.mxu0 0
        %5317 = vmatprep.subr.bf16.mxu0 0
        %5318 = vmatpush1.bf16.msra.mxu0 0
        %5319 = vmatprep.subr.bf16.mxu0 0
        %5320 = vmatpush1.bf16.msra.mxu0 0
        %5321 = vmatprep.subr.bf16.mxu0 0
        %5322 = vmatpush1.bf16.msra.mxu0 0
        %5323 = vmatprep.subr.bf16.mxu0 0
        %5324 = vmatpush1.bf16.msra.mxu0 0
        %5325 = vmatprep.subr.bf16.mxu0 0
        %5326 = vmatpush1.bf16.msra.mxu0 0
        %5327 = vmatprep.subr.bf16.mxu0 0
        %5328 = vmatpush1.bf16.msra.mxu0 0
        %5329 = vmatprep.subr.bf16.mxu0 0
        %5330 = vmatpush1.bf16.msra.mxu0 0
        %5331 = vmatprep.subr.bf16.mxu0 0
        %5332 = vmatpush1.bf16.msra.mxu0 0
        %5333 = vmatprep.mubr.bf16.mxu0 0
        %5334 = vmatmul.mubr.bf16.gmra.mrb[0].mxu0 %v5296
        %v5335 = vpop.f32.mrb[0].mxu0
        %v5336 = vadd.f32 0.0, %v5335
        %v5337 = vpop.f32.mrb[0].mxu0
        %v5338 = vpop.f32.mrb[0].mxu0
        %v5339 = vpop.f32.mrb[0].mxu0
        %5340 = vdwg.mxu0
        %v5341 = vpack.c.bf16 %v5336, %v5336
        %5343 = vrot.lane.b32.xlu0 %v5232, 120
        %v5344 = vpop.permute.xlu0 %5343
        %5345 = vrot.lane.b32.xlu0 %v5233, 120
        %v5346 = vpop.permute.xlu0 %5345
        %v5348 = vsel %vm768, %v5344, 0
        %v5351 = vsel %vm768, %v5346, 0
        %5353 = vmatprep.subr.bf16.mxu0 0
        %5354 = vmatpush1.bf16.xpose.msra.mxu0 %v5351
        %5355 = vmatprep.subr.bf16.mxu0 0
        %5356 = vmatpush1.bf16.xpose.msra.mxu0 0
        %5357 = vmatprep.subr.bf16.mxu0 0
        %5358 = vmatpush1.bf16.xpose.msra.mxu0 0
        %5359 = vmatprep.subr.bf16.mxu0 0
        %5360 = vmatpush1.bf16.xpose.msra.mxu0 0
        %5361 = vmatprep.subr.bf16.mxu0 0
        %5362 = vmatpush1.bf16.xpose.msra.mxu0 0
        %5363 = vmatprep.subr.bf16.mxu0 0
        %5364 = vmatpush1.bf16.xpose.msra.mxu0 0
        %5365 = vmatprep.subr.bf16.mxu0 0
        %5366 = vmatpush1.bf16.xpose.msra.mxu0 0
        %5367 = vmatprep.subr.bf16.mxu0 0
        %5368 = vmatpush1.bf16.xpose.msra.mxu0 0
        %5369 = vmatprep.subr.bf16.mxu0 0
        %5370 = vmatpush1.bf16.xpose.msra.mxu0 0
        %5371 = vmatprep.subr.bf16.mxu0 0
        %5372 = vmatpush1.bf16.xpose.msra.mxu0 0
        %5373 = vmatprep.subr.bf16.mxu0 0
        %5374 = vmatpush1.bf16.xpose.msra.mxu0 0
        %5375 = vmatprep.subr.bf16.mxu0 0
        %5376 = vmatpush1.bf16.xpose.msra.mxu0 0
        %5377 = vmatprep.subr.bf16.mxu0 0
        %5378 = vmatpush1.bf16.xpose.msra.mxu0 0
        %5379 = vmatprep.subr.bf16.mxu0 0
        %5380 = vmatpush1.bf16.xpose.msra.mxu0 0
        %5381 = vmatprep.subr.bf16.mxu0 0
        %5382 = vmatpush1.bf16.xpose.msra.mxu0 0
        %5383 = vmatprep.subr.bf16.mxu0 0
        %5384 = vmatpush1.bf16.xpose.msra.mxu0 0
        %5385 = vmatprep.mubr.bf16.mxu0 0
        %5386 = vmatmul.mubr.bf16.gmra.mrb[0].mxu0 %v5348
        %v5387 = vpop.f32.mrb[0].mxu0
        %v5388 = vadd.f32 0.0, %v5387
        %v5389 = vpop.f32.mrb[0].mxu0
        %v5390 = vpop.f32.mrb[0].mxu0
        %v5391 = vpop.f32.mrb[0].mxu0
        %5392 = vdwg.mxu0
        %v5393 = vsel %vm768, %v5388, -inf
        %5394 = vmax.xlane.f32.xlu0 %v5393
        %v5395 = vpop.xlane.xlu0 %5394
        %v5396 = vsub.f32 %v5388, %v5395
        %v5397 = vmul.f32 %v5396, 1.442695
        %v5398 = vpow.pop %v5397
        %v5399 = vsel %vm768, %v5398, 0.0
        %5400 = vadd.xlane.f32.xlu0 %v5399
        %v5401 = vpop.xlane.xlu0 %5400
        %v5402 = vrcp.pop %v5401
        %v5403 = vmul.f32 %v5398, %v5402
        %v5404 = vpack.c.bf16 %v5403, %v5403
        %5405 = vrot.lane.b32.xlu0 %v5233, 88
        %v5406 = vpop.permute.xlu0 %5405
        %v5408 = vsel %vm768, %v5404, 0
        %v5411 = vsel %vm832, %v5406, 0
        %5413 = vmatprep.subr.bf16.mxu0 0
        %5414 = vmatpush1.bf16.msra.mxu0 %v5411
        %5415 = vmatprep.subr.bf16.mxu0 0
        %5416 = vmatpush1.bf16.msra.mxu0 0
        %5417 = vmatprep.subr.bf16.mxu0 0
        %5418 = vmatpush1.bf16.msra.mxu0 0
        %5419 = vmatprep.subr.bf16.mxu0 0
        %5420 = vmatpush1.bf16.msra.mxu0 0
        %5421 = vmatprep.subr.bf16.mxu0 0
        %5422 = vmatpush1.bf16.msra.mxu0 0
        %5423 = vmatprep.subr.bf16.mxu0 0
        %5424 = vmatpush1.bf16.msra.mxu0 0
        %5425 = vmatprep.subr.bf16.mxu0 0
        %5426 = vmatpush1.bf16.msra.mxu0 0
        %5427 = vmatprep.subr.bf16.mxu0 0
        %5428 = vmatpush1.bf16.msra.mxu0 0
        %5429 = vmatprep.subr.bf16.mxu0 0
        %5430 = vmatpush1.bf16.msra.mxu0 0
        %5431 = vmatprep.subr.bf16.mxu0 0
        %5432 = vmatpush1.bf16.msra.mxu0 0
        %5433 = vmatprep.subr.bf16.mxu0 0
        %5434 = vmatpush1.bf16.msra.mxu0 0
        %5435 = vmatprep.subr.bf16.mxu0 0
        %5436 = vmatpush1.bf16.msra.mxu0 0
        %5437 = vmatprep.subr.bf16.mxu0 0
        %5438 = vmatpush1.bf16.msra.mxu0 0
        %5439 = vmatprep.subr.bf16.mxu0 0
        %5440 = vmatpush1.bf16.msra.mxu0 0
        %5441 = vmatprep.subr.bf16.mxu0 0
        %5442 = vmatpush1.bf16.msra.mxu0 0
        %5443 = vmatprep.subr.bf16.mxu0 0
        %5444 = vmatpush1.bf16.msra.mxu0 0
        %5445 = vmatprep.mubr.bf16.mxu0 0
        %5446 = vmatmul.mubr.bf16.gmra.mrb[0].mxu0 %v5408
        %v5447 = vpop.f32.mrb[0].mxu0
        %v5448 = vadd.f32 0.0, %v5447
        %v5449 = vpop.f32.mrb[0].mxu0
        %v5450 = vpop.f32.mrb[0].mxu0
        %v5451 = vpop.f32.mrb[0].mxu0
        %5452 = vdwg.mxu0
        %v5453 = vpack.c.bf16 %v5448, %v5448
        %v5455 = vsel %vm768, %v5453, 0
        %v5458 = vsel %vm832, %v4342, 0
        %5460 = vmatprep.subr.bf16.mxu0 0
        %5461 = vmatpush1.bf16.msra.mxu0 %v5458
        %5462 = vmatprep.subr.bf16.mxu0 0
        %5463 = vmatpush1.bf16.msra.mxu0 0
        %5464 = vmatprep.subr.bf16.mxu0 0
        %5465 = vmatpush1.bf16.msra.mxu0 0
        %5466 = vmatprep.subr.bf16.mxu0 0
        %5467 = vmatpush1.bf16.msra.mxu0 0
        %5468 = vmatprep.subr.bf16.mxu0 0
        %5469 = vmatpush1.bf16.msra.mxu0 0
        %5470 = vmatprep.subr.bf16.mxu0 0
        %5471 = vmatpush1.bf16.msra.mxu0 0
        %5472 = vmatprep.subr.bf16.mxu0 0
        %5473 = vmatpush1.bf16.msra.mxu0 0
        %5474 = vmatprep.subr.bf16.mxu0 0
        %5475 = vmatpush1.bf16.msra.mxu0 0
        %5476 = vmatprep.subr.bf16.mxu0 0
        %5477 = vmatpush1.bf16.msra.mxu0 0
        %5478 = vmatprep.subr.bf16.mxu0 0
        %5479 = vmatpush1.bf16.msra.mxu0 0
        %5480 = vmatprep.subr.bf16.mxu0 0
        %5481 = vmatpush1.bf16.msra.mxu0 0
        %5482 = vmatprep.subr.bf16.mxu0 0
        %5483 = vmatpush1.bf16.msra.mxu0 0
        %5484 = vmatprep.subr.bf16.mxu0 0
        %5485 = vmatpush1.bf16.msra.mxu0 0
        %5486 = vmatprep.subr.bf16.mxu0 0
        %5487 = vmatpush1.bf16.msra.mxu0 0
        %5488 = vmatprep.subr.bf16.mxu0 0
        %5489 = vmatpush1.bf16.msra.mxu0 0
        %5490 = vmatprep.subr.bf16.mxu0 0
        %5491 = vmatpush1.bf16.msra.mxu0 0
        %5492 = vmatprep.mubr.bf16.mxu0 0
        %5493 = vmatmul.mubr.bf16.gmra.mrb[0].mxu0 %v5455
        %v5494 = vpop.f32.mrb[0].mxu0
        %v5495 = vadd.f32 0.0, %v5494
        %v5496 = vpop.f32.mrb[0].mxu0
        %v5497 = vpop.f32.mrb[0].mxu0
        %v5498 = vpop.f32.mrb[0].mxu0
        %5499 = vdwg.mxu0
        %v5501 = vsel %vm768, %v5341, 0
        %v5504 = vsel %vm832, %v4341, 0
        %5506 = vmatprep.subr.bf16.mxu0 0
        %5507 = vmatpush1.bf16.msra.mxu0 %v5504
        %5508 = vmatprep.subr.bf16.mxu0 0
        %5509 = vmatpush1.bf16.msra.mxu0 0
        %5510 = vmatprep.subr.bf16.mxu0 0
        %5511 = vmatpush1.bf16.msra.mxu0 0
        %5512 = vmatprep.subr.bf16.mxu0 0
        %5513 = vmatpush1.bf16.msra.mxu0 0
        %5514 = vmatprep.subr.bf16.mxu0 0
        %5515 = vmatpush1.bf16.msra.mxu0 0
        %5516 = vmatprep.subr.bf16.mxu0 0
        %5517 = vmatpush1.bf16.msra.mxu0 0
        %5518 = vmatprep.subr.bf16.mxu0 0
        %5519 = vmatpush1.bf16.msra.mxu0 0
        %5520 = vmatprep.subr.bf16.mxu0 0
        %5521 = vmatpush1.bf16.msra.mxu0 0
        %5522 = vmatprep.subr.bf16.mxu0 0
        %5523 = vmatpush1.bf16.msra.mxu0 0
        %5524 = vmatprep.subr.bf16.mxu0 0
        %5525 = vmatpush1.bf16.msra.mxu0 0
        %5526 = vmatprep.subr.bf16.mxu0 0
        %5527 = vmatpush1.bf16.msra.mxu0 0
        %5528 = vmatprep.subr.bf16.mxu0 0
        %5529 = vmatpush1.bf16.msra.mxu0 0
        %5530 = vmatprep.subr.bf16.mxu0 0
        %5531 = vmatpush1.bf16.msra.mxu0 0
        %5532 = vmatprep.subr.bf16.mxu0 0
        %5533 = vmatpush1.bf16.msra.mxu0 0
        %5534 = vmatprep.subr.bf16.mxu0 0
        %5535 = vmatpush1.bf16.msra.mxu0 0
        %5536 = vmatprep.subr.bf16.mxu0 0
        %5537 = vmatpush1.bf16.msra.mxu0 0
        %5538 = vmatprep.mubr.bf16.mxu0 0
        %5539 = vmatmul.mubr.bf16.gmra.mrb[0].mxu0 %v5501
        %v5540 = vpop.f32.mrb[0].mxu0
        %v5541 = vadd.f32 %v5495, %v5540
        %v5542 = vpop.f32.mrb[0].mxu0
        %v5543 = vpop.f32.mrb[0].mxu0
        %v5544 = vpop.f32.mrb[0].mxu0
        %5545 = vdwg.mxu0
        %5546 = vrot.lane.b32.xlu0 %v5232, 112
        %v5547 = vpop.permute.xlu0 %5546
        %5548 = vrot.lane.b32.xlu0 %v5233, 112
        %v5549 = vpop.permute.xlu0 %5548
        %v5551 = vsel %vm768, %v5547, 0
        %v5554 = vsel %vm768, %v5549, 0
        %5556 = vmatprep.subr.bf16.mxu0 0
        %5557 = vmatpush1.bf16.xpose.msra.mxu0 %v5554
        %5558 = vmatprep.subr.bf16.mxu0 0
        %5559 = vmatpush1.bf16.xpose.msra.mxu0 0
        %5560 = vmatprep.subr.bf16.mxu0 0
        %5561 = vmatpush1.bf16.xpose.msra.mxu0 0
        %5562 = vmatprep.subr.bf16.mxu0 0
        %5563 = vmatpush1.bf16.xpose.msra.mxu0 0
        %5564 = vmatprep.subr.bf16.mxu0 0
        %5565 = vmatpush1.bf16.xpose.msra.mxu0 0
        %5566 = vmatprep.subr.bf16.mxu0 0
        %5567 = vmatpush1.bf16.xpose.msra.mxu0 0
        %5568 = vmatprep.subr.bf16.mxu0 0
        %5569 = vmatpush1.bf16.xpose.msra.mxu0 0
        %5570 = vmatprep.subr.bf16.mxu0 0
        %5571 = vmatpush1.bf16.xpose.msra.mxu0 0
        %5572 = vmatprep.subr.bf16.mxu0 0
        %5573 = vmatpush1.bf16.xpose.msra.mxu0 0
        %5574 = vmatprep.subr.bf16.mxu0 0
        %5575 = vmatpush1.bf16.xpose.msra.mxu0 0
        %5576 = vmatprep.subr.bf16.mxu0 0
        %5577 = vmatpush1.bf16.xpose.msra.mxu0 0
        %5578 = vmatprep.subr.bf16.mxu0 0
        %5579 = vmatpush1.bf16.xpose.msra.mxu0 0
        %5580 = vmatprep.subr.bf16.mxu0 0
        %5581 = vmatpush1.bf16.xpose.msra.mxu0 0
        %5582 = vmatprep.subr.bf16.mxu0 0
        %5583 = vmatpush1.bf16.xpose.msra.mxu0 0
        %5584 = vmatprep.subr.bf16.mxu0 0
        %5585 = vmatpush1.bf16.xpose.msra.mxu0 0
        %5586 = vmatprep.subr.bf16.mxu0 0
        %5587 = vmatpush1.bf16.xpose.msra.mxu0 0
        %5588 = vmatprep.mubr.bf16.mxu0 0
        %5589 = vmatmul.mubr.bf16.gmra.mrb[0].mxu0 %v5551
        %v5590 = vpop.f32.mrb[0].mxu0
        %v5591 = vadd.f32 0.0, %v5590
        %v5592 = vpop.f32.mrb[0].mxu0
        %v5593 = vpop.f32.mrb[0].mxu0
        %v5594 = vpop.f32.mrb[0].mxu0
        %5595 = vdwg.mxu0
        %v5596 = vsel %vm768, %v5591, -inf
        %5597 = vmax.xlane.f32.xlu0 %v5596
        %v5598 = vpop.xlane.xlu0 %5597
        %v5599 = vsub.f32 %v5591, %v5598
        %v5600 = vmul.f32 %v5599, 1.442695
        %v5601 = vpow.pop %v5600
        %v5602 = vsel %vm768, %v5601, 0.0
        %5603 = vadd.xlane.f32.xlu0 %v5602
        %v5604 = vpop.xlane.xlu0 %5603
        %v5605 = vrcp.pop %v5604
        %v5606 = vmul.f32 %v5601, %v5605
        %v5607 = vpack.c.bf16 %v5606, %v5606
        %5608 = vrot.lane.b32.xlu0 %v5233, 80
        %v5609 = vpop.permute.xlu0 %5608
        %v5611 = vsel %vm768, %v5607, 0
        %v5614 = vsel %vm832, %v5609, 0
        %5616 = vmatprep.subr.bf16.mxu0 0
        %5617 = vmatpush1.bf16.msra.mxu0 %v5614
        %5618 = vmatprep.subr.bf16.mxu0 0
        %5619 = vmatpush1.bf16.msra.mxu0 0
        %5620 = vmatprep.subr.bf16.mxu0 0
        %5621 = vmatpush1.bf16.msra.mxu0 0
        %5622 = vmatprep.subr.bf16.mxu0 0
        %5623 = vmatpush1.bf16.msra.mxu0 0
        %5624 = vmatprep.subr.bf16.mxu0 0
        %5625 = vmatpush1.bf16.msra.mxu0 0
        %5626 = vmatprep.subr.bf16.mxu0 0
        %5627 = vmatpush1.bf16.msra.mxu0 0
        %5628 = vmatprep.subr.bf16.mxu0 0
        %5629 = vmatpush1.bf16.msra.mxu0 0
        %5630 = vmatprep.subr.bf16.mxu0 0
        %5631 = vmatpush1.bf16.msra.mxu0 0
        %5632 = vmatprep.subr.bf16.mxu0 0
        %5633 = vmatpush1.bf16.msra.mxu0 0
        %5634 = vmatprep.subr.bf16.mxu0 0
        %5635 = vmatpush1.bf16.msra.mxu0 0
        %5636 = vmatprep.subr.bf16.mxu0 0
        %5637 = vmatpush1.bf16.msra.mxu0 0
        %5638 = vmatprep.subr.bf16.mxu0 0
        %5639 = vmatpush1.bf16.msra.mxu0 0
        %5640 = vmatprep.subr.bf16.mxu0 0
        %5641 = vmatpush1.bf16.msra.mxu0 0
        %5642 = vmatprep.subr.bf16.mxu0 0
        %5643 = vmatpush1.bf16.msra.mxu0 0
        %5644 = vmatprep.subr.bf16.mxu0 0
        %5645 = vmatpush1.bf16.msra.mxu0 0
        %5646 = vmatprep.subr.bf16.mxu0 0
        %5647 = vmatpush1.bf16.msra.mxu0 0
        %5648 = vmatprep.mubr.bf16.mxu0 0
        %5649 = vmatmul.mubr.bf16.gmra.mrb[0].mxu0 %v5611
        %v5650 = vpop.f32.mrb[0].mxu0
        %v5651 = vadd.f32 0.0, %v5650
        %v5652 = vpop.f32.mrb[0].mxu0
        %v5653 = vpop.f32.mrb[0].mxu0
        %v5654 = vpop.f32.mrb[0].mxu0
        %5655 = vdwg.mxu0
        %v5656 = vpack.c.bf16 %v5651, %v5651
        %v5658 = vsel %vm768, %v5656, 0
        %v5661 = vsel %vm832, %v4343, 0
        %5663 = vmatprep.subr.bf16.mxu0 0
        %5664 = vmatpush1.bf16.msra.mxu0 %v5661
        %5665 = vmatprep.subr.bf16.mxu0 0
        %5666 = vmatpush1.bf16.msra.mxu0 0
        %5667 = vmatprep.subr.bf16.mxu0 0
        %5668 = vmatpush1.bf16.msra.mxu0 0
        %5669 = vmatprep.subr.bf16.mxu0 0
        %5670 = vmatpush1.bf16.msra.mxu0 0
        %5671 = vmatprep.subr.bf16.mxu0 0
        %5672 = vmatpush1.bf16.msra.mxu0 0
        %5673 = vmatprep.subr.bf16.mxu0 0
        %5674 = vmatpush1.bf16.msra.mxu0 0
        %5675 = vmatprep.subr.bf16.mxu0 0
        %5676 = vmatpush1.bf16.msra.mxu0 0
        %5677 = vmatprep.subr.bf16.mxu0 0
        %5678 = vmatpush1.bf16.msra.mxu0 0
        %5679 = vmatprep.subr.bf16.mxu0 0
        %5680 = vmatpush1.bf16.msra.mxu0 0
        %5681 = vmatprep.subr.bf16.mxu0 0
        %5682 = vmatpush1.bf16.msra.mxu0 0
        %5683 = vmatprep.subr.bf16.mxu0 0
        %5684 = vmatpush1.bf16.msra.mxu0 0
        %5685 = vmatprep.subr.bf16.mxu0 0
        %5686 = vmatpush1.bf16.msra.mxu0 0
        %5687 = vmatprep.subr.bf16.mxu0 0
        %5688 = vmatpush1.bf16.msra.mxu0 0
        %5689 = vmatprep.subr.bf16.mxu0 0
        %5690 = vmatpush1.bf16.msra.mxu0 0
        %5691 = vmatprep.subr.bf16.mxu0 0
        %5692 = vmatpush1.bf16.msra.mxu0 0
        %5693 = vmatprep.subr.bf16.mxu0 0
        %5694 = vmatpush1.bf16.msra.mxu0 0
        %5695 = vmatprep.mubr.bf16.mxu0 0
        %5696 = vmatmul.mubr.bf16.gmra.mrb[0].mxu0 %v5658
        %v5697 = vpop.f32.mrb[0].mxu0
        %v5698 = vadd.f32 0.0, %v5697
        %v5699 = vpop.f32.mrb[0].mxu0
        %v5700 = vpop.f32.mrb[0].mxu0
        %v5701 = vpop.f32.mrb[0].mxu0
        %5702 = vdwg.mxu0
        %v5703 = vadd.f32 %v5541, %v5698
        %5704 = vrot.lane.b32.xlu0 %v5232, 104
        %v5705 = vpop.permute.xlu0 %5704
        %5706 = vrot.lane.b32.xlu0 %v5233, 104
        %v5707 = vpop.permute.xlu0 %5706
        %v5709 = vsel %vm768, %v5705, 0
        %v5712 = vsel %vm768, %v5707, 0
        %5714 = vmatprep.subr.bf16.mxu0 0
        %5715 = vmatpush1.bf16.xpose.msra.mxu0 %v5712
        %5716 = vmatprep.subr.bf16.mxu0 0
        %5717 = vmatpush1.bf16.xpose.msra.mxu0 0
        %5718 = vmatprep.subr.bf16.mxu0 0
        %5719 = vmatpush1.bf16.xpose.msra.mxu0 0
        %5720 = vmatprep.subr.bf16.mxu0 0
        %5721 = vmatpush1.bf16.xpose.msra.mxu0 0
        %5722 = vmatprep.subr.bf16.mxu0 0
        %5723 = vmatpush1.bf16.xpose.msra.mxu0 0
        %5724 = vmatprep.subr.bf16.mxu0 0
        %5725 = vmatpush1.bf16.xpose.msra.mxu0 0
        %5726 = vmatprep.subr.bf16.mxu0 0
        %5727 = vmatpush1.bf16.xpose.msra.mxu0 0
        %5728 = vmatprep.subr.bf16.mxu0 0
        %5729 = vmatpush1.bf16.xpose.msra.mxu0 0
        %5730 = vmatprep.subr.bf16.mxu0 0
        %5731 = vmatpush1.bf16.xpose.msra.mxu0 0
        %5732 = vmatprep.subr.bf16.mxu0 0
        %5733 = vmatpush1.bf16.xpose.msra.mxu0 0
        %5734 = vmatprep.subr.bf16.mxu0 0
        %5735 = vmatpush1.bf16.xpose.msra.mxu0 0
        %5736 = vmatprep.subr.bf16.mxu0 0
        %5737 = vmatpush1.bf16.xpose.msra.mxu0 0
        %5738 = vmatprep.subr.bf16.mxu0 0
        %5739 = vmatpush1.bf16.xpose.msra.mxu0 0
        %5740 = vmatprep.subr.bf16.mxu0 0
        %5741 = vmatpush1.bf16.xpose.msra.mxu0 0
        %5742 = vmatprep.subr.bf16.mxu0 0
        %5743 = vmatpush1.bf16.xpose.msra.mxu0 0
        %5744 = vmatprep.subr.bf16.mxu0 0
        %5745 = vmatpush1.bf16.xpose.msra.mxu0 0
        %5746 = vmatprep.mubr.bf16.mxu0 0
        %5747 = vmatmul.mubr.bf16.gmra.mrb[0].mxu0 %v5709
        %v5748 = vpop.f32.mrb[0].mxu0
        %v5749 = vadd.f32 0.0, %v5748
        %v5750 = vpop.f32.mrb[0].mxu0
        %v5751 = vpop.f32.mrb[0].mxu0
        %v5752 = vpop.f32.mrb[0].mxu0
        %5753 = vdwg.mxu0
        %v5754 = vsel %vm768, %v5749, -inf
        %5755 = vmax.xlane.f32.xlu0 %v5754
        %v5756 = vpop.xlane.xlu0 %5755
        %v5757 = vsub.f32 %v5749, %v5756
        %v5758 = vmul.f32 %v5757, 1.442695
        %v5759 = vpow.pop %v5758
        %v5760 = vsel %vm768, %v5759, 0.0
        %5761 = vadd.xlane.f32.xlu0 %v5760
        %v5762 = vpop.xlane.xlu0 %5761
        %v5763 = vrcp.pop %v5762
        %v5764 = vmul.f32 %v5759, %v5763
        %v5765 = vpack.c.bf16 %v5764, %v5764
        %5766 = vrot.lane.b32.xlu0 %v5233, 72
        %v5767 = vpop.permute.xlu0 %5766
        %v5769 = vsel %vm768, %v5765, 0
        %v5772 = vsel %vm832, %v5767, 0
        %5774 = vmatprep.subr.bf16.mxu0 0
        %5775 = vmatpush1.bf16.msra.mxu0 %v5772
        %5776 = vmatprep.subr.bf16.mxu0 0
        %5777 = vmatpush1.bf16.msra.mxu0 0
        %5778 = vmatprep.subr.bf16.mxu0 0
        %5779 = vmatpush1.bf16.msra.mxu0 0
        %5780 = vmatprep.subr.bf16.mxu0 0
        %5781 = vmatpush1.bf16.msra.mxu0 0
        %5782 = vmatprep.subr.bf16.mxu0 0
        %5783 = vmatpush1.bf16.msra.mxu0 0
        %5784 = vmatprep.subr.bf16.mxu0 0
        %5785 = vmatpush1.bf16.msra.mxu0 0
        %5786 = vmatprep.subr.bf16.mxu0 0
        %5787 = vmatpush1.bf16.msra.mxu0 0
        %5788 = vmatprep.subr.bf16.mxu0 0
        %5789 = vmatpush1.bf16.msra.mxu0 0
        %5790 = vmatprep.subr.bf16.mxu0 0
        %5791 = vmatpush1.bf16.msra.mxu0 0
        %5792 = vmatprep.subr.bf16.mxu0 0
        %5793 = vmatpush1.bf16.msra.mxu0 0
        %5794 = vmatprep.subr.bf16.mxu0 0
        %5795 = vmatpush1.bf16.msra.mxu0 0
        %5796 = vmatprep.subr.bf16.mxu0 0
        %5797 = vmatpush1.bf16.msra.mxu0 0
        %5798 = vmatprep.subr.bf16.mxu0 0
        %5799 = vmatpush1.bf16.msra.mxu0 0
        %5800 = vmatprep.subr.bf16.mxu0 0
        %5801 = vmatpush1.bf16.msra.mxu0 0
        %5802 = vmatprep.subr.bf16.mxu0 0
        %5803 = vmatpush1.bf16.msra.mxu0 0
        %5804 = vmatprep.subr.bf16.mxu0 0
        %5805 = vmatpush1.bf16.msra.mxu0 0
        %5806 = vmatprep.mubr.bf16.mxu0 0
        %5807 = vmatmul.mubr.bf16.gmra.mrb[0].mxu0 %v5769
        %v5808 = vpop.f32.mrb[0].mxu0
        %v5809 = vadd.f32 0.0, %v5808
        %v5810 = vpop.f32.mrb[0].mxu0
        %v5811 = vpop.f32.mrb[0].mxu0
        %v5812 = vpop.f32.mrb[0].mxu0
        %5813 = vdwg.mxu0
        %v5814 = vpack.c.bf16 %v5809, %v5809
        %v5816 = vsel %vm768, %v5814, 0
        %v5819 = vsel %vm832, %v4344, 0
        %5821 = vmatprep.subr.bf16.mxu0 0
        %5822 = vmatpush1.bf16.msra.mxu0 %v5819
        %5823 = vmatprep.subr.bf16.mxu0 0
        %5824 = vmatpush1.bf16.msra.mxu0 0
        %5825 = vmatprep.subr.bf16.mxu0 0
        %5826 = vmatpush1.bf16.msra.mxu0 0
        %5827 = vmatprep.subr.bf16.mxu0 0
        %5828 = vmatpush1.bf16.msra.mxu0 0
        %5829 = vmatprep.subr.bf16.mxu0 0
        %5830 = vmatpush1.bf16.msra.mxu0 0
        %5831 = vmatprep.subr.bf16.mxu0 0
        %5832 = vmatpush1.bf16.msra.mxu0 0
        %5833 = vmatprep.subr.bf16.mxu0 0
        %5834 = vmatpush1.bf16.msra.mxu0 0
        %5835 = vmatprep.subr.bf16.mxu0 0
        %5836 = vmatpush1.bf16.msra.mxu0 0
        %5837 = vmatprep.subr.bf16.mxu0 0
        %5838 = vmatpush1.bf16.msra.mxu0 0
        %5839 = vmatprep.subr.bf16.mxu0 0
        %5840 = vmatpush1.bf16.msra.mxu0 0
        %5841 = vmatprep.subr.bf16.mxu0 0
        %5842 = vmatpush1.bf16.msra.mxu0 0
        %5843 = vmatprep.subr.bf16.mxu0 0
        %5844 = vmatpush1.bf16.msra.mxu0 0
        %5845 = vmatprep.subr.bf16.mxu0 0
        %5846 = vmatpush1.bf16.msra.mxu0 0
        %5847 = vmatprep.subr.bf16.mxu0 0
        %5848 = vmatpush1.bf16.msra.mxu0 0
        %5849 = vmatprep.subr.bf16.mxu0 0
        %5850 = vmatpush1.bf16.msra.mxu0 0
        %5851 = vmatprep.subr.bf16.mxu0 0
        %5852 = vmatpush1.bf16.msra.mxu0 0
        %5853 = vmatprep.mubr.bf16.mxu0 0
        %5854 = vmatmul.mubr.bf16.gmra.mrb[0].mxu0 %v5816
        %v5855 = vpop.f32.mrb[0].mxu0
        %v5856 = vadd.f32 0.0, %v5855
        %v5857 = vpop.f32.mrb[0].mxu0
        %v5858 = vpop.f32.mrb[0].mxu0
        %v5859 = vpop.f32.mrb[0].mxu0
        %5860 = vdwg.mxu0
        %v5861 = vadd.f32 %v5703, %v5856
        %v5862 = vadd.f32 %v5091, %v5861
        %v5863 = vlaneseq
        %v5864 = vshrl.u32 %v5863, 7
        %v5865 = vsub.s32 0, %v5864
        %v5866 = vrot.slane %v4369, %v5865
        %v5867 = vadd.f32 %v5862, %v5866
        %v5868 = vsel %vm677, %v5867, 0.0
        %5869 = vadd.xlane.f32.xlu0 %v5868
        %v5870 = vpop.xlane.xlu0 %5869
        %v5871 = vmul.f32 %v5870, %v681
        %v5872 = vsub.f32 %v5867, %v5871
        %v5873 = vmul.f32 %v5872, %v5872
        %v5874 = vsel %vm677, %v5873, 0.0
        %5875 = vadd.xlane.f32.xlu0 %v5874
        %v5876 = vpop.xlane.xlu0 %5875
        %v5877 = vmul.f32 %v5876, %v681
        %v5878 = vadd.f32 %v5877, 1e-05
        %v5879 = vrsqrt.pop %v5878
        %v5880 = vmul.f32 %v5872, %v5879
        %v5881 = vlaneseq
        %v5882 = vshrl.u32 %v5881, 7
        %v5883 = vsub.s32 1, %v5882
        %v5884 = vrot.slane %v4369, %v5883
        %v5885 = vmul.f32 %v5880, %v5884
        %v5886 = vlaneseq
        %v5887 = vshrl.u32 %v5886, 7
        %v5888 = vsub.s32 2, %v5887
        %v5889 = vrot.slane %v4369, %v5888
        %v5890 = vadd.f32 %v5885, %v5889
        %v5891 = vpack.c.bf16 %v5890, %v5890
        %v5892 = vlaneseq
        %v5893 = vshrl.u32 %v5892, 7
        %v5894 = vsub.s32 3, %v5893
        %v5895 = vrot.slane %v4369, %v5894
        %v5900 = vunpack.c.l.b16 %v4346
        %v5901 = vunpack.c.l.b16 %v4347
        %v5902 = vunpack.c.l.b16 %v4348
        %v5903 = vunpack.c.l.b16 %v4349
        %v5904 = vpack.c.b16 %v5901, %v5900
        %v5905 = vpack.c.b16 %v5903, %v5902
        %v5909 = vsel %vm677, %v5891, 0
        %5911 = vmatprep.subr.bf16.mxu0 0
        %5912 = vmatpush1.bf16.msra.mxu0 %v5904
        %5913 = vmatprep.subr.bf16.mxu0 0
        %5914 = vmatpush1.bf16.msra.mxu0 %v5905
        %5915 = vmatprep.subr.bf16.mxu0 0
        %5916 = vmatpush1.bf16.msra.mxu0 0
        %5917 = vmatprep.subr.bf16.mxu0 0
        %5918 = vmatpush1.bf16.msra.mxu0 0
        %5919 = vmatprep.subr.bf16.mxu0 0
        %5920 = vmatpush1.bf16.msra.mxu0 0
        %5921 = vmatprep.subr.bf16.mxu0 0
        %5922 = vmatpush1.bf16.msra.mxu0 0
        %5923 = vmatprep.subr.bf16.mxu0 0
        %5924 = vmatpush1.bf16.msra.mxu0 0
        %5925 = vmatprep.subr.bf16.mxu0 0
        %5926 = vmatpush1.bf16.msra.mxu0 0
        %5927 = vmatprep.subr.bf16.mxu0 0
        %5928 = vmatpush1.bf16.msra.mxu0 0
        %5929 = vmatprep.subr.bf16.mxu0 0
        %5930 = vmatpush1.bf16.msra.mxu0 0
        %5931 = vmatprep.subr.bf16.mxu0 0
        %5932 = vmatpush1.bf16.msra.mxu0 0
        %5933 = vmatprep.subr.bf16.mxu0 0
        %5934 = vmatpush1.bf16.msra.mxu0 0
        %5935 = vmatprep.subr.bf16.mxu0 0
        %5936 = vmatpush1.bf16.msra.mxu0 0
        %5937 = vmatprep.subr.bf16.mxu0 0
        %5938 = vmatpush1.bf16.msra.mxu0 0
        %5939 = vmatprep.subr.bf16.mxu0 0
        %5940 = vmatpush1.bf16.msra.mxu0 0
        %5941 = vmatprep.subr.bf16.mxu0 0
        %5942 = vmatpush1.bf16.msra.mxu0 0
        %5943 = vmatprep.mubr.bf16.mxu0 0
        %5944 = vmatmul.mubr.bf16.gmra.mrb[0].mxu0 %v5909
        %v5945 = vpop.f32.mrb[0].mxu0
        %v5946 = vadd.f32 %v5895, %v5945
        %v5947 = vpop.f32.mrb[0].mxu0
        %v5948 = vpop.f32.mrb[0].mxu0
        %v5949 = vpop.f32.mrb[0].mxu0
        %5950 = vdwg.mxu0
        %v5951 = vmul.f32 %v5946, 0.5
        %v5952 = vmul.f32 %v5946, 0.044715
        %v5953 = vmul.f32 %v5952, %v5946
        %v5954 = vmul.f32 %v5953, %v5946
        %v5955 = vadd.f32 %v5946, %v5954
        %v5956 = vmul.f32 %v5955, 0.7978846
        %v5957 = vtanh.pop %v5956
        %v5958 = vadd.f32 %v5957, 1.0
        %v5959 = vmul.f32 %v5951, %v5958
        %v5960 = vpack.c.bf16 %v5959, %v5959
        %v5961 = vlaneseq
        %v5962 = vshrl.u32 %v5961, 7
        %v5963 = vsub.s32 4, %v5962
        %v5964 = vrot.slane %v4369, %v5963
        %v5981 = vunpack.c.l.b16 %v4351
        %v5982 = vunpack.c.l.b16 %v4352
        %v5983 = vunpack.c.l.b16 %v4353
        %v5984 = vunpack.c.l.b16 %v4354
        %v5985 = vunpack.c.l.b16 %v4355
        %v5986 = vunpack.c.l.b16 %v4356
        %v5987 = vunpack.c.l.b16 %v4357
        %v5988 = vunpack.c.l.b16 %v4358
        %v5989 = vunpack.c.l.b16 %v4359
        %v5990 = vunpack.c.l.b16 %v4360
        %v5991 = vunpack.c.l.b16 %v4361
        %v5992 = vunpack.c.l.b16 %v4362
        %v5993 = vunpack.c.l.b16 %v4363
        %v5994 = vunpack.c.l.b16 %v4364
        %v5995 = vunpack.c.l.b16 %v4365
        %v5996 = vunpack.c.l.b16 %v4366
        %v5997 = vpack.c.b16 %v5982, %v5981
        %v5998 = vpack.c.b16 %v5984, %v5983
        %v5999 = vpack.c.b16 %v5986, %v5985
        %v6000 = vpack.c.b16 %v5988, %v5987
        %v6001 = vpack.c.b16 %v5990, %v5989
        %v6002 = vpack.c.b16 %v5992, %v5991
        %v6003 = vpack.c.b16 %v5994, %v5993
        %v6004 = vpack.c.b16 %v5996, %v5995
        %6013 = vmatprep.subr.bf16.mxu0 0
        %6014 = vmatpush1.bf16.msra.mxu0 %v5997
        %6015 = vmatprep.subr.bf16.mxu0 0
        %6016 = vmatpush1.bf16.msra.mxu0 %v5998
        %6017 = vmatprep.subr.bf16.mxu0 0
        %6018 = vmatpush1.bf16.msra.mxu0 %v5999
        %6019 = vmatprep.subr.bf16.mxu0 0
        %6020 = vmatpush1.bf16.msra.mxu0 %v6000
        %6021 = vmatprep.subr.bf16.mxu0 0
        %6022 = vmatpush1.bf16.msra.mxu0 %v6001
        %6023 = vmatprep.subr.bf16.mxu0 0
        %6024 = vmatpush1.bf16.msra.mxu0 %v6002
        %6025 = vmatprep.subr.bf16.mxu0 0
        %6026 = vmatpush1.bf16.msra.mxu0 %v6003
        %6027 = vmatprep.subr.bf16.mxu0 0
        %6028 = vmatpush1.bf16.msra.mxu0 %v6004
        %6029 = vmatprep.subr.bf16.mxu0 0
        %6030 = vmatpush1.bf16.msra.mxu0 0
        %6031 = vmatprep.subr.bf16.mxu0 0
        %6032 = vmatpush1.bf16.msra.mxu0 0
        %6033 = vmatprep.subr.bf16.mxu0 0
        %6034 = vmatpush1.bf16.msra.mxu0 0
        %6035 = vmatprep.subr.bf16.mxu0 0
        %6036 = vmatpush1.bf16.msra.mxu0 0
        %6037 = vmatprep.subr.bf16.mxu0 0
        %6038 = vmatpush1.bf16.msra.mxu0 0
        %6039 = vmatprep.subr.bf16.mxu0 0
        %6040 = vmatpush1.bf16.msra.mxu0 0
        %6041 = vmatprep.subr.bf16.mxu0 0
        %6042 = vmatpush1.bf16.msra.mxu0 0
        %6043 = vmatprep.subr.bf16.mxu0 0
        %6044 = vmatpush1.bf16.msra.mxu0 0
        %6045 = vmatprep.mubr.bf16.mxu0 0
        %6046 = vmatmul.mubr.bf16.gmra.mrb[0].mxu0 %v5960
        %v6047 = vpop.f32.mrb[0].mxu0
        %v6048 = vadd.f32 %v5964, %v6047
        %v6049 = vpop.f32.mrb[0].mxu0
        %v6050 = vpop.f32.mrb[0].mxu0
        %v6051 = vpop.f32.mrb[0].mxu0
        %6052 = vdwg.mxu0
        %v6053 = vadd.f32 %v5867, %v6048
        %v6054 = vsel %vm677, %v6053, 0.0
        %6055 = vadd.xlane.f32.xlu0 %v6054
        %v6056 = vpop.xlane.xlu0 %6055
        %v6057 = vmul.f32 %v6056, %v681
        %v6058 = vsub.f32 %v6053, %v6057
        %v6059 = vmul.f32 %v6058, %v6058
        %v6060 = vsel %vm677, %v6059, 0.0
        %6061 = vadd.xlane.f32.xlu0 %v6060
        %v6062 = vpop.xlane.xlu0 %6061
        %v6063 = vmul.f32 %v6062, %v681
        %v6064 = vadd.f32 %v6063, 1e-05
        %v6065 = vrsqrt.pop %v6064
        %v6066 = vmul.f32 %v6058, %v6065
        %v6067 = vlaneseq
        %v6068 = vshrl.u32 %v6067, 7
        %v6069 = vsub.s32 2, %v6068
        %v6070 = vrot.slane %v589, %v6069
        %v6071 = vmul.f32 %v6066, %v6070
        %v6072 = vlaneseq
        %v6073 = vshrl.u32 %v6072, 7
        %v6074 = vsub.s32 3, %v6073
        %v6075 = vrot.slane %v589, %v6074
        %v6076 = vadd.f32 %v6071, %v6075
        %6077 = vst.msk [vmem:[%s579] sm:$0xff] %vm677, %v6076
        %s6078 = sand.u32 %s428, 1
        %s6079 = scalar_lea.sflag [#allocation3], %s6078
        %s6080 = sand.u32 %s428, 1
        %s6081 = smul.addr %s6080, 8
        %s6082 = scalar_lea.vmem [#allocation2], %s6081
        // Predicated region
        $region93: #{transformer_with_graph2vec_forward.1} parent=91 // pred_check
          %p6083 = pneg %p438
        $region94: #{transformer_with_graph2vec_forward.1} parent=91 // pred_check_branch
          %6085 = sbr.rel (%p6083) target = $region96
        $region95: #{transformer_with_graph2vec_forward.1} parent=91 // pred_region
          %s6087 = ssub.s32 128, 128
          %6088 = vsyncadd %s6079, %s6087
          %s6089 = smul.addr %s32, 128
          %s6090 = scalar_lea.hbm %s18, %s6089
          %s6092 = sshll.u32 %s6082, 4
          %s6093 = int_to_ptr.vmem [resolvable:$true] %s6092
          %6095 = dma.vmem_to_hbm [thread:$0]  %s6093, 128, %s6090, %s6079
        $region96: #{transformer_with_graph2vec_forward.1} parent=91 // pred_fallthru
          _
      $region92: #{transformer_with_graph2vec_forward.1} parent=5 // pred_fallthru
        _
      %p6096 = scmp.le.s32.totalorder 2, %s27
      // Predicated region
      $region97: #{transformer_with_graph2vec_forward.1} parent=5 // pred_check
        %p6097 = pneg %p6096
      $region98: #{transformer_with_graph2vec_forward.1} parent=5 // pred_check_branch
        %6099 = sbr.rel (%p6097) target = $region100
      $region99: #{transformer_with_graph2vec_forward.1} parent=5 // pred_region
        %s6100 = ssub.s32 %s27, 2
        // Predicated region
        $region101: #{transformer_with_graph2vec_forward.1} parent=99 // pred_check
          %p6101 = pneg %p444
        $region102: #{transformer_with_graph2vec_forward.1} parent=99 // pred_check_branch
          %6103 = sbr.rel (%p6101) target = $region104
        $region103: #{transformer_with_graph2vec_forward.1} parent=99 // pred_region
          %s6104 = sand.u32 %s429, 1
          %s6105 = scalar_lea.sflag [#allocation3], %s6104
          %s6106 = sand.u32 %s429, 1
          %s6107 = smul.addr %s6106, 8
          %s6108 = scalar_lea.vmem [#allocation2], %s6107
          %6109 = dma.done %s6105, 128
        $region104: #{transformer_with_graph2vec_forward.1} parent=99 // pred_fallthru
          _
      $region100: #{transformer_with_graph2vec_forward.1} parent=5 // pred_fallthru
        _
    $region6: #{transformer_with_graph2vec_forward.1} parent=1 // loop_footer
      %s31 = sadd.s32 1, %s27
    $region7: #{transformer_with_graph2vec_forward.1} parent=1 // loop_footer_branch
      %26 = sbr.rel target = $region3
    $region8: #{transformer_with_graph2vec_forward.1} parent=1 // loop_exit
      _
    %6110 = vsyncpa [#allocation3], 1
    %s6111 = scalar_lea.sflag [#allocation3], 1
    %6112 = vsyncpa %s6111, 1

</llo_original>
